<compile_context>
chip_gen: v7x
topology: tpu7x:2x2x1
jax: 0.10.0
libtpu: 0.0.40
codegen_flags: <defaults>
</compile_context>

<pallas_src>
import jax
import jax.numpy as jnp
from jax import lax
from jax.experimental import pallas as pl
from jax.experimental.pallas import tpu as pltpu


def _chunk_stack(feat, num_layers, d):
    """torch.chunk(dim=-1): chunk i == feat[..., i*d:(i+1)*d] -> (N, items, T, D)."""
    n_items, h, w, _ = feat.shape
    t = h * w
    return feat.reshape(n_items, t, num_layers, d).transpose(2, 0, 1, 3)


def _vmem_estimate(q, t, d, n, kb, kc, gate_bytes):
    """Coarse per-grid-step VMEM usage (bytes) used for block sizing."""
    qt, kbt, kct = q * t, kb * t, kc * t
    lane = lambda x: ((x + 127) // 128) * 128
    g_block = 2 * n * d * kbt * 2            # double-buffered bf16 gallery block (lane-dense)
    qp_res = n * qt * lane(d) * 2            # resident query projections (lane-padded)
    gates = n * t * (lane(kct) + lane(qt)) * gate_bytes
    pools = kct * lane(kc) * 2 + q * lane(qt) * 2
    sims = 2 * qt * kct * (4 + gate_bytes)   # f32 MXU result + gated copy, both orientations
    out_block = 2 * q * lane(kb) * 4
    return g_block + qp_res + gates + pools + sims + out_block


def _pick_gallery_chunk(kb, q, t, sim_budget_bytes=8 * 1024 * 1024):
    """Largest divisor of kb whose fused sim chunk stays under the budget."""
    # TODO(synk): very large Q*T additionally needs query-token chunking.
    best = 1
    for kc in range(1, kb + 1):
        if kb % kc == 0 and 2 * (q * t) * (kc * t) * 6 <= sim_budget_bytes:
            best = kc
    return best


def _pick_gallery_block(k, q, t, d, n, budget):
    """Gallery block per grid step: lane-dense (multiple of 128) output blocks,
    fits the VMEM budget, and >=2 grid steps when possible so both v7x
    TensorCores get work under dimension_semantics=('parallel',)."""
    cands = [kb for kb in range(128, k + 1, 128) if k % kb == 0]
    if not cands:
        return k                              # tiny gallery: block == full array dims

    def fits(kb):
        return _vmem_estimate(q, t, d, n, kb, _pick_gallery_chunk(kb, q, t), 2) <= budget

    fitting = [kb for kb in cands if fits(kb)] or [min(cands)]
    multi = [kb for kb in fitting if k // kb >= 2]
    return max(multi) if multi else max(fitting)


def transformer_decoder(q_feat, g_feat, params, *, num_layers, norm=None,
                        gallery_block=None, gallery_chunk=None,
                        gate_max_dtype=None):
    Q, H, W, DN = q_feat.shape
    K = g_feat.shape[0]
    assert DN % num_layers == 0
    N = num_layers
    D = DN // N
    T = H * W
    QT = Q * T

    # ---- per-generation VMEM budget / tiling (review: re-derive KB, set limit) ----
    try:
        vmem_cap = int(pltpu.get_tpu_info().vmem_capacity_bytes)
    except Exception:                          # conservative (v7x-sized) fallback
        vmem_cap = 64 * 1024 * 1024

    KB = gallery_block if gallery_block is not None else _pick_gallery_block(
        K, Q, T, D, N, budget=int(0.45 * vmem_cap))
    assert K % KB == 0 and (KB == K or KB % 128 == 0), (K, KB)
    KC = gallery_chunk if gallery_chunk is not None else _pick_gallery_chunk(KB, Q, T)
    assert KB % KC == 0, (KB, KC)
    n_chunks = KB // KC

    # bf16 gate/max on v6e/v7x (bf16 VPU); pass jnp.float32 on v5e.  bf16 also
    # needs the (Q*T, .) -> (Q, T, .) row-split reshape to be layout-free
    # (T % 16 == 0), else fall back to f32 (T % 8 == 0 preferred).
    if gate_max_dtype is None:
        gate_dtype = jnp.bfloat16 if T % 16 == 0 else jnp.float32
    else:
        gate_dtype = gate_max_dtype

    # ---- wrapper-side layout plumbing + hoisted query-side projections -----------
    # qp does not depend on the gallery block, so project it ONCE here (review item)
    # and pass it as a small constant-resident bf16 input (token-major so both sim
    # matmuls use the natively supported "contract on last dims" form).
    q_tok = _chunk_stack(q_feat, N, D).reshape(N, QT, D)
    qp_all = (jnp.einsum("ntd,nde->nte", q_tok.astype(jnp.bfloat16),
                         params["wq"].astype(jnp.bfloat16),
                         preferred_element_type=jnp.float32)
              + params["bq"].astype(jnp.float32)).astype(jnp.bfloat16)   # (N, QT, D)

    # gallery features D-first so the streamed VMEM block is lane-dense (no padding).
    g_all = jnp.swapaxes(_chunk_stack(g_feat, N, D).reshape(N, K * T, D),
                         1, 2).astype(jnp.bfloat16)                      # (N, D, K*T)
    wgT = jnp.swapaxes(params["wg"], 1, 2).astype(jnp.bfloat16)          # (N, Dout, Din)
    bgT = jnp.swapaxes(params["bg"].astype(jnp.float32), 1, 2)           # (N, D, 1)

    # score-embed gate: sigmoid once; tiled only to CHUNK width (not K), bf16.
    sig = jax.nn.sigmoid(params["se"].astype(jnp.float32))               # (N, T, T)
    gate_a = jnp.tile(sig, (1, 1, KC)).astype(gate_dtype)                # (N, T, KC*T)
    gate_b = jnp.tile(jnp.swapaxes(sig, 1, 2), (1, 1, Q)).astype(gate_dtype)  # (N, T, QT)

    # segmented-mean pooling matrices (bf16 MXU operands, f32 accumulation).
    # pool_bT is pre-transposed so the mean_s-max_t term lands directly in (Q, KC)
    # and no in-kernel accumulator transpose / second output is needed.
    pool_a = (jnp.repeat(jnp.eye(KC, dtype=jnp.float32), T, axis=0) / T
              ).astype(jnp.bfloat16)                                      # (KC*T, KC)
    pool_bT = (jnp.repeat(jnp.eye(Q, dtype=jnp.float32), T, axis=1) / T
               ).astype(jnp.bfloat16)                                     # (Q, Q*T)

    def kernel(qp_ref, g_ref, wgt_ref, bg_ref, ga_ref, gb_ref, pa_ref, pb_ref,
               out_ref):
        pool_a_v = pa_ref[...]                    # (KC*T, KC) bf16
        pool_bT_v = pb_ref[...]                   # (Q, Q*T)   bf16

        # Static chunk loop over gallery items within this block: each chunk fuses
        # matmul -> gate -> max -> pooled mean and writes disjoint output columns,
        # so the (Q*T, KB*T) similarity is never materialized.  (Switch to pl.loop
        # + pl.ds if n_chunks ever gets large.)
        for c in range(n_chunks):
            c0 = c * KC * T

            def layer_body(i, acc):
                # gallery projection for this (layer, chunk): D-first block keeps the
                # DMA lane-dense; one small f32 transpose yields the token-major
                # operand both sims consume via transpose-rhs contractions.
                g_c = g_ref[i, :, c0:c0 + KC * T]                        # (D, KC*T) bf16
                gp = jnp.dot(wgt_ref[i], g_c,
                             preferred_element_type=jnp.float32) + bg_ref[i]
                gp_tok = gp.T.astype(jnp.bfloat16)                       # (KC*T, D)
                qp = qp_ref[i]                                           # (Q*T, D) bf16

                # orientation A: rows (q,s), cols (k,t); max over s, mean over t
                sim_a = lax.dot_general(qp, gp_tok, (((1,), (1,)), ((), ())),
                                        preferred_element_type=jnp.float32)
                sim_a = sim_a.astype(gate_dtype).reshape(Q, T, KC * T) * ga_ref[i][None]
                ma = jnp.max(sim_a, axis=1).astype(jnp.bfloat16)         # (Q, KC*T)
                acc = acc + jnp.dot(ma, pool_a_v,
                                    preferred_element_type=jnp.float32)  # (Q, KC)

                # orientation B: rows (k,t), cols (q,s); max over t, mean over s
                sim_b = lax.dot_general(gp_tok, qp, (((1,), (1,)), ((), ())),
                                        preferred_element_type=jnp.float32)
                sim_b = sim_b.astype(gate_dtype).reshape(KC, T, QT) * gb_ref[i][None]
                mb = jnp.max(sim_b, axis=1).astype(jnp.bfloat16)         # (KC, Q*T)
                acc = acc + lax.dot_general(pool_bT_v, mb,
                                            (((1,), (1,)), ((), ())),
                                            preferred_element_type=jnp.float32)
                return acc

            acc = lax.fori_loop(0, N, layer_body, jnp.zeros((Q, KC), jnp.float32))
            out_ref[:, c * KC:(c + 1) * KC] = acc

    est = _vmem_estimate(Q, T, D, N, KB, KC, jnp.dtype(gate_dtype).itemsize)
    vmem_limit = int(min(vmem_cap, max(2 * est, 32 * 1024 * 1024)))

    score = pl.pallas_call(
        kernel,
        out_shape=jax.ShapeDtypeStruct((Q, K), jnp.float32),
        grid=(K // KB,),
        in_specs=[
            pl.BlockSpec((N, QT, D), lambda j: (0, 0, 0)),       # qp (resident)
            pl.BlockSpec((N, D, KB * T), lambda j: (0, 0, j)),   # gallery block (streamed)
            pl.BlockSpec((N, D, D), lambda j: (0, 0, 0)),        # wg^T
            pl.BlockSpec((N, D, 1), lambda j: (0, 0, 0)),        # bg (D-first)
            pl.BlockSpec((N, T, KC * T), lambda j: (0, 0, 0)),   # gate, chunk width only
            pl.BlockSpec((N, T, QT), lambda j: (0, 0, 0)),       # gate^T, query width
            pl.BlockSpec((KC * T, KC), lambda j: (0, 0)),        # per-chunk mean-over-t
            pl.BlockSpec((Q, QT), lambda j: (0, 0)),             # mean-over-s (pre-transposed)
        ],
        out_specs=pl.BlockSpec((Q, KB), lambda j: (0, j)),
        compiler_params=pltpu.CompilerParams(
            dimension_semantics=("parallel",),
            vmem_limit_bytes=vmem_limit),
    )(qp_all, g_all, wgT, bgT, gate_a, gate_b, pool_a, pool_bT)

    if norm is not None:
        # mirrors: score.view(-1, 1) -> norm -> view(q, k)
        score = norm(score.reshape(-1, 1)).reshape(Q, K)
    return score


def transformer_decoder_ref(q_feat, g_feat, params, *, num_layers, norm=None):
    """Pure-JAX reference (same math, same bf16-MXU / f32-accumulate policy)."""
    Q, H, W, DN = q_feat.shape
    K = g_feat.shape[0]
    D = DN // num_layers
    T = H * W
    q_stack = _chunk_stack(q_feat, num_layers, D)   # (N, Q, T, D)
    g_stack = _chunk_stack(g_feat, num_layers, D)   # (N, K, T, D)

    score = jnp.zeros((Q, K), jnp.float32)
    for i in range(num_layers):
        qi = q_stack[i].reshape(Q * T, D).astype(jnp.bfloat16)
        gi = g_stack[i].reshape(K * T, D).astype(jnp.bfloat16)
        qp = (jnp.dot(qi, params["wq"][i].astype(jnp.bfloat16),
                      preferred_element_type=jnp.float32)
              + params["bq"][i]).astype(jnp.bfloat16)
        gp = (jnp.dot(gi, params["wg"][i].astype(jnp.bfloat16),
                      preferred_element_type=jnp.float32)
              + params["bg"][i]).astype(jnp.bfloat16)
        sim = jnp.dot(qp, gp.T, preferred_element_type=jnp.float32)   # (Q*T, K*T)
        sim = sim.reshape(Q, T, K, T) * jax.nn.sigmoid(
            params["se"][i])[None, :, None, :]
        p1 = jnp.max(sim, axis=3).mean(axis=1)    # mean_s max_t  -> (Q, K)
        p2 = jnp.max(sim, axis=1).mean(axis=2)    # mean_t max_s  -> (Q, K)
        score = score + p1 + p2
    if norm is not None:
        score = norm(score.reshape(-1, 1)).reshape(Q, K)
    return score


def init_params(key, num_layers, d_model, t):
    ks = jax.random.split(key, 5)
    return {
        "wq": jax.random.normal(ks[0], (num_layers, d_model, d_model),
                                jnp.float32) / (d_model ** 0.5),
        "wg": jax.random.normal(ks[1], (num_layers, d_model, d_model),
                                jnp.float32) / (d_model ** 0.5),
        "bq": 0.01 * jax.random.normal(ks[2], (num_layers, 1, d_model),
                                       jnp.float32),
        "bg": 0.01 * jax.random.normal(ks[3], (num_layers, 1, d_model),
                                       jnp.float32),
        "se": jax.random.normal(ks[4], (num_layers, t, t), jnp.float32),
    }


if __name__ == "__main__":
    # Small shapes: Q=4 queries, K=256 gallery items, 4x4 feature maps,
    # d_model=32 per layer, num_layers=3 -> last dim d*n = 96.  K=256 lets the
    # test exercise the multi-block grid (KB=128 -> 2 parallel steps) and the
    # in-kernel chunk loop, per the review's coverage concern.
    Q, K, H, W, D, N = 4, 256, 4, 4, 32, 3
    T = H * W

    key = jax.random.PRNGKey(0)
    kq, kg, kp = jax.random.split(key, 3)
    q_feat = jax.random.normal(kq, (Q, H, W, D * N), jnp.float32)
    g_feat = jax.random.normal(kg, (K, H, W, D * N), jnp.float32)
    params = init_params(kp, N, D, T)

    ref = jax.block_until_ready(
        transformer_decoder_ref(q_feat, g_feat, params, num_layers=N))

    # auto-tiled path (KB/KC derived from the VMEM budget; >=2 parallel grid steps)
    out = jax.block_until_ready(
        transformer_decoder(q_feat, g_feat, params, num_layers=N, norm=None))
    assert out.shape == (Q, K)
    assert jnp.allclose(out, ref, rtol=2e-2, atol=2e-2), (
        f"auto path: max abs diff {jnp.max(jnp.abs(out - ref))}")

    # explicitly exercise multi-block AND multi-chunk (2 grid steps x 2 chunks)
    out2 = jax.block_until_ready(
        transformer_decoder(q_feat, g_feat, params, num_layers=N, norm=None,
                            gallery_block=128, gallery_chunk=64))
    assert jnp.allclose(out2, ref, rtol=2e-2, atol=2e-2), (
        f"blocked path: max abs diff {jnp.max(jnp.abs(out2 - ref))}")

    print("KERNEL_OK")
</pallas_src>

<mosaic_0001>
module attributes {stable_mosaic.version = 11 : i64} {
  func.func @kernel(%arg0: i32, %arg1: memref<3x64x32xbf16, #tpu.memory_space<vmem>>, %arg2: memref<3x32x2048xbf16, #tpu.memory_space<vmem>>, %arg3: memref<3x32x32xbf16, #tpu.memory_space<vmem>>, %arg4: memref<3x32x1xf32, #tpu.memory_space<vmem>>, %arg5: memref<3x16x2048xbf16, #tpu.memory_space<vmem>>, %arg6: memref<3x16x64xbf16, #tpu.memory_space<vmem>>, %arg7: memref<2048x128xbf16, #tpu.memory_space<vmem>>, %arg8: memref<4x64xbf16, #tpu.memory_space<vmem>>, %arg9: memref<4x128xf32, #tpu.memory_space<vmem>>) attributes {dimension_semantics = [#tpu.dimension_semantics<parallel>], iteration_bounds = array<i64: 2>, scalar_prefetch = 0 : i64, scratch_operands = 0 : i64, tpu.core_type = #tpu.core_type<tc>, window_params = [{pipeline_mode = #tpu.pipeline_mode<synchronous>, transform_indices = @transform_0, window_bounds = array<i64: 3, 64, 32>}, {transform_indices = @transform_1, window_bounds = array<i64: 3, 32, 2048>}, {pipeline_mode = #tpu.pipeline_mode<synchronous>, transform_indices = @transform_2, window_bounds = array<i64: 3, 32, 32>}, {pipeline_mode = #tpu.pipeline_mode<synchronous>, transform_indices = @transform_3, window_bounds = array<i64: 3, 32, 1>}, {pipeline_mode = #tpu.pipeline_mode<synchronous>, transform_indices = @transform_4, window_bounds = array<i64: 3, 16, 2048>}, {pipeline_mode = #tpu.pipeline_mode<synchronous>, transform_indices = @transform_5, window_bounds = array<i64: 3, 16, 64>}, {pipeline_mode = #tpu.pipeline_mode<synchronous>, transform_indices = @transform_6, window_bounds = array<i64: 2048, 128>}, {pipeline_mode = #tpu.pipeline_mode<synchronous>, transform_indices = @transform_7, window_bounds = array<i64: 4, 64>}, {transform_indices = @transform_8, window_bounds = array<i64: 4, 128>}]} {
    %c0 = arith.constant 0 : index
    %c0_0 = arith.constant 0 : index
    %0 = vector.load %arg7[%c0, %c0_0] : memref<2048x128xbf16, #tpu.memory_space<vmem>>, vector<2048x128xbf16>
    %c0_1 = arith.constant 0 : index
    %c0_2 = arith.constant 0 : index
    %1 = vector.load %arg8[%c0_1, %c0_2] : memref<4x64xbf16, #tpu.memory_space<vmem>>, vector<4x64xbf16>
    %cst = arith.constant 0.000000e+00 : f32
    %2 = vector.broadcast %cst : f32 to vector<4x128xf32>
    %c0_i32 = arith.constant 0 : i32
    %c3_i32 = arith.constant 3 : i32
    %3 = arith.addi %c0_i32, %c3_i32 : i32
    %c1_i32 = arith.constant 1 : i32
    %4 = scf.for %arg10 = %c0_i32 to %3 step %c1_i32 iter_args(%arg11 = %2) -> (vector<4x128xf32>)  : i32 {
      %6 = arith.index_cast %arg10 : i32 to index
      %c0_6 = arith.constant 0 : index
      %c0_7 = arith.constant 0 : index
      %7 = vector.load %arg2[%6, %c0_6, %c0_7] : memref<3x32x2048xbf16, #tpu.memory_space<vmem>>, vector<1x32x2048xbf16>
      %8 = vector.shape_cast %7 : vector<1x32x2048xbf16> to vector<32x2048xbf16>
      %9 = arith.index_cast %arg10 : i32 to index
      %c0_8 = arith.constant 0 : index
      %c0_9 = arith.constant 0 : index
      %10 = vector.load %arg3[%9, %c0_8, %c0_9] : memref<3x32x32xbf16, #tpu.memory_space<vmem>>, vector<1x32x32xbf16>
      %11 = vector.shape_cast %10 : vector<1x32x32xbf16> to vector<32x32xbf16>
      %cst_10 = arith.constant dense<0.000000e+00> : vector<32x2048xf32>
      %12 = tpu.matmul %11, %8, %cst_10 {dimension_numbers = #tpu.dot_dimension_numbers<[1], [0], [0], [1], [0, 0, 1, 1], [], []>} : vector<32x32xbf16>, vector<32x2048xbf16>, vector<32x2048xf32> -> vector<32x2048xf32>
      %13 = arith.index_cast %arg10 : i32 to index
      %c0_11 = arith.constant 0 : index
      %c0_12 = arith.constant 0 : index
      %14 = vector.load %arg4[%13, %c0_11, %c0_12] : memref<3x32x1xf32, #tpu.memory_space<vmem>>, vector<1x32x1xf32>
      %15 = vector.shape_cast %14 : vector<1x32x1xf32> to vector<32x1xf32>
      %16 = vector.broadcast %15 : vector<32x1xf32> to vector<32x2048xf32>
      %17 = arith.addf %12, %16 : vector<32x2048xf32>
      %18 = tpu.transpose %17, [1, 0] : vector<32x2048xf32> -> vector<2048x32xf32>
      %19 = arith.truncf %18 : vector<2048x32xf32> to vector<2048x32xbf16>
      %20 = arith.index_cast %arg10 : i32 to index
      %c0_13 = arith.constant 0 : index
      %c0_14 = arith.constant 0 : index
      %21 = vector.load %arg1[%20, %c0_13, %c0_14] : memref<3x64x32xbf16, #tpu.memory_space<vmem>>, vector<1x64x32xbf16>
      %22 = vector.shape_cast %21 : vector<1x64x32xbf16> to vector<64x32xbf16>
      %cst_15 = arith.constant dense<0.000000e+00> : vector<64x2048xf32>
      %23 = tpu.matmul %22, %19, %cst_15 {dimension_numbers = #tpu.dot_dimension_numbers<[1], [1], [0], [0], [0, 0, 1, 0], [], []>} : vector<64x32xbf16>, vector<2048x32xbf16>, vector<64x2048xf32> -> vector<64x2048xf32>
      %24 = arith.truncf %23 : vector<64x2048xf32> to vector<64x2048xbf16>
      %25 = vector.shape_cast %24 : vector<64x2048xbf16> to vector<4x16x2048xbf16>
      %26 = arith.index_cast %arg10 : i32 to index
      %c0_16 = arith.constant 0 : index
      %c0_17 = arith.constant 0 : index
      %27 = vector.load %arg5[%26, %c0_16, %c0_17] : memref<3x16x2048xbf16, #tpu.memory_space<vmem>>, vector<1x16x2048xbf16>
      %28 = vector.shape_cast %27 : vector<1x16x2048xbf16> to vector<16x2048xbf16>
      %29 = vector.shape_cast %28 : vector<16x2048xbf16> to vector<1x16x2048xbf16>
      %30 = vector.broadcast %29 : vector<1x16x2048xbf16> to vector<4x16x2048xbf16>
      %31 = arith.mulf %25, %30 : vector<4x16x2048xbf16>
      %cst_18 = arith.constant dense<0xFF80> : vector<4x2048xbf16>
      %32 = vector.multi_reduction <maximumf>, %31, %cst_18 [1] : vector<4x16x2048xbf16> to vector<4x2048xbf16>
      %cst_19 = arith.constant dense<0.000000e+00> : vector<4x128xf32>
      %33 = tpu.matmul %32, %0, %cst_19 {dimension_numbers = #tpu.dot_dimension_numbers<[1], [0], [0], [1], [0, 0, 1, 1], [], []>} : vector<4x2048xbf16>, vector<2048x128xbf16>, vector<4x128xf32> -> vector<4x128xf32>
      %34 = arith.addf %arg11, %33 : vector<4x128xf32>
      %cst_20 = arith.constant dense<0.000000e+00> : vector<2048x64xf32>
      %35 = tpu.matmul %19, %22, %cst_20 {dimension_numbers = #tpu.dot_dimension_numbers<[1], [1], [0], [0], [0, 0, 1, 0], [], []>} : vector<2048x32xbf16>, vector<64x32xbf16>, vector<2048x64xf32> -> vector<2048x64xf32>
      %36 = arith.truncf %35 : vector<2048x64xf32> to vector<2048x64xbf16>
      %37 = vector.shape_cast %36 : vector<2048x64xbf16> to vector<128x16x64xbf16>
      %38 = arith.index_cast %arg10 : i32 to index
      %c0_21 = arith.constant 0 : index
      %c0_22 = arith.constant 0 : index
      %39 = vector.load %arg6[%38, %c0_21, %c0_22] : memref<3x16x64xbf16, #tpu.memory_space<vmem>>, vector<1x16x64xbf16>
      %40 = vector.shape_cast %39 : vector<1x16x64xbf16> to vector<16x64xbf16>
      %41 = vector.shape_cast %40 : vector<16x64xbf16> to vector<1x16x64xbf16>
      %42 = vector.broadcast %41 : vector<1x16x64xbf16> to vector<128x16x64xbf16>
      %43 = arith.mulf %37, %42 : vector<128x16x64xbf16>
      %cst_23 = arith.constant dense<0xFF80> : vector<128x64xbf16>
      %44 = vector.multi_reduction <maximumf>, %43, %cst_23 [1] : vector<128x16x64xbf16> to vector<128x64xbf16>
      %cst_24 = arith.constant dense<0.000000e+00> : vector<4x128xf32>
      %45 = tpu.matmul %1, %44, %cst_24 {dimension_numbers = #tpu.dot_dimension_numbers<[1], [1], [0], [0], [0, 0, 1, 0], [], []>} : vector<4x64xbf16>, vector<128x64xbf16>, vector<4x128xf32> -> vector<4x128xf32>
      %46 = arith.addf %34, %45 : vector<4x128xf32>
      scf.yield %46 : vector<4x128xf32>
    }
    %c3_i32_3 = arith.constant 3 : i32
    %c0_4 = arith.constant 0 : index
    %c0_5 = arith.constant 0 : index
    %5 = vector.load %arg9[%c0_4, %c0_5] : memref<4x128xf32, #tpu.memory_space<vmem>>, vector<4x128xf32>
    tpu.vector_store %arg9[%c0_4, %c0_5], %4 {strides = array<i32>} : memref<4x128xf32, #tpu.memory_space<vmem>>, vector<4x128xf32>,
    return
  }
  func.func @transform_0(%arg0: i32) -> (i32, i32, i32) {
    %c0_i32 = arith.constant 0 : i32
    %c0_i32_0 = arith.constant 0 : i32
    %c0_i32_1 = arith.constant 0 : i32
    %c0_i32_2 = arith.constant 0 : i32
    return %c0_i32, %c0_i32_0, %c0_i32_1 : i32, i32, i32
  }
  func.func @transform_1(%arg0: i32) -> (i32, i32, i32) {
    %c0_i32 = arith.constant 0 : i32
    %c0_i32_0 = arith.constant 0 : i32
    %c0_i32_1 = arith.constant 0 : i32
    return %c0_i32, %c0_i32_0, %arg0 : i32, i32, i32
  }
  func.func @transform_2(%arg0: i32) -> (i32, i32, i32) {
    %c0_i32 = arith.constant 0 : i32
    %c0_i32_0 = arith.constant 0 : i32
    %c0_i32_1 = arith.constant 0 : i32
    %c0_i32_2 = arith.constant 0 : i32
    return %c0_i32, %c0_i32_0, %c0_i32_1 : i32, i32, i32
  }
  func.func @transform_3(%arg0: i32) -> (i32, i32, i32) {
    %c0_i32 = arith.constant 0 : i32
    %c0_i32_0 = arith.constant 0 : i32
    %c0_i32_1 = arith.constant 0 : i32
    %c0_i32_2 = arith.constant 0 : i32
    return %c0_i32, %c0_i32_0, %c0_i32_1 : i32, i32, i32
  }
  func.func @transform_4(%arg0: i32) -> (i32, i32, i32) {
    %c0_i32 = arith.constant 0 : i32
    %c0_i32_0 = arith.constant 0 : i32
    %c0_i32_1 = arith.constant 0 : i32
    %c0_i32_2 = arith.constant 0 : i32
    return %c0_i32, %c0_i32_0, %c0_i32_1 : i32, i32, i32
  }
  func.func @transform_5(%arg0: i32) -> (i32, i32, i32) {
    %c0_i32 = arith.constant 0 : i32
    %c0_i32_0 = arith.constant 0 : i32
    %c0_i32_1 = arith.constant 0 : i32
    %c0_i32_2 = arith.constant 0 : i32
    return %c0_i32, %c0_i32_0, %c0_i32_1 : i32, i32, i32
  }
  func.func @transform_6(%arg0: i32) -> (i32, i32) {
    %c0_i32 = arith.constant 0 : i32
    %c0_i32_0 = arith.constant 0 : i32
    %c0_i32_1 = arith.constant 0 : i32
    return %c0_i32, %c0_i32_0 : i32, i32
  }
  func.func @transform_7(%arg0: i32) -> (i32, i32) {
    %c0_i32 = arith.constant 0 : i32
    %c0_i32_0 = arith.constant 0 : i32
    %c0_i32_1 = arith.constant 0 : i32
    return %c0_i32, %c0_i32_0 : i32, i32
  }
  func.func @transform_8(%arg0: i32) -> (i32, i32) {
    %c0_i32 = arith.constant 0 : i32
    %c0_i32_0 = arith.constant 0 : i32
    return %c0_i32, %arg0 : i32, i32
  }
}

</mosaic_0001>

<llo_original>
// kernel: tpu_custom_call.1
$region0: #{tpu_custom_call.1}
  #allocation0 [shape = 'u32[]', space=smem, size = 0x4, offset = 0x4, fixed_abs, tag = 'smem constant byte address 0x4 - core index']
  #allocation1 [shape = 'u32[144,128]{1,0:T(1,128)}', space=vmem, size = 0x12000, scoped, tag = 'internal scratch']
  %s0 = inlined_call_operand.vmem [shape: bf16[3,64,32], index: 0, kind: input, shape index: {}]
  %s1 = inlined_call_operand.hbm [shape: bf16[3,32,4096], index: 1, kind: input, shape index: {}]
  %s2 = inlined_call_operand.vmem [shape: bf16[3,32,32], index: 2, kind: input, shape index: {}]
  %s3 = inlined_call_operand.vmem [shape: f32[3,32,1], index: 3, kind: input, shape index: {}]
  %s4 = inlined_call_operand.hbm [shape: bf16[3,16,2048], index: 4, kind: input, shape index: {}]
  %s5 = inlined_call_operand.vmem [shape: bf16[3,16,64], index: 5, kind: input, shape index: {}]
  %s6 = inlined_call_operand.hbm [shape: bf16[2048,128], index: 6, kind: input, shape index: {}]
  %s7 = inlined_call_operand.vmem [shape: bf16[4,64], index: 7, kind: input, shape index: {}]
  %s8 = inlined_call_operand.hbm [shape: f32[4,256], index: 8, kind: output, shape index: {}]
  %s9 = sld [smem:[#allocation0]]
  $region84: #{tpu_custom_call.1} parent=0
    _
  %s11 = ssub.s32 1, %s9
  %s12 = scalar_select 0, %s11, %s9
  $region1: #{tpu_custom_call.1} parent=0
    #allocation2 [shape = 'u8[786432]{0}', space=vmem, size = 0xc0000, scoped, tag = 'input window, operand 1']
    #allocation3 [shape = 's32[2]{0}', space=sflag, size = 0x8, scoped, tag = 'scoped memory for tpu_custom_call.1']
    #allocation4 [shape = 's32[2]{0}', space=sflag, size = 0x8, scoped, tag = 'scoped memory for tpu_custom_call.1']
    #allocation5 [shape = 'u8[196608]{0}', space=vmem, size = 0x30000, scoped, tag = 'input window, operand 4, single buffered']
    #allocation6 [shape = 's32[1]{0}', space=sflag, size = 0x4, scoped, tag = 'scoped memory for tpu_custom_call.1']
    #allocation7 [shape = 'u8[524288]{0}', space=vmem, size = 0x80000, scoped, tag = 'input window, operand 6, single buffered']
    #allocation8 [shape = 'u8[4096]{0}', space=vmem, size = 0x1000, scoped, tag = 'output window, operand 0']
    %13 = vsyncpa [#allocation3], 0
    %s14 = scalar_lea.sflag [#allocation3], 1
    %15 = vsyncpa %s14, 0
    %16 = vsyncpa [#allocation6], 0
    %17 = vsyncpa [#allocation4], 0
    %s18 = scalar_lea.sflag [#allocation4], 1
    %19 = vsyncpa %s18, 0
    loop: start=0, step=1, limit=4
    $region2: #{tpu_custom_call.1} parent=1 // loop_pre_header
      _
    $region3: #{tpu_custom_call.1} parent=1 // loop_header
      %s21 = sphi 0, %s25
      %p22 = scmp.ge.s32.totalorder %s21, 4
      %s29 = sphi 0, %s29
      %s31 = sphi 0, %s29
      %s32 = sphi 0, %s31
      %s46 = sphi 0, %s32
      %s52 = sphi 0, %s54
      %s55 = sphi 0, %s52
      %s56 = sphi 0, %s55
      %s72 = sphi 0, %s56
      %s76 = sphi 0, %s76
      %s78 = sphi 0, %s76
      %s79 = sphi 0, %s78
      %s93 = sphi 0, %s79
      %s97 = sphi 0, %s97
      %s99 = sphi 0, %s97
      %s100 = sphi 0, %s99
      %s114 = sphi 0, %s100
      %s118 = sphi 0, %s118
      %s120 = sphi 0, %s118
      %s121 = sphi 0, %s120
      %s135 = sphi 0, %s121
      %s139 = sphi 0, %s139
      %s141 = sphi 0, %s139
      %s142 = sphi 0, %s141
      %s156 = sphi 0, %s142
      %s160 = sphi 0, %s160
      %s162 = sphi 0, %s160
      %s163 = sphi 0, %s162
      %s177 = sphi 0, %s163
      %s181 = sphi 0, %s181
      %s183 = sphi 0, %s181
      %s184 = sphi 0, %s183
      %s198 = sphi 0, %s184
      %s204 = sphi 0, %s206
      %s207 = sphi 0, %s204
      %s208 = sphi 0, %s207
      %s224 = sphi 0, %s208
    $region4: #{tpu_custom_call.1} parent=1 // loop_header_branch
      %24 = sbr.rel (%p22) target = $region8
    $region5: #{tpu_custom_call.1} parent=1 // loop_body
      %s26 = ssub.s32 %s21, 1
      %s27 = ssub.s32 %s21, 2
      %s28 = sadd.s32 %s21, 1
      %s30 = sadd.s32 %s29, 1
      %p33 = scmp.eq.s32.totalorder %s21, 1
      %p34 = scmp.ne.s32.totalorder %s29, %s31
      %p35 = scmp.eq.s32.totalorder %s21, 0
      %p36 = por %p34, %p35
      %p37 = scmp.ne.s32.totalorder %s29, %s31
      %p38 = scmp.eq.s32.totalorder %s26, 1
      %p39 = por %p37, %p38
      %p40 = scmp.ne.s32.totalorder %s31, %s32
      %p41 = scmp.eq.s32.totalorder %s26, 0
      %p42 = por %p40, %p41
      %p43 = scmp.ne.s32.totalorder %s31, %s32
      %p44 = scmp.eq.s32.totalorder %s27, 1
      %p45 = por %p43, %p44
      %p47 = scmp.ne.s32.totalorder %s32, %s46
      %p48 = scmp.eq.s32.totalorder %s27, 0
      %p49 = por %p47, %p48
      %s50 = ssub.s32 %s21, %s28
      %p51 = scmp.eq.s32.totalorder %s50, 0
      %s53 = sadd.s32 %s52, 1
      %s54 = scalar_select %p51, %s52, %s53
      %p57 = pneg %p51
      %p58 = scmp.eq.s32.totalorder %s21, 1
      %p59 = por %p57, %p58
      %p60 = scmp.ne.s32.totalorder %s52, %s55
      %p61 = scmp.eq.s32.totalorder %s21, 0
      %p62 = por %p60, %p61
      %p63 = scmp.ne.s32.totalorder %s52, %s55
      %p64 = scmp.eq.s32.totalorder %s26, 1
      %p65 = por %p63, %p64
      %p66 = scmp.ne.s32.totalorder %s55, %s56
      %p67 = scmp.eq.s32.totalorder %s26, 0
      %p68 = por %p66, %p67
      %p69 = scmp.ne.s32.totalorder %s55, %s56
      %p70 = scmp.eq.s32.totalorder %s27, 1
      %p71 = por %p69, %p70
      %p73 = scmp.ne.s32.totalorder %s56, %s72
      %p74 = scmp.eq.s32.totalorder %s27, 0
      %p75 = por %p73, %p74
      %s77 = sadd.s32 %s76, 1
      %p80 = scmp.eq.s32.totalorder %s21, 1
      %p81 = scmp.ne.s32.totalorder %s76, %s78
      %p82 = scmp.eq.s32.totalorder %s21, 0
      %p83 = por %p81, %p82
      %p84 = scmp.ne.s32.totalorder %s76, %s78
      %p85 = scmp.eq.s32.totalorder %s26, 1
      %p86 = por %p84, %p85
      %p87 = scmp.ne.s32.totalorder %s78, %s79
      %p88 = scmp.eq.s32.totalorder %s26, 0
      %p89 = por %p87, %p88
      %p90 = scmp.ne.s32.totalorder %s78, %s79
      %p91 = scmp.eq.s32.totalorder %s27, 1
      %p92 = por %p90, %p91
      %p94 = scmp.ne.s32.totalorder %s79, %s93
      %p95 = scmp.eq.s32.totalorder %s27, 0
      %p96 = por %p94, %p95
      %s98 = sadd.s32 %s97, 1
      %p101 = scmp.eq.s32.totalorder %s21, 1
      %p102 = scmp.ne.s32.totalorder %s97, %s99
      %p103 = scmp.eq.s32.totalorder %s21, 0
      %p104 = por %p102, %p103
      %p105 = scmp.ne.s32.totalorder %s97, %s99
      %p106 = scmp.eq.s32.totalorder %s26, 1
      %p107 = por %p105, %p106
      %p108 = scmp.ne.s32.totalorder %s99, %s100
      %p109 = scmp.eq.s32.totalorder %s26, 0
      %p110 = por %p108, %p109
      %p111 = scmp.ne.s32.totalorder %s99, %s100
      %p112 = scmp.eq.s32.totalorder %s27, 1
      %p113 = por %p111, %p112
      %p115 = scmp.ne.s32.totalorder %s100, %s114
      %p116 = scmp.eq.s32.totalorder %s27, 0
      %p117 = por %p115, %p116
      %s119 = sadd.s32 %s118, 1
      %p122 = scmp.eq.s32.totalorder %s21, 1
      %p123 = scmp.ne.s32.totalorder %s118, %s120
      %p124 = scmp.eq.s32.totalorder %s21, 0
      %p125 = por %p123, %p124
      %p126 = scmp.ne.s32.totalorder %s118, %s120
      %p127 = scmp.eq.s32.totalorder %s26, 1
      %p128 = por %p126, %p127
      %p129 = scmp.ne.s32.totalorder %s120, %s121
      %p130 = scmp.eq.s32.totalorder %s26, 0
      %p131 = por %p129, %p130
      %p132 = scmp.ne.s32.totalorder %s120, %s121
      %p133 = scmp.eq.s32.totalorder %s27, 1
      %p134 = por %p132, %p133
      %p136 = scmp.ne.s32.totalorder %s121, %s135
      %p137 = scmp.eq.s32.totalorder %s27, 0
      %p138 = por %p136, %p137
      %s140 = sadd.s32 %s139, 1
      %p143 = scmp.eq.s32.totalorder %s21, 1
      %p144 = scmp.ne.s32.totalorder %s139, %s141
      %p145 = scmp.eq.s32.totalorder %s21, 0
      %p146 = por %p144, %p145
      %p147 = scmp.ne.s32.totalorder %s139, %s141
      %p148 = scmp.eq.s32.totalorder %s26, 1
      %p149 = por %p147, %p148
      %p150 = scmp.ne.s32.totalorder %s141, %s142
      %p151 = scmp.eq.s32.totalorder %s26, 0
      %p152 = por %p150, %p151
      %p153 = scmp.ne.s32.totalorder %s141, %s142
      %p154 = scmp.eq.s32.totalorder %s27, 1
      %p155 = por %p153, %p154
      %p157 = scmp.ne.s32.totalorder %s142, %s156
      %p158 = scmp.eq.s32.totalorder %s27, 0
      %p159 = por %p157, %p158
      %s161 = sadd.s32 %s160, 1
      %p164 = scmp.eq.s32.totalorder %s21, 1
      %p165 = scmp.ne.s32.totalorder %s160, %s162
      %p166 = scmp.eq.s32.totalorder %s21, 0
      %p167 = por %p165, %p166
      %p168 = scmp.ne.s32.totalorder %s160, %s162
      %p169 = scmp.eq.s32.totalorder %s26, 1
      %p170 = por %p168, %p169
      %p171 = scmp.ne.s32.totalorder %s162, %s163
      %p172 = scmp.eq.s32.totalorder %s26, 0
      %p173 = por %p171, %p172
      %p174 = scmp.ne.s32.totalorder %s162, %s163
      %p175 = scmp.eq.s32.totalorder %s27, 1
      %p176 = por %p174, %p175
      %p178 = scmp.ne.s32.totalorder %s163, %s177
      %p179 = scmp.eq.s32.totalorder %s27, 0
      %p180 = por %p178, %p179
      %s182 = sadd.s32 %s181, 1
      %p185 = scmp.eq.s32.totalorder %s21, 1
      %p186 = scmp.ne.s32.totalorder %s181, %s183
      %p187 = scmp.eq.s32.totalorder %s21, 0
      %p188 = por %p186, %p187
      %p189 = scmp.ne.s32.totalorder %s181, %s183
      %p190 = scmp.eq.s32.totalorder %s26, 1
      %p191 = por %p189, %p190
      %p192 = scmp.ne.s32.totalorder %s183, %s184
      %p193 = scmp.eq.s32.totalorder %s26, 0
      %p194 = por %p192, %p193
      %p195 = scmp.ne.s32.totalorder %s183, %s184
      %p196 = scmp.eq.s32.totalorder %s27, 1
      %p197 = por %p195, %p196
      %p199 = scmp.ne.s32.totalorder %s184, %s198
      %p200 = scmp.eq.s32.totalorder %s27, 0
      %p201 = por %p199, %p200
      %s202 = ssub.s32 %s21, %s28
      %p203 = scmp.eq.s32.totalorder %s202, 0
      %s205 = sadd.s32 %s204, 1
      %s206 = scalar_select %p203, %s204, %s205
      %p209 = pneg %p203
      %p210 = scmp.eq.s32.totalorder %s21, 1
      %p211 = por %p209, %p210
      %p212 = scmp.ne.s32.totalorder %s204, %s207
      %p213 = scmp.eq.s32.totalorder %s21, 0
      %p214 = por %p212, %p213
      %p215 = scmp.ne.s32.totalorder %s204, %s207
      %p216 = scmp.eq.s32.totalorder %s26, 1
      %p217 = por %p215, %p216
      %p218 = scmp.ne.s32.totalorder %s207, %s208
      %p219 = scmp.eq.s32.totalorder %s26, 0
      %p220 = por %p218, %p219
      %p221 = scmp.ne.s32.totalorder %s207, %s208
      %p222 = scmp.eq.s32.totalorder %s27, 1
      %p223 = por %p221, %p222
      %p225 = scmp.ne.s32.totalorder %s208, %s224
      %p226 = scmp.eq.s32.totalorder %s27, 0
      %p227 = por %p225, %p226
      %p228 = scmp.le.s32.totalorder 1, %s21
      %p229 = scmp.lt.s32.totalorder %s21, 3
      %p230 = pnand %p228, %p229
      %p231 = pneg %p230
      // Predicated region
      $region9: #{tpu_custom_call.1} parent=5 // pred_check
        _
      $region10: #{tpu_custom_call.1} parent=5 // pred_check_branch
        %233 = sbr.rel (%p230) target = $region12
      $region11: #{tpu_custom_call.1} parent=5 // pred_region
        %s234 = ssub.s32 %s21, 1
        // Predicated region
        $region13: #{tpu_custom_call.1} parent=11 // pred_check
          %p235 = pneg %p42
        $region14: #{tpu_custom_call.1} parent=11 // pred_check_branch
          %237 = sbr.rel (%p235) target = $region16
        $region15: #{tpu_custom_call.1} parent=11 // pred_region
          _
        $region16: #{tpu_custom_call.1} parent=11 // pred_fallthru
          _
        // Predicated region
        $region17: #{tpu_custom_call.1} parent=11 // pred_check
          %p238 = pneg %p89
        $region18: #{tpu_custom_call.1} parent=11 // pred_check_branch
          %240 = sbr.rel (%p238) target = $region20
        $region19: #{tpu_custom_call.1} parent=11 // pred_region
          _
        $region20: #{tpu_custom_call.1} parent=11 // pred_fallthru
          _
        // Predicated region
        $region21: #{tpu_custom_call.1} parent=11 // pred_check
          %p241 = pneg %p110
        $region22: #{tpu_custom_call.1} parent=11 // pred_check_branch
          %243 = sbr.rel (%p241) target = $region24
        $region23: #{tpu_custom_call.1} parent=11 // pred_region
          _
        $region24: #{tpu_custom_call.1} parent=11 // pred_fallthru
          _
        // Predicated region
        $region25: #{tpu_custom_call.1} parent=11 // pred_check
          %p244 = pneg %p131
        $region26: #{tpu_custom_call.1} parent=11 // pred_check_branch
          %246 = sbr.rel (%p244) target = $region28
        $region27: #{tpu_custom_call.1} parent=11 // pred_region
          %s248 = ssub.s32 6144, 6144
          %249 = vsyncadd [#allocation6], %s248
          %s250 = sshll.u32 [#allocation5], 4
          %s251 = int_to_ptr.vmem [resolvable:$true] %s250
          %256 = dma.hbm_to_vmem [thread:$0]  %s4, 6144, %s251, [#allocation6], 1024, 1024, 64
        $region28: #{tpu_custom_call.1} parent=11 // pred_fallthru
          _
        // Predicated region
        $region29: #{tpu_custom_call.1} parent=11 // pred_check
          %p257 = pneg %p152
        $region30: #{tpu_custom_call.1} parent=11 // pred_check_branch
          %259 = sbr.rel (%p257) target = $region32
        $region31: #{tpu_custom_call.1} parent=11 // pred_region
          _
        $region32: #{tpu_custom_call.1} parent=11 // pred_fallthru
          _
        // Predicated region
        $region33: #{tpu_custom_call.1} parent=11 // pred_check
          %p260 = pneg %p173
        $region34: #{tpu_custom_call.1} parent=11 // pred_check_branch
          %262 = sbr.rel (%p260) target = $region36
        $region35: #{tpu_custom_call.1} parent=11 // pred_region
          %s264 = ssub.s32 16384, 16384
          %265 = vsyncadd [#allocation6], %s264
          %s266 = sshll.u32 [#allocation7], 4
          %s267 = int_to_ptr.vmem [resolvable:$true] %s266
          %272 = dma.hbm_to_vmem [thread:$0]  %s6, 16384, %s267, [#allocation6], 64, 64, 4
        $region36: #{tpu_custom_call.1} parent=11 // pred_fallthru
          _
        // Predicated region
        $region37: #{tpu_custom_call.1} parent=11 // pred_check
          %p273 = pneg %p194
        $region38: #{tpu_custom_call.1} parent=11 // pred_check_branch
          %275 = sbr.rel (%p273) target = $region40
        $region39: #{tpu_custom_call.1} parent=11 // pred_region
          _
        $region40: #{tpu_custom_call.1} parent=11 // pred_fallthru
          _
      $region12: #{tpu_custom_call.1} parent=5 // pred_fallthru
        _
      %p276 = scmp.lt.s32.totalorder %s21, 2
      // Predicated region
      $region41: #{tpu_custom_call.1} parent=5 // pred_check
        %p277 = pneg %p276
      $region42: #{tpu_custom_call.1} parent=5 // pred_check_branch
        %279 = sbr.rel (%p277) target = $region44
      $region43: #{tpu_custom_call.1} parent=5 // pred_region
        // Predicated region
        $region45: #{tpu_custom_call.1} parent=43 // pred_check
          %p280 = pneg %p62
        $region46: #{tpu_custom_call.1} parent=43 // pred_check_branch
          %282 = sbr.rel (%p280) target = $region48
        $region47: #{tpu_custom_call.1} parent=43 // pred_region
          %s283 = sand.u32 %s52, 1
          %s284 = scalar_lea.sflag [#allocation3], %s283
          %s285 = sand.u32 %s52, 1
          %s286 = smul.addr %s285, 768
          %s287 = scalar_lea.vmem [#allocation2], %s286
          %s288 = smul.u32 16, %s21
          %s290 = ssub.s32 12288, 12288
          %291 = vsyncadd %s284, %s290
          %s292 = smul.addr %s288, 64
          %s293 = scalar_lea.hbm %s1, %s292
          %s294 = sshll.u32 %s287, 4
          %s295 = int_to_ptr.vmem [resolvable:$true] %s294
          %300 = dma.hbm_to_vmem [thread:$0]  %s293, 12288, %s295, %s284, 2048, 1024, 64
        $region48: #{tpu_custom_call.1} parent=43 // pred_fallthru
          _
      $region44: #{tpu_custom_call.1} parent=5 // pred_fallthru
        _
      %p301 = scmp.le.s32.totalorder 1, %s21
      %p302 = scmp.lt.s32.totalorder %s21, 3
      %p303 = pnand %p301, %p302
      %p304 = pneg %p303
      // Predicated region
      $region49: #{tpu_custom_call.1} parent=5 // pred_check
        _
      $region50: #{tpu_custom_call.1} parent=5 // pred_check_branch
        %306 = sbr.rel (%p303) target = $region52
      $region51: #{tpu_custom_call.1} parent=5 // pred_region
        %s307 = ssub.s32 %s21, 1
        %s308 = sand.u32 %s55, 1
        %s309 = scalar_lea.sflag [#allocation3], %s308
        %s310 = sand.u32 %s55, 1
        %s311 = smul.addr %s310, 768
        %s312 = scalar_lea.vmem [#allocation2], %s311
        // Predicated region
        $region53: #{tpu_custom_call.1} parent=51 // pred_check
          %p313 = pneg %p68
        $region54: #{tpu_custom_call.1} parent=51 // pred_check_branch
          %315 = sbr.rel (%p313) target = $region56
        $region55: #{tpu_custom_call.1} parent=51 // pred_region
          %316 = dma.done %s309, 12288
        $region56: #{tpu_custom_call.1} parent=51 // pred_fallthru
          _
        // Predicated region
        $region57: #{tpu_custom_call.1} parent=51 // pred_check
          %p317 = pneg %p131
        $region58: #{tpu_custom_call.1} parent=51 // pred_check_branch
          %319 = sbr.rel (%p317) target = $region60
        $region59: #{tpu_custom_call.1} parent=51 // pred_region
          %320 = dma.done [#allocation6], 6144
        $region60: #{tpu_custom_call.1} parent=51 // pred_fallthru
          _
        // Predicated region
        $region61: #{tpu_custom_call.1} parent=51 // pred_check
          %p321 = pneg %p173
        $region62: #{tpu_custom_call.1} parent=51 // pred_check_branch
          %323 = sbr.rel (%p321) target = $region64
        $region63: #{tpu_custom_call.1} parent=51 // pred_region
          %324 = dma.done [#allocation6], 16384
        $region64: #{tpu_custom_call.1} parent=51 // pred_fallthru
          _
        %p325 = pneg %p42
        %p326 = pneg %p39
        %s327 = sand.u32 %s55, 1
        %s328 = scalar_lea.sflag [#allocation3], %s327
        %s329 = sand.u32 %s55, 1
        %s330 = smul.addr %s329, 768
        %s331 = scalar_lea.vmem [#allocation2], %s330
        %p332 = pneg %p68
        %p333 = pneg %p65
        %p334 = pneg %p89
        %p335 = pneg %p86
        %p336 = pneg %p110
        %p337 = pneg %p107
        %p338 = pneg %p131
        %p339 = pneg %p128
        %p340 = pneg %p152
        %p341 = pneg %p149
        %p342 = pneg %p173
        %p343 = pneg %p170
        %p344 = pneg %p194
        %p345 = pneg %p191
        %p346 = pneg %p220
        %p347 = pneg %p217
        %s348 = sand.u32 %s207, 1
        %s349 = scalar_lea.sflag [#allocation4], %s348
        %s350 = sand.u32 %s207, 1
        %s351 = smul.addr %s350, 4
        %s352 = scalar_lea.vmem [#allocation8], %s351
        %s353 = smul.u32 16, %s26
        %v356 = vld [vmem:[#allocation7] sm:$0xf]
        %v357 = vld [vmem:[#allocation7 + $0x4] sm:$0xf]
        %v358 = vld [vmem:[#allocation7 + $0x8] sm:$0xf]
        %v359 = vld [vmem:[#allocation7 + $0xc] sm:$0xf]
        %v360 = vld [vmem:[#allocation7 + $0x10] sm:$0xf]
        %v361 = vld [vmem:[#allocation7 + $0x14] sm:$0xf]
        %v362 = vld [vmem:[#allocation7 + $0x18] sm:$0xf]
        %v363 = vld [vmem:[#allocation7 + $0x1c] sm:$0xf]
        %v364 = vld [vmem:[#allocation7 + $0x20] sm:$0xf]
        %v365 = vld [vmem:[#allocation7 + $0x24] sm:$0xf]
        %v366 = vld [vmem:[#allocation7 + $0x28] sm:$0xf]
        %v367 = vld [vmem:[#allocation7 + $0x2c] sm:$0xf]
        %v368 = vld [vmem:[#allocation7 + $0x30] sm:$0xf]
        %v369 = vld [vmem:[#allocation7 + $0x34] sm:$0xf]
        %v370 = vld [vmem:[#allocation7 + $0x38] sm:$0xf]
        %v371 = vld [vmem:[#allocation7 + $0x3c] sm:$0xf]
        %v372 = vld [vmem:[#allocation7 + $0x40] sm:$0xf]
        %v373 = vld [vmem:[#allocation7 + $0x44] sm:$0xf]
        %v374 = vld [vmem:[#allocation7 + $0x48] sm:$0xf]
        %v375 = vld [vmem:[#allocation7 + $0x4c] sm:$0xf]
        %v376 = vld [vmem:[#allocation7 + $0x50] sm:$0xf]
        %v377 = vld [vmem:[#allocation7 + $0x54] sm:$0xf]
        %v378 = vld [vmem:[#allocation7 + $0x58] sm:$0xf]
        %v379 = vld [vmem:[#allocation7 + $0x5c] sm:$0xf]
        %v380 = vld [vmem:[#allocation7 + $0x60] sm:$0xf]
        %v381 = vld [vmem:[#allocation7 + $0x64] sm:$0xf]
        %v382 = vld [vmem:[#allocation7 + $0x68] sm:$0xf]
        %v383 = vld [vmem:[#allocation7 + $0x6c] sm:$0xf]
        %v384 = vld [vmem:[#allocation7 + $0x70] sm:$0xf]
        %v385 = vld [vmem:[#allocation7 + $0x74] sm:$0xf]
        %v386 = vld [vmem:[#allocation7 + $0x78] sm:$0xf]
        %v387 = vld [vmem:[#allocation7 + $0x7c] sm:$0xf]
        %v388 = vld [vmem:[#allocation7 + $0x80] sm:$0xf]
        %v389 = vld [vmem:[#allocation7 + $0x84] sm:$0xf]
        %v390 = vld [vmem:[#allocation7 + $0x88] sm:$0xf]
        %v391 = vld [vmem:[#allocation7 + $0x8c] sm:$0xf]
        %v392 = vld [vmem:[#allocation7 + $0x90] sm:$0xf]
        %v393 = vld [vmem:[#allocation7 + $0x94] sm:$0xf]
        %v394 = vld [vmem:[#allocation7 + $0x98] sm:$0xf]
        %v395 = vld [vmem:[#allocation7 + $0x9c] sm:$0xf]
        %v396 = vld [vmem:[#allocation7 + $0xa0] sm:$0xf]
        %v397 = vld [vmem:[#allocation7 + $0xa4] sm:$0xf]
        %v398 = vld [vmem:[#allocation7 + $0xa8] sm:$0xf]
        %v399 = vld [vmem:[#allocation7 + $0xac] sm:$0xf]
        %v400 = vld [vmem:[#allocation7 + $0xb0] sm:$0xf]
        %v401 = vld [vmem:[#allocation7 + $0xb4] sm:$0xf]
        %v402 = vld [vmem:[#allocation7 + $0xb8] sm:$0xf]
        %v403 = vld [vmem:[#allocation7 + $0xbc] sm:$0xf]
        %v404 = vld [vmem:[#allocation7 + $0xc0] sm:$0xf]
        %v405 = vld [vmem:[#allocation7 + $0xc4] sm:$0xf]
        %v406 = vld [vmem:[#allocation7 + $0xc8] sm:$0xf]
        %v407 = vld [vmem:[#allocation7 + $0xcc] sm:$0xf]
        %v408 = vld [vmem:[#allocation7 + $0xd0] sm:$0xf]
        %v409 = vld [vmem:[#allocation7 + $0xd4] sm:$0xf]
        %v410 = vld [vmem:[#allocation7 + $0xd8] sm:$0xf]
        %v411 = vld [vmem:[#allocation7 + $0xdc] sm:$0xf]
        %v412 = vld [vmem:[#allocation7 + $0xe0] sm:$0xf]
        %v413 = vld [vmem:[#allocation7 + $0xe4] sm:$0xf]
        %v414 = vld [vmem:[#allocation7 + $0xe8] sm:$0xf]
        %v415 = vld [vmem:[#allocation7 + $0xec] sm:$0xf]
        %v416 = vld [vmem:[#allocation7 + $0xf0] sm:$0xf]
        %v417 = vld [vmem:[#allocation7 + $0xf4] sm:$0xf]
        %v418 = vld [vmem:[#allocation7 + $0xf8] sm:$0xf]
        %v419 = vld [vmem:[#allocation7 + $0xfc] sm:$0xf]
        %v420 = vld [vmem:[#allocation7 + $0x100] sm:$0xf]
        %v421 = vld [vmem:[#allocation7 + $0x104] sm:$0xf]
        %v422 = vld [vmem:[#allocation7 + $0x108] sm:$0xf]
        %v423 = vld [vmem:[#allocation7 + $0x10c] sm:$0xf]
        %v424 = vld [vmem:[#allocation7 + $0x110] sm:$0xf]
        %v425 = vld [vmem:[#allocation7 + $0x114] sm:$0xf]
        %v426 = vld [vmem:[#allocation7 + $0x118] sm:$0xf]
        %v427 = vld [vmem:[#allocation7 + $0x11c] sm:$0xf]
        %v428 = vld [vmem:[#allocation7 + $0x120] sm:$0xf]
        %v429 = vld [vmem:[#allocation7 + $0x124] sm:$0xf]
        %v430 = vld [vmem:[#allocation7 + $0x128] sm:$0xf]
        %v431 = vld [vmem:[#allocation7 + $0x12c] sm:$0xf]
        %v432 = vld [vmem:[#allocation7 + $0x130] sm:$0xf]
        %v433 = vld [vmem:[#allocation7 + $0x134] sm:$0xf]
        %v434 = vld [vmem:[#allocation7 + $0x138] sm:$0xf]
        %v435 = vld [vmem:[#allocation7 + $0x13c] sm:$0xf]
        %v436 = vld [vmem:[#allocation7 + $0x140] sm:$0xf]
        %v437 = vld [vmem:[#allocation7 + $0x144] sm:$0xf]
        %v438 = vld [vmem:[#allocation7 + $0x148] sm:$0xf]
        %v439 = vld [vmem:[#allocation7 + $0x14c] sm:$0xf]
        %v440 = vld [vmem:[#allocation7 + $0x150] sm:$0xf]
        %v441 = vld [vmem:[#allocation7 + $0x154] sm:$0xf]
        %v442 = vld [vmem:[#allocation7 + $0x158] sm:$0xf]
        %v443 = vld [vmem:[#allocation7 + $0x15c] sm:$0xf]
        %v444 = vld [vmem:[#allocation7 + $0x160] sm:$0xf]
        %v445 = vld [vmem:[#allocation7 + $0x164] sm:$0xf]
        %v446 = vld [vmem:[#allocation7 + $0x168] sm:$0xf]
        %v447 = vld [vmem:[#allocation7 + $0x16c] sm:$0xf]
        %v448 = vld [vmem:[#allocation7 + $0x170] sm:$0xf]
        %v449 = vld [vmem:[#allocation7 + $0x174] sm:$0xf]
        %v450 = vld [vmem:[#allocation7 + $0x178] sm:$0xf]
        %v451 = vld [vmem:[#allocation7 + $0x17c] sm:$0xf]
        %v452 = vld [vmem:[#allocation7 + $0x180] sm:$0xf]
        %v453 = vld [vmem:[#allocation7 + $0x184] sm:$0xf]
        %v454 = vld [vmem:[#allocation7 + $0x188] sm:$0xf]
        %v455 = vld [vmem:[#allocation7 + $0x18c] sm:$0xf]
        %v456 = vld [vmem:[#allocation7 + $0x190] sm:$0xf]
        %v457 = vld [vmem:[#allocation7 + $0x194] sm:$0xf]
        %v458 = vld [vmem:[#allocation7 + $0x198] sm:$0xf]
        %v459 = vld [vmem:[#allocation7 + $0x19c] sm:$0xf]
        %v460 = vld [vmem:[#allocation7 + $0x1a0] sm:$0xf]
        %v461 = vld [vmem:[#allocation7 + $0x1a4] sm:$0xf]
        %v462 = vld [vmem:[#allocation7 + $0x1a8] sm:$0xf]
        %v463 = vld [vmem:[#allocation7 + $0x1ac] sm:$0xf]
        %v464 = vld [vmem:[#allocation7 + $0x1b0] sm:$0xf]
        %v465 = vld [vmem:[#allocation7 + $0x1b4] sm:$0xf]
        %v466 = vld [vmem:[#allocation7 + $0x1b8] sm:$0xf]
        %v467 = vld [vmem:[#allocation7 + $0x1bc] sm:$0xf]
        %v468 = vld [vmem:[#allocation7 + $0x1c0] sm:$0xf]
        %v469 = vld [vmem:[#allocation7 + $0x1c4] sm:$0xf]
        %v470 = vld [vmem:[#allocation7 + $0x1c8] sm:$0xf]
        %v471 = vld [vmem:[#allocation7 + $0x1cc] sm:$0xf]
        %v472 = vld [vmem:[#allocation7 + $0x1d0] sm:$0xf]
        %v473 = vld [vmem:[#allocation7 + $0x1d4] sm:$0xf]
        %v474 = vld [vmem:[#allocation7 + $0x1d8] sm:$0xf]
        %v475 = vld [vmem:[#allocation7 + $0x1dc] sm:$0xf]
        %v476 = vld [vmem:[#allocation7 + $0x1e0] sm:$0xf]
        %v477 = vld [vmem:[#allocation7 + $0x1e4] sm:$0xf]
        %v478 = vld [vmem:[#allocation7 + $0x1e8] sm:$0xf]
        %v479 = vld [vmem:[#allocation7 + $0x1ec] sm:$0xf]
        %v480 = vld [vmem:[#allocation7 + $0x1f0] sm:$0xf]
        %v481 = vld [vmem:[#allocation7 + $0x1f4] sm:$0xf]
        %v482 = vld [vmem:[#allocation7 + $0x1f8] sm:$0xf]
        %v483 = vld [vmem:[#allocation7 + $0x1fc] sm:$0xf]
        %v484 = vld [vmem:[#allocation7 + $0x200] sm:$0xf]
        %v485 = vld [vmem:[#allocation7 + $0x204] sm:$0xf]
        %v486 = vld [vmem:[#allocation7 + $0x208] sm:$0xf]
        %v487 = vld [vmem:[#allocation7 + $0x20c] sm:$0xf]
        %v488 = vld [vmem:[#allocation7 + $0x210] sm:$0xf]
        %v489 = vld [vmem:[#allocation7 + $0x214] sm:$0xf]
        %v490 = vld [vmem:[#allocation7 + $0x218] sm:$0xf]
        %v491 = vld [vmem:[#allocation7 + $0x21c] sm:$0xf]
        %v492 = vld [vmem:[#allocation7 + $0x220] sm:$0xf]
        %v493 = vld [vmem:[#allocation7 + $0x224] sm:$0xf]
        %v494 = vld [vmem:[#allocation7 + $0x228] sm:$0xf]
        %v495 = vld [vmem:[#allocation7 + $0x22c] sm:$0xf]
        %v496 = vld [vmem:[#allocation7 + $0x230] sm:$0xf]
        %v497 = vld [vmem:[#allocation7 + $0x234] sm:$0xf]
        %v498 = vld [vmem:[#allocation7 + $0x238] sm:$0xf]
        %v499 = vld [vmem:[#allocation7 + $0x23c] sm:$0xf]
        %v500 = vld [vmem:[#allocation7 + $0x240] sm:$0xf]
        %v501 = vld [vmem:[#allocation7 + $0x244] sm:$0xf]
        %v502 = vld [vmem:[#allocation7 + $0x248] sm:$0xf]
        %v503 = vld [vmem:[#allocation7 + $0x24c] sm:$0xf]
        %v504 = vld [vmem:[#allocation7 + $0x250] sm:$0xf]
        %v505 = vld [vmem:[#allocation7 + $0x254] sm:$0xf]
        %v506 = vld [vmem:[#allocation7 + $0x258] sm:$0xf]
        %v507 = vld [vmem:[#allocation7 + $0x25c] sm:$0xf]
        %v508 = vld [vmem:[#allocation7 + $0x260] sm:$0xf]
        %v509 = vld [vmem:[#allocation7 + $0x264] sm:$0xf]
        %v510 = vld [vmem:[#allocation7 + $0x268] sm:$0xf]
        %v511 = vld [vmem:[#allocation7 + $0x26c] sm:$0xf]
        %v512 = vld [vmem:[#allocation7 + $0x270] sm:$0xf]
        %v513 = vld [vmem:[#allocation7 + $0x274] sm:$0xf]
        %v514 = vld [vmem:[#allocation7 + $0x278] sm:$0xf]
        %v515 = vld [vmem:[#allocation7 + $0x27c] sm:$0xf]
        %v516 = vld [vmem:[#allocation7 + $0x280] sm:$0xf]
        %v517 = vld [vmem:[#allocation7 + $0x284] sm:$0xf]
        %v518 = vld [vmem:[#allocation7 + $0x288] sm:$0xf]
        %v519 = vld [vmem:[#allocation7 + $0x28c] sm:$0xf]
        %v520 = vld [vmem:[#allocation7 + $0x290] sm:$0xf]
        %v521 = vld [vmem:[#allocation7 + $0x294] sm:$0xf]
        %v522 = vld [vmem:[#allocation7 + $0x298] sm:$0xf]
        %v523 = vld [vmem:[#allocation7 + $0x29c] sm:$0xf]
        %v524 = vld [vmem:[#allocation7 + $0x2a0] sm:$0xf]
        %v525 = vld [vmem:[#allocation7 + $0x2a4] sm:$0xf]
        %v526 = vld [vmem:[#allocation7 + $0x2a8] sm:$0xf]
        %v527 = vld [vmem:[#allocation7 + $0x2ac] sm:$0xf]
        %v528 = vld [vmem:[#allocation7 + $0x2b0] sm:$0xf]
        %v529 = vld [vmem:[#allocation7 + $0x2b4] sm:$0xf]
        %v530 = vld [vmem:[#allocation7 + $0x2b8] sm:$0xf]
        %v531 = vld [vmem:[#allocation7 + $0x2bc] sm:$0xf]
        %v532 = vld [vmem:[#allocation7 + $0x2c0] sm:$0xf]
        %v533 = vld [vmem:[#allocation7 + $0x2c4] sm:$0xf]
        %v534 = vld [vmem:[#allocation7 + $0x2c8] sm:$0xf]
        %v535 = vld [vmem:[#allocation7 + $0x2cc] sm:$0xf]
        %v536 = vld [vmem:[#allocation7 + $0x2d0] sm:$0xf]
        %v537 = vld [vmem:[#allocation7 + $0x2d4] sm:$0xf]
        %v538 = vld [vmem:[#allocation7 + $0x2d8] sm:$0xf]
        %v539 = vld [vmem:[#allocation7 + $0x2dc] sm:$0xf]
        %v540 = vld [vmem:[#allocation7 + $0x2e0] sm:$0xf]
        %v541 = vld [vmem:[#allocation7 + $0x2e4] sm:$0xf]
        %v542 = vld [vmem:[#allocation7 + $0x2e8] sm:$0xf]
        %v543 = vld [vmem:[#allocation7 + $0x2ec] sm:$0xf]
        %v544 = vld [vmem:[#allocation7 + $0x2f0] sm:$0xf]
        %v545 = vld [vmem:[#allocation7 + $0x2f4] sm:$0xf]
        %v546 = vld [vmem:[#allocation7 + $0x2f8] sm:$0xf]
        %v547 = vld [vmem:[#allocation7 + $0x2fc] sm:$0xf]
        %v548 = vld [vmem:[#allocation7 + $0x300] sm:$0xf]
        %v549 = vld [vmem:[#allocation7 + $0x304] sm:$0xf]
        %v550 = vld [vmem:[#allocation7 + $0x308] sm:$0xf]
        %v551 = vld [vmem:[#allocation7 + $0x30c] sm:$0xf]
        %v552 = vld [vmem:[#allocation7 + $0x310] sm:$0xf]
        %v553 = vld [vmem:[#allocation7 + $0x314] sm:$0xf]
        %v554 = vld [vmem:[#allocation7 + $0x318] sm:$0xf]
        %v555 = vld [vmem:[#allocation7 + $0x31c] sm:$0xf]
        %v556 = vld [vmem:[#allocation7 + $0x320] sm:$0xf]
        %v557 = vld [vmem:[#allocation7 + $0x324] sm:$0xf]
        %v558 = vld [vmem:[#allocation7 + $0x328] sm:$0xf]
        %v559 = vld [vmem:[#allocation7 + $0x32c] sm:$0xf]
        %v560 = vld [vmem:[#allocation7 + $0x330] sm:$0xf]
        %v561 = vld [vmem:[#allocation7 + $0x334] sm:$0xf]
        %v562 = vld [vmem:[#allocation7 + $0x338] sm:$0xf]
        %v563 = vld [vmem:[#allocation7 + $0x33c] sm:$0xf]
        %v564 = vld [vmem:[#allocation7 + $0x340] sm:$0xf]
        %v565 = vld [vmem:[#allocation7 + $0x344] sm:$0xf]
        %v566 = vld [vmem:[#allocation7 + $0x348] sm:$0xf]
        %v567 = vld [vmem:[#allocation7 + $0x34c] sm:$0xf]
        %v568 = vld [vmem:[#allocation7 + $0x350] sm:$0xf]
        %v569 = vld [vmem:[#allocation7 + $0x354] sm:$0xf]
        %v570 = vld [vmem:[#allocation7 + $0x358] sm:$0xf]
        %v571 = vld [vmem:[#allocation7 + $0x35c] sm:$0xf]
        %v572 = vld [vmem:[#allocation7 + $0x360] sm:$0xf]
        %v573 = vld [vmem:[#allocation7 + $0x364] sm:$0xf]
        %v574 = vld [vmem:[#allocation7 + $0x368] sm:$0xf]
        %v575 = vld [vmem:[#allocation7 + $0x36c] sm:$0xf]
        %v576 = vld [vmem:[#allocation7 + $0x370] sm:$0xf]
        %v577 = vld [vmem:[#allocation7 + $0x374] sm:$0xf]
        %v578 = vld [vmem:[#allocation7 + $0x378] sm:$0xf]
        %v579 = vld [vmem:[#allocation7 + $0x37c] sm:$0xf]
        %v580 = vld [vmem:[#allocation7 + $0x380] sm:$0xf]
        %v581 = vld [vmem:[#allocation7 + $0x384] sm:$0xf]
        %v582 = vld [vmem:[#allocation7 + $0x388] sm:$0xf]
        %v583 = vld [vmem:[#allocation7 + $0x38c] sm:$0xf]
        %v584 = vld [vmem:[#allocation7 + $0x390] sm:$0xf]
        %v585 = vld [vmem:[#allocation7 + $0x394] sm:$0xf]
        %v586 = vld [vmem:[#allocation7 + $0x398] sm:$0xf]
        %v587 = vld [vmem:[#allocation7 + $0x39c] sm:$0xf]
        %v588 = vld [vmem:[#allocation7 + $0x3a0] sm:$0xf]
        %v589 = vld [vmem:[#allocation7 + $0x3a4] sm:$0xf]
        %v590 = vld [vmem:[#allocation7 + $0x3a8] sm:$0xf]
        %v591 = vld [vmem:[#allocation7 + $0x3ac] sm:$0xf]
        %v592 = vld [vmem:[#allocation7 + $0x3b0] sm:$0xf]
        %v593 = vld [vmem:[#allocation7 + $0x3b4] sm:$0xf]
        %v594 = vld [vmem:[#allocation7 + $0x3b8] sm:$0xf]
        %v595 = vld [vmem:[#allocation7 + $0x3bc] sm:$0xf]
        %v596 = vld [vmem:[#allocation7 + $0x3c0] sm:$0xf]
        %v597 = vld [vmem:[#allocation7 + $0x3c4] sm:$0xf]
        %v598 = vld [vmem:[#allocation7 + $0x3c8] sm:$0xf]
        %v599 = vld [vmem:[#allocation7 + $0x3cc] sm:$0xf]
        %v600 = vld [vmem:[#allocation7 + $0x3d0] sm:$0xf]
        %v601 = vld [vmem:[#allocation7 + $0x3d4] sm:$0xf]
        %v602 = vld [vmem:[#allocation7 + $0x3d8] sm:$0xf]
        %v603 = vld [vmem:[#allocation7 + $0x3dc] sm:$0xf]
        %v604 = vld [vmem:[#allocation7 + $0x3e0] sm:$0xf]
        %v605 = vld [vmem:[#allocation7 + $0x3e4] sm:$0xf]
        %v606 = vld [vmem:[#allocation7 + $0x3e8] sm:$0xf]
        %v607 = vld [vmem:[#allocation7 + $0x3ec] sm:$0xf]
        %v608 = vld [vmem:[#allocation7 + $0x3f0] sm:$0xf]
        %v609 = vld [vmem:[#allocation7 + $0x3f4] sm:$0xf]
        %v610 = vld [vmem:[#allocation7 + $0x3f8] sm:$0xf]
        %v611 = vld [vmem:[#allocation7 + $0x3fc] sm:$0xf]
        %v612 = vld [vmem:[%s7] sm:$0x3]
        loop: start=0, step=1, limit=3
        $region65: #{tpu_custom_call.1} parent=51 // loop_pre_header
          _
        $region66: #{tpu_custom_call.1} parent=51 // loop_header
          %s614 = sphi 0, %s618
          %p615 = scmp.ge.s32.totalorder %s614, 3
          %v619 = vphi 0.0, %v8543
        $region67: #{tpu_custom_call.1} parent=51 // loop_header_branch
          %617 = sbr.rel (%p615) target = $region71
        $region68: #{tpu_custom_call.1} parent=51 // loop_body
          %s620 = smul.u32 %s614, 64
          %s621 = smul.addr %s620, 4
          %s622 = scalar_lea.vmem %s312, %s621 [#allocation2]
          %v623 = vld [vmem:[%s622] sm:$0xff]
          %v624 = vld [vmem:[%s622 + $0x8] sm:$0xff]
          %v625 = vld [vmem:[%s622 + $0x10] sm:$0xff]
          %v626 = vld [vmem:[%s622 + $0x18] sm:$0xff]
          %v627 = vld [vmem:[%s622 + $0x20] sm:$0xff]
          %v628 = vld [vmem:[%s622 + $0x28] sm:$0xff]
          %v629 = vld [vmem:[%s622 + $0x30] sm:$0xff]
          %v630 = vld [vmem:[%s622 + $0x38] sm:$0xff]
          %v631 = vld [vmem:[%s622 + $0x40] sm:$0xff]
          %v632 = vld [vmem:[%s622 + $0x48] sm:$0xff]
          %v633 = vld [vmem:[%s622 + $0x50] sm:$0xff]
          %v634 = vld [vmem:[%s622 + $0x58] sm:$0xff]
          %v635 = vld [vmem:[%s622 + $0x60] sm:$0xff]
          %v636 = vld [vmem:[%s622 + $0x68] sm:$0xff]
          %v637 = vld [vmem:[%s622 + $0x70] sm:$0xff]
          %v638 = vld [vmem:[%s622 + $0x78] sm:$0xff]
          %v639 = vld [vmem:[%s622 + $0x80] sm:$0xff]
          %v640 = vld [vmem:[%s622 + $0x88] sm:$0xff]
          %v641 = vld [vmem:[%s622 + $0x90] sm:$0xff]
          %v642 = vld [vmem:[%s622 + $0x98] sm:$0xff]
          %v643 = vld [vmem:[%s622 + $0xa0] sm:$0xff]
          %v644 = vld [vmem:[%s622 + $0xa8] sm:$0xff]
          %v645 = vld [vmem:[%s622 + $0xb0] sm:$0xff]
          %v646 = vld [vmem:[%s622 + $0xb8] sm:$0xff]
          %v647 = vld [vmem:[%s622 + $0xc0] sm:$0xff]
          %v648 = vld [vmem:[%s622 + $0xc8] sm:$0xff]
          %v649 = vld [vmem:[%s622 + $0xd0] sm:$0xff]
          %v650 = vld [vmem:[%s622 + $0xd8] sm:$0xff]
          %v651 = vld [vmem:[%s622 + $0xe0] sm:$0xff]
          %v652 = vld [vmem:[%s622 + $0xe8] sm:$0xff]
          %v653 = vld [vmem:[%s622 + $0xf0] sm:$0xff]
          %v654 = vld [vmem:[%s622 + $0xf8] sm:$0xff]
          %s655 = smul.u32 %s614, 4
          %s656 = smul.addr %s655, 4
          %s657 = scalar_lea.vmem %s2, %s656
          %v658 = vld [vmem:[%s657] sm:$0xf]
          %v659 = vld [vmem:[%s657 + $0x4] sm:$0xf]
          %v660 = vld [vmem:[%s657 + $0x8] sm:$0xf]
          %v661 = vld [vmem:[%s657 + $0xc] sm:$0xf]
          %s662 = smul.u32 %s614, 32
          %s663 = scalar_lea.vmem %s3, %s662
          %v664 = vld [vmem:[%s663] sm:$0xff]
          %v665 = vld [vmem:[%s663 + $0x8] sm:$0xff]
          %v666 = vld [vmem:[%s663 + $0x10] sm:$0xff]
          %v667 = vld [vmem:[%s663 + $0x18] sm:$0xff]
          %669 = vset.pattern.permute.xlu0 0
          %670 = vperm.xlu0 %669, %v664
          %v671 = vpop.permute.xlu0 %670
          %674 = vset.pattern.permute.xlu0 0
          %675 = vperm.xlu0 %674, %v665
          %v676 = vpop.permute.xlu0 %675
          %679 = vset.pattern.permute.xlu0 0
          %680 = vperm.xlu0 %679, %v666
          %v681 = vpop.permute.xlu0 %680
          %684 = vset.pattern.permute.xlu0 0
          %685 = vperm.xlu0 %684, %v667
          %v686 = vpop.permute.xlu0 %685
          %v692 = vunpack.c.l.b16 %v658
          %v693 = vunpack.c.l.b16 %v659
          %v694 = vunpack.c.l.b16 %v660
          %v695 = vunpack.c.l.b16 %v661
          %v696 = vpack.c.b16 %v693, %v692
          %v697 = vpack.c.b16 %v695, %v694
          %v730 = vunpack.c.l.b16 %v623
          %v731 = vunpack.c.h.b16 %v623
          %v732 = vunpack.c.l.b16 %v624
          %v733 = vunpack.c.h.b16 %v624
          %v734 = vunpack.c.l.b16 %v625
          %v735 = vunpack.c.h.b16 %v625
          %v736 = vunpack.c.l.b16 %v626
          %v737 = vunpack.c.h.b16 %v626
          %v738 = vunpack.c.l.b16 %v627
          %v739 = vunpack.c.h.b16 %v627
          %v740 = vunpack.c.l.b16 %v628
          %v741 = vunpack.c.h.b16 %v628
          %v742 = vunpack.c.l.b16 %v629
          %v743 = vunpack.c.h.b16 %v629
          %v744 = vunpack.c.l.b16 %v630
          %v745 = vunpack.c.h.b16 %v630
          %v746 = vunpack.c.l.b16 %v631
          %v747 = vunpack.c.h.b16 %v631
          %v748 = vunpack.c.l.b16 %v632
          %v749 = vunpack.c.h.b16 %v632
          %v750 = vunpack.c.l.b16 %v633
          %v751 = vunpack.c.h.b16 %v633
          %v752 = vunpack.c.l.b16 %v634
          %v753 = vunpack.c.h.b16 %v634
          %v754 = vunpack.c.l.b16 %v635
          %v755 = vunpack.c.h.b16 %v635
          %v756 = vunpack.c.l.b16 %v636
          %v757 = vunpack.c.h.b16 %v636
          %v758 = vunpack.c.l.b16 %v637
          %v759 = vunpack.c.h.b16 %v637
          %v760 = vunpack.c.l.b16 %v638
          %v761 = vunpack.c.h.b16 %v638
          %v762 = vunpack.c.l.b16 %v639
          %v763 = vunpack.c.h.b16 %v639
          %v764 = vunpack.c.l.b16 %v640
          %v765 = vunpack.c.h.b16 %v640
          %v766 = vunpack.c.l.b16 %v641
          %v767 = vunpack.c.h.b16 %v641
          %v768 = vunpack.c.l.b16 %v642
          %v769 = vunpack.c.h.b16 %v642
          %v770 = vunpack.c.l.b16 %v643
          %v771 = vunpack.c.h.b16 %v643
          %v772 = vunpack.c.l.b16 %v644
          %v773 = vunpack.c.h.b16 %v644
          %v774 = vunpack.c.l.b16 %v645
          %v775 = vunpack.c.h.b16 %v645
          %v776 = vunpack.c.l.b16 %v646
          %v777 = vunpack.c.h.b16 %v646
          %v778 = vunpack.c.l.b16 %v647
          %v779 = vunpack.c.h.b16 %v647
          %v780 = vunpack.c.l.b16 %v648
          %v781 = vunpack.c.h.b16 %v648
          %v782 = vunpack.c.l.b16 %v649
          %v783 = vunpack.c.h.b16 %v649
          %v784 = vunpack.c.l.b16 %v650
          %v785 = vunpack.c.h.b16 %v650
          %v786 = vunpack.c.l.b16 %v651
          %v787 = vunpack.c.h.b16 %v651
          %v788 = vunpack.c.l.b16 %v652
          %v789 = vunpack.c.h.b16 %v652
          %v790 = vunpack.c.l.b16 %v653
          %v791 = vunpack.c.h.b16 %v653
          %v792 = vunpack.c.l.b16 %v654
          %v793 = vunpack.c.h.b16 %v654
          %v794 = vpack.c.b16 %v746, %v730
          %v795 = vpack.c.b16 %v747, %v731
          %v796 = vpack.c.b16 %v748, %v732
          %v797 = vpack.c.b16 %v749, %v733
          %v798 = vpack.c.b16 %v750, %v734
          %v799 = vpack.c.b16 %v751, %v735
          %v800 = vpack.c.b16 %v752, %v736
          %v801 = vpack.c.b16 %v753, %v737
          %v802 = vpack.c.b16 %v754, %v738
          %v803 = vpack.c.b16 %v755, %v739
          %v804 = vpack.c.b16 %v756, %v740
          %v805 = vpack.c.b16 %v757, %v741
          %v806 = vpack.c.b16 %v758, %v742
          %v807 = vpack.c.b16 %v759, %v743
          %v808 = vpack.c.b16 %v760, %v744
          %v809 = vpack.c.b16 %v761, %v745
          %v810 = vpack.c.b16 %v778, %v762
          %v811 = vpack.c.b16 %v779, %v763
          %v812 = vpack.c.b16 %v780, %v764
          %v813 = vpack.c.b16 %v781, %v765
          %v814 = vpack.c.b16 %v782, %v766
          %v815 = vpack.c.b16 %v783, %v767
          %v816 = vpack.c.b16 %v784, %v768
          %v817 = vpack.c.b16 %v785, %v769
          %v818 = vpack.c.b16 %v786, %v770
          %v819 = vpack.c.b16 %v787, %v771
          %v820 = vpack.c.b16 %v788, %v772
          %v821 = vpack.c.b16 %v789, %v773
          %v822 = vpack.c.b16 %v790, %v774
          %v823 = vpack.c.b16 %v791, %v775
          %v824 = vpack.c.b16 %v792, %v776
          %v825 = vpack.c.b16 %v793, %v777
          %vm858 = vcmask 261120
          %v860 = vsel %vm858, %v696, 0
          %v863 = vsel %vm858, %v697, 0
          %865 = vmatprep.subr.bf16.mxu0 %v795
          %866 = vmatpush1.bf16.msra.mxu0 %v794
          %867 = vmatprep.subr.bf16.mxu0 %v811
          %868 = vmatpush1.bf16.msra.mxu0 %v810
          %869 = vmatprep.subr.bf16.mxu0 0
          %870 = vmatpush1.bf16.msra.mxu0 0
          %871 = vmatprep.subr.bf16.mxu0 0
          %872 = vmatpush1.bf16.msra.mxu0 0
          %873 = vmatprep.subr.bf16.mxu0 0
          %874 = vmatpush1.bf16.msra.mxu0 0
          %875 = vmatprep.subr.bf16.mxu0 0
          %876 = vmatpush1.bf16.msra.mxu0 0
          %877 = vmatprep.subr.bf16.mxu0 0
          %878 = vmatpush1.bf16.msra.mxu0 0
          %879 = vmatprep.subr.bf16.mxu0 0
          %880 = vmatpush1.bf16.msra.mxu0 0
          %881 = vmatprep.subr.bf16.mxu0 0
          %882 = vmatpush1.bf16.msra.mxu0 0
          %883 = vmatprep.subr.bf16.mxu0 0
          %884 = vmatpush1.bf16.msra.mxu0 0
          %885 = vmatprep.subr.bf16.mxu0 0
          %886 = vmatpush1.bf16.msra.mxu0 0
          %887 = vmatprep.subr.bf16.mxu0 0
          %888 = vmatpush1.bf16.msra.mxu0 0
          %889 = vmatprep.subr.bf16.mxu0 0
          %890 = vmatpush1.bf16.msra.mxu0 0
          %891 = vmatprep.subr.bf16.mxu0 0
          %892 = vmatpush1.bf16.msra.mxu0 0
          %893 = vmatprep.subr.bf16.mxu0 0
          %894 = vmatpush1.bf16.msra.mxu0 0
          %895 = vmatprep.subr.bf16.mxu0 0
          %896 = vmatpush1.bf16.msra.mxu0 0
          %897 = vmatprep.mubr.bf16.mxu0 0
          %898 = vmatmul.mubr.bf16.gmra.mrb[0].mxu0 %v860
          %v899 = vpop.f32.mrb[0].mxu0
          %v900 = vadd.f32 %v671, %v899
          %v901 = vpop.f32.mrb[0].mxu0
          %v902 = vadd.f32 %v671, %v901
          %v903 = vpop.f32.mrb[0].mxu0
          %v904 = vadd.f32 %v676, %v903
          %v905 = vpop.f32.mrb[0].mxu0
          %v906 = vadd.f32 %v676, %v905
          %907 = vmatprep.mubr.bf16.mxu0 0
          %908 = vmatmul.mubr.bf16.gmra.mrb[0].mxu0 %v863
          %v909 = vpop.f32.mrb[0].mxu0
          %v910 = vadd.f32 %v681, %v909
          %v911 = vpop.f32.mrb[0].mxu0
          %v912 = vadd.f32 %v681, %v911
          %v913 = vpop.f32.mrb[0].mxu0
          %v914 = vadd.f32 %v686, %v913
          %v915 = vpop.f32.mrb[0].mxu0
          %v916 = vadd.f32 %v686, %v915
          %917 = vdwg.mxu0
          %918 = vmatprep.subr.bf16.mxu0 %v797
          %919 = vmatpush1.bf16.msra.mxu0 %v796
          %920 = vmatprep.subr.bf16.mxu0 %v813
          %921 = vmatpush1.bf16.msra.mxu0 %v812
          %922 = vmatprep.subr.bf16.mxu0 0
          %923 = vmatpush1.bf16.msra.mxu0 0
          %924 = vmatprep.subr.bf16.mxu0 0
          %925 = vmatpush1.bf16.msra.mxu0 0
          %926 = vmatprep.subr.bf16.mxu0 0
          %927 = vmatpush1.bf16.msra.mxu0 0
          %928 = vmatprep.subr.bf16.mxu0 0
          %929 = vmatpush1.bf16.msra.mxu0 0
          %930 = vmatprep.subr.bf16.mxu0 0
          %931 = vmatpush1.bf16.msra.mxu0 0
          %932 = vmatprep.subr.bf16.mxu0 0
          %933 = vmatpush1.bf16.msra.mxu0 0
          %934 = vmatprep.subr.bf16.mxu0 0
          %935 = vmatpush1.bf16.msra.mxu0 0
          %936 = vmatprep.subr.bf16.mxu0 0
          %937 = vmatpush1.bf16.msra.mxu0 0
          %938 = vmatprep.subr.bf16.mxu0 0
          %939 = vmatpush1.bf16.msra.mxu0 0
          %940 = vmatprep.subr.bf16.mxu0 0
          %941 = vmatpush1.bf16.msra.mxu0 0
          %942 = vmatprep.subr.bf16.mxu0 0
          %943 = vmatpush1.bf16.msra.mxu0 0
          %944 = vmatprep.subr.bf16.mxu0 0
          %945 = vmatpush1.bf16.msra.mxu0 0
          %946 = vmatprep.subr.bf16.mxu0 0
          %947 = vmatpush1.bf16.msra.mxu0 0
          %948 = vmatprep.subr.bf16.mxu0 0
          %949 = vmatpush1.bf16.msra.mxu0 0
          %950 = vmatprep.mubr.bf16.mxu0 0
          %951 = vmatmul.mubr.bf16.gmra.mrb[0].mxu0 %v860
          %v952 = vpop.f32.mrb[0].mxu0
          %v953 = vadd.f32 %v671, %v952
          %v954 = vpop.f32.mrb[0].mxu0
          %v955 = vadd.f32 %v671, %v954
          %v956 = vpop.f32.mrb[0].mxu0
          %v957 = vadd.f32 %v676, %v956
          %v958 = vpop.f32.mrb[0].mxu0
          %v959 = vadd.f32 %v676, %v958
          %960 = vmatprep.mubr.bf16.mxu0 0
          %961 = vmatmul.mubr.bf16.gmra.mrb[0].mxu0 %v863
          %v962 = vpop.f32.mrb[0].mxu0
          %v963 = vadd.f32 %v681, %v962
          %v964 = vpop.f32.mrb[0].mxu0
          %v965 = vadd.f32 %v681, %v964
          %v966 = vpop.f32.mrb[0].mxu0
          %v967 = vadd.f32 %v686, %v966
          %v968 = vpop.f32.mrb[0].mxu0
          %v969 = vadd.f32 %v686, %v968
          %970 = vdwg.mxu0
          %971 = vmatprep.subr.bf16.mxu0 %v799
          %972 = vmatpush1.bf16.msra.mxu0 %v798
          %973 = vmatprep.subr.bf16.mxu0 %v815
          %974 = vmatpush1.bf16.msra.mxu0 %v814
          %975 = vmatprep.subr.bf16.mxu0 0
          %976 = vmatpush1.bf16.msra.mxu0 0
          %977 = vmatprep.subr.bf16.mxu0 0
          %978 = vmatpush1.bf16.msra.mxu0 0
          %979 = vmatprep.subr.bf16.mxu0 0
          %980 = vmatpush1.bf16.msra.mxu0 0
          %981 = vmatprep.subr.bf16.mxu0 0
          %982 = vmatpush1.bf16.msra.mxu0 0
          %983 = vmatprep.subr.bf16.mxu0 0
          %984 = vmatpush1.bf16.msra.mxu0 0
          %985 = vmatprep.subr.bf16.mxu0 0
          %986 = vmatpush1.bf16.msra.mxu0 0
          %987 = vmatprep.subr.bf16.mxu0 0
          %988 = vmatpush1.bf16.msra.mxu0 0
          %989 = vmatprep.subr.bf16.mxu0 0
          %990 = vmatpush1.bf16.msra.mxu0 0
          %991 = vmatprep.subr.bf16.mxu0 0
          %992 = vmatpush1.bf16.msra.mxu0 0
          %993 = vmatprep.subr.bf16.mxu0 0
          %994 = vmatpush1.bf16.msra.mxu0 0
          %995 = vmatprep.subr.bf16.mxu0 0
          %996 = vmatpush1.bf16.msra.mxu0 0
          %997 = vmatprep.subr.bf16.mxu0 0
          %998 = vmatpush1.bf16.msra.mxu0 0
          %999 = vmatprep.subr.bf16.mxu0 0
          %1000 = vmatpush1.bf16.msra.mxu0 0
          %1001 = vmatprep.subr.bf16.mxu0 0
          %1002 = vmatpush1.bf16.msra.mxu0 0
          %1003 = vmatprep.mubr.bf16.mxu0 0
          %1004 = vmatmul.mubr.bf16.gmra.mrb[0].mxu0 %v860
          %v1005 = vpop.f32.mrb[0].mxu0
          %v1006 = vadd.f32 %v671, %v1005
          %v1007 = vpop.f32.mrb[0].mxu0
          %v1008 = vadd.f32 %v671, %v1007
          %v1009 = vpop.f32.mrb[0].mxu0
          %v1010 = vadd.f32 %v676, %v1009
          %v1011 = vpop.f32.mrb[0].mxu0
          %v1012 = vadd.f32 %v676, %v1011
          %1013 = vmatprep.mubr.bf16.mxu0 0
          %1014 = vmatmul.mubr.bf16.gmra.mrb[0].mxu0 %v863
          %v1015 = vpop.f32.mrb[0].mxu0
          %v1016 = vadd.f32 %v681, %v1015
          %v1017 = vpop.f32.mrb[0].mxu0
          %v1018 = vadd.f32 %v681, %v1017
          %v1019 = vpop.f32.mrb[0].mxu0
          %v1020 = vadd.f32 %v686, %v1019
          %v1021 = vpop.f32.mrb[0].mxu0
          %v1022 = vadd.f32 %v686, %v1021
          %1023 = vdwg.mxu0
          %1024 = vmatprep.subr.bf16.mxu0 %v801
          %1025 = vmatpush1.bf16.msra.mxu0 %v800
          %1026 = vmatprep.subr.bf16.mxu0 %v817
          %1027 = vmatpush1.bf16.msra.mxu0 %v816
          %1028 = vmatprep.subr.bf16.mxu0 0
          %1029 = vmatpush1.bf16.msra.mxu0 0
          %1030 = vmatprep.subr.bf16.mxu0 0
          %1031 = vmatpush1.bf16.msra.mxu0 0
          %1032 = vmatprep.subr.bf16.mxu0 0
          %1033 = vmatpush1.bf16.msra.mxu0 0
          %1034 = vmatprep.subr.bf16.mxu0 0
          %1035 = vmatpush1.bf16.msra.mxu0 0
          %1036 = vmatprep.subr.bf16.mxu0 0
          %1037 = vmatpush1.bf16.msra.mxu0 0
          %1038 = vmatprep.subr.bf16.mxu0 0
          %1039 = vmatpush1.bf16.msra.mxu0 0
          %1040 = vmatprep.subr.bf16.mxu0 0
          %1041 = vmatpush1.bf16.msra.mxu0 0
          %1042 = vmatprep.subr.bf16.mxu0 0
          %1043 = vmatpush1.bf16.msra.mxu0 0
          %1044 = vmatprep.subr.bf16.mxu0 0
          %1045 = vmatpush1.bf16.msra.mxu0 0
          %1046 = vmatprep.subr.bf16.mxu0 0
          %1047 = vmatpush1.bf16.msra.mxu0 0
          %1048 = vmatprep.subr.bf16.mxu0 0
          %1049 = vmatpush1.bf16.msra.mxu0 0
          %1050 = vmatprep.subr.bf16.mxu0 0
          %1051 = vmatpush1.bf16.msra.mxu0 0
          %1052 = vmatprep.subr.bf16.mxu0 0
          %1053 = vmatpush1.bf16.msra.mxu0 0
          %1054 = vmatprep.subr.bf16.mxu0 0
          %1055 = vmatpush1.bf16.msra.mxu0 0
          %1056 = vmatprep.mubr.bf16.mxu0 0
          %1057 = vmatmul.mubr.bf16.gmra.mrb[0].mxu0 %v860
          %v1058 = vpop.f32.mrb[0].mxu0
          %v1059 = vadd.f32 %v671, %v1058
          %v1060 = vpop.f32.mrb[0].mxu0
          %v1061 = vadd.f32 %v671, %v1060
          %v1062 = vpop.f32.mrb[0].mxu0
          %v1063 = vadd.f32 %v676, %v1062
          %v1064 = vpop.f32.mrb[0].mxu0
          %v1065 = vadd.f32 %v676, %v1064
          %1066 = vmatprep.mubr.bf16.mxu0 0
          %1067 = vmatmul.mubr.bf16.gmra.mrb[0].mxu0 %v863
          %v1068 = vpop.f32.mrb[0].mxu0
          %v1069 = vadd.f32 %v681, %v1068
          %v1070 = vpop.f32.mrb[0].mxu0
          %v1071 = vadd.f32 %v681, %v1070
          %v1072 = vpop.f32.mrb[0].mxu0
          %v1073 = vadd.f32 %v686, %v1072
          %v1074 = vpop.f32.mrb[0].mxu0
          %v1075 = vadd.f32 %v686, %v1074
          %1076 = vdwg.mxu0
          %1077 = vmatprep.subr.bf16.mxu0 %v803
          %1078 = vmatpush1.bf16.msra.mxu0 %v802
          %1079 = vmatprep.subr.bf16.mxu0 %v819
          %1080 = vmatpush1.bf16.msra.mxu0 %v818
          %1081 = vmatprep.subr.bf16.mxu0 0
          %1082 = vmatpush1.bf16.msra.mxu0 0
          %1083 = vmatprep.subr.bf16.mxu0 0
          %1084 = vmatpush1.bf16.msra.mxu0 0
          %1085 = vmatprep.subr.bf16.mxu0 0
          %1086 = vmatpush1.bf16.msra.mxu0 0
          %1087 = vmatprep.subr.bf16.mxu0 0
          %1088 = vmatpush1.bf16.msra.mxu0 0
          %1089 = vmatprep.subr.bf16.mxu0 0
          %1090 = vmatpush1.bf16.msra.mxu0 0
          %1091 = vmatprep.subr.bf16.mxu0 0
          %1092 = vmatpush1.bf16.msra.mxu0 0
          %1093 = vmatprep.subr.bf16.mxu0 0
          %1094 = vmatpush1.bf16.msra.mxu0 0
          %1095 = vmatprep.subr.bf16.mxu0 0
          %1096 = vmatpush1.bf16.msra.mxu0 0
          %1097 = vmatprep.subr.bf16.mxu0 0
          %1098 = vmatpush1.bf16.msra.mxu0 0
          %1099 = vmatprep.subr.bf16.mxu0 0
          %1100 = vmatpush1.bf16.msra.mxu0 0
          %1101 = vmatprep.subr.bf16.mxu0 0
          %1102 = vmatpush1.bf16.msra.mxu0 0
          %1103 = vmatprep.subr.bf16.mxu0 0
          %1104 = vmatpush1.bf16.msra.mxu0 0
          %1105 = vmatprep.subr.bf16.mxu0 0
          %1106 = vmatpush1.bf16.msra.mxu0 0
          %1107 = vmatprep.subr.bf16.mxu0 0
          %1108 = vmatpush1.bf16.msra.mxu0 0
          %1109 = vmatprep.mubr.bf16.mxu0 0
          %1110 = vmatmul.mubr.bf16.gmra.mrb[0].mxu0 %v860
          %v1111 = vpop.f32.mrb[0].mxu0
          %v1112 = vadd.f32 %v671, %v1111
          %v1113 = vpop.f32.mrb[0].mxu0
          %v1114 = vadd.f32 %v671, %v1113
          %v1115 = vpop.f32.mrb[0].mxu0
          %v1116 = vadd.f32 %v676, %v1115
          %v1117 = vpop.f32.mrb[0].mxu0
          %v1118 = vadd.f32 %v676, %v1117
          %1119 = vmatprep.mubr.bf16.mxu0 0
          %1120 = vmatmul.mubr.bf16.gmra.mrb[0].mxu0 %v863
          %v1121 = vpop.f32.mrb[0].mxu0
          %v1122 = vadd.f32 %v681, %v1121
          %v1123 = vpop.f32.mrb[0].mxu0
          %v1124 = vadd.f32 %v681, %v1123
          %v1125 = vpop.f32.mrb[0].mxu0
          %v1126 = vadd.f32 %v686, %v1125
          %v1127 = vpop.f32.mrb[0].mxu0
          %v1128 = vadd.f32 %v686, %v1127
          %1129 = vdwg.mxu0
          %1130 = vmatprep.subr.bf16.mxu0 %v805
          %1131 = vmatpush1.bf16.msra.mxu0 %v804
          %1132 = vmatprep.subr.bf16.mxu0 %v821
          %1133 = vmatpush1.bf16.msra.mxu0 %v820
          %1134 = vmatprep.subr.bf16.mxu0 0
          %1135 = vmatpush1.bf16.msra.mxu0 0
          %1136 = vmatprep.subr.bf16.mxu0 0
          %1137 = vmatpush1.bf16.msra.mxu0 0
          %1138 = vmatprep.subr.bf16.mxu0 0
          %1139 = vmatpush1.bf16.msra.mxu0 0
          %1140 = vmatprep.subr.bf16.mxu0 0
          %1141 = vmatpush1.bf16.msra.mxu0 0
          %1142 = vmatprep.subr.bf16.mxu0 0
          %1143 = vmatpush1.bf16.msra.mxu0 0
          %1144 = vmatprep.subr.bf16.mxu0 0
          %1145 = vmatpush1.bf16.msra.mxu0 0
          %1146 = vmatprep.subr.bf16.mxu0 0
          %1147 = vmatpush1.bf16.msra.mxu0 0
          %1148 = vmatprep.subr.bf16.mxu0 0
          %1149 = vmatpush1.bf16.msra.mxu0 0
          %1150 = vmatprep.subr.bf16.mxu0 0
          %1151 = vmatpush1.bf16.msra.mxu0 0
          %1152 = vmatprep.subr.bf16.mxu0 0
          %1153 = vmatpush1.bf16.msra.mxu0 0
          %1154 = vmatprep.subr.bf16.mxu0 0
          %1155 = vmatpush1.bf16.msra.mxu0 0
          %1156 = vmatprep.subr.bf16.mxu0 0
          %1157 = vmatpush1.bf16.msra.mxu0 0
          %1158 = vmatprep.subr.bf16.mxu0 0
          %1159 = vmatpush1.bf16.msra.mxu0 0
          %1160 = vmatprep.subr.bf16.mxu0 0
          %1161 = vmatpush1.bf16.msra.mxu0 0
          %1162 = vmatprep.mubr.bf16.mxu0 0
          %1163 = vmatmul.mubr.bf16.gmra.mrb[0].mxu0 %v860
          %v1164 = vpop.f32.mrb[0].mxu0
          %v1165 = vadd.f32 %v671, %v1164
          %v1166 = vpop.f32.mrb[0].mxu0
          %v1167 = vadd.f32 %v671, %v1166
          %v1168 = vpop.f32.mrb[0].mxu0
          %v1169 = vadd.f32 %v676, %v1168
          %v1170 = vpop.f32.mrb[0].mxu0
          %v1171 = vadd.f32 %v676, %v1170
          %1172 = vmatprep.mubr.bf16.mxu0 0
          %1173 = vmatmul.mubr.bf16.gmra.mrb[0].mxu0 %v863
          %v1174 = vpop.f32.mrb[0].mxu0
          %v1175 = vadd.f32 %v681, %v1174
          %v1176 = vpop.f32.mrb[0].mxu0
          %v1177 = vadd.f32 %v681, %v1176
          %v1178 = vpop.f32.mrb[0].mxu0
          %v1179 = vadd.f32 %v686, %v1178
          %v1180 = vpop.f32.mrb[0].mxu0
          %v1181 = vadd.f32 %v686, %v1180
          %1182 = vdwg.mxu0
          %1183 = vmatprep.subr.bf16.mxu0 %v807
          %1184 = vmatpush1.bf16.msra.mxu0 %v806
          %1185 = vmatprep.subr.bf16.mxu0 %v823
          %1186 = vmatpush1.bf16.msra.mxu0 %v822
          %1187 = vmatprep.subr.bf16.mxu0 0
          %1188 = vmatpush1.bf16.msra.mxu0 0
          %1189 = vmatprep.subr.bf16.mxu0 0
          %1190 = vmatpush1.bf16.msra.mxu0 0
          %1191 = vmatprep.subr.bf16.mxu0 0
          %1192 = vmatpush1.bf16.msra.mxu0 0
          %1193 = vmatprep.subr.bf16.mxu0 0
          %1194 = vmatpush1.bf16.msra.mxu0 0
          %1195 = vmatprep.subr.bf16.mxu0 0
          %1196 = vmatpush1.bf16.msra.mxu0 0
          %1197 = vmatprep.subr.bf16.mxu0 0
          %1198 = vmatpush1.bf16.msra.mxu0 0
          %1199 = vmatprep.subr.bf16.mxu0 0
          %1200 = vmatpush1.bf16.msra.mxu0 0
          %1201 = vmatprep.subr.bf16.mxu0 0
          %1202 = vmatpush1.bf16.msra.mxu0 0
          %1203 = vmatprep.subr.bf16.mxu0 0
          %1204 = vmatpush1.bf16.msra.mxu0 0
          %1205 = vmatprep.subr.bf16.mxu0 0
          %1206 = vmatpush1.bf16.msra.mxu0 0
          %1207 = vmatprep.subr.bf16.mxu0 0
          %1208 = vmatpush1.bf16.msra.mxu0 0
          %1209 = vmatprep.subr.bf16.mxu0 0
          %1210 = vmatpush1.bf16.msra.mxu0 0
          %1211 = vmatprep.subr.bf16.mxu0 0
          %1212 = vmatpush1.bf16.msra.mxu0 0
          %1213 = vmatprep.subr.bf16.mxu0 0
          %1214 = vmatpush1.bf16.msra.mxu0 0
          %1215 = vmatprep.mubr.bf16.mxu0 0
          %1216 = vmatmul.mubr.bf16.gmra.mrb[0].mxu0 %v860
          %v1217 = vpop.f32.mrb[0].mxu0
          %v1218 = vadd.f32 %v671, %v1217
          %v1219 = vpop.f32.mrb[0].mxu0
          %v1220 = vadd.f32 %v671, %v1219
          %v1221 = vpop.f32.mrb[0].mxu0
          %v1222 = vadd.f32 %v676, %v1221
          %v1223 = vpop.f32.mrb[0].mxu0
          %v1224 = vadd.f32 %v676, %v1223
          %1225 = vmatprep.mubr.bf16.mxu0 0
          %1226 = vmatmul.mubr.bf16.gmra.mrb[0].mxu0 %v863
          %v1227 = vpop.f32.mrb[0].mxu0
          %v1228 = vadd.f32 %v681, %v1227
          %v1229 = vpop.f32.mrb[0].mxu0
          %v1230 = vadd.f32 %v681, %v1229
          %v1231 = vpop.f32.mrb[0].mxu0
          %v1232 = vadd.f32 %v686, %v1231
          %v1233 = vpop.f32.mrb[0].mxu0
          %v1234 = vadd.f32 %v686, %v1233
          %1235 = vdwg.mxu0
          %1236 = vmatprep.subr.bf16.mxu0 %v809
          %1237 = vmatpush1.bf16.msra.mxu0 %v808
          %1238 = vmatprep.subr.bf16.mxu0 %v825
          %1239 = vmatpush1.bf16.msra.mxu0 %v824
          %1240 = vmatprep.subr.bf16.mxu0 0
          %1241 = vmatpush1.bf16.msra.mxu0 0
          %1242 = vmatprep.subr.bf16.mxu0 0
          %1243 = vmatpush1.bf16.msra.mxu0 0
          %1244 = vmatprep.subr.bf16.mxu0 0
          %1245 = vmatpush1.bf16.msra.mxu0 0
          %1246 = vmatprep.subr.bf16.mxu0 0
          %1247 = vmatpush1.bf16.msra.mxu0 0
          %1248 = vmatprep.subr.bf16.mxu0 0
          %1249 = vmatpush1.bf16.msra.mxu0 0
          %1250 = vmatprep.subr.bf16.mxu0 0
          %1251 = vmatpush1.bf16.msra.mxu0 0
          %1252 = vmatprep.subr.bf16.mxu0 0
          %1253 = vmatpush1.bf16.msra.mxu0 0
          %1254 = vmatprep.subr.bf16.mxu0 0
          %1255 = vmatpush1.bf16.msra.mxu0 0
          %1256 = vmatprep.subr.bf16.mxu0 0
          %1257 = vmatpush1.bf16.msra.mxu0 0
          %1258 = vmatprep.subr.bf16.mxu0 0
          %1259 = vmatpush1.bf16.msra.mxu0 0
          %1260 = vmatprep.subr.bf16.mxu0 0
          %1261 = vmatpush1.bf16.msra.mxu0 0
          %1262 = vmatprep.subr.bf16.mxu0 0
          %1263 = vmatpush1.bf16.msra.mxu0 0
          %1264 = vmatprep.subr.bf16.mxu0 0
          %1265 = vmatpush1.bf16.msra.mxu0 0
          %1266 = vmatprep.subr.bf16.mxu0 0
          %1267 = vmatpush1.bf16.msra.mxu0 0
          %1268 = vmatprep.mubr.bf16.mxu0 0
          %1269 = vmatmul.mubr.bf16.gmra.mrb[0].mxu0 %v860
          %v1270 = vpop.f32.mrb[0].mxu0
          %v1271 = vadd.f32 %v671, %v1270
          %v1272 = vpop.f32.mrb[0].mxu0
          %v1273 = vadd.f32 %v671, %v1272
          %v1274 = vpop.f32.mrb[0].mxu0
          %v1275 = vadd.f32 %v676, %v1274
          %v1276 = vpop.f32.mrb[0].mxu0
          %v1277 = vadd.f32 %v676, %v1276
          %1278 = vmatprep.mubr.bf16.mxu0 0
          %1279 = vmatmul.mubr.bf16.gmra.mrb[0].mxu0 %v863
          %v1280 = vpop.f32.mrb[0].mxu0
          %v1281 = vadd.f32 %v681, %v1280
          %v1282 = vpop.f32.mrb[0].mxu0
          %v1283 = vadd.f32 %v681, %v1282
          %v1284 = vpop.f32.mrb[0].mxu0
          %v1285 = vadd.f32 %v686, %v1284
          %v1286 = vpop.f32.mrb[0].mxu0
          %v1287 = vadd.f32 %v686, %v1286
          %1288 = vdwg.mxu0
          %1289 = vxpose.xlu0.b32.start [1/16] %v900, 128
          %1290 = vxpose.xlu0.b32.cont [2/16] %v904, 128
          %1291 = vxpose.xlu0.b32.cont [3/16] %v910, 128
          %1292 = vxpose.xlu0.b32.cont [4/16] %v914, 128
          %1293 = vxpose.xlu0.b32.cont [5/16] 0.0, 128
          %1294 = vxpose.xlu0.b32.cont [6/16] 0.0, 128
          %1295 = vxpose.xlu0.b32.cont [7/16] 0.0, 128
          %1296 = vxpose.xlu0.b32.cont [8/16] 0.0, 128
          %1297 = vxpose.xlu0.b32.cont [9/16] 0.0, 128
          %1298 = vxpose.xlu0.b32.cont [10/16] 0.0, 128
          %1299 = vxpose.xlu0.b32.cont [11/16] 0.0, 128
          %1300 = vxpose.xlu0.b32.cont [12/16] 0.0, 128
          %1301 = vxpose.xlu0.b32.cont [13/16] 0.0, 128
          %1302 = vxpose.xlu0.b32.cont [14/16] 0.0, 128
          %1303 = vxpose.xlu0.b32.cont [15/16] 0.0, 128
          %1304 = vxpose.xlu0.b32.end [16/16] 0.0, 128
          %v1305 = vpop.trf.xlu0
          %v1306 = vpop.trf.xlu0
          %v1307 = vpop.trf.xlu0
          %v1308 = vpop.trf.xlu0
          %v1309 = vpop.trf.xlu0
          %v1310 = vpop.trf.xlu0
          %v1311 = vpop.trf.xlu0
          %v1312 = vpop.trf.xlu0
          %v1313 = vpop.trf.xlu0
          %v1314 = vpop.trf.xlu0
          %v1315 = vpop.trf.xlu0
          %v1316 = vpop.trf.xlu0
          %v1317 = vpop.trf.xlu0
          %v1318 = vpop.trf.xlu0
          %v1319 = vpop.trf.xlu0
          %v1320 = vpop.trf.xlu0
          %1321 = vxpose.xlu0.b32.start [1/16] %v902, 128
          %1322 = vxpose.xlu0.b32.cont [2/16] %v906, 128
          %1323 = vxpose.xlu0.b32.cont [3/16] %v912, 128
          %1324 = vxpose.xlu0.b32.cont [4/16] %v916, 128
          %1325 = vxpose.xlu0.b32.cont [5/16] 0.0, 128
          %1326 = vxpose.xlu0.b32.cont [6/16] 0.0, 128
          %1327 = vxpose.xlu0.b32.cont [7/16] 0.0, 128
          %1328 = vxpose.xlu0.b32.cont [8/16] 0.0, 128
          %1329 = vxpose.xlu0.b32.cont [9/16] 0.0, 128
          %1330 = vxpose.xlu0.b32.cont [10/16] 0.0, 128
          %1331 = vxpose.xlu0.b32.cont [11/16] 0.0, 128
          %1332 = vxpose.xlu0.b32.cont [12/16] 0.0, 128
          %1333 = vxpose.xlu0.b32.cont [13/16] 0.0, 128
          %1334 = vxpose.xlu0.b32.cont [14/16] 0.0, 128
          %1335 = vxpose.xlu0.b32.cont [15/16] 0.0, 128
          %1336 = vxpose.xlu0.b32.end [16/16] 0.0, 128
          %v1337 = vpop.trf.xlu0
          %v1338 = vpop.trf.xlu0
          %v1339 = vpop.trf.xlu0
          %v1340 = vpop.trf.xlu0
          %v1341 = vpop.trf.xlu0
          %v1342 = vpop.trf.xlu0
          %v1343 = vpop.trf.xlu0
          %v1344 = vpop.trf.xlu0
          %v1345 = vpop.trf.xlu0
          %v1346 = vpop.trf.xlu0
          %v1347 = vpop.trf.xlu0
          %v1348 = vpop.trf.xlu0
          %v1349 = vpop.trf.xlu0
          %v1350 = vpop.trf.xlu0
          %v1351 = vpop.trf.xlu0
          %v1352 = vpop.trf.xlu0
          %1353 = vxpose.xlu0.b32.start [1/16] %v953, 128
          %1354 = vxpose.xlu0.b32.cont [2/16] %v957, 128
          %1355 = vxpose.xlu0.b32.cont [3/16] %v963, 128
          %1356 = vxpose.xlu0.b32.cont [4/16] %v967, 128
          %1357 = vxpose.xlu0.b32.cont [5/16] 0.0, 128
          %1358 = vxpose.xlu0.b32.cont [6/16] 0.0, 128
          %1359 = vxpose.xlu0.b32.cont [7/16] 0.0, 128
          %1360 = vxpose.xlu0.b32.cont [8/16] 0.0, 128
          %1361 = vxpose.xlu0.b32.cont [9/16] 0.0, 128
          %1362 = vxpose.xlu0.b32.cont [10/16] 0.0, 128
          %1363 = vxpose.xlu0.b32.cont [11/16] 0.0, 128
          %1364 = vxpose.xlu0.b32.cont [12/16] 0.0, 128
          %1365 = vxpose.xlu0.b32.cont [13/16] 0.0, 128
          %1366 = vxpose.xlu0.b32.cont [14/16] 0.0, 128
          %1367 = vxpose.xlu0.b32.cont [15/16] 0.0, 128
          %1368 = vxpose.xlu0.b32.end [16/16] 0.0, 128
          %v1369 = vpop.trf.xlu0
          %v1370 = vpop.trf.xlu0
          %v1371 = vpop.trf.xlu0
          %v1372 = vpop.trf.xlu0
          %v1373 = vpop.trf.xlu0
          %v1374 = vpop.trf.xlu0
          %v1375 = vpop.trf.xlu0
          %v1376 = vpop.trf.xlu0
          %v1377 = vpop.trf.xlu0
          %v1378 = vpop.trf.xlu0
          %v1379 = vpop.trf.xlu0
          %v1380 = vpop.trf.xlu0
          %v1381 = vpop.trf.xlu0
          %v1382 = vpop.trf.xlu0
          %v1383 = vpop.trf.xlu0
          %v1384 = vpop.trf.xlu0
          %1385 = vxpose.xlu0.b32.start [1/16] %v955, 128
          %1386 = vxpose.xlu0.b32.cont [2/16] %v959, 128
          %1387 = vxpose.xlu0.b32.cont [3/16] %v965, 128
          %1388 = vxpose.xlu0.b32.cont [4/16] %v969, 128
          %1389 = vxpose.xlu0.b32.cont [5/16] 0.0, 128
          %1390 = vxpose.xlu0.b32.cont [6/16] 0.0, 128
          %1391 = vxpose.xlu0.b32.cont [7/16] 0.0, 128
          %1392 = vxpose.xlu0.b32.cont [8/16] 0.0, 128
          %1393 = vxpose.xlu0.b32.cont [9/16] 0.0, 128
          %1394 = vxpose.xlu0.b32.cont [10/16] 0.0, 128
          %1395 = vxpose.xlu0.b32.cont [11/16] 0.0, 128
          %1396 = vxpose.xlu0.b32.cont [12/16] 0.0, 128
          %1397 = vxpose.xlu0.b32.cont [13/16] 0.0, 128
          %1398 = vxpose.xlu0.b32.cont [14/16] 0.0, 128
          %1399 = vxpose.xlu0.b32.cont [15/16] 0.0, 128
          %1400 = vxpose.xlu0.b32.end [16/16] 0.0, 128
          %v1401 = vpop.trf.xlu0
          %v1402 = vpop.trf.xlu0
          %v1403 = vpop.trf.xlu0
          %v1404 = vpop.trf.xlu0
          %v1405 = vpop.trf.xlu0
          %v1406 = vpop.trf.xlu0
          %v1407 = vpop.trf.xlu0
          %v1408 = vpop.trf.xlu0
          %v1409 = vpop.trf.xlu0
          %v1410 = vpop.trf.xlu0
          %v1411 = vpop.trf.xlu0
          %v1412 = vpop.trf.xlu0
          %v1413 = vpop.trf.xlu0
          %v1414 = vpop.trf.xlu0
          %v1415 = vpop.trf.xlu0
          %v1416 = vpop.trf.xlu0
          %1417 = vxpose.xlu0.b32.start [1/16] %v1006, 128
          %1418 = vxpose.xlu0.b32.cont [2/16] %v1010, 128
          %1419 = vxpose.xlu0.b32.cont [3/16] %v1016, 128
          %1420 = vxpose.xlu0.b32.cont [4/16] %v1020, 128
          %1421 = vxpose.xlu0.b32.cont [5/16] 0.0, 128
          %1422 = vxpose.xlu0.b32.cont [6/16] 0.0, 128
          %1423 = vxpose.xlu0.b32.cont [7/16] 0.0, 128
          %1424 = vxpose.xlu0.b32.cont [8/16] 0.0, 128
          %1425 = vxpose.xlu0.b32.cont [9/16] 0.0, 128
          %1426 = vxpose.xlu0.b32.cont [10/16] 0.0, 128
          %1427 = vxpose.xlu0.b32.cont [11/16] 0.0, 128
          %1428 = vxpose.xlu0.b32.cont [12/16] 0.0, 128
          %1429 = vxpose.xlu0.b32.cont [13/16] 0.0, 128
          %1430 = vxpose.xlu0.b32.cont [14/16] 0.0, 128
          %1431 = vxpose.xlu0.b32.cont [15/16] 0.0, 128
          %1432 = vxpose.xlu0.b32.end [16/16] 0.0, 128
          %v1433 = vpop.trf.xlu0
          %v1434 = vpop.trf.xlu0
          %v1435 = vpop.trf.xlu0
          %v1436 = vpop.trf.xlu0
          %v1437 = vpop.trf.xlu0
          %v1438 = vpop.trf.xlu0
          %v1439 = vpop.trf.xlu0
          %v1440 = vpop.trf.xlu0
          %v1441 = vpop.trf.xlu0
          %v1442 = vpop.trf.xlu0
          %v1443 = vpop.trf.xlu0
          %v1444 = vpop.trf.xlu0
          %v1445 = vpop.trf.xlu0
          %v1446 = vpop.trf.xlu0
          %v1447 = vpop.trf.xlu0
          %v1448 = vpop.trf.xlu0
          %1449 = vxpose.xlu0.b32.start [1/16] %v1008, 128
          %1450 = vxpose.xlu0.b32.cont [2/16] %v1012, 128
          %1451 = vxpose.xlu0.b32.cont [3/16] %v1018, 128
          %1452 = vxpose.xlu0.b32.cont [4/16] %v1022, 128
          %1453 = vxpose.xlu0.b32.cont [5/16] 0.0, 128
          %1454 = vxpose.xlu0.b32.cont [6/16] 0.0, 128
          %1455 = vxpose.xlu0.b32.cont [7/16] 0.0, 128
          %1456 = vxpose.xlu0.b32.cont [8/16] 0.0, 128
          %1457 = vxpose.xlu0.b32.cont [9/16] 0.0, 128
          %1458 = vxpose.xlu0.b32.cont [10/16] 0.0, 128
          %1459 = vxpose.xlu0.b32.cont [11/16] 0.0, 128
          %1460 = vxpose.xlu0.b32.cont [12/16] 0.0, 128
          %1461 = vxpose.xlu0.b32.cont [13/16] 0.0, 128
          %1462 = vxpose.xlu0.b32.cont [14/16] 0.0, 128
          %1463 = vxpose.xlu0.b32.cont [15/16] 0.0, 128
          %1464 = vxpose.xlu0.b32.end [16/16] 0.0, 128
          %v1465 = vpop.trf.xlu0
          %v1466 = vpop.trf.xlu0
          %v1467 = vpop.trf.xlu0
          %v1468 = vpop.trf.xlu0
          %v1469 = vpop.trf.xlu0
          %v1470 = vpop.trf.xlu0
          %v1471 = vpop.trf.xlu0
          %v1472 = vpop.trf.xlu0
          %v1473 = vpop.trf.xlu0
          %v1474 = vpop.trf.xlu0
          %v1475 = vpop.trf.xlu0
          %v1476 = vpop.trf.xlu0
          %v1477 = vpop.trf.xlu0
          %v1478 = vpop.trf.xlu0
          %v1479 = vpop.trf.xlu0
          %v1480 = vpop.trf.xlu0
          %1481 = vxpose.xlu0.b32.start [1/16] %v1059, 128
          %1482 = vxpose.xlu0.b32.cont [2/16] %v1063, 128
          %1483 = vxpose.xlu0.b32.cont [3/16] %v1069, 128
          %1484 = vxpose.xlu0.b32.cont [4/16] %v1073, 128
          %1485 = vxpose.xlu0.b32.cont [5/16] 0.0, 128
          %1486 = vxpose.xlu0.b32.cont [6/16] 0.0, 128
          %1487 = vxpose.xlu0.b32.cont [7/16] 0.0, 128
          %1488 = vxpose.xlu0.b32.cont [8/16] 0.0, 128
          %1489 = vxpose.xlu0.b32.cont [9/16] 0.0, 128
          %1490 = vxpose.xlu0.b32.cont [10/16] 0.0, 128
          %1491 = vxpose.xlu0.b32.cont [11/16] 0.0, 128
          %1492 = vxpose.xlu0.b32.cont [12/16] 0.0, 128
          %1493 = vxpose.xlu0.b32.cont [13/16] 0.0, 128
          %1494 = vxpose.xlu0.b32.cont [14/16] 0.0, 128
          %1495 = vxpose.xlu0.b32.cont [15/16] 0.0, 128
          %1496 = vxpose.xlu0.b32.end [16/16] 0.0, 128
          %v1497 = vpop.trf.xlu0
          %v1498 = vpop.trf.xlu0
          %v1499 = vpop.trf.xlu0
          %v1500 = vpop.trf.xlu0
          %v1501 = vpop.trf.xlu0
          %v1502 = vpop.trf.xlu0
          %v1503 = vpop.trf.xlu0
          %v1504 = vpop.trf.xlu0
          %v1505 = vpop.trf.xlu0
          %v1506 = vpop.trf.xlu0
          %v1507 = vpop.trf.xlu0
          %v1508 = vpop.trf.xlu0
          %v1509 = vpop.trf.xlu0
          %v1510 = vpop.trf.xlu0
          %v1511 = vpop.trf.xlu0
          %v1512 = vpop.trf.xlu0
          %1513 = vxpose.xlu0.b32.start [1/16] %v1061, 128
          %1514 = vxpose.xlu0.b32.cont [2/16] %v1065, 128
          %1515 = vxpose.xlu0.b32.cont [3/16] %v1071, 128
          %1516 = vxpose.xlu0.b32.cont [4/16] %v1075, 128
          %1517 = vxpose.xlu0.b32.cont [5/16] 0.0, 128
          %1518 = vxpose.xlu0.b32.cont [6/16] 0.0, 128
          %1519 = vxpose.xlu0.b32.cont [7/16] 0.0, 128
          %1520 = vxpose.xlu0.b32.cont [8/16] 0.0, 128
          %1521 = vxpose.xlu0.b32.cont [9/16] 0.0, 128
          %1522 = vxpose.xlu0.b32.cont [10/16] 0.0, 128
          %1523 = vxpose.xlu0.b32.cont [11/16] 0.0, 128
          %1524 = vxpose.xlu0.b32.cont [12/16] 0.0, 128
          %1525 = vxpose.xlu0.b32.cont [13/16] 0.0, 128
          %1526 = vxpose.xlu0.b32.cont [14/16] 0.0, 128
          %1527 = vxpose.xlu0.b32.cont [15/16] 0.0, 128
          %1528 = vxpose.xlu0.b32.end [16/16] 0.0, 128
          %v1529 = vpop.trf.xlu0
          %v1530 = vpop.trf.xlu0
          %v1531 = vpop.trf.xlu0
          %v1532 = vpop.trf.xlu0
          %v1533 = vpop.trf.xlu0
          %v1534 = vpop.trf.xlu0
          %v1535 = vpop.trf.xlu0
          %v1536 = vpop.trf.xlu0
          %v1537 = vpop.trf.xlu0
          %v1538 = vpop.trf.xlu0
          %v1539 = vpop.trf.xlu0
          %v1540 = vpop.trf.xlu0
          %v1541 = vpop.trf.xlu0
          %v1542 = vpop.trf.xlu0
          %v1543 = vpop.trf.xlu0
          %v1544 = vpop.trf.xlu0
          %1545 = vxpose.xlu0.b32.start [1/16] %v1112, 128
          %1546 = vxpose.xlu0.b32.cont [2/16] %v1116, 128
          %1547 = vxpose.xlu0.b32.cont [3/16] %v1122, 128
          %1548 = vxpose.xlu0.b32.cont [4/16] %v1126, 128
          %1549 = vxpose.xlu0.b32.cont [5/16] 0.0, 128
          %1550 = vxpose.xlu0.b32.cont [6/16] 0.0, 128
          %1551 = vxpose.xlu0.b32.cont [7/16] 0.0, 128
          %1552 = vxpose.xlu0.b32.cont [8/16] 0.0, 128
          %1553 = vxpose.xlu0.b32.cont [9/16] 0.0, 128
          %1554 = vxpose.xlu0.b32.cont [10/16] 0.0, 128
          %1555 = vxpose.xlu0.b32.cont [11/16] 0.0, 128
          %1556 = vxpose.xlu0.b32.cont [12/16] 0.0, 128
          %1557 = vxpose.xlu0.b32.cont [13/16] 0.0, 128
          %1558 = vxpose.xlu0.b32.cont [14/16] 0.0, 128
          %1559 = vxpose.xlu0.b32.cont [15/16] 0.0, 128
          %1560 = vxpose.xlu0.b32.end [16/16] 0.0, 128
          %v1561 = vpop.trf.xlu0
          %v1562 = vpop.trf.xlu0
          %v1563 = vpop.trf.xlu0
          %v1564 = vpop.trf.xlu0
          %v1565 = vpop.trf.xlu0
          %v1566 = vpop.trf.xlu0
          %v1567 = vpop.trf.xlu0
          %v1568 = vpop.trf.xlu0
          %v1569 = vpop.trf.xlu0
          %v1570 = vpop.trf.xlu0
          %v1571 = vpop.trf.xlu0
          %v1572 = vpop.trf.xlu0
          %v1573 = vpop.trf.xlu0
          %v1574 = vpop.trf.xlu0
          %v1575 = vpop.trf.xlu0
          %v1576 = vpop.trf.xlu0
          %1577 = vxpose.xlu0.b32.start [1/16] %v1114, 128
          %1578 = vxpose.xlu0.b32.cont [2/16] %v1118, 128
          %1579 = vxpose.xlu0.b32.cont [3/16] %v1124, 128
          %1580 = vxpose.xlu0.b32.cont [4/16] %v1128, 128
          %1581 = vxpose.xlu0.b32.cont [5/16] 0.0, 128
          %1582 = vxpose.xlu0.b32.cont [6/16] 0.0, 128
          %1583 = vxpose.xlu0.b32.cont [7/16] 0.0, 128
          %1584 = vxpose.xlu0.b32.cont [8/16] 0.0, 128
          %1585 = vxpose.xlu0.b32.cont [9/16] 0.0, 128
          %1586 = vxpose.xlu0.b32.cont [10/16] 0.0, 128
          %1587 = vxpose.xlu0.b32.cont [11/16] 0.0, 128
          %1588 = vxpose.xlu0.b32.cont [12/16] 0.0, 128
          %1589 = vxpose.xlu0.b32.cont [13/16] 0.0, 128
          %1590 = vxpose.xlu0.b32.cont [14/16] 0.0, 128
          %1591 = vxpose.xlu0.b32.cont [15/16] 0.0, 128
          %1592 = vxpose.xlu0.b32.end [16/16] 0.0, 128
          %v1593 = vpop.trf.xlu0
          %v1594 = vpop.trf.xlu0
          %v1595 = vpop.trf.xlu0
          %v1596 = vpop.trf.xlu0
          %v1597 = vpop.trf.xlu0
          %v1598 = vpop.trf.xlu0
          %v1599 = vpop.trf.xlu0
          %v1600 = vpop.trf.xlu0
          %v1601 = vpop.trf.xlu0
          %v1602 = vpop.trf.xlu0
          %v1603 = vpop.trf.xlu0
          %v1604 = vpop.trf.xlu0
          %v1605 = vpop.trf.xlu0
          %v1606 = vpop.trf.xlu0
          %v1607 = vpop.trf.xlu0
          %v1608 = vpop.trf.xlu0
          %1609 = vxpose.xlu0.b32.start [1/16] %v1165, 128
          %1610 = vxpose.xlu0.b32.cont [2/16] %v1169, 128
          %1611 = vxpose.xlu0.b32.cont [3/16] %v1175, 128
          %1612 = vxpose.xlu0.b32.cont [4/16] %v1179, 128
          %1613 = vxpose.xlu0.b32.cont [5/16] 0.0, 128
          %1614 = vxpose.xlu0.b32.cont [6/16] 0.0, 128
          %1615 = vxpose.xlu0.b32.cont [7/16] 0.0, 128
          %1616 = vxpose.xlu0.b32.cont [8/16] 0.0, 128
          %1617 = vxpose.xlu0.b32.cont [9/16] 0.0, 128
          %1618 = vxpose.xlu0.b32.cont [10/16] 0.0, 128
          %1619 = vxpose.xlu0.b32.cont [11/16] 0.0, 128
          %1620 = vxpose.xlu0.b32.cont [12/16] 0.0, 128
          %1621 = vxpose.xlu0.b32.cont [13/16] 0.0, 128
          %1622 = vxpose.xlu0.b32.cont [14/16] 0.0, 128
          %1623 = vxpose.xlu0.b32.cont [15/16] 0.0, 128
          %1624 = vxpose.xlu0.b32.end [16/16] 0.0, 128
          %v1625 = vpop.trf.xlu0
          %v1626 = vpop.trf.xlu0
          %v1627 = vpop.trf.xlu0
          %v1628 = vpop.trf.xlu0
          %v1629 = vpop.trf.xlu0
          %v1630 = vpop.trf.xlu0
          %v1631 = vpop.trf.xlu0
          %v1632 = vpop.trf.xlu0
          %v1633 = vpop.trf.xlu0
          %v1634 = vpop.trf.xlu0
          %v1635 = vpop.trf.xlu0
          %v1636 = vpop.trf.xlu0
          %v1637 = vpop.trf.xlu0
          %v1638 = vpop.trf.xlu0
          %v1639 = vpop.trf.xlu0
          %v1640 = vpop.trf.xlu0
          %1641 = vxpose.xlu0.b32.start [1/16] %v1167, 128
          %1642 = vxpose.xlu0.b32.cont [2/16] %v1171, 128
          %1643 = vxpose.xlu0.b32.cont [3/16] %v1177, 128
          %1644 = vxpose.xlu0.b32.cont [4/16] %v1181, 128
          %1645 = vxpose.xlu0.b32.cont [5/16] 0.0, 128
          %1646 = vxpose.xlu0.b32.cont [6/16] 0.0, 128
          %1647 = vxpose.xlu0.b32.cont [7/16] 0.0, 128
          %1648 = vxpose.xlu0.b32.cont [8/16] 0.0, 128
          %1649 = vxpose.xlu0.b32.cont [9/16] 0.0, 128
          %1650 = vxpose.xlu0.b32.cont [10/16] 0.0, 128
          %1651 = vxpose.xlu0.b32.cont [11/16] 0.0, 128
          %1652 = vxpose.xlu0.b32.cont [12/16] 0.0, 128
          %1653 = vxpose.xlu0.b32.cont [13/16] 0.0, 128
          %1654 = vxpose.xlu0.b32.cont [14/16] 0.0, 128
          %1655 = vxpose.xlu0.b32.cont [15/16] 0.0, 128
          %1656 = vxpose.xlu0.b32.end [16/16] 0.0, 128
          %v1657 = vpop.trf.xlu0
          %v1658 = vpop.trf.xlu0
          %v1659 = vpop.trf.xlu0
          %v1660 = vpop.trf.xlu0
          %v1661 = vpop.trf.xlu0
          %v1662 = vpop.trf.xlu0
          %v1663 = vpop.trf.xlu0
          %v1664 = vpop.trf.xlu0
          %v1665 = vpop.trf.xlu0
          %v1666 = vpop.trf.xlu0
          %v1667 = vpop.trf.xlu0
          %v1668 = vpop.trf.xlu0
          %v1669 = vpop.trf.xlu0
          %v1670 = vpop.trf.xlu0
          %v1671 = vpop.trf.xlu0
          %v1672 = vpop.trf.xlu0
          %1673 = vxpose.xlu0.b32.start [1/16] %v1218, 128
          %1674 = vxpose.xlu0.b32.cont [2/16] %v1222, 128
          %1675 = vxpose.xlu0.b32.cont [3/16] %v1228, 128
          %1676 = vxpose.xlu0.b32.cont [4/16] %v1232, 128
          %1677 = vxpose.xlu0.b32.cont [5/16] 0.0, 128
          %1678 = vxpose.xlu0.b32.cont [6/16] 0.0, 128
          %1679 = vxpose.xlu0.b32.cont [7/16] 0.0, 128
          %1680 = vxpose.xlu0.b32.cont [8/16] 0.0, 128
          %1681 = vxpose.xlu0.b32.cont [9/16] 0.0, 128
          %1682 = vxpose.xlu0.b32.cont [10/16] 0.0, 128
          %1683 = vxpose.xlu0.b32.cont [11/16] 0.0, 128
          %1684 = vxpose.xlu0.b32.cont [12/16] 0.0, 128
          %1685 = vxpose.xlu0.b32.cont [13/16] 0.0, 128
          %1686 = vxpose.xlu0.b32.cont [14/16] 0.0, 128
          %1687 = vxpose.xlu0.b32.cont [15/16] 0.0, 128
          %1688 = vxpose.xlu0.b32.end [16/16] 0.0, 128
          %v1689 = vpop.trf.xlu0
          %v1690 = vpop.trf.xlu0
          %v1691 = vpop.trf.xlu0
          %v1692 = vpop.trf.xlu0
          %v1693 = vpop.trf.xlu0
          %v1694 = vpop.trf.xlu0
          %v1695 = vpop.trf.xlu0
          %v1696 = vpop.trf.xlu0
          %v1697 = vpop.trf.xlu0
          %v1698 = vpop.trf.xlu0
          %v1699 = vpop.trf.xlu0
          %v1700 = vpop.trf.xlu0
          %v1701 = vpop.trf.xlu0
          %v1702 = vpop.trf.xlu0
          %v1703 = vpop.trf.xlu0
          %v1704 = vpop.trf.xlu0
          %1705 = vxpose.xlu0.b32.start [1/16] %v1220, 128
          %1706 = vxpose.xlu0.b32.cont [2/16] %v1224, 128
          %1707 = vxpose.xlu0.b32.cont [3/16] %v1230, 128
          %1708 = vxpose.xlu0.b32.cont [4/16] %v1234, 128
          %1709 = vxpose.xlu0.b32.cont [5/16] 0.0, 128
          %1710 = vxpose.xlu0.b32.cont [6/16] 0.0, 128
          %1711 = vxpose.xlu0.b32.cont [7/16] 0.0, 128
          %1712 = vxpose.xlu0.b32.cont [8/16] 0.0, 128
          %1713 = vxpose.xlu0.b32.cont [9/16] 0.0, 128
          %1714 = vxpose.xlu0.b32.cont [10/16] 0.0, 128
          %1715 = vxpose.xlu0.b32.cont [11/16] 0.0, 128
          %1716 = vxpose.xlu0.b32.cont [12/16] 0.0, 128
          %1717 = vxpose.xlu0.b32.cont [13/16] 0.0, 128
          %1718 = vxpose.xlu0.b32.cont [14/16] 0.0, 128
          %1719 = vxpose.xlu0.b32.cont [15/16] 0.0, 128
          %1720 = vxpose.xlu0.b32.end [16/16] 0.0, 128
          %v1721 = vpop.trf.xlu0
          %v1722 = vpop.trf.xlu0
          %v1723 = vpop.trf.xlu0
          %v1724 = vpop.trf.xlu0
          %v1725 = vpop.trf.xlu0
          %v1726 = vpop.trf.xlu0
          %v1727 = vpop.trf.xlu0
          %v1728 = vpop.trf.xlu0
          %v1729 = vpop.trf.xlu0
          %v1730 = vpop.trf.xlu0
          %v1731 = vpop.trf.xlu0
          %v1732 = vpop.trf.xlu0
          %v1733 = vpop.trf.xlu0
          %v1734 = vpop.trf.xlu0
          %v1735 = vpop.trf.xlu0
          %v1736 = vpop.trf.xlu0
          %1737 = vxpose.xlu0.b32.start [1/16] %v1271, 128
          %1738 = vxpose.xlu0.b32.cont [2/16] %v1275, 128
          %1739 = vxpose.xlu0.b32.cont [3/16] %v1281, 128
          %1740 = vxpose.xlu0.b32.cont [4/16] %v1285, 128
          %1741 = vxpose.xlu0.b32.cont [5/16] 0.0, 128
          %1742 = vxpose.xlu0.b32.cont [6/16] 0.0, 128
          %1743 = vxpose.xlu0.b32.cont [7/16] 0.0, 128
          %1744 = vxpose.xlu0.b32.cont [8/16] 0.0, 128
          %1745 = vxpose.xlu0.b32.cont [9/16] 0.0, 128
          %1746 = vxpose.xlu0.b32.cont [10/16] 0.0, 128
          %1747 = vxpose.xlu0.b32.cont [11/16] 0.0, 128
          %1748 = vxpose.xlu0.b32.cont [12/16] 0.0, 128
          %1749 = vxpose.xlu0.b32.cont [13/16] 0.0, 128
          %1750 = vxpose.xlu0.b32.cont [14/16] 0.0, 128
          %1751 = vxpose.xlu0.b32.cont [15/16] 0.0, 128
          %1752 = vxpose.xlu0.b32.end [16/16] 0.0, 128
          %v1753 = vpop.trf.xlu0
          %v1754 = vpop.trf.xlu0
          %v1755 = vpop.trf.xlu0
          %v1756 = vpop.trf.xlu0
          %v1757 = vpop.trf.xlu0
          %v1758 = vpop.trf.xlu0
          %v1759 = vpop.trf.xlu0
          %v1760 = vpop.trf.xlu0
          %v1761 = vpop.trf.xlu0
          %v1762 = vpop.trf.xlu0
          %v1763 = vpop.trf.xlu0
          %v1764 = vpop.trf.xlu0
          %v1765 = vpop.trf.xlu0
          %v1766 = vpop.trf.xlu0
          %v1767 = vpop.trf.xlu0
          %v1768 = vpop.trf.xlu0
          %1769 = vxpose.xlu0.b32.start [1/16] %v1273, 128
          %1770 = vxpose.xlu0.b32.cont [2/16] %v1277, 128
          %1771 = vxpose.xlu0.b32.cont [3/16] %v1283, 128
          %1772 = vxpose.xlu0.b32.cont [4/16] %v1287, 128
          %1773 = vxpose.xlu0.b32.cont [5/16] 0.0, 128
          %1774 = vxpose.xlu0.b32.cont [6/16] 0.0, 128
          %1775 = vxpose.xlu0.b32.cont [7/16] 0.0, 128
          %1776 = vxpose.xlu0.b32.cont [8/16] 0.0, 128
          %1777 = vxpose.xlu0.b32.cont [9/16] 0.0, 128
          %1778 = vxpose.xlu0.b32.cont [10/16] 0.0, 128
          %1779 = vxpose.xlu0.b32.cont [11/16] 0.0, 128
          %1780 = vxpose.xlu0.b32.cont [12/16] 0.0, 128
          %1781 = vxpose.xlu0.b32.cont [13/16] 0.0, 128
          %1782 = vxpose.xlu0.b32.cont [14/16] 0.0, 128
          %1783 = vxpose.xlu0.b32.cont [15/16] 0.0, 128
          %1784 = vxpose.xlu0.b32.end [16/16] 0.0, 128
          %v1785 = vpop.trf.xlu0
          %v1786 = vpop.trf.xlu0
          %v1787 = vpop.trf.xlu0
          %v1788 = vpop.trf.xlu0
          %v1789 = vpop.trf.xlu0
          %v1790 = vpop.trf.xlu0
          %v1791 = vpop.trf.xlu0
          %v1792 = vpop.trf.xlu0
          %v1793 = vpop.trf.xlu0
          %v1794 = vpop.trf.xlu0
          %v1795 = vpop.trf.xlu0
          %v1796 = vpop.trf.xlu0
          %v1797 = vpop.trf.xlu0
          %v1798 = vpop.trf.xlu0
          %v1799 = vpop.trf.xlu0
          %v1800 = vpop.trf.xlu0
          %v1801 = vpack.c.bf16 %v1306, %v1305
          %v1802 = vpack.c.bf16 %v1308, %v1307
          %v1803 = vpack.c.bf16 %v1310, %v1309
          %v1804 = vpack.c.bf16 %v1312, %v1311
          %v1805 = vpack.c.bf16 %v1314, %v1313
          %v1806 = vpack.c.bf16 %v1316, %v1315
          %v1807 = vpack.c.bf16 %v1318, %v1317
          %v1808 = vpack.c.bf16 %v1320, %v1319
          %v1809 = vpack.c.bf16 %v1338, %v1337
          %v1810 = vpack.c.bf16 %v1340, %v1339
          %v1811 = vpack.c.bf16 %v1342, %v1341
          %v1812 = vpack.c.bf16 %v1344, %v1343
          %v1813 = vpack.c.bf16 %v1346, %v1345
          %v1814 = vpack.c.bf16 %v1348, %v1347
          %v1815 = vpack.c.bf16 %v1350, %v1349
          %v1816 = vpack.c.bf16 %v1352, %v1351
          %v1817 = vpack.c.bf16 %v1370, %v1369
          %v1818 = vpack.c.bf16 %v1372, %v1371
          %v1819 = vpack.c.bf16 %v1374, %v1373
          %v1820 = vpack.c.bf16 %v1376, %v1375
          %v1821 = vpack.c.bf16 %v1378, %v1377
          %v1822 = vpack.c.bf16 %v1380, %v1379
          %v1823 = vpack.c.bf16 %v1382, %v1381
          %v1824 = vpack.c.bf16 %v1384, %v1383
          %v1825 = vpack.c.bf16 %v1402, %v1401
          %v1826 = vpack.c.bf16 %v1404, %v1403
          %v1827 = vpack.c.bf16 %v1406, %v1405
          %v1828 = vpack.c.bf16 %v1408, %v1407
          %v1829 = vpack.c.bf16 %v1410, %v1409
          %v1830 = vpack.c.bf16 %v1412, %v1411
          %v1831 = vpack.c.bf16 %v1414, %v1413
          %v1832 = vpack.c.bf16 %v1416, %v1415
          %v1833 = vpack.c.bf16 %v1434, %v1433
          %v1834 = vpack.c.bf16 %v1436, %v1435
          %v1835 = vpack.c.bf16 %v1438, %v1437
          %v1836 = vpack.c.bf16 %v1440, %v1439
          %v1837 = vpack.c.bf16 %v1442, %v1441
          %v1838 = vpack.c.bf16 %v1444, %v1443
          %v1839 = vpack.c.bf16 %v1446, %v1445
          %v1840 = vpack.c.bf16 %v1448, %v1447
          %v1841 = vpack.c.bf16 %v1466, %v1465
          %v1842 = vpack.c.bf16 %v1468, %v1467
          %v1843 = vpack.c.bf16 %v1470, %v1469
          %v1844 = vpack.c.bf16 %v1472, %v1471
          %v1845 = vpack.c.bf16 %v1474, %v1473
          %v1846 = vpack.c.bf16 %v1476, %v1475
          %v1847 = vpack.c.bf16 %v1478, %v1477
          %v1848 = vpack.c.bf16 %v1480, %v1479
          %v1849 = vpack.c.bf16 %v1498, %v1497
          %v1850 = vpack.c.bf16 %v1500, %v1499
          %v1851 = vpack.c.bf16 %v1502, %v1501
          %v1852 = vpack.c.bf16 %v1504, %v1503
          %v1853 = vpack.c.bf16 %v1506, %v1505
          %v1854 = vpack.c.bf16 %v1508, %v1507
          %v1855 = vpack.c.bf16 %v1510, %v1509
          %v1856 = vpack.c.bf16 %v1512, %v1511
          %v1857 = vpack.c.bf16 %v1530, %v1529
          %v1858 = vpack.c.bf16 %v1532, %v1531
          %v1859 = vpack.c.bf16 %v1534, %v1533
          %v1860 = vpack.c.bf16 %v1536, %v1535
          %v1861 = vpack.c.bf16 %v1538, %v1537
          %v1862 = vpack.c.bf16 %v1540, %v1539
          %v1863 = vpack.c.bf16 %v1542, %v1541
          %v1864 = vpack.c.bf16 %v1544, %v1543
          %v1865 = vpack.c.bf16 %v1562, %v1561
          %v1866 = vpack.c.bf16 %v1564, %v1563
          %v1867 = vpack.c.bf16 %v1566, %v1565
          %v1868 = vpack.c.bf16 %v1568, %v1567
          %v1869 = vpack.c.bf16 %v1570, %v1569
          %v1870 = vpack.c.bf16 %v1572, %v1571
          %v1871 = vpack.c.bf16 %v1574, %v1573
          %v1872 = vpack.c.bf16 %v1576, %v1575
          %v1873 = vpack.c.bf16 %v1594, %v1593
          %v1874 = vpack.c.bf16 %v1596, %v1595
          %v1875 = vpack.c.bf16 %v1598, %v1597
          %v1876 = vpack.c.bf16 %v1600, %v1599
          %v1877 = vpack.c.bf16 %v1602, %v1601
          %v1878 = vpack.c.bf16 %v1604, %v1603
          %v1879 = vpack.c.bf16 %v1606, %v1605
          %v1880 = vpack.c.bf16 %v1608, %v1607
          %v1881 = vpack.c.bf16 %v1626, %v1625
          %v1882 = vpack.c.bf16 %v1628, %v1627
          %v1883 = vpack.c.bf16 %v1630, %v1629
          %v1884 = vpack.c.bf16 %v1632, %v1631
          %v1885 = vpack.c.bf16 %v1634, %v1633
          %v1886 = vpack.c.bf16 %v1636, %v1635
          %v1887 = vpack.c.bf16 %v1638, %v1637
          %v1888 = vpack.c.bf16 %v1640, %v1639
          %v1889 = vpack.c.bf16 %v1658, %v1657
          %v1890 = vpack.c.bf16 %v1660, %v1659
          %v1891 = vpack.c.bf16 %v1662, %v1661
          %v1892 = vpack.c.bf16 %v1664, %v1663
          %v1893 = vpack.c.bf16 %v1666, %v1665
          %v1894 = vpack.c.bf16 %v1668, %v1667
          %v1895 = vpack.c.bf16 %v1670, %v1669
          %v1896 = vpack.c.bf16 %v1672, %v1671
          %v1897 = vpack.c.bf16 %v1690, %v1689
          %v1898 = vpack.c.bf16 %v1692, %v1691
          %v1899 = vpack.c.bf16 %v1694, %v1693
          %v1900 = vpack.c.bf16 %v1696, %v1695
          %v1901 = vpack.c.bf16 %v1698, %v1697
          %v1902 = vpack.c.bf16 %v1700, %v1699
          %v1903 = vpack.c.bf16 %v1702, %v1701
          %v1904 = vpack.c.bf16 %v1704, %v1703
          %v1905 = vpack.c.bf16 %v1722, %v1721
          %v1906 = vpack.c.bf16 %v1724, %v1723
          %v1907 = vpack.c.bf16 %v1726, %v1725
          %v1908 = vpack.c.bf16 %v1728, %v1727
          %v1909 = vpack.c.bf16 %v1730, %v1729
          %v1910 = vpack.c.bf16 %v1732, %v1731
          %v1911 = vpack.c.bf16 %v1734, %v1733
          %v1912 = vpack.c.bf16 %v1736, %v1735
          %v1913 = vpack.c.bf16 %v1754, %v1753
          %v1914 = vpack.c.bf16 %v1756, %v1755
          %v1915 = vpack.c.bf16 %v1758, %v1757
          %v1916 = vpack.c.bf16 %v1760, %v1759
          %v1917 = vpack.c.bf16 %v1762, %v1761
          %v1918 = vpack.c.bf16 %v1764, %v1763
          %v1919 = vpack.c.bf16 %v1766, %v1765
          %v1920 = vpack.c.bf16 %v1768, %v1767
          %v1921 = vpack.c.bf16 %v1786, %v1785
          %v1922 = vpack.c.bf16 %v1788, %v1787
          %v1923 = vpack.c.bf16 %v1790, %v1789
          %v1924 = vpack.c.bf16 %v1792, %v1791
          %v1925 = vpack.c.bf16 %v1794, %v1793
          %v1926 = vpack.c.bf16 %v1796, %v1795
          %v1927 = vpack.c.bf16 %v1798, %v1797
          %v1928 = vpack.c.bf16 %v1800, %v1799
          %s1929 = smul.u32 %s614, 8
          %s1930 = smul.addr %s1929, 4
          %s1931 = scalar_lea.vmem %s0, %s1930
          %v1932 = vld [vmem:[%s1931] sm:$0xf]
          %v1933 = vld [vmem:[%s1931 + $0x4] sm:$0xf]
          %v1934 = vld [vmem:[%s1931 + $0x8] sm:$0xf]
          %v1935 = vld [vmem:[%s1931 + $0xc] sm:$0xf]
          %v1936 = vld [vmem:[%s1931 + $0x10] sm:$0xf]
          %v1937 = vld [vmem:[%s1931 + $0x14] sm:$0xf]
          %v1938 = vld [vmem:[%s1931 + $0x18] sm:$0xf]
          %v1939 = vld [vmem:[%s1931 + $0x1c] sm:$0xf]
          %v1948 = vunpack.c.l.b16 %v1932
          %v1949 = vunpack.c.l.b16 %v1933
          %v1950 = vunpack.c.l.b16 %v1934
          %v1951 = vunpack.c.l.b16 %v1935
          %v1952 = vunpack.c.l.b16 %v1936
          %v1953 = vunpack.c.l.b16 %v1937
          %v1954 = vunpack.c.l.b16 %v1938
          %v1955 = vunpack.c.l.b16 %v1939
          %v1956 = vpack.c.b16 %v1949, %v1948
          %v1957 = vpack.c.b16 %v1951, %v1950
          %v1958 = vpack.c.b16 %v1953, %v1952
          %v1959 = vpack.c.b16 %v1955, %v1954
          %v1961 = vsel %vm858, %v1956, 0
          %v1964 = vsel %vm858, %v1957, 0
          %v1967 = vsel %vm858, %v1958, 0
          %v1970 = vsel %vm858, %v1959, 0
          %v1973 = vsel %vm858, %v1801, 0
          %v1976 = vsel %vm858, %v1802, 0
          %v1979 = vsel %vm858, %v1803, 0
          %v1982 = vsel %vm858, %v1804, 0
          %v1985 = vsel %vm858, %v1805, 0
          %v1988 = vsel %vm858, %v1806, 0
          %v1991 = vsel %vm858, %v1807, 0
          %v1994 = vsel %vm858, %v1808, 0
          %v1997 = vsel %vm858, %v1809, 0
          %v2000 = vsel %vm858, %v1810, 0
          %v2003 = vsel %vm858, %v1811, 0
          %v2006 = vsel %vm858, %v1812, 0
          %v2009 = vsel %vm858, %v1813, 0
          %v2012 = vsel %vm858, %v1814, 0
          %v2015 = vsel %vm858, %v1815, 0
          %v2018 = vsel %vm858, %v1816, 0
          %v2021 = vsel %vm858, %v1817, 0
          %v2024 = vsel %vm858, %v1818, 0
          %v2027 = vsel %vm858, %v1819, 0
          %v2030 = vsel %vm858, %v1820, 0
          %v2033 = vsel %vm858, %v1821, 0
          %v2036 = vsel %vm858, %v1822, 0
          %v2039 = vsel %vm858, %v1823, 0
          %v2042 = vsel %vm858, %v1824, 0
          %v2045 = vsel %vm858, %v1825, 0
          %v2048 = vsel %vm858, %v1826, 0
          %v2051 = vsel %vm858, %v1827, 0
          %v2054 = vsel %vm858, %v1828, 0
          %v2057 = vsel %vm858, %v1829, 0
          %v2060 = vsel %vm858, %v1830, 0
          %v2063 = vsel %vm858, %v1831, 0
          %v2066 = vsel %vm858, %v1832, 0
          %v2069 = vsel %vm858, %v1833, 0
          %v2072 = vsel %vm858, %v1834, 0
          %v2075 = vsel %vm858, %v1835, 0
          %v2078 = vsel %vm858, %v1836, 0
          %v2081 = vsel %vm858, %v1837, 0
          %v2084 = vsel %vm858, %v1838, 0
          %v2087 = vsel %vm858, %v1839, 0
          %v2090 = vsel %vm858, %v1840, 0
          %v2093 = vsel %vm858, %v1841, 0
          %v2096 = vsel %vm858, %v1842, 0
          %v2099 = vsel %vm858, %v1843, 0
          %v2102 = vsel %vm858, %v1844, 0
          %v2105 = vsel %vm858, %v1845, 0
          %v2108 = vsel %vm858, %v1846, 0
          %v2111 = vsel %vm858, %v1847, 0
          %v2114 = vsel %vm858, %v1848, 0
          %v2117 = vsel %vm858, %v1849, 0
          %v2120 = vsel %vm858, %v1850, 0
          %v2123 = vsel %vm858, %v1851, 0
          %v2126 = vsel %vm858, %v1852, 0
          %v2129 = vsel %vm858, %v1853, 0
          %v2132 = vsel %vm858, %v1854, 0
          %v2135 = vsel %vm858, %v1855, 0
          %v2138 = vsel %vm858, %v1856, 0
          %v2141 = vsel %vm858, %v1857, 0
          %v2144 = vsel %vm858, %v1858, 0
          %v2147 = vsel %vm858, %v1859, 0
          %v2150 = vsel %vm858, %v1860, 0
          %v2153 = vsel %vm858, %v1861, 0
          %v2156 = vsel %vm858, %v1862, 0
          %v2159 = vsel %vm858, %v1863, 0
          %v2162 = vsel %vm858, %v1864, 0
          %v2165 = vsel %vm858, %v1865, 0
          %v2168 = vsel %vm858, %v1866, 0
          %v2171 = vsel %vm858, %v1867, 0
          %v2174 = vsel %vm858, %v1868, 0
          %v2177 = vsel %vm858, %v1869, 0
          %v2180 = vsel %vm858, %v1870, 0
          %v2183 = vsel %vm858, %v1871, 0
          %v2186 = vsel %vm858, %v1872, 0
          %v2189 = vsel %vm858, %v1873, 0
          %v2192 = vsel %vm858, %v1874, 0
          %v2195 = vsel %vm858, %v1875, 0
          %v2198 = vsel %vm858, %v1876, 0
          %v2201 = vsel %vm858, %v1877, 0
          %v2204 = vsel %vm858, %v1878, 0
          %v2207 = vsel %vm858, %v1879, 0
          %v2210 = vsel %vm858, %v1880, 0
          %v2213 = vsel %vm858, %v1881, 0
          %v2216 = vsel %vm858, %v1882, 0
          %v2219 = vsel %vm858, %v1883, 0
          %v2222 = vsel %vm858, %v1884, 0
          %v2225 = vsel %vm858, %v1885, 0
          %v2228 = vsel %vm858, %v1886, 0
          %v2231 = vsel %vm858, %v1887, 0
          %v2234 = vsel %vm858, %v1888, 0
          %v2237 = vsel %vm858, %v1889, 0
          %v2240 = vsel %vm858, %v1890, 0
          %v2243 = vsel %vm858, %v1891, 0
          %v2246 = vsel %vm858, %v1892, 0
          %v2249 = vsel %vm858, %v1893, 0
          %v2252 = vsel %vm858, %v1894, 0
          %v2255 = vsel %vm858, %v1895, 0
          %v2258 = vsel %vm858, %v1896, 0
          %v2261 = vsel %vm858, %v1897, 0
          %v2264 = vsel %vm858, %v1898, 0
          %v2267 = vsel %vm858, %v1899, 0
          %v2270 = vsel %vm858, %v1900, 0
          %v2273 = vsel %vm858, %v1901, 0
          %v2276 = vsel %vm858, %v1902, 0
          %v2279 = vsel %vm858, %v1903, 0
          %v2282 = vsel %vm858, %v1904, 0
          %v2285 = vsel %vm858, %v1905, 0
          %v2288 = vsel %vm858, %v1906, 0
          %v2291 = vsel %vm858, %v1907, 0
          %v2294 = vsel %vm858, %v1908, 0
          %v2297 = vsel %vm858, %v1909, 0
          %v2300 = vsel %vm858, %v1910, 0
          %v2303 = vsel %vm858, %v1911, 0
          %v2306 = vsel %vm858, %v1912, 0
          %v2309 = vsel %vm858, %v1913, 0
          %v2312 = vsel %vm858, %v1914, 0
          %v2315 = vsel %vm858, %v1915, 0
          %v2318 = vsel %vm858, %v1916, 0
          %v2321 = vsel %vm858, %v1917, 0
          %v2324 = vsel %vm858, %v1918, 0
          %v2327 = vsel %vm858, %v1919, 0
          %v2330 = vsel %vm858, %v1920, 0
          %v2333 = vsel %vm858, %v1921, 0
          %v2336 = vsel %vm858, %v1922, 0
          %v2339 = vsel %vm858, %v1923, 0
          %v2342 = vsel %vm858, %v1924, 0
          %v2345 = vsel %vm858, %v1925, 0
          %v2348 = vsel %vm858, %v1926, 0
          %v2351 = vsel %vm858, %v1927, 0
          %v2354 = vsel %vm858, %v1928, 0
          %2356 = vmatprep.subr.bf16.mxu0 0
          %2357 = vmatpush1.bf16.xpose.msra.mxu0 %v1973
          %2358 = vmatprep.subr.bf16.mxu0 0
          %2359 = vmatpush1.bf16.xpose.msra.mxu0 %v1976
          %2360 = vmatprep.subr.bf16.mxu0 0
          %2361 = vmatpush1.bf16.xpose.msra.mxu0 %v1979
          %2362 = vmatprep.subr.bf16.mxu0 0
          %2363 = vmatpush1.bf16.xpose.msra.mxu0 %v1982
          %2364 = vmatprep.subr.bf16.mxu0 0
          %2365 = vmatpush1.bf16.xpose.msra.mxu0 %v1985
          %2366 = vmatprep.subr.bf16.mxu0 0
          %2367 = vmatpush1.bf16.xpose.msra.mxu0 %v1988
          %2368 = vmatprep.subr.bf16.mxu0 0
          %2369 = vmatpush1.bf16.xpose.msra.mxu0 %v1991
          %2370 = vmatprep.subr.bf16.mxu0 0
          %2371 = vmatpush1.bf16.xpose.msra.mxu0 %v1994
          %2372 = vmatprep.subr.bf16.mxu0 0
          %2373 = vmatpush1.bf16.xpose.msra.mxu0 %v1997
          %2374 = vmatprep.subr.bf16.mxu0 0
          %2375 = vmatpush1.bf16.xpose.msra.mxu0 %v2000
          %2376 = vmatprep.subr.bf16.mxu0 0
          %2377 = vmatpush1.bf16.xpose.msra.mxu0 %v2003
          %2378 = vmatprep.subr.bf16.mxu0 0
          %2379 = vmatpush1.bf16.xpose.msra.mxu0 %v2006
          %2380 = vmatprep.subr.bf16.mxu0 0
          %2381 = vmatpush1.bf16.xpose.msra.mxu0 %v2009
          %2382 = vmatprep.subr.bf16.mxu0 0
          %2383 = vmatpush1.bf16.xpose.msra.mxu0 %v2012
          %2384 = vmatprep.subr.bf16.mxu0 0
          %2385 = vmatpush1.bf16.xpose.msra.mxu0 %v2015
          %2386 = vmatprep.subr.bf16.mxu0 0
          %2387 = vmatpush1.bf16.xpose.msra.mxu0 %v2018
          %2388 = vmatprep.mubr.bf16.mxu0 0
          %2389 = vmatmul.mubr.bf16.gmra.mrb[0].mxu0 %v1961
          %v2390 = vpop.f32.mrb[0].mxu0
          %v2391 = vadd.f32 0.0, %v2390
          %v2392 = vpop.f32.mrb[0].mxu0
          %v2393 = vadd.f32 0.0, %v2392
          %v2394 = vpop.f32.mrb[0].mxu0
          %v2395 = vadd.f32 0.0, %v2394
          %v2396 = vpop.f32.mrb[0].mxu0
          %v2397 = vadd.f32 0.0, %v2396
          %2398 = vmatprep.mubr.bf16.mxu0 0
          %2399 = vmatmul.mubr.bf16.gmra.mrb[0].mxu0 %v1964
          %v2400 = vpop.f32.mrb[0].mxu0
          %v2401 = vadd.f32 0.0, %v2400
          %v2402 = vpop.f32.mrb[0].mxu0
          %v2403 = vadd.f32 0.0, %v2402
          %v2404 = vpop.f32.mrb[0].mxu0
          %v2405 = vadd.f32 0.0, %v2404
          %v2406 = vpop.f32.mrb[0].mxu0
          %v2407 = vadd.f32 0.0, %v2406
          %2408 = vmatprep.mubr.bf16.mxu0 0
          %2409 = vmatmul.mubr.bf16.gmra.mrb[0].mxu0 %v1967
          %v2410 = vpop.f32.mrb[0].mxu0
          %v2411 = vadd.f32 0.0, %v2410
          %v2412 = vpop.f32.mrb[0].mxu0
          %v2413 = vadd.f32 0.0, %v2412
          %v2414 = vpop.f32.mrb[0].mxu0
          %v2415 = vadd.f32 0.0, %v2414
          %v2416 = vpop.f32.mrb[0].mxu0
          %v2417 = vadd.f32 0.0, %v2416
          %2418 = vmatprep.mubr.bf16.mxu0 0
          %2419 = vmatmul.mubr.bf16.gmra.mrb[0].mxu0 %v1970
          %v2420 = vpop.f32.mrb[0].mxu0
          %v2421 = vadd.f32 0.0, %v2420
          %v2422 = vpop.f32.mrb[0].mxu0
          %v2423 = vadd.f32 0.0, %v2422
          %v2424 = vpop.f32.mrb[0].mxu0
          %v2425 = vadd.f32 0.0, %v2424
          %v2426 = vpop.f32.mrb[0].mxu0
          %v2427 = vadd.f32 0.0, %v2426
          %2428 = vdwg.mxu0
          %2429 = vmatprep.subr.bf16.mxu0 0
          %2430 = vmatpush1.bf16.xpose.msra.mxu0 %v2021
          %2431 = vmatprep.subr.bf16.mxu0 0
          %2432 = vmatpush1.bf16.xpose.msra.mxu0 %v2024
          %2433 = vmatprep.subr.bf16.mxu0 0
          %2434 = vmatpush1.bf16.xpose.msra.mxu0 %v2027
          %2435 = vmatprep.subr.bf16.mxu0 0
          %2436 = vmatpush1.bf16.xpose.msra.mxu0 %v2030
          %2437 = vmatprep.subr.bf16.mxu0 0
          %2438 = vmatpush1.bf16.xpose.msra.mxu0 %v2033
          %2439 = vmatprep.subr.bf16.mxu0 0
          %2440 = vmatpush1.bf16.xpose.msra.mxu0 %v2036
          %2441 = vmatprep.subr.bf16.mxu0 0
          %2442 = vmatpush1.bf16.xpose.msra.mxu0 %v2039
          %2443 = vmatprep.subr.bf16.mxu0 0
          %2444 = vmatpush1.bf16.xpose.msra.mxu0 %v2042
          %2445 = vmatprep.subr.bf16.mxu0 0
          %2446 = vmatpush1.bf16.xpose.msra.mxu0 %v2045
          %2447 = vmatprep.subr.bf16.mxu0 0
          %2448 = vmatpush1.bf16.xpose.msra.mxu0 %v2048
          %2449 = vmatprep.subr.bf16.mxu0 0
          %2450 = vmatpush1.bf16.xpose.msra.mxu0 %v2051
          %2451 = vmatprep.subr.bf16.mxu0 0
          %2452 = vmatpush1.bf16.xpose.msra.mxu0 %v2054
          %2453 = vmatprep.subr.bf16.mxu0 0
          %2454 = vmatpush1.bf16.xpose.msra.mxu0 %v2057
          %2455 = vmatprep.subr.bf16.mxu0 0
          %2456 = vmatpush1.bf16.xpose.msra.mxu0 %v2060
          %2457 = vmatprep.subr.bf16.mxu0 0
          %2458 = vmatpush1.bf16.xpose.msra.mxu0 %v2063
          %2459 = vmatprep.subr.bf16.mxu0 0
          %2460 = vmatpush1.bf16.xpose.msra.mxu0 %v2066
          %2461 = vmatprep.mubr.bf16.mxu0 0
          %2462 = vmatmul.mubr.bf16.gmra.mrb[0].mxu0 %v1961
          %v2463 = vpop.f32.mrb[0].mxu0
          %v2464 = vadd.f32 0.0, %v2463
          %v2465 = vpop.f32.mrb[0].mxu0
          %v2466 = vadd.f32 0.0, %v2465
          %v2467 = vpop.f32.mrb[0].mxu0
          %v2468 = vadd.f32 0.0, %v2467
          %v2469 = vpop.f32.mrb[0].mxu0
          %v2470 = vadd.f32 0.0, %v2469
          %2471 = vmatprep.mubr.bf16.mxu0 0
          %2472 = vmatmul.mubr.bf16.gmra.mrb[0].mxu0 %v1964
          %v2473 = vpop.f32.mrb[0].mxu0
          %v2474 = vadd.f32 0.0, %v2473
          %v2475 = vpop.f32.mrb[0].mxu0
          %v2476 = vadd.f32 0.0, %v2475
          %v2477 = vpop.f32.mrb[0].mxu0
          %v2478 = vadd.f32 0.0, %v2477
          %v2479 = vpop.f32.mrb[0].mxu0
          %v2480 = vadd.f32 0.0, %v2479
          %2481 = vmatprep.mubr.bf16.mxu0 0
          %2482 = vmatmul.mubr.bf16.gmra.mrb[0].mxu0 %v1967
          %v2483 = vpop.f32.mrb[0].mxu0
          %v2484 = vadd.f32 0.0, %v2483
          %v2485 = vpop.f32.mrb[0].mxu0
          %v2486 = vadd.f32 0.0, %v2485
          %v2487 = vpop.f32.mrb[0].mxu0
          %v2488 = vadd.f32 0.0, %v2487
          %v2489 = vpop.f32.mrb[0].mxu0
          %v2490 = vadd.f32 0.0, %v2489
          %2491 = vmatprep.mubr.bf16.mxu0 0
          %2492 = vmatmul.mubr.bf16.gmra.mrb[0].mxu0 %v1970
          %v2493 = vpop.f32.mrb[0].mxu0
          %v2494 = vadd.f32 0.0, %v2493
          %v2495 = vpop.f32.mrb[0].mxu0
          %v2496 = vadd.f32 0.0, %v2495
          %v2497 = vpop.f32.mrb[0].mxu0
          %v2498 = vadd.f32 0.0, %v2497
          %v2499 = vpop.f32.mrb[0].mxu0
          %v2500 = vadd.f32 0.0, %v2499
          %2501 = vdwg.mxu0
          %2502 = vmatprep.subr.bf16.mxu0 0
          %2503 = vmatpush1.bf16.xpose.msra.mxu0 %v2069
          %2504 = vmatprep.subr.bf16.mxu0 0
          %2505 = vmatpush1.bf16.xpose.msra.mxu0 %v2072
          %2506 = vmatprep.subr.bf16.mxu0 0
          %2507 = vmatpush1.bf16.xpose.msra.mxu0 %v2075
          %2508 = vmatprep.subr.bf16.mxu0 0
          %2509 = vmatpush1.bf16.xpose.msra.mxu0 %v2078
          %2510 = vmatprep.subr.bf16.mxu0 0
          %2511 = vmatpush1.bf16.xpose.msra.mxu0 %v2081
          %2512 = vmatprep.subr.bf16.mxu0 0
          %2513 = vmatpush1.bf16.xpose.msra.mxu0 %v2084
          %2514 = vmatprep.subr.bf16.mxu0 0
          %2515 = vmatpush1.bf16.xpose.msra.mxu0 %v2087
          %2516 = vmatprep.subr.bf16.mxu0 0
          %2517 = vmatpush1.bf16.xpose.msra.mxu0 %v2090
          %2518 = vmatprep.subr.bf16.mxu0 0
          %2519 = vmatpush1.bf16.xpose.msra.mxu0 %v2093
          %2520 = vmatprep.subr.bf16.mxu0 0
          %2521 = vmatpush1.bf16.xpose.msra.mxu0 %v2096
          %2522 = vmatprep.subr.bf16.mxu0 0
          %2523 = vmatpush1.bf16.xpose.msra.mxu0 %v2099
          %2524 = vmatprep.subr.bf16.mxu0 0
          %2525 = vmatpush1.bf16.xpose.msra.mxu0 %v2102
          %2526 = vmatprep.subr.bf16.mxu0 0
          %2527 = vmatpush1.bf16.xpose.msra.mxu0 %v2105
          %2528 = vmatprep.subr.bf16.mxu0 0
          %2529 = vmatpush1.bf16.xpose.msra.mxu0 %v2108
          %2530 = vmatprep.subr.bf16.mxu0 0
          %2531 = vmatpush1.bf16.xpose.msra.mxu0 %v2111
          %2532 = vmatprep.subr.bf16.mxu0 0
          %2533 = vmatpush1.bf16.xpose.msra.mxu0 %v2114
          %2534 = vmatprep.mubr.bf16.mxu0 0
          %2535 = vmatmul.mubr.bf16.gmra.mrb[0].mxu0 %v1961
          %v2536 = vpop.f32.mrb[0].mxu0
          %v2537 = vadd.f32 0.0, %v2536
          %v2538 = vpop.f32.mrb[0].mxu0
          %v2539 = vadd.f32 0.0, %v2538
          %v2540 = vpop.f32.mrb[0].mxu0
          %v2541 = vadd.f32 0.0, %v2540
          %v2542 = vpop.f32.mrb[0].mxu0
          %v2543 = vadd.f32 0.0, %v2542
          %2544 = vmatprep.mubr.bf16.mxu0 0
          %2545 = vmatmul.mubr.bf16.gmra.mrb[0].mxu0 %v1964
          %v2546 = vpop.f32.mrb[0].mxu0
          %v2547 = vadd.f32 0.0, %v2546
          %v2548 = vpop.f32.mrb[0].mxu0
          %v2549 = vadd.f32 0.0, %v2548
          %v2550 = vpop.f32.mrb[0].mxu0
          %v2551 = vadd.f32 0.0, %v2550
          %v2552 = vpop.f32.mrb[0].mxu0
          %v2553 = vadd.f32 0.0, %v2552
          %2554 = vmatprep.mubr.bf16.mxu0 0
          %2555 = vmatmul.mubr.bf16.gmra.mrb[0].mxu0 %v1967
          %v2556 = vpop.f32.mrb[0].mxu0
          %v2557 = vadd.f32 0.0, %v2556
          %v2558 = vpop.f32.mrb[0].mxu0
          %v2559 = vadd.f32 0.0, %v2558
          %v2560 = vpop.f32.mrb[0].mxu0
          %v2561 = vadd.f32 0.0, %v2560
          %v2562 = vpop.f32.mrb[0].mxu0
          %v2563 = vadd.f32 0.0, %v2562
          %2564 = vmatprep.mubr.bf16.mxu0 0
          %2565 = vmatmul.mubr.bf16.gmra.mrb[0].mxu0 %v1970
          %v2566 = vpop.f32.mrb[0].mxu0
          %v2567 = vadd.f32 0.0, %v2566
          %v2568 = vpop.f32.mrb[0].mxu0
          %v2569 = vadd.f32 0.0, %v2568
          %v2570 = vpop.f32.mrb[0].mxu0
          %v2571 = vadd.f32 0.0, %v2570
          %v2572 = vpop.f32.mrb[0].mxu0
          %v2573 = vadd.f32 0.0, %v2572
          %2574 = vdwg.mxu0
          %2575 = vmatprep.subr.bf16.mxu0 0
          %2576 = vmatpush1.bf16.xpose.msra.mxu0 %v2117
          %2577 = vmatprep.subr.bf16.mxu0 0
          %2578 = vmatpush1.bf16.xpose.msra.mxu0 %v2120
          %2579 = vmatprep.subr.bf16.mxu0 0
          %2580 = vmatpush1.bf16.xpose.msra.mxu0 %v2123
          %2581 = vmatprep.subr.bf16.mxu0 0
          %2582 = vmatpush1.bf16.xpose.msra.mxu0 %v2126
          %2583 = vmatprep.subr.bf16.mxu0 0
          %2584 = vmatpush1.bf16.xpose.msra.mxu0 %v2129
          %2585 = vmatprep.subr.bf16.mxu0 0
          %2586 = vmatpush1.bf16.xpose.msra.mxu0 %v2132
          %2587 = vmatprep.subr.bf16.mxu0 0
          %2588 = vmatpush1.bf16.xpose.msra.mxu0 %v2135
          %2589 = vmatprep.subr.bf16.mxu0 0
          %2590 = vmatpush1.bf16.xpose.msra.mxu0 %v2138
          %2591 = vmatprep.subr.bf16.mxu0 0
          %2592 = vmatpush1.bf16.xpose.msra.mxu0 %v2141
          %2593 = vmatprep.subr.bf16.mxu0 0
          %2594 = vmatpush1.bf16.xpose.msra.mxu0 %v2144
          %2595 = vmatprep.subr.bf16.mxu0 0
          %2596 = vmatpush1.bf16.xpose.msra.mxu0 %v2147
          %2597 = vmatprep.subr.bf16.mxu0 0
          %2598 = vmatpush1.bf16.xpose.msra.mxu0 %v2150
          %2599 = vmatprep.subr.bf16.mxu0 0
          %2600 = vmatpush1.bf16.xpose.msra.mxu0 %v2153
          %2601 = vmatprep.subr.bf16.mxu0 0
          %2602 = vmatpush1.bf16.xpose.msra.mxu0 %v2156
          %2603 = vmatprep.subr.bf16.mxu0 0
          %2604 = vmatpush1.bf16.xpose.msra.mxu0 %v2159
          %2605 = vmatprep.subr.bf16.mxu0 0
          %2606 = vmatpush1.bf16.xpose.msra.mxu0 %v2162
          %2607 = vmatprep.mubr.bf16.mxu0 0
          %2608 = vmatmul.mubr.bf16.gmra.mrb[0].mxu0 %v1961
          %v2609 = vpop.f32.mrb[0].mxu0
          %v2610 = vadd.f32 0.0, %v2609
          %v2611 = vpop.f32.mrb[0].mxu0
          %v2612 = vadd.f32 0.0, %v2611
          %v2613 = vpop.f32.mrb[0].mxu0
          %v2614 = vadd.f32 0.0, %v2613
          %v2615 = vpop.f32.mrb[0].mxu0
          %v2616 = vadd.f32 0.0, %v2615
          %2617 = vmatprep.mubr.bf16.mxu0 0
          %2618 = vmatmul.mubr.bf16.gmra.mrb[0].mxu0 %v1964
          %v2619 = vpop.f32.mrb[0].mxu0
          %v2620 = vadd.f32 0.0, %v2619
          %v2621 = vpop.f32.mrb[0].mxu0
          %v2622 = vadd.f32 0.0, %v2621
          %v2623 = vpop.f32.mrb[0].mxu0
          %v2624 = vadd.f32 0.0, %v2623
          %v2625 = vpop.f32.mrb[0].mxu0
          %v2626 = vadd.f32 0.0, %v2625
          %2627 = vmatprep.mubr.bf16.mxu0 0
          %2628 = vmatmul.mubr.bf16.gmra.mrb[0].mxu0 %v1967
          %v2629 = vpop.f32.mrb[0].mxu0
          %v2630 = vadd.f32 0.0, %v2629
          %v2631 = vpop.f32.mrb[0].mxu0
          %v2632 = vadd.f32 0.0, %v2631
          %v2633 = vpop.f32.mrb[0].mxu0
          %v2634 = vadd.f32 0.0, %v2633
          %v2635 = vpop.f32.mrb[0].mxu0
          %v2636 = vadd.f32 0.0, %v2635
          %2637 = vmatprep.mubr.bf16.mxu0 0
          %2638 = vmatmul.mubr.bf16.gmra.mrb[0].mxu0 %v1970
          %v2639 = vpop.f32.mrb[0].mxu0
          %v2640 = vadd.f32 0.0, %v2639
          %v2641 = vpop.f32.mrb[0].mxu0
          %v2642 = vadd.f32 0.0, %v2641
          %v2643 = vpop.f32.mrb[0].mxu0
          %v2644 = vadd.f32 0.0, %v2643
          %v2645 = vpop.f32.mrb[0].mxu0
          %v2646 = vadd.f32 0.0, %v2645
          %2647 = vdwg.mxu0
          %2648 = vmatprep.subr.bf16.mxu0 0
          %2649 = vmatpush1.bf16.xpose.msra.mxu0 %v2165
          %2650 = vmatprep.subr.bf16.mxu0 0
          %2651 = vmatpush1.bf16.xpose.msra.mxu0 %v2168
          %2652 = vmatprep.subr.bf16.mxu0 0
          %2653 = vmatpush1.bf16.xpose.msra.mxu0 %v2171
          %2654 = vmatprep.subr.bf16.mxu0 0
          %2655 = vmatpush1.bf16.xpose.msra.mxu0 %v2174
          %2656 = vmatprep.subr.bf16.mxu0 0
          %2657 = vmatpush1.bf16.xpose.msra.mxu0 %v2177
          %2658 = vmatprep.subr.bf16.mxu0 0
          %2659 = vmatpush1.bf16.xpose.msra.mxu0 %v2180
          %2660 = vmatprep.subr.bf16.mxu0 0
          %2661 = vmatpush1.bf16.xpose.msra.mxu0 %v2183
          %2662 = vmatprep.subr.bf16.mxu0 0
          %2663 = vmatpush1.bf16.xpose.msra.mxu0 %v2186
          %2664 = vmatprep.subr.bf16.mxu0 0
          %2665 = vmatpush1.bf16.xpose.msra.mxu0 %v2189
          %2666 = vmatprep.subr.bf16.mxu0 0
          %2667 = vmatpush1.bf16.xpose.msra.mxu0 %v2192
          %2668 = vmatprep.subr.bf16.mxu0 0
          %2669 = vmatpush1.bf16.xpose.msra.mxu0 %v2195
          %2670 = vmatprep.subr.bf16.mxu0 0
          %2671 = vmatpush1.bf16.xpose.msra.mxu0 %v2198
          %2672 = vmatprep.subr.bf16.mxu0 0
          %2673 = vmatpush1.bf16.xpose.msra.mxu0 %v2201
          %2674 = vmatprep.subr.bf16.mxu0 0
          %2675 = vmatpush1.bf16.xpose.msra.mxu0 %v2204
          %2676 = vmatprep.subr.bf16.mxu0 0
          %2677 = vmatpush1.bf16.xpose.msra.mxu0 %v2207
          %2678 = vmatprep.subr.bf16.mxu0 0
          %2679 = vmatpush1.bf16.xpose.msra.mxu0 %v2210
          %2680 = vmatprep.mubr.bf16.mxu0 0
          %2681 = vmatmul.mubr.bf16.gmra.mrb[0].mxu0 %v1961
          %v2682 = vpop.f32.mrb[0].mxu0
          %v2683 = vadd.f32 0.0, %v2682
          %v2684 = vpop.f32.mrb[0].mxu0
          %v2685 = vadd.f32 0.0, %v2684
          %v2686 = vpop.f32.mrb[0].mxu0
          %v2687 = vadd.f32 0.0, %v2686
          %v2688 = vpop.f32.mrb[0].mxu0
          %v2689 = vadd.f32 0.0, %v2688
          %2690 = vmatprep.mubr.bf16.mxu0 0
          %2691 = vmatmul.mubr.bf16.gmra.mrb[0].mxu0 %v1964
          %v2692 = vpop.f32.mrb[0].mxu0
          %v2693 = vadd.f32 0.0, %v2692
          %v2694 = vpop.f32.mrb[0].mxu0
          %v2695 = vadd.f32 0.0, %v2694
          %v2696 = vpop.f32.mrb[0].mxu0
          %v2697 = vadd.f32 0.0, %v2696
          %v2698 = vpop.f32.mrb[0].mxu0
          %v2699 = vadd.f32 0.0, %v2698
          %2700 = vmatprep.mubr.bf16.mxu0 0
          %2701 = vmatmul.mubr.bf16.gmra.mrb[0].mxu0 %v1967
          %v2702 = vpop.f32.mrb[0].mxu0
          %v2703 = vadd.f32 0.0, %v2702
          %v2704 = vpop.f32.mrb[0].mxu0
          %v2705 = vadd.f32 0.0, %v2704
          %v2706 = vpop.f32.mrb[0].mxu0
          %v2707 = vadd.f32 0.0, %v2706
          %v2708 = vpop.f32.mrb[0].mxu0
          %v2709 = vadd.f32 0.0, %v2708
          %2710 = vmatprep.mubr.bf16.mxu0 0
          %2711 = vmatmul.mubr.bf16.gmra.mrb[0].mxu0 %v1970
          %v2712 = vpop.f32.mrb[0].mxu0
          %v2713 = vadd.f32 0.0, %v2712
          %v2714 = vpop.f32.mrb[0].mxu0
          %v2715 = vadd.f32 0.0, %v2714
          %v2716 = vpop.f32.mrb[0].mxu0
          %v2717 = vadd.f32 0.0, %v2716
          %v2718 = vpop.f32.mrb[0].mxu0
          %v2719 = vadd.f32 0.0, %v2718
          %2720 = vdwg.mxu0
          %2721 = vmatprep.subr.bf16.mxu0 0
          %2722 = vmatpush1.bf16.xpose.msra.mxu0 %v2213
          %2723 = vmatprep.subr.bf16.mxu0 0
          %2724 = vmatpush1.bf16.xpose.msra.mxu0 %v2216
          %2725 = vmatprep.subr.bf16.mxu0 0
          %2726 = vmatpush1.bf16.xpose.msra.mxu0 %v2219
          %2727 = vmatprep.subr.bf16.mxu0 0
          %2728 = vmatpush1.bf16.xpose.msra.mxu0 %v2222
          %2729 = vmatprep.subr.bf16.mxu0 0
          %2730 = vmatpush1.bf16.xpose.msra.mxu0 %v2225
          %2731 = vmatprep.subr.bf16.mxu0 0
          %2732 = vmatpush1.bf16.xpose.msra.mxu0 %v2228
          %2733 = vmatprep.subr.bf16.mxu0 0
          %2734 = vmatpush1.bf16.xpose.msra.mxu0 %v2231
          %2735 = vmatprep.subr.bf16.mxu0 0
          %2736 = vmatpush1.bf16.xpose.msra.mxu0 %v2234
          %2737 = vmatprep.subr.bf16.mxu0 0
          %2738 = vmatpush1.bf16.xpose.msra.mxu0 %v2237
          %2739 = vmatprep.subr.bf16.mxu0 0
          %2740 = vmatpush1.bf16.xpose.msra.mxu0 %v2240
          %2741 = vmatprep.subr.bf16.mxu0 0
          %2742 = vmatpush1.bf16.xpose.msra.mxu0 %v2243
          %2743 = vmatprep.subr.bf16.mxu0 0
          %2744 = vmatpush1.bf16.xpose.msra.mxu0 %v2246
          %2745 = vmatprep.subr.bf16.mxu0 0
          %2746 = vmatpush1.bf16.xpose.msra.mxu0 %v2249
          %2747 = vmatprep.subr.bf16.mxu0 0
          %2748 = vmatpush1.bf16.xpose.msra.mxu0 %v2252
          %2749 = vmatprep.subr.bf16.mxu0 0
          %2750 = vmatpush1.bf16.xpose.msra.mxu0 %v2255
          %2751 = vmatprep.subr.bf16.mxu0 0
          %2752 = vmatpush1.bf16.xpose.msra.mxu0 %v2258
          %2753 = vmatprep.mubr.bf16.mxu0 0
          %2754 = vmatmul.mubr.bf16.gmra.mrb[0].mxu0 %v1961
          %v2755 = vpop.f32.mrb[0].mxu0
          %v2756 = vadd.f32 0.0, %v2755
          %v2757 = vpop.f32.mrb[0].mxu0
          %v2758 = vadd.f32 0.0, %v2757
          %v2759 = vpop.f32.mrb[0].mxu0
          %v2760 = vadd.f32 0.0, %v2759
          %v2761 = vpop.f32.mrb[0].mxu0
          %v2762 = vadd.f32 0.0, %v2761
          %2763 = vmatprep.mubr.bf16.mxu0 0
          %2764 = vmatmul.mubr.bf16.gmra.mrb[0].mxu0 %v1964
          %v2765 = vpop.f32.mrb[0].mxu0
          %v2766 = vadd.f32 0.0, %v2765
          %v2767 = vpop.f32.mrb[0].mxu0
          %v2768 = vadd.f32 0.0, %v2767
          %v2769 = vpop.f32.mrb[0].mxu0
          %v2770 = vadd.f32 0.0, %v2769
          %v2771 = vpop.f32.mrb[0].mxu0
          %v2772 = vadd.f32 0.0, %v2771
          %2773 = vmatprep.mubr.bf16.mxu0 0
          %2774 = vmatmul.mubr.bf16.gmra.mrb[0].mxu0 %v1967
          %v2775 = vpop.f32.mrb[0].mxu0
          %v2776 = vadd.f32 0.0, %v2775
          %v2777 = vpop.f32.mrb[0].mxu0
          %v2778 = vadd.f32 0.0, %v2777
          %v2779 = vpop.f32.mrb[0].mxu0
          %v2780 = vadd.f32 0.0, %v2779
          %v2781 = vpop.f32.mrb[0].mxu0
          %v2782 = vadd.f32 0.0, %v2781
          %2783 = vmatprep.mubr.bf16.mxu0 0
          %2784 = vmatmul.mubr.bf16.gmra.mrb[0].mxu0 %v1970
          %v2785 = vpop.f32.mrb[0].mxu0
          %v2786 = vadd.f32 0.0, %v2785
          %v2787 = vpop.f32.mrb[0].mxu0
          %v2788 = vadd.f32 0.0, %v2787
          %v2789 = vpop.f32.mrb[0].mxu0
          %v2790 = vadd.f32 0.0, %v2789
          %v2791 = vpop.f32.mrb[0].mxu0
          %v2792 = vadd.f32 0.0, %v2791
          %2793 = vdwg.mxu0
          %2794 = vmatprep.subr.bf16.mxu0 0
          %2795 = vmatpush1.bf16.xpose.msra.mxu0 %v2261
          %2796 = vmatprep.subr.bf16.mxu0 0
          %2797 = vmatpush1.bf16.xpose.msra.mxu0 %v2264
          %2798 = vmatprep.subr.bf16.mxu0 0
          %2799 = vmatpush1.bf16.xpose.msra.mxu0 %v2267
          %2800 = vmatprep.subr.bf16.mxu0 0
          %2801 = vmatpush1.bf16.xpose.msra.mxu0 %v2270
          %2802 = vmatprep.subr.bf16.mxu0 0
          %2803 = vmatpush1.bf16.xpose.msra.mxu0 %v2273
          %2804 = vmatprep.subr.bf16.mxu0 0
          %2805 = vmatpush1.bf16.xpose.msra.mxu0 %v2276
          %2806 = vmatprep.subr.bf16.mxu0 0
          %2807 = vmatpush1.bf16.xpose.msra.mxu0 %v2279
          %2808 = vmatprep.subr.bf16.mxu0 0
          %2809 = vmatpush1.bf16.xpose.msra.mxu0 %v2282
          %2810 = vmatprep.subr.bf16.mxu0 0
          %2811 = vmatpush1.bf16.xpose.msra.mxu0 %v2285
          %2812 = vmatprep.subr.bf16.mxu0 0
          %2813 = vmatpush1.bf16.xpose.msra.mxu0 %v2288
          %2814 = vmatprep.subr.bf16.mxu0 0
          %2815 = vmatpush1.bf16.xpose.msra.mxu0 %v2291
          %2816 = vmatprep.subr.bf16.mxu0 0
          %2817 = vmatpush1.bf16.xpose.msra.mxu0 %v2294
          %2818 = vmatprep.subr.bf16.mxu0 0
          %2819 = vmatpush1.bf16.xpose.msra.mxu0 %v2297
          %2820 = vmatprep.subr.bf16.mxu0 0
          %2821 = vmatpush1.bf16.xpose.msra.mxu0 %v2300
          %2822 = vmatprep.subr.bf16.mxu0 0
          %2823 = vmatpush1.bf16.xpose.msra.mxu0 %v2303
          %2824 = vmatprep.subr.bf16.mxu0 0
          %2825 = vmatpush1.bf16.xpose.msra.mxu0 %v2306
          %2826 = vmatprep.mubr.bf16.mxu0 0
          %2827 = vmatmul.mubr.bf16.gmra.mrb[0].mxu0 %v1961
          %v2828 = vpop.f32.mrb[0].mxu0
          %v2829 = vadd.f32 0.0, %v2828
          %v2830 = vpop.f32.mrb[0].mxu0
          %v2831 = vadd.f32 0.0, %v2830
          %v2832 = vpop.f32.mrb[0].mxu0
          %v2833 = vadd.f32 0.0, %v2832
          %v2834 = vpop.f32.mrb[0].mxu0
          %v2835 = vadd.f32 0.0, %v2834
          %2836 = vmatprep.mubr.bf16.mxu0 0
          %2837 = vmatmul.mubr.bf16.gmra.mrb[0].mxu0 %v1964
          %v2838 = vpop.f32.mrb[0].mxu0
          %v2839 = vadd.f32 0.0, %v2838
          %v2840 = vpop.f32.mrb[0].mxu0
          %v2841 = vadd.f32 0.0, %v2840
          %v2842 = vpop.f32.mrb[0].mxu0
          %v2843 = vadd.f32 0.0, %v2842
          %v2844 = vpop.f32.mrb[0].mxu0
          %v2845 = vadd.f32 0.0, %v2844
          %2846 = vmatprep.mubr.bf16.mxu0 0
          %2847 = vmatmul.mubr.bf16.gmra.mrb[0].mxu0 %v1967
          %v2848 = vpop.f32.mrb[0].mxu0
          %v2849 = vadd.f32 0.0, %v2848
          %v2850 = vpop.f32.mrb[0].mxu0
          %v2851 = vadd.f32 0.0, %v2850
          %v2852 = vpop.f32.mrb[0].mxu0
          %v2853 = vadd.f32 0.0, %v2852
          %v2854 = vpop.f32.mrb[0].mxu0
          %v2855 = vadd.f32 0.0, %v2854
          %2856 = vmatprep.mubr.bf16.mxu0 0
          %2857 = vmatmul.mubr.bf16.gmra.mrb[0].mxu0 %v1970
          %v2858 = vpop.f32.mrb[0].mxu0
          %v2859 = vadd.f32 0.0, %v2858
          %v2860 = vpop.f32.mrb[0].mxu0
          %v2861 = vadd.f32 0.0, %v2860
          %v2862 = vpop.f32.mrb[0].mxu0
          %v2863 = vadd.f32 0.0, %v2862
          %v2864 = vpop.f32.mrb[0].mxu0
          %v2865 = vadd.f32 0.0, %v2864
          %2866 = vdwg.mxu0
          %2867 = vmatprep.subr.bf16.mxu0 0
          %2868 = vmatpush1.bf16.xpose.msra.mxu0 %v2309
          %2869 = vmatprep.subr.bf16.mxu0 0
          %2870 = vmatpush1.bf16.xpose.msra.mxu0 %v2312
          %2871 = vmatprep.subr.bf16.mxu0 0
          %2872 = vmatpush1.bf16.xpose.msra.mxu0 %v2315
          %2873 = vmatprep.subr.bf16.mxu0 0
          %2874 = vmatpush1.bf16.xpose.msra.mxu0 %v2318
          %2875 = vmatprep.subr.bf16.mxu0 0
          %2876 = vmatpush1.bf16.xpose.msra.mxu0 %v2321
          %2877 = vmatprep.subr.bf16.mxu0 0
          %2878 = vmatpush1.bf16.xpose.msra.mxu0 %v2324
          %2879 = vmatprep.subr.bf16.mxu0 0
          %2880 = vmatpush1.bf16.xpose.msra.mxu0 %v2327
          %2881 = vmatprep.subr.bf16.mxu0 0
          %2882 = vmatpush1.bf16.xpose.msra.mxu0 %v2330
          %2883 = vmatprep.subr.bf16.mxu0 0
          %2884 = vmatpush1.bf16.xpose.msra.mxu0 %v2333
          %2885 = vmatprep.subr.bf16.mxu0 0
          %2886 = vmatpush1.bf16.xpose.msra.mxu0 %v2336
          %2887 = vmatprep.subr.bf16.mxu0 0
          %2888 = vmatpush1.bf16.xpose.msra.mxu0 %v2339
          %2889 = vmatprep.subr.bf16.mxu0 0
          %2890 = vmatpush1.bf16.xpose.msra.mxu0 %v2342
          %2891 = vmatprep.subr.bf16.mxu0 0
          %2892 = vmatpush1.bf16.xpose.msra.mxu0 %v2345
          %2893 = vmatprep.subr.bf16.mxu0 0
          %2894 = vmatpush1.bf16.xpose.msra.mxu0 %v2348
          %2895 = vmatprep.subr.bf16.mxu0 0
          %2896 = vmatpush1.bf16.xpose.msra.mxu0 %v2351
          %2897 = vmatprep.subr.bf16.mxu0 0
          %2898 = vmatpush1.bf16.xpose.msra.mxu0 %v2354
          %2899 = vmatprep.mubr.bf16.mxu0 0
          %2900 = vmatmul.mubr.bf16.gmra.mrb[0].mxu0 %v1961
          %v2901 = vpop.f32.mrb[0].mxu0
          %v2902 = vadd.f32 0.0, %v2901
          %v2903 = vpop.f32.mrb[0].mxu0
          %v2904 = vadd.f32 0.0, %v2903
          %v2905 = vpop.f32.mrb[0].mxu0
          %v2906 = vadd.f32 0.0, %v2905
          %v2907 = vpop.f32.mrb[0].mxu0
          %v2908 = vadd.f32 0.0, %v2907
          %2909 = vmatprep.mubr.bf16.mxu0 0
          %2910 = vmatmul.mubr.bf16.gmra.mrb[0].mxu0 %v1964
          %v2911 = vpop.f32.mrb[0].mxu0
          %v2912 = vadd.f32 0.0, %v2911
          %v2913 = vpop.f32.mrb[0].mxu0
          %v2914 = vadd.f32 0.0, %v2913
          %v2915 = vpop.f32.mrb[0].mxu0
          %v2916 = vadd.f32 0.0, %v2915
          %v2917 = vpop.f32.mrb[0].mxu0
          %v2918 = vadd.f32 0.0, %v2917
          %2919 = vmatprep.mubr.bf16.mxu0 0
          %2920 = vmatmul.mubr.bf16.gmra.mrb[0].mxu0 %v1967
          %v2921 = vpop.f32.mrb[0].mxu0
          %v2922 = vadd.f32 0.0, %v2921
          %v2923 = vpop.f32.mrb[0].mxu0
          %v2924 = vadd.f32 0.0, %v2923
          %v2925 = vpop.f32.mrb[0].mxu0
          %v2926 = vadd.f32 0.0, %v2925
          %v2927 = vpop.f32.mrb[0].mxu0
          %v2928 = vadd.f32 0.0, %v2927
          %2929 = vmatprep.mubr.bf16.mxu0 0
          %2930 = vmatmul.mubr.bf16.gmra.mrb[0].mxu0 %v1970
          %v2931 = vpop.f32.mrb[0].mxu0
          %v2932 = vadd.f32 0.0, %v2931
          %v2933 = vpop.f32.mrb[0].mxu0
          %v2934 = vadd.f32 0.0, %v2933
          %v2935 = vpop.f32.mrb[0].mxu0
          %v2936 = vadd.f32 0.0, %v2935
          %v2937 = vpop.f32.mrb[0].mxu0
          %v2938 = vadd.f32 0.0, %v2937
          %2939 = vdwg.mxu0
          %v2940 = vpack.c.bf16 %v2395, %v2391
          %v2941 = vpack.c.bf16 %v2397, %v2393
          %v2942 = vpack.c.bf16 %v2468, %v2464
          %v2943 = vpack.c.bf16 %v2470, %v2466
          %v2944 = vpack.c.bf16 %v2541, %v2537
          %v2945 = vpack.c.bf16 %v2543, %v2539
          %v2946 = vpack.c.bf16 %v2614, %v2610
          %v2947 = vpack.c.bf16 %v2616, %v2612
          %v2948 = vpack.c.bf16 %v2687, %v2683
          %v2949 = vpack.c.bf16 %v2689, %v2685
          %v2950 = vpack.c.bf16 %v2760, %v2756
          %v2951 = vpack.c.bf16 %v2762, %v2758
          %v2952 = vpack.c.bf16 %v2833, %v2829
          %v2953 = vpack.c.bf16 %v2835, %v2831
          %v2954 = vpack.c.bf16 %v2906, %v2902
          %v2955 = vpack.c.bf16 %v2908, %v2904
          %v2956 = vpack.c.bf16 %v2405, %v2401
          %v2957 = vpack.c.bf16 %v2407, %v2403
          %v2958 = vpack.c.bf16 %v2478, %v2474
          %v2959 = vpack.c.bf16 %v2480, %v2476
          %v2960 = vpack.c.bf16 %v2551, %v2547
          %v2961 = vpack.c.bf16 %v2553, %v2549
          %v2962 = vpack.c.bf16 %v2624, %v2620
          %v2963 = vpack.c.bf16 %v2626, %v2622
          %v2964 = vpack.c.bf16 %v2697, %v2693
          %v2965 = vpack.c.bf16 %v2699, %v2695
          %v2966 = vpack.c.bf16 %v2770, %v2766
          %v2967 = vpack.c.bf16 %v2772, %v2768
          %v2968 = vpack.c.bf16 %v2843, %v2839
          %v2969 = vpack.c.bf16 %v2845, %v2841
          %v2970 = vpack.c.bf16 %v2916, %v2912
          %v2971 = vpack.c.bf16 %v2918, %v2914
          %v2972 = vpack.c.bf16 %v2415, %v2411
          %v2973 = vpack.c.bf16 %v2417, %v2413
          %v2974 = vpack.c.bf16 %v2488, %v2484
          %v2975 = vpack.c.bf16 %v2490, %v2486
          %v2976 = vpack.c.bf16 %v2561, %v2557
          %v2977 = vpack.c.bf16 %v2563, %v2559
          %v2978 = vpack.c.bf16 %v2634, %v2630
          %v2979 = vpack.c.bf16 %v2636, %v2632
          %v2980 = vpack.c.bf16 %v2707, %v2703
          %v2981 = vpack.c.bf16 %v2709, %v2705
          %v2982 = vpack.c.bf16 %v2780, %v2776
          %v2983 = vpack.c.bf16 %v2782, %v2778
          %v2984 = vpack.c.bf16 %v2853, %v2849
          %v2985 = vpack.c.bf16 %v2855, %v2851
          %v2986 = vpack.c.bf16 %v2926, %v2922
          %v2987 = vpack.c.bf16 %v2928, %v2924
          %v2988 = vpack.c.bf16 %v2425, %v2421
          %v2989 = vpack.c.bf16 %v2427, %v2423
          %v2990 = vpack.c.bf16 %v2498, %v2494
          %v2991 = vpack.c.bf16 %v2500, %v2496
          %v2992 = vpack.c.bf16 %v2571, %v2567
          %v2993 = vpack.c.bf16 %v2573, %v2569
          %v2994 = vpack.c.bf16 %v2644, %v2640
          %v2995 = vpack.c.bf16 %v2646, %v2642
          %v2996 = vpack.c.bf16 %v2717, %v2713
          %v2997 = vpack.c.bf16 %v2719, %v2715
          %v2998 = vpack.c.bf16 %v2790, %v2786
          %v2999 = vpack.c.bf16 %v2792, %v2788
          %v3000 = vpack.c.bf16 %v2863, %v2859
          %v3001 = vpack.c.bf16 %v2865, %v2861
          %v3002 = vpack.c.bf16 %v2936, %v2932
          %v3003 = vpack.c.bf16 %v2938, %v2934
          %s3004 = smul.addr %s662, 4
          %s3005 = scalar_lea.vmem [#allocation5], %s3004
          %v3006 = vld [vmem:[%s3005] sm:$0xff]
          %v3007 = vld [vmem:[%s3005 + $0x8] sm:$0xff]
          %v3008 = vld [vmem:[%s3005 + $0x10] sm:$0xff]
          %v3009 = vld [vmem:[%s3005 + $0x18] sm:$0xff]
          %v3010 = vld [vmem:[%s3005 + $0x20] sm:$0xff]
          %v3011 = vld [vmem:[%s3005 + $0x28] sm:$0xff]
          %v3012 = vld [vmem:[%s3005 + $0x30] sm:$0xff]
          %v3013 = vld [vmem:[%s3005 + $0x38] sm:$0xff]
          %v3014 = vld [vmem:[%s3005 + $0x40] sm:$0xff]
          %v3015 = vld [vmem:[%s3005 + $0x48] sm:$0xff]
          %v3016 = vld [vmem:[%s3005 + $0x50] sm:$0xff]
          %v3017 = vld [vmem:[%s3005 + $0x58] sm:$0xff]
          %v3018 = vld [vmem:[%s3005 + $0x60] sm:$0xff]
          %v3019 = vld [vmem:[%s3005 + $0x68] sm:$0xff]
          %v3020 = vld [vmem:[%s3005 + $0x70] sm:$0xff]
          %v3021 = vld [vmem:[%s3005 + $0x78] sm:$0xff]
          %v3038 = vunpack.c.l.b16 %v3006
          %v3039 = vunpack.c.h.b16 %v3006
          %v3040 = vunpack.c.l.b16 %v3007
          %v3041 = vunpack.c.h.b16 %v3007
          %v3042 = vunpack.c.l.b16 %v3008
          %v3043 = vunpack.c.h.b16 %v3008
          %v3044 = vunpack.c.l.b16 %v3009
          %v3045 = vunpack.c.h.b16 %v3009
          %v3046 = vunpack.c.l.b16 %v3010
          %v3047 = vunpack.c.h.b16 %v3010
          %v3048 = vunpack.c.l.b16 %v3011
          %v3049 = vunpack.c.h.b16 %v3011
          %v3050 = vunpack.c.l.b16 %v3012
          %v3051 = vunpack.c.h.b16 %v3012
          %v3052 = vunpack.c.l.b16 %v3013
          %v3053 = vunpack.c.h.b16 %v3013
          %v3054 = vunpack.c.l.b16 %v3014
          %v3055 = vunpack.c.h.b16 %v3014
          %v3056 = vunpack.c.l.b16 %v3015
          %v3057 = vunpack.c.h.b16 %v3015
          %v3058 = vunpack.c.l.b16 %v3016
          %v3059 = vunpack.c.h.b16 %v3016
          %v3060 = vunpack.c.l.b16 %v3017
          %v3061 = vunpack.c.h.b16 %v3017
          %v3062 = vunpack.c.l.b16 %v3018
          %v3063 = vunpack.c.h.b16 %v3018
          %v3064 = vunpack.c.l.b16 %v3019
          %v3065 = vunpack.c.h.b16 %v3019
          %v3066 = vunpack.c.l.b16 %v3020
          %v3067 = vunpack.c.h.b16 %v3020
          %v3068 = vunpack.c.l.b16 %v3021
          %v3069 = vunpack.c.h.b16 %v3021
          %v3070 = vpack.c.b16 %v3054, %v3038
          %v3071 = vpack.c.b16 %v3055, %v3039
          %v3072 = vpack.c.b16 %v3056, %v3040
          %v3073 = vpack.c.b16 %v3057, %v3041
          %v3074 = vpack.c.b16 %v3058, %v3042
          %v3075 = vpack.c.b16 %v3059, %v3043
          %v3076 = vpack.c.b16 %v3060, %v3044
          %v3077 = vpack.c.b16 %v3061, %v3045
          %v3078 = vpack.c.b16 %v3062, %v3046
          %v3079 = vpack.c.b16 %v3063, %v3047
          %v3080 = vpack.c.b16 %v3064, %v3048
          %v3081 = vpack.c.b16 %v3065, %v3049
          %v3082 = vpack.c.b16 %v3066, %v3050
          %v3083 = vpack.c.b16 %v3067, %v3051
          %v3084 = vpack.c.b16 %v3068, %v3052
          %v3085 = vpack.c.b16 %v3069, %v3053
          %v3102 = vmul.bf16 %v2940, %v3070
          %v3103 = vmul.bf16 %v2941, %v3071
          %v3104 = vmul.bf16 %v2942, %v3072
          %v3105 = vmul.bf16 %v2943, %v3073
          %v3106 = vmul.bf16 %v2944, %v3074
          %v3107 = vmul.bf16 %v2945, %v3075
          %v3108 = vmul.bf16 %v2946, %v3076
          %v3109 = vmul.bf16 %v2947, %v3077
          %v3110 = vmul.bf16 %v2948, %v3078
          %v3111 = vmul.bf16 %v2949, %v3079
          %v3112 = vmul.bf16 %v2950, %v3080
          %v3113 = vmul.bf16 %v2951, %v3081
          %v3114 = vmul.bf16 %v2952, %v3082
          %v3115 = vmul.bf16 %v2953, %v3083
          %v3116 = vmul.bf16 %v2954, %v3084
          %v3117 = vmul.bf16 %v2955, %v3085
          %v3118 = vmul.bf16 %v2956, %v3070
          %v3119 = vmul.bf16 %v2957, %v3071
          %v3120 = vmul.bf16 %v2958, %v3072
          %v3121 = vmul.bf16 %v2959, %v3073
          %v3122 = vmul.bf16 %v2960, %v3074
          %v3123 = vmul.bf16 %v2961, %v3075
          %v3124 = vmul.bf16 %v2962, %v3076
          %v3125 = vmul.bf16 %v2963, %v3077
          %v3126 = vmul.bf16 %v2964, %v3078
          %v3127 = vmul.bf16 %v2965, %v3079
          %v3128 = vmul.bf16 %v2966, %v3080
          %v3129 = vmul.bf16 %v2967, %v3081
          %v3130 = vmul.bf16 %v2968, %v3082
          %v3131 = vmul.bf16 %v2969, %v3083
          %v3132 = vmul.bf16 %v2970, %v3084
          %v3133 = vmul.bf16 %v2971, %v3085
          %v3134 = vmul.bf16 %v2972, %v3070
          %v3135 = vmul.bf16 %v2973, %v3071
          %v3136 = vmul.bf16 %v2974, %v3072
          %v3137 = vmul.bf16 %v2975, %v3073
          %v3138 = vmul.bf16 %v2976, %v3074
          %v3139 = vmul.bf16 %v2977, %v3075
          %v3140 = vmul.bf16 %v2978, %v3076
          %v3141 = vmul.bf16 %v2979, %v3077
          %v3142 = vmul.bf16 %v2980, %v3078
          %v3143 = vmul.bf16 %v2981, %v3079
          %v3144 = vmul.bf16 %v2982, %v3080
          %v3145 = vmul.bf16 %v2983, %v3081
          %v3146 = vmul.bf16 %v2984, %v3082
          %v3147 = vmul.bf16 %v2985, %v3083
          %v3148 = vmul.bf16 %v2986, %v3084
          %v3149 = vmul.bf16 %v2987, %v3085
          %v3150 = vmul.bf16 %v2988, %v3070
          %v3151 = vmul.bf16 %v2989, %v3071
          %v3152 = vmul.bf16 %v2990, %v3072
          %v3153 = vmul.bf16 %v2991, %v3073
          %v3154 = vmul.bf16 %v2992, %v3074
          %v3155 = vmul.bf16 %v2993, %v3075
          %v3156 = vmul.bf16 %v2994, %v3076
          %v3157 = vmul.bf16 %v2995, %v3077
          %v3158 = vmul.bf16 %v2996, %v3078
          %v3159 = vmul.bf16 %v2997, %v3079
          %v3160 = vmul.bf16 %v2998, %v3080
          %v3161 = vmul.bf16 %v2999, %v3081
          %v3162 = vmul.bf16 %v3000, %v3082
          %v3163 = vmul.bf16 %v3001, %v3083
          %v3164 = vmul.bf16 %v3002, %v3084
          %v3165 = vmul.bf16 %v3003, %v3085
          %v3166 = vunpack.i.l.bf16 %v3102
          %v3167 = vunpack.i.h.bf16 %v3102
          %v3168 = vmax.f32 %v3166, %v3167
          %v3169 = vrot.slane %v3168, 4
          %v3170 = vmax.f32 %v3168, %v3169
          %v3171 = vrot.slane %v3170, 2
          %v3172 = vmax.f32 %v3170, %v3171
          %v3173 = vrot.slane %v3172, 1
          %v3174 = vmax.f32 %v3172, %v3173
          %v3175 = vpack.i.bf16 %v3174, %v3174
          %v3176 = vunpack.i.l.bf16 %v3103
          %v3177 = vunpack.i.h.bf16 %v3103
          %v3178 = vmax.f32 %v3176, %v3177
          %v3179 = vrot.slane %v3178, 4
          %v3180 = vmax.f32 %v3178, %v3179
          %v3181 = vrot.slane %v3180, 2
          %v3182 = vmax.f32 %v3180, %v3181
          %v3183 = vrot.slane %v3182, 1
          %v3184 = vmax.f32 %v3182, %v3183
          %v3185 = vpack.i.bf16 %v3184, %v3184
          %v3186 = vunpack.i.l.bf16 %v3104
          %v3187 = vunpack.i.h.bf16 %v3104
          %v3188 = vmax.f32 %v3186, %v3187
          %v3189 = vrot.slane %v3188, 4
          %v3190 = vmax.f32 %v3188, %v3189
          %v3191 = vrot.slane %v3190, 2
          %v3192 = vmax.f32 %v3190, %v3191
          %v3193 = vrot.slane %v3192, 1
          %v3194 = vmax.f32 %v3192, %v3193
          %v3195 = vpack.i.bf16 %v3194, %v3194
          %v3196 = vunpack.i.l.bf16 %v3105
          %v3197 = vunpack.i.h.bf16 %v3105
          %v3198 = vmax.f32 %v3196, %v3197
          %v3199 = vrot.slane %v3198, 4
          %v3200 = vmax.f32 %v3198, %v3199
          %v3201 = vrot.slane %v3200, 2
          %v3202 = vmax.f32 %v3200, %v3201
          %v3203 = vrot.slane %v3202, 1
          %v3204 = vmax.f32 %v3202, %v3203
          %v3205 = vpack.i.bf16 %v3204, %v3204
          %v3206 = vunpack.i.l.bf16 %v3106
          %v3207 = vunpack.i.h.bf16 %v3106
          %v3208 = vmax.f32 %v3206, %v3207
          %v3209 = vrot.slane %v3208, 4
          %v3210 = vmax.f32 %v3208, %v3209
          %v3211 = vrot.slane %v3210, 2
          %v3212 = vmax.f32 %v3210, %v3211
          %v3213 = vrot.slane %v3212, 1
          %v3214 = vmax.f32 %v3212, %v3213
          %v3215 = vpack.i.bf16 %v3214, %v3214
          %v3216 = vunpack.i.l.bf16 %v3107
          %v3217 = vunpack.i.h.bf16 %v3107
          %v3218 = vmax.f32 %v3216, %v3217
          %v3219 = vrot.slane %v3218, 4
          %v3220 = vmax.f32 %v3218, %v3219
          %v3221 = vrot.slane %v3220, 2
          %v3222 = vmax.f32 %v3220, %v3221
          %v3223 = vrot.slane %v3222, 1
          %v3224 = vmax.f32 %v3222, %v3223
          %v3225 = vpack.i.bf16 %v3224, %v3224
          %v3226 = vunpack.i.l.bf16 %v3108
          %v3227 = vunpack.i.h.bf16 %v3108
          %v3228 = vmax.f32 %v3226, %v3227
          %v3229 = vrot.slane %v3228, 4
          %v3230 = vmax.f32 %v3228, %v3229
          %v3231 = vrot.slane %v3230, 2
          %v3232 = vmax.f32 %v3230, %v3231
          %v3233 = vrot.slane %v3232, 1
          %v3234 = vmax.f32 %v3232, %v3233
          %v3235 = vpack.i.bf16 %v3234, %v3234
          %v3236 = vunpack.i.l.bf16 %v3109
          %v3237 = vunpack.i.h.bf16 %v3109
          %v3238 = vmax.f32 %v3236, %v3237
          %v3239 = vrot.slane %v3238, 4
          %v3240 = vmax.f32 %v3238, %v3239
          %v3241 = vrot.slane %v3240, 2
          %v3242 = vmax.f32 %v3240, %v3241
          %v3243 = vrot.slane %v3242, 1
          %v3244 = vmax.f32 %v3242, %v3243
          %v3245 = vpack.i.bf16 %v3244, %v3244
          %v3246 = vunpack.i.l.bf16 %v3110
          %v3247 = vunpack.i.h.bf16 %v3110
          %v3248 = vmax.f32 %v3246, %v3247
          %v3249 = vrot.slane %v3248, 4
          %v3250 = vmax.f32 %v3248, %v3249
          %v3251 = vrot.slane %v3250, 2
          %v3252 = vmax.f32 %v3250, %v3251
          %v3253 = vrot.slane %v3252, 1
          %v3254 = vmax.f32 %v3252, %v3253
          %v3255 = vpack.i.bf16 %v3254, %v3254
          %v3256 = vunpack.i.l.bf16 %v3111
          %v3257 = vunpack.i.h.bf16 %v3111
          %v3258 = vmax.f32 %v3256, %v3257
          %v3259 = vrot.slane %v3258, 4
          %v3260 = vmax.f32 %v3258, %v3259
          %v3261 = vrot.slane %v3260, 2
          %v3262 = vmax.f32 %v3260, %v3261
          %v3263 = vrot.slane %v3262, 1
          %v3264 = vmax.f32 %v3262, %v3263
          %v3265 = vpack.i.bf16 %v3264, %v3264
          %v3266 = vunpack.i.l.bf16 %v3112
          %v3267 = vunpack.i.h.bf16 %v3112
          %v3268 = vmax.f32 %v3266, %v3267
          %v3269 = vrot.slane %v3268, 4
          %v3270 = vmax.f32 %v3268, %v3269
          %v3271 = vrot.slane %v3270, 2
          %v3272 = vmax.f32 %v3270, %v3271
          %v3273 = vrot.slane %v3272, 1
          %v3274 = vmax.f32 %v3272, %v3273
          %v3275 = vpack.i.bf16 %v3274, %v3274
          %v3276 = vunpack.i.l.bf16 %v3113
          %v3277 = vunpack.i.h.bf16 %v3113
          %v3278 = vmax.f32 %v3276, %v3277
          %v3279 = vrot.slane %v3278, 4
          %v3280 = vmax.f32 %v3278, %v3279
          %v3281 = vrot.slane %v3280, 2
          %v3282 = vmax.f32 %v3280, %v3281
          %v3283 = vrot.slane %v3282, 1
          %v3284 = vmax.f32 %v3282, %v3283
          %v3285 = vpack.i.bf16 %v3284, %v3284
          %v3286 = vunpack.i.l.bf16 %v3114
          %v3287 = vunpack.i.h.bf16 %v3114
          %v3288 = vmax.f32 %v3286, %v3287
          %v3289 = vrot.slane %v3288, 4
          %v3290 = vmax.f32 %v3288, %v3289
          %v3291 = vrot.slane %v3290, 2
          %v3292 = vmax.f32 %v3290, %v3291
          %v3293 = vrot.slane %v3292, 1
          %v3294 = vmax.f32 %v3292, %v3293
          %v3295 = vpack.i.bf16 %v3294, %v3294
          %v3296 = vunpack.i.l.bf16 %v3115
          %v3297 = vunpack.i.h.bf16 %v3115
          %v3298 = vmax.f32 %v3296, %v3297
          %v3299 = vrot.slane %v3298, 4
          %v3300 = vmax.f32 %v3298, %v3299
          %v3301 = vrot.slane %v3300, 2
          %v3302 = vmax.f32 %v3300, %v3301
          %v3303 = vrot.slane %v3302, 1
          %v3304 = vmax.f32 %v3302, %v3303
          %v3305 = vpack.i.bf16 %v3304, %v3304
          %v3306 = vunpack.i.l.bf16 %v3116
          %v3307 = vunpack.i.h.bf16 %v3116
          %v3308 = vmax.f32 %v3306, %v3307
          %v3309 = vrot.slane %v3308, 4
          %v3310 = vmax.f32 %v3308, %v3309
          %v3311 = vrot.slane %v3310, 2
          %v3312 = vmax.f32 %v3310, %v3311
          %v3313 = vrot.slane %v3312, 1
          %v3314 = vmax.f32 %v3312, %v3313
          %v3315 = vpack.i.bf16 %v3314, %v3314
          %v3316 = vunpack.i.l.bf16 %v3117
          %v3317 = vunpack.i.h.bf16 %v3117
          %v3318 = vmax.f32 %v3316, %v3317
          %v3319 = vrot.slane %v3318, 4
          %v3320 = vmax.f32 %v3318, %v3319
          %v3321 = vrot.slane %v3320, 2
          %v3322 = vmax.f32 %v3320, %v3321
          %v3323 = vrot.slane %v3322, 1
          %v3324 = vmax.f32 %v3322, %v3323
          %v3325 = vpack.i.bf16 %v3324, %v3324
          %v3326 = vunpack.i.l.bf16 %v3118
          %v3327 = vunpack.i.h.bf16 %v3118
          %v3328 = vmax.f32 %v3326, %v3327
          %v3329 = vrot.slane %v3328, 4
          %v3330 = vmax.f32 %v3328, %v3329
          %v3331 = vrot.slane %v3330, 2
          %v3332 = vmax.f32 %v3330, %v3331
          %v3333 = vrot.slane %v3332, 1
          %v3334 = vmax.f32 %v3332, %v3333
          %v3335 = vpack.i.bf16 %v3334, %v3334
          %v3336 = vunpack.i.l.bf16 %v3119
          %v3337 = vunpack.i.h.bf16 %v3119
          %v3338 = vmax.f32 %v3336, %v3337
          %v3339 = vrot.slane %v3338, 4
          %v3340 = vmax.f32 %v3338, %v3339
          %v3341 = vrot.slane %v3340, 2
          %v3342 = vmax.f32 %v3340, %v3341
          %v3343 = vrot.slane %v3342, 1
          %v3344 = vmax.f32 %v3342, %v3343
          %v3345 = vpack.i.bf16 %v3344, %v3344
          %v3346 = vunpack.i.l.bf16 %v3120
          %v3347 = vunpack.i.h.bf16 %v3120
          %v3348 = vmax.f32 %v3346, %v3347
          %v3349 = vrot.slane %v3348, 4
          %v3350 = vmax.f32 %v3348, %v3349
          %v3351 = vrot.slane %v3350, 2
          %v3352 = vmax.f32 %v3350, %v3351
          %v3353 = vrot.slane %v3352, 1
          %v3354 = vmax.f32 %v3352, %v3353
          %v3355 = vpack.i.bf16 %v3354, %v3354
          %v3356 = vunpack.i.l.bf16 %v3121
          %v3357 = vunpack.i.h.bf16 %v3121
          %v3358 = vmax.f32 %v3356, %v3357
          %v3359 = vrot.slane %v3358, 4
          %v3360 = vmax.f32 %v3358, %v3359
          %v3361 = vrot.slane %v3360, 2
          %v3362 = vmax.f32 %v3360, %v3361
          %v3363 = vrot.slane %v3362, 1
          %v3364 = vmax.f32 %v3362, %v3363
          %v3365 = vpack.i.bf16 %v3364, %v3364
          %v3366 = vunpack.i.l.bf16 %v3122
          %v3367 = vunpack.i.h.bf16 %v3122
          %v3368 = vmax.f32 %v3366, %v3367
          %v3369 = vrot.slane %v3368, 4
          %v3370 = vmax.f32 %v3368, %v3369
          %v3371 = vrot.slane %v3370, 2
          %v3372 = vmax.f32 %v3370, %v3371
          %v3373 = vrot.slane %v3372, 1
          %v3374 = vmax.f32 %v3372, %v3373
          %v3375 = vpack.i.bf16 %v3374, %v3374
          %v3376 = vunpack.i.l.bf16 %v3123
          %v3377 = vunpack.i.h.bf16 %v3123
          %v3378 = vmax.f32 %v3376, %v3377
          %v3379 = vrot.slane %v3378, 4
          %v3380 = vmax.f32 %v3378, %v3379
          %v3381 = vrot.slane %v3380, 2
          %v3382 = vmax.f32 %v3380, %v3381
          %v3383 = vrot.slane %v3382, 1
          %v3384 = vmax.f32 %v3382, %v3383
          %v3385 = vpack.i.bf16 %v3384, %v3384
          %v3386 = vunpack.i.l.bf16 %v3124
          %v3387 = vunpack.i.h.bf16 %v3124
          %v3388 = vmax.f32 %v3386, %v3387
          %v3389 = vrot.slane %v3388, 4
          %v3390 = vmax.f32 %v3388, %v3389
          %v3391 = vrot.slane %v3390, 2
          %v3392 = vmax.f32 %v3390, %v3391
          %v3393 = vrot.slane %v3392, 1
          %v3394 = vmax.f32 %v3392, %v3393
          %v3395 = vpack.i.bf16 %v3394, %v3394
          %v3396 = vunpack.i.l.bf16 %v3125
          %v3397 = vunpack.i.h.bf16 %v3125
          %v3398 = vmax.f32 %v3396, %v3397
          %v3399 = vrot.slane %v3398, 4
          %v3400 = vmax.f32 %v3398, %v3399
          %v3401 = vrot.slane %v3400, 2
          %v3402 = vmax.f32 %v3400, %v3401
          %v3403 = vrot.slane %v3402, 1
          %v3404 = vmax.f32 %v3402, %v3403
          %v3405 = vpack.i.bf16 %v3404, %v3404
          %v3406 = vunpack.i.l.bf16 %v3126
          %v3407 = vunpack.i.h.bf16 %v3126
          %v3408 = vmax.f32 %v3406, %v3407
          %v3409 = vrot.slane %v3408, 4
          %v3410 = vmax.f32 %v3408, %v3409
          %v3411 = vrot.slane %v3410, 2
          %v3412 = vmax.f32 %v3410, %v3411
          %v3413 = vrot.slane %v3412, 1
          %v3414 = vmax.f32 %v3412, %v3413
          %v3415 = vpack.i.bf16 %v3414, %v3414
          %v3416 = vunpack.i.l.bf16 %v3127
          %v3417 = vunpack.i.h.bf16 %v3127
          %v3418 = vmax.f32 %v3416, %v3417
          %v3419 = vrot.slane %v3418, 4
          %v3420 = vmax.f32 %v3418, %v3419
          %v3421 = vrot.slane %v3420, 2
          %v3422 = vmax.f32 %v3420, %v3421
          %v3423 = vrot.slane %v3422, 1
          %v3424 = vmax.f32 %v3422, %v3423
          %v3425 = vpack.i.bf16 %v3424, %v3424
          %v3426 = vunpack.i.l.bf16 %v3128
          %v3427 = vunpack.i.h.bf16 %v3128
          %v3428 = vmax.f32 %v3426, %v3427
          %v3429 = vrot.slane %v3428, 4
          %v3430 = vmax.f32 %v3428, %v3429
          %v3431 = vrot.slane %v3430, 2
          %v3432 = vmax.f32 %v3430, %v3431
          %v3433 = vrot.slane %v3432, 1
          %v3434 = vmax.f32 %v3432, %v3433
          %v3435 = vpack.i.bf16 %v3434, %v3434
          %v3436 = vunpack.i.l.bf16 %v3129
          %v3437 = vunpack.i.h.bf16 %v3129
          %v3438 = vmax.f32 %v3436, %v3437
          %v3439 = vrot.slane %v3438, 4
          %v3440 = vmax.f32 %v3438, %v3439
          %v3441 = vrot.slane %v3440, 2
          %v3442 = vmax.f32 %v3440, %v3441
          %v3443 = vrot.slane %v3442, 1
          %v3444 = vmax.f32 %v3442, %v3443
          %v3445 = vpack.i.bf16 %v3444, %v3444
          %v3446 = vunpack.i.l.bf16 %v3130
          %v3447 = vunpack.i.h.bf16 %v3130
          %v3448 = vmax.f32 %v3446, %v3447
          %v3449 = vrot.slane %v3448, 4
          %v3450 = vmax.f32 %v3448, %v3449
          %v3451 = vrot.slane %v3450, 2
          %v3452 = vmax.f32 %v3450, %v3451
          %v3453 = vrot.slane %v3452, 1
          %v3454 = vmax.f32 %v3452, %v3453
          %v3455 = vpack.i.bf16 %v3454, %v3454
          %v3456 = vunpack.i.l.bf16 %v3131
          %v3457 = vunpack.i.h.bf16 %v3131
          %v3458 = vmax.f32 %v3456, %v3457
          %v3459 = vrot.slane %v3458, 4
          %v3460 = vmax.f32 %v3458, %v3459
          %v3461 = vrot.slane %v3460, 2
          %v3462 = vmax.f32 %v3460, %v3461
          %v3463 = vrot.slane %v3462, 1
          %v3464 = vmax.f32 %v3462, %v3463
          %v3465 = vpack.i.bf16 %v3464, %v3464
          %v3466 = vunpack.i.l.bf16 %v3132
          %v3467 = vunpack.i.h.bf16 %v3132
          %v3468 = vmax.f32 %v3466, %v3467
          %v3469 = vrot.slane %v3468, 4
          %v3470 = vmax.f32 %v3468, %v3469
          %v3471 = vrot.slane %v3470, 2
          %v3472 = vmax.f32 %v3470, %v3471
          %v3473 = vrot.slane %v3472, 1
          %v3474 = vmax.f32 %v3472, %v3473
          %v3475 = vpack.i.bf16 %v3474, %v3474
          %v3476 = vunpack.i.l.bf16 %v3133
          %v3477 = vunpack.i.h.bf16 %v3133
          %v3478 = vmax.f32 %v3476, %v3477
          %v3479 = vrot.slane %v3478, 4
          %v3480 = vmax.f32 %v3478, %v3479
          %v3481 = vrot.slane %v3480, 2
          %v3482 = vmax.f32 %v3480, %v3481
          %v3483 = vrot.slane %v3482, 1
          %v3484 = vmax.f32 %v3482, %v3483
          %v3485 = vpack.i.bf16 %v3484, %v3484
          %v3486 = vunpack.i.l.bf16 %v3134
          %v3487 = vunpack.i.h.bf16 %v3134
          %v3488 = vmax.f32 %v3486, %v3487
          %v3489 = vrot.slane %v3488, 4
          %v3490 = vmax.f32 %v3488, %v3489
          %v3491 = vrot.slane %v3490, 2
          %v3492 = vmax.f32 %v3490, %v3491
          %v3493 = vrot.slane %v3492, 1
          %v3494 = vmax.f32 %v3492, %v3493
          %v3495 = vpack.i.bf16 %v3494, %v3494
          %v3496 = vunpack.i.l.bf16 %v3135
          %v3497 = vunpack.i.h.bf16 %v3135
          %v3498 = vmax.f32 %v3496, %v3497
          %v3499 = vrot.slane %v3498, 4
          %v3500 = vmax.f32 %v3498, %v3499
          %v3501 = vrot.slane %v3500, 2
          %v3502 = vmax.f32 %v3500, %v3501
          %v3503 = vrot.slane %v3502, 1
          %v3504 = vmax.f32 %v3502, %v3503
          %v3505 = vpack.i.bf16 %v3504, %v3504
          %v3506 = vunpack.i.l.bf16 %v3136
          %v3507 = vunpack.i.h.bf16 %v3136
          %v3508 = vmax.f32 %v3506, %v3507
          %v3509 = vrot.slane %v3508, 4
          %v3510 = vmax.f32 %v3508, %v3509
          %v3511 = vrot.slane %v3510, 2
          %v3512 = vmax.f32 %v3510, %v3511
          %v3513 = vrot.slane %v3512, 1
          %v3514 = vmax.f32 %v3512, %v3513
          %v3515 = vpack.i.bf16 %v3514, %v3514
          %v3516 = vunpack.i.l.bf16 %v3137
          %v3517 = vunpack.i.h.bf16 %v3137
          %v3518 = vmax.f32 %v3516, %v3517
          %v3519 = vrot.slane %v3518, 4
          %v3520 = vmax.f32 %v3518, %v3519
          %v3521 = vrot.slane %v3520, 2
          %v3522 = vmax.f32 %v3520, %v3521
          %v3523 = vrot.slane %v3522, 1
          %v3524 = vmax.f32 %v3522, %v3523
          %v3525 = vpack.i.bf16 %v3524, %v3524
          %v3526 = vunpack.i.l.bf16 %v3138
          %v3527 = vunpack.i.h.bf16 %v3138
          %v3528 = vmax.f32 %v3526, %v3527
          %v3529 = vrot.slane %v3528, 4
          %v3530 = vmax.f32 %v3528, %v3529
          %v3531 = vrot.slane %v3530, 2
          %v3532 = vmax.f32 %v3530, %v3531
          %v3533 = vrot.slane %v3532, 1
          %v3534 = vmax.f32 %v3532, %v3533
          %v3535 = vpack.i.bf16 %v3534, %v3534
          %v3536 = vunpack.i.l.bf16 %v3139
          %v3537 = vunpack.i.h.bf16 %v3139
          %v3538 = vmax.f32 %v3536, %v3537
          %v3539 = vrot.slane %v3538, 4
          %v3540 = vmax.f32 %v3538, %v3539
          %v3541 = vrot.slane %v3540, 2
          %v3542 = vmax.f32 %v3540, %v3541
          %v3543 = vrot.slane %v3542, 1
          %v3544 = vmax.f32 %v3542, %v3543
          %v3545 = vpack.i.bf16 %v3544, %v3544
          %v3546 = vunpack.i.l.bf16 %v3140
          %v3547 = vunpack.i.h.bf16 %v3140
          %v3548 = vmax.f32 %v3546, %v3547
          %v3549 = vrot.slane %v3548, 4
          %v3550 = vmax.f32 %v3548, %v3549
          %v3551 = vrot.slane %v3550, 2
          %v3552 = vmax.f32 %v3550, %v3551
          %v3553 = vrot.slane %v3552, 1
          %v3554 = vmax.f32 %v3552, %v3553
          %v3555 = vpack.i.bf16 %v3554, %v3554
          %v3556 = vunpack.i.l.bf16 %v3141
          %v3557 = vunpack.i.h.bf16 %v3141
          %v3558 = vmax.f32 %v3556, %v3557
          %v3559 = vrot.slane %v3558, 4
          %v3560 = vmax.f32 %v3558, %v3559
          %v3561 = vrot.slane %v3560, 2
          %v3562 = vmax.f32 %v3560, %v3561
          %v3563 = vrot.slane %v3562, 1
          %v3564 = vmax.f32 %v3562, %v3563
          %v3565 = vpack.i.bf16 %v3564, %v3564
          %v3566 = vunpack.i.l.bf16 %v3142
          %v3567 = vunpack.i.h.bf16 %v3142
          %v3568 = vmax.f32 %v3566, %v3567
          %v3569 = vrot.slane %v3568, 4
          %v3570 = vmax.f32 %v3568, %v3569
          %v3571 = vrot.slane %v3570, 2
          %v3572 = vmax.f32 %v3570, %v3571
          %v3573 = vrot.slane %v3572, 1
          %v3574 = vmax.f32 %v3572, %v3573
          %v3575 = vpack.i.bf16 %v3574, %v3574
          %v3576 = vunpack.i.l.bf16 %v3143
          %v3577 = vunpack.i.h.bf16 %v3143
          %v3578 = vmax.f32 %v3576, %v3577
          %v3579 = vrot.slane %v3578, 4
          %v3580 = vmax.f32 %v3578, %v3579
          %v3581 = vrot.slane %v3580, 2
          %v3582 = vmax.f32 %v3580, %v3581
          %v3583 = vrot.slane %v3582, 1
          %v3584 = vmax.f32 %v3582, %v3583
          %v3585 = vpack.i.bf16 %v3584, %v3584
          %v3586 = vunpack.i.l.bf16 %v3144
          %v3587 = vunpack.i.h.bf16 %v3144
          %v3588 = vmax.f32 %v3586, %v3587
          %v3589 = vrot.slane %v3588, 4
          %v3590 = vmax.f32 %v3588, %v3589
          %v3591 = vrot.slane %v3590, 2
          %v3592 = vmax.f32 %v3590, %v3591
          %v3593 = vrot.slane %v3592, 1
          %v3594 = vmax.f32 %v3592, %v3593
          %v3595 = vpack.i.bf16 %v3594, %v3594
          %v3596 = vunpack.i.l.bf16 %v3145
          %v3597 = vunpack.i.h.bf16 %v3145
          %v3598 = vmax.f32 %v3596, %v3597
          %v3599 = vrot.slane %v3598, 4
          %v3600 = vmax.f32 %v3598, %v3599
          %v3601 = vrot.slane %v3600, 2
          %v3602 = vmax.f32 %v3600, %v3601
          %v3603 = vrot.slane %v3602, 1
          %v3604 = vmax.f32 %v3602, %v3603
          %v3605 = vpack.i.bf16 %v3604, %v3604
          %v3606 = vunpack.i.l.bf16 %v3146
          %v3607 = vunpack.i.h.bf16 %v3146
          %v3608 = vmax.f32 %v3606, %v3607
          %v3609 = vrot.slane %v3608, 4
          %v3610 = vmax.f32 %v3608, %v3609
          %v3611 = vrot.slane %v3610, 2
          %v3612 = vmax.f32 %v3610, %v3611
          %v3613 = vrot.slane %v3612, 1
          %v3614 = vmax.f32 %v3612, %v3613
          %v3615 = vpack.i.bf16 %v3614, %v3614
          %v3616 = vunpack.i.l.bf16 %v3147
          %v3617 = vunpack.i.h.bf16 %v3147
          %v3618 = vmax.f32 %v3616, %v3617
          %v3619 = vrot.slane %v3618, 4
          %v3620 = vmax.f32 %v3618, %v3619
          %v3621 = vrot.slane %v3620, 2
          %v3622 = vmax.f32 %v3620, %v3621
          %v3623 = vrot.slane %v3622, 1
          %v3624 = vmax.f32 %v3622, %v3623
          %v3625 = vpack.i.bf16 %v3624, %v3624
          %v3626 = vunpack.i.l.bf16 %v3148
          %v3627 = vunpack.i.h.bf16 %v3148
          %v3628 = vmax.f32 %v3626, %v3627
          %v3629 = vrot.slane %v3628, 4
          %v3630 = vmax.f32 %v3628, %v3629
          %v3631 = vrot.slane %v3630, 2
          %v3632 = vmax.f32 %v3630, %v3631
          %v3633 = vrot.slane %v3632, 1
          %v3634 = vmax.f32 %v3632, %v3633
          %v3635 = vpack.i.bf16 %v3634, %v3634
          %v3636 = vunpack.i.l.bf16 %v3149
          %v3637 = vunpack.i.h.bf16 %v3149
          %v3638 = vmax.f32 %v3636, %v3637
          %v3639 = vrot.slane %v3638, 4
          %v3640 = vmax.f32 %v3638, %v3639
          %v3641 = vrot.slane %v3640, 2
          %v3642 = vmax.f32 %v3640, %v3641
          %v3643 = vrot.slane %v3642, 1
          %v3644 = vmax.f32 %v3642, %v3643
          %v3645 = vpack.i.bf16 %v3644, %v3644
          %v3646 = vunpack.i.l.bf16 %v3150
          %v3647 = vunpack.i.h.bf16 %v3150
          %v3648 = vmax.f32 %v3646, %v3647
          %v3649 = vrot.slane %v3648, 4
          %v3650 = vmax.f32 %v3648, %v3649
          %v3651 = vrot.slane %v3650, 2
          %v3652 = vmax.f32 %v3650, %v3651
          %v3653 = vrot.slane %v3652, 1
          %v3654 = vmax.f32 %v3652, %v3653
          %v3655 = vpack.i.bf16 %v3654, %v3654
          %v3656 = vunpack.i.l.bf16 %v3151
          %v3657 = vunpack.i.h.bf16 %v3151
          %v3658 = vmax.f32 %v3656, %v3657
          %v3659 = vrot.slane %v3658, 4
          %v3660 = vmax.f32 %v3658, %v3659
          %v3661 = vrot.slane %v3660, 2
          %v3662 = vmax.f32 %v3660, %v3661
          %v3663 = vrot.slane %v3662, 1
          %v3664 = vmax.f32 %v3662, %v3663
          %v3665 = vpack.i.bf16 %v3664, %v3664
          %v3666 = vunpack.i.l.bf16 %v3152
          %v3667 = vunpack.i.h.bf16 %v3152
          %v3668 = vmax.f32 %v3666, %v3667
          %v3669 = vrot.slane %v3668, 4
          %v3670 = vmax.f32 %v3668, %v3669
          %v3671 = vrot.slane %v3670, 2
          %v3672 = vmax.f32 %v3670, %v3671
          %v3673 = vrot.slane %v3672, 1
          %v3674 = vmax.f32 %v3672, %v3673
          %v3675 = vpack.i.bf16 %v3674, %v3674
          %v3676 = vunpack.i.l.bf16 %v3153
          %v3677 = vunpack.i.h.bf16 %v3153
          %v3678 = vmax.f32 %v3676, %v3677
          %v3679 = vrot.slane %v3678, 4
          %v3680 = vmax.f32 %v3678, %v3679
          %v3681 = vrot.slane %v3680, 2
          %v3682 = vmax.f32 %v3680, %v3681
          %v3683 = vrot.slane %v3682, 1
          %v3684 = vmax.f32 %v3682, %v3683
          %v3685 = vpack.i.bf16 %v3684, %v3684
          %v3686 = vunpack.i.l.bf16 %v3154
          %v3687 = vunpack.i.h.bf16 %v3154
          %v3688 = vmax.f32 %v3686, %v3687
          %v3689 = vrot.slane %v3688, 4
          %v3690 = vmax.f32 %v3688, %v3689
          %v3691 = vrot.slane %v3690, 2
          %v3692 = vmax.f32 %v3690, %v3691
          %v3693 = vrot.slane %v3692, 1
          %v3694 = vmax.f32 %v3692, %v3693
          %v3695 = vpack.i.bf16 %v3694, %v3694
          %v3696 = vunpack.i.l.bf16 %v3155
          %v3697 = vunpack.i.h.bf16 %v3155
          %v3698 = vmax.f32 %v3696, %v3697
          %v3699 = vrot.slane %v3698, 4
          %v3700 = vmax.f32 %v3698, %v3699
          %v3701 = vrot.slane %v3700, 2
          %v3702 = vmax.f32 %v3700, %v3701
          %v3703 = vrot.slane %v3702, 1
          %v3704 = vmax.f32 %v3702, %v3703
          %v3705 = vpack.i.bf16 %v3704, %v3704
          %v3706 = vunpack.i.l.bf16 %v3156
          %v3707 = vunpack.i.h.bf16 %v3156
          %v3708 = vmax.f32 %v3706, %v3707
          %v3709 = vrot.slane %v3708, 4
          %v3710 = vmax.f32 %v3708, %v3709
          %v3711 = vrot.slane %v3710, 2
          %v3712 = vmax.f32 %v3710, %v3711
          %v3713 = vrot.slane %v3712, 1
          %v3714 = vmax.f32 %v3712, %v3713
          %v3715 = vpack.i.bf16 %v3714, %v3714
          %v3716 = vunpack.i.l.bf16 %v3157
          %v3717 = vunpack.i.h.bf16 %v3157
          %v3718 = vmax.f32 %v3716, %v3717
          %v3719 = vrot.slane %v3718, 4
          %v3720 = vmax.f32 %v3718, %v3719
          %v3721 = vrot.slane %v3720, 2
          %v3722 = vmax.f32 %v3720, %v3721
          %v3723 = vrot.slane %v3722, 1
          %v3724 = vmax.f32 %v3722, %v3723
          %v3725 = vpack.i.bf16 %v3724, %v3724
          %v3726 = vunpack.i.l.bf16 %v3158
          %v3727 = vunpack.i.h.bf16 %v3158
          %v3728 = vmax.f32 %v3726, %v3727
          %v3729 = vrot.slane %v3728, 4
          %v3730 = vmax.f32 %v3728, %v3729
          %v3731 = vrot.slane %v3730, 2
          %v3732 = vmax.f32 %v3730, %v3731
          %v3733 = vrot.slane %v3732, 1
          %v3734 = vmax.f32 %v3732, %v3733
          %v3735 = vpack.i.bf16 %v3734, %v3734
          %v3736 = vunpack.i.l.bf16 %v3159
          %v3737 = vunpack.i.h.bf16 %v3159
          %v3738 = vmax.f32 %v3736, %v3737
          %v3739 = vrot.slane %v3738, 4
          %v3740 = vmax.f32 %v3738, %v3739
          %v3741 = vrot.slane %v3740, 2
          %v3742 = vmax.f32 %v3740, %v3741
          %v3743 = vrot.slane %v3742, 1
          %v3744 = vmax.f32 %v3742, %v3743
          %v3745 = vpack.i.bf16 %v3744, %v3744
          %v3746 = vunpack.i.l.bf16 %v3160
          %v3747 = vunpack.i.h.bf16 %v3160
          %v3748 = vmax.f32 %v3746, %v3747
          %v3749 = vrot.slane %v3748, 4
          %v3750 = vmax.f32 %v3748, %v3749
          %v3751 = vrot.slane %v3750, 2
          %v3752 = vmax.f32 %v3750, %v3751
          %v3753 = vrot.slane %v3752, 1
          %v3754 = vmax.f32 %v3752, %v3753
          %v3755 = vpack.i.bf16 %v3754, %v3754
          %v3756 = vunpack.i.l.bf16 %v3161
          %v3757 = vunpack.i.h.bf16 %v3161
          %v3758 = vmax.f32 %v3756, %v3757
          %v3759 = vrot.slane %v3758, 4
          %v3760 = vmax.f32 %v3758, %v3759
          %v3761 = vrot.slane %v3760, 2
          %v3762 = vmax.f32 %v3760, %v3761
          %v3763 = vrot.slane %v3762, 1
          %v3764 = vmax.f32 %v3762, %v3763
          %v3765 = vpack.i.bf16 %v3764, %v3764
          %v3766 = vunpack.i.l.bf16 %v3162
          %v3767 = vunpack.i.h.bf16 %v3162
          %v3768 = vmax.f32 %v3766, %v3767
          %v3769 = vrot.slane %v3768, 4
          %v3770 = vmax.f32 %v3768, %v3769
          %v3771 = vrot.slane %v3770, 2
          %v3772 = vmax.f32 %v3770, %v3771
          %v3773 = vrot.slane %v3772, 1
          %v3774 = vmax.f32 %v3772, %v3773
          %v3775 = vpack.i.bf16 %v3774, %v3774
          %v3776 = vunpack.i.l.bf16 %v3163
          %v3777 = vunpack.i.h.bf16 %v3163
          %v3778 = vmax.f32 %v3776, %v3777
          %v3779 = vrot.slane %v3778, 4
          %v3780 = vmax.f32 %v3778, %v3779
          %v3781 = vrot.slane %v3780, 2
          %v3782 = vmax.f32 %v3780, %v3781
          %v3783 = vrot.slane %v3782, 1
          %v3784 = vmax.f32 %v3782, %v3783
          %v3785 = vpack.i.bf16 %v3784, %v3784
          %v3786 = vunpack.i.l.bf16 %v3164
          %v3787 = vunpack.i.h.bf16 %v3164
          %v3788 = vmax.f32 %v3786, %v3787
          %v3789 = vrot.slane %v3788, 4
          %v3790 = vmax.f32 %v3788, %v3789
          %v3791 = vrot.slane %v3790, 2
          %v3792 = vmax.f32 %v3790, %v3791
          %v3793 = vrot.slane %v3792, 1
          %v3794 = vmax.f32 %v3792, %v3793
          %v3795 = vpack.i.bf16 %v3794, %v3794
          %v3796 = vunpack.i.l.bf16 %v3165
          %v3797 = vunpack.i.h.bf16 %v3165
          %v3798 = vmax.f32 %v3796, %v3797
          %v3799 = vrot.slane %v3798, 4
          %v3800 = vmax.f32 %v3798, %v3799
          %v3801 = vrot.slane %v3800, 2
          %v3802 = vmax.f32 %v3800, %v3801
          %v3803 = vrot.slane %v3802, 1
          %v3804 = vmax.f32 %v3802, %v3803
          %v3805 = vpack.i.bf16 %v3804, %v3804
          %v3870 = vunpack.c.l.b16 %v3175
          %v3871 = vunpack.c.l.b16 %v3185
          %v3872 = vunpack.c.l.b16 %v3195
          %v3873 = vunpack.c.l.b16 %v3205
          %v3874 = vunpack.c.l.b16 %v3215
          %v3875 = vunpack.c.l.b16 %v3225
          %v3876 = vunpack.c.l.b16 %v3235
          %v3877 = vunpack.c.l.b16 %v3245
          %v3878 = vunpack.c.l.b16 %v3255
          %v3879 = vunpack.c.l.b16 %v3265
          %v3880 = vunpack.c.l.b16 %v3275
          %v3881 = vunpack.c.l.b16 %v3285
          %v3882 = vunpack.c.l.b16 %v3295
          %v3883 = vunpack.c.l.b16 %v3305
          %v3884 = vunpack.c.l.b16 %v3315
          %v3885 = vunpack.c.l.b16 %v3325
          %v3886 = vunpack.c.l.b16 %v3335
          %v3887 = vunpack.c.l.b16 %v3345
          %v3888 = vunpack.c.l.b16 %v3355
          %v3889 = vunpack.c.l.b16 %v3365
          %v3890 = vunpack.c.l.b16 %v3375
          %v3891 = vunpack.c.l.b16 %v3385
          %v3892 = vunpack.c.l.b16 %v3395
          %v3893 = vunpack.c.l.b16 %v3405
          %v3894 = vunpack.c.l.b16 %v3415
          %v3895 = vunpack.c.l.b16 %v3425
          %v3896 = vunpack.c.l.b16 %v3435
          %v3897 = vunpack.c.l.b16 %v3445
          %v3898 = vunpack.c.l.b16 %v3455
          %v3899 = vunpack.c.l.b16 %v3465
          %v3900 = vunpack.c.l.b16 %v3475
          %v3901 = vunpack.c.l.b16 %v3485
          %v3902 = vunpack.c.l.b16 %v3495
          %v3903 = vunpack.c.l.b16 %v3505
          %v3904 = vunpack.c.l.b16 %v3515
          %v3905 = vunpack.c.l.b16 %v3525
          %v3906 = vunpack.c.l.b16 %v3535
          %v3907 = vunpack.c.l.b16 %v3545
          %v3908 = vunpack.c.l.b16 %v3555
          %v3909 = vunpack.c.l.b16 %v3565
          %v3910 = vunpack.c.l.b16 %v3575
          %v3911 = vunpack.c.l.b16 %v3585
          %v3912 = vunpack.c.l.b16 %v3595
          %v3913 = vunpack.c.l.b16 %v3605
          %v3914 = vunpack.c.l.b16 %v3615
          %v3915 = vunpack.c.l.b16 %v3625
          %v3916 = vunpack.c.l.b16 %v3635
          %v3917 = vunpack.c.l.b16 %v3645
          %v3918 = vunpack.c.l.b16 %v3655
          %v3919 = vunpack.c.l.b16 %v3665
          %v3920 = vunpack.c.l.b16 %v3675
          %v3921 = vunpack.c.l.b16 %v3685
          %v3922 = vunpack.c.l.b16 %v3695
          %v3923 = vunpack.c.l.b16 %v3705
          %v3924 = vunpack.c.l.b16 %v3715
          %v3925 = vunpack.c.l.b16 %v3725
          %v3926 = vunpack.c.l.b16 %v3735
          %v3927 = vunpack.c.l.b16 %v3745
          %v3928 = vunpack.c.l.b16 %v3755
          %v3929 = vunpack.c.l.b16 %v3765
          %v3930 = vunpack.c.l.b16 %v3775
          %v3931 = vunpack.c.l.b16 %v3785
          %v3932 = vunpack.c.l.b16 %v3795
          %v3933 = vunpack.c.l.b16 %v3805
          %vm3934 = vcmask 1041409
          %v3935 = vsel %vm3934, %v3886, %v3870
          %vm3936 = vcmask 1042434
          %v3937 = vsel %vm3936, %v3902, %v3935
          %vm3938 = vcmask 1043459
          %v3939 = vsel %vm3938, %v3918, %v3937
          %v3940 = vsel %vm3934, %v3887, %v3871
          %v3941 = vsel %vm3936, %v3903, %v3940
          %v3942 = vsel %vm3938, %v3919, %v3941
          %v3943 = vsel %vm3934, %v3888, %v3872
          %v3944 = vsel %vm3936, %v3904, %v3943
          %v3945 = vsel %vm3938, %v3920, %v3944
          %v3946 = vsel %vm3934, %v3889, %v3873
          %v3947 = vsel %vm3936, %v3905, %v3946
          %v3948 = vsel %vm3938, %v3921, %v3947
          %v3949 = vsel %vm3934, %v3890, %v3874
          %v3950 = vsel %vm3936, %v3906, %v3949
          %v3951 = vsel %vm3938, %v3922, %v3950
          %v3952 = vsel %vm3934, %v3891, %v3875
          %v3953 = vsel %vm3936, %v3907, %v3952
          %v3954 = vsel %vm3938, %v3923, %v3953
          %v3955 = vsel %vm3934, %v3892, %v3876
          %v3956 = vsel %vm3936, %v3908, %v3955
          %v3957 = vsel %vm3938, %v3924, %v3956
          %v3958 = vsel %vm3934, %v3893, %v3877
          %v3959 = vsel %vm3936, %v3909, %v3958
          %v3960 = vsel %vm3938, %v3925, %v3959
          %v3961 = vsel %vm3934, %v3894, %v3878
          %v3962 = vsel %vm3936, %v3910, %v3961
          %v3963 = vsel %vm3938, %v3926, %v3962
          %v3964 = vsel %vm3934, %v3895, %v3879
          %v3965 = vsel %vm3936, %v3911, %v3964
          %v3966 = vsel %vm3938, %v3927, %v3965
          %v3967 = vsel %vm3934, %v3896, %v3880
          %v3968 = vsel %vm3936, %v3912, %v3967
          %v3969 = vsel %vm3938, %v3928, %v3968
          %v3970 = vsel %vm3934, %v3897, %v3881
          %v3971 = vsel %vm3936, %v3913, %v3970
          %v3972 = vsel %vm3938, %v3929, %v3971
          %v3973 = vsel %vm3934, %v3898, %v3882
          %v3974 = vsel %vm3936, %v3914, %v3973
          %v3975 = vsel %vm3938, %v3930, %v3974
          %v3976 = vsel %vm3934, %v3899, %v3883
          %v3977 = vsel %vm3936, %v3915, %v3976
          %v3978 = vsel %vm3938, %v3931, %v3977
          %v3979 = vsel %vm3934, %v3900, %v3884
          %v3980 = vsel %vm3936, %v3916, %v3979
          %v3981 = vsel %vm3938, %v3932, %v3980
          %v3982 = vsel %vm3934, %v3901, %v3885
          %v3983 = vsel %vm3936, %v3917, %v3982
          %v3984 = vsel %vm3938, %v3933, %v3983
          %v3985 = vpack.c.b16 %v3939, %v3939
          %v3986 = vpack.c.b16 %v3942, %v3942
          %v3987 = vpack.c.b16 %v3945, %v3945
          %v3988 = vpack.c.b16 %v3948, %v3948
          %v3989 = vpack.c.b16 %v3951, %v3951
          %v3990 = vpack.c.b16 %v3954, %v3954
          %v3991 = vpack.c.b16 %v3957, %v3957
          %v3992 = vpack.c.b16 %v3960, %v3960
          %v3993 = vpack.c.b16 %v3963, %v3963
          %v3994 = vpack.c.b16 %v3966, %v3966
          %v3995 = vpack.c.b16 %v3969, %v3969
          %v3996 = vpack.c.b16 %v3972, %v3972
          %v3997 = vpack.c.b16 %v3975, %v3975
          %v3998 = vpack.c.b16 %v3978, %v3978
          %v3999 = vpack.c.b16 %v3981, %v3981
          %v4000 = vpack.c.b16 %v3984, %v3984
          %v4273 = vunpack.c.l.b16 %v356
          %v4274 = vunpack.c.l.b16 %v357
          %v4275 = vunpack.c.l.b16 %v358
          %v4276 = vunpack.c.l.b16 %v359
          %v4277 = vunpack.c.l.b16 %v360
          %v4278 = vunpack.c.l.b16 %v361
          %v4279 = vunpack.c.l.b16 %v362
          %v4280 = vunpack.c.l.b16 %v363
          %v4281 = vunpack.c.l.b16 %v364
          %v4282 = vunpack.c.l.b16 %v365
          %v4283 = vunpack.c.l.b16 %v366
          %v4284 = vunpack.c.l.b16 %v367
          %v4285 = vunpack.c.l.b16 %v368
          %v4286 = vunpack.c.l.b16 %v369
          %v4287 = vunpack.c.l.b16 %v370
          %v4288 = vunpack.c.l.b16 %v371
          %v4289 = vunpack.c.l.b16 %v372
          %v4290 = vunpack.c.l.b16 %v373
          %v4291 = vunpack.c.l.b16 %v374
          %v4292 = vunpack.c.l.b16 %v375
          %v4293 = vunpack.c.l.b16 %v376
          %v4294 = vunpack.c.l.b16 %v377
          %v4295 = vunpack.c.l.b16 %v378
          %v4296 = vunpack.c.l.b16 %v379
          %v4297 = vunpack.c.l.b16 %v380
          %v4298 = vunpack.c.l.b16 %v381
          %v4299 = vunpack.c.l.b16 %v382
          %v4300 = vunpack.c.l.b16 %v383
          %v4301 = vunpack.c.l.b16 %v384
          %v4302 = vunpack.c.l.b16 %v385
          %v4303 = vunpack.c.l.b16 %v386
          %v4304 = vunpack.c.l.b16 %v387
          %v4305 = vunpack.c.l.b16 %v388
          %v4306 = vunpack.c.l.b16 %v389
          %v4307 = vunpack.c.l.b16 %v390
          %v4308 = vunpack.c.l.b16 %v391
          %v4309 = vunpack.c.l.b16 %v392
          %v4310 = vunpack.c.l.b16 %v393
          %v4311 = vunpack.c.l.b16 %v394
          %v4312 = vunpack.c.l.b16 %v395
          %v4313 = vunpack.c.l.b16 %v396
          %v4314 = vunpack.c.l.b16 %v397
          %v4315 = vunpack.c.l.b16 %v398
          %v4316 = vunpack.c.l.b16 %v399
          %v4317 = vunpack.c.l.b16 %v400
          %v4318 = vunpack.c.l.b16 %v401
          %v4319 = vunpack.c.l.b16 %v402
          %v4320 = vunpack.c.l.b16 %v403
          %v4321 = vunpack.c.l.b16 %v404
          %v4322 = vunpack.c.l.b16 %v405
          %v4323 = vunpack.c.l.b16 %v406
          %v4324 = vunpack.c.l.b16 %v407
          %v4325 = vunpack.c.l.b16 %v408
          %v4326 = vunpack.c.l.b16 %v409
          %v4327 = vunpack.c.l.b16 %v410
          %v4328 = vunpack.c.l.b16 %v411
          %v4329 = vunpack.c.l.b16 %v412
          %v4330 = vunpack.c.l.b16 %v413
          %v4331 = vunpack.c.l.b16 %v414
          %v4332 = vunpack.c.l.b16 %v415
          %v4333 = vunpack.c.l.b16 %v416
          %v4334 = vunpack.c.l.b16 %v417
          %v4335 = vunpack.c.l.b16 %v418
          %v4336 = vunpack.c.l.b16 %v419
          %v4337 = vunpack.c.l.b16 %v420
          %v4338 = vunpack.c.l.b16 %v421
          %v4339 = vunpack.c.l.b16 %v422
          %v4340 = vunpack.c.l.b16 %v423
          %v4341 = vunpack.c.l.b16 %v424
          %v4342 = vunpack.c.l.b16 %v425
          %v4343 = vunpack.c.l.b16 %v426
          %v4344 = vunpack.c.l.b16 %v427
          %v4345 = vunpack.c.l.b16 %v428
          %v4346 = vunpack.c.l.b16 %v429
          %v4347 = vunpack.c.l.b16 %v430
          %v4348 = vunpack.c.l.b16 %v431
          %v4349 = vunpack.c.l.b16 %v432
          %v4350 = vunpack.c.l.b16 %v433
          %v4351 = vunpack.c.l.b16 %v434
          %v4352 = vunpack.c.l.b16 %v435
          %v4353 = vunpack.c.l.b16 %v436
          %v4354 = vunpack.c.l.b16 %v437
          %v4355 = vunpack.c.l.b16 %v438
          %v4356 = vunpack.c.l.b16 %v439
          %v4357 = vunpack.c.l.b16 %v440
          %v4358 = vunpack.c.l.b16 %v441
          %v4359 = vunpack.c.l.b16 %v442
          %v4360 = vunpack.c.l.b16 %v443
          %v4361 = vunpack.c.l.b16 %v444
          %v4362 = vunpack.c.l.b16 %v445
          %v4363 = vunpack.c.l.b16 %v446
          %v4364 = vunpack.c.l.b16 %v447
          %v4365 = vunpack.c.l.b16 %v448
          %v4366 = vunpack.c.l.b16 %v449
          %v4367 = vunpack.c.l.b16 %v450
          %v4368 = vunpack.c.l.b16 %v451
          %v4369 = vunpack.c.l.b16 %v452
          %v4370 = vunpack.c.l.b16 %v453
          %v4371 = vunpack.c.l.b16 %v454
          %v4372 = vunpack.c.l.b16 %v455
          %v4373 = vunpack.c.l.b16 %v456
          %v4374 = vunpack.c.l.b16 %v457
          %v4375 = vunpack.c.l.b16 %v458
          %v4376 = vunpack.c.l.b16 %v459
          %v4377 = vunpack.c.l.b16 %v460
          %v4378 = vunpack.c.l.b16 %v461
          %v4379 = vunpack.c.l.b16 %v462
          %v4380 = vunpack.c.l.b16 %v463
          %v4381 = vunpack.c.l.b16 %v464
          %v4382 = vunpack.c.l.b16 %v465
          %v4383 = vunpack.c.l.b16 %v466
          %v4384 = vunpack.c.l.b16 %v467
          %v4385 = vunpack.c.l.b16 %v468
          %v4386 = vunpack.c.l.b16 %v469
          %v4387 = vunpack.c.l.b16 %v470
          %v4388 = vunpack.c.l.b16 %v471
          %v4389 = vunpack.c.l.b16 %v472
          %v4390 = vunpack.c.l.b16 %v473
          %v4391 = vunpack.c.l.b16 %v474
          %v4392 = vunpack.c.l.b16 %v475
          %v4393 = vunpack.c.l.b16 %v476
          %v4394 = vunpack.c.l.b16 %v477
          %v4395 = vunpack.c.l.b16 %v478
          %v4396 = vunpack.c.l.b16 %v479
          %v4397 = vunpack.c.l.b16 %v480
          %v4398 = vunpack.c.l.b16 %v481
          %v4399 = vunpack.c.l.b16 %v482
          %v4400 = vunpack.c.l.b16 %v483
          %v4401 = vunpack.c.l.b16 %v484
          %v4402 = vunpack.c.l.b16 %v485
          %v4403 = vunpack.c.l.b16 %v486
          %v4404 = vunpack.c.l.b16 %v487
          %v4405 = vunpack.c.l.b16 %v488
          %v4406 = vunpack.c.l.b16 %v489
          %v4407 = vunpack.c.l.b16 %v490
          %v4408 = vunpack.c.l.b16 %v491
          %v4409 = vunpack.c.l.b16 %v492
          %v4410 = vunpack.c.l.b16 %v493
          %v4411 = vunpack.c.l.b16 %v494
          %v4412 = vunpack.c.l.b16 %v495
          %v4413 = vunpack.c.l.b16 %v496
          %v4414 = vunpack.c.l.b16 %v497
          %v4415 = vunpack.c.l.b16 %v498
          %v4416 = vunpack.c.l.b16 %v499
          %v4417 = vunpack.c.l.b16 %v500
          %v4418 = vunpack.c.l.b16 %v501
          %v4419 = vunpack.c.l.b16 %v502
          %v4420 = vunpack.c.l.b16 %v503
          %v4421 = vunpack.c.l.b16 %v504
          %v4422 = vunpack.c.l.b16 %v505
          %v4423 = vunpack.c.l.b16 %v506
          %v4424 = vunpack.c.l.b16 %v507
          %v4425 = vunpack.c.l.b16 %v508
          %v4426 = vunpack.c.l.b16 %v509
          %v4427 = vunpack.c.l.b16 %v510
          %v4428 = vunpack.c.l.b16 %v511
          %v4429 = vunpack.c.l.b16 %v512
          %v4430 = vunpack.c.l.b16 %v513
          %v4431 = vunpack.c.l.b16 %v514
          %v4432 = vunpack.c.l.b16 %v515
          %v4433 = vunpack.c.l.b16 %v516
          %v4434 = vunpack.c.l.b16 %v517
          %v4435 = vunpack.c.l.b16 %v518
          %v4436 = vunpack.c.l.b16 %v519
          %v4437 = vunpack.c.l.b16 %v520
          %v4438 = vunpack.c.l.b16 %v521
          %v4439 = vunpack.c.l.b16 %v522
          %v4440 = vunpack.c.l.b16 %v523
          %v4441 = vunpack.c.l.b16 %v524
          %v4442 = vunpack.c.l.b16 %v525
          %v4443 = vunpack.c.l.b16 %v526
          %v4444 = vunpack.c.l.b16 %v527
          %v4445 = vunpack.c.l.b16 %v528
          %v4446 = vunpack.c.l.b16 %v529
          %v4447 = vunpack.c.l.b16 %v530
          %v4448 = vunpack.c.l.b16 %v531
          %v4449 = vunpack.c.l.b16 %v532
          %v4450 = vunpack.c.l.b16 %v533
          %v4451 = vunpack.c.l.b16 %v534
          %v4452 = vunpack.c.l.b16 %v535
          %v4453 = vunpack.c.l.b16 %v536
          %v4454 = vunpack.c.l.b16 %v537
          %v4455 = vunpack.c.l.b16 %v538
          %v4456 = vunpack.c.l.b16 %v539
          %v4457 = vunpack.c.l.b16 %v540
          %v4458 = vunpack.c.l.b16 %v541
          %v4459 = vunpack.c.l.b16 %v542
          %v4460 = vunpack.c.l.b16 %v543
          %v4461 = vunpack.c.l.b16 %v544
          %v4462 = vunpack.c.l.b16 %v545
          %v4463 = vunpack.c.l.b16 %v546
          %v4464 = vunpack.c.l.b16 %v547
          %v4465 = vunpack.c.l.b16 %v548
          %v4466 = vunpack.c.l.b16 %v549
          %v4467 = vunpack.c.l.b16 %v550
          %v4468 = vunpack.c.l.b16 %v551
          %v4469 = vunpack.c.l.b16 %v552
          %v4470 = vunpack.c.l.b16 %v553
          %v4471 = vunpack.c.l.b16 %v554
          %v4472 = vunpack.c.l.b16 %v555
          %v4473 = vunpack.c.l.b16 %v556
          %v4474 = vunpack.c.l.b16 %v557
          %v4475 = vunpack.c.l.b16 %v558
          %v4476 = vunpack.c.l.b16 %v559
          %v4477 = vunpack.c.l.b16 %v560
          %v4478 = vunpack.c.l.b16 %v561
          %v4479 = vunpack.c.l.b16 %v562
          %v4480 = vunpack.c.l.b16 %v563
          %v4481 = vunpack.c.l.b16 %v564
          %v4482 = vunpack.c.l.b16 %v565
          %v4483 = vunpack.c.l.b16 %v566
          %v4484 = vunpack.c.l.b16 %v567
          %v4485 = vunpack.c.l.b16 %v568
          %v4486 = vunpack.c.l.b16 %v569
          %v4487 = vunpack.c.l.b16 %v570
          %v4488 = vunpack.c.l.b16 %v571
          %v4489 = vunpack.c.l.b16 %v572
          %v4490 = vunpack.c.l.b16 %v573
          %v4491 = vunpack.c.l.b16 %v574
          %v4492 = vunpack.c.l.b16 %v575
          %v4493 = vunpack.c.l.b16 %v576
          %v4494 = vunpack.c.l.b16 %v577
          %v4495 = vunpack.c.l.b16 %v578
          %v4496 = vunpack.c.l.b16 %v579
          %v4497 = vunpack.c.l.b16 %v580
          %v4498 = vunpack.c.l.b16 %v581
          %v4499 = vunpack.c.l.b16 %v582
          %v4500 = vunpack.c.l.b16 %v583
          %v4501 = vunpack.c.l.b16 %v584
          %v4502 = vunpack.c.l.b16 %v585
          %v4503 = vunpack.c.l.b16 %v586
          %v4504 = vunpack.c.l.b16 %v587
          %v4505 = vunpack.c.l.b16 %v588
          %v4506 = vunpack.c.l.b16 %v589
          %v4507 = vunpack.c.l.b16 %v590
          %v4508 = vunpack.c.l.b16 %v591
          %v4509 = vunpack.c.l.b16 %v592
          %v4510 = vunpack.c.l.b16 %v593
          %v4511 = vunpack.c.l.b16 %v594
          %v4512 = vunpack.c.l.b16 %v595
          %v4513 = vunpack.c.l.b16 %v596
          %v4514 = vunpack.c.l.b16 %v597
          %v4515 = vunpack.c.l.b16 %v598
          %v4516 = vunpack.c.l.b16 %v599
          %v4517 = vunpack.c.l.b16 %v600
          %v4518 = vunpack.c.l.b16 %v601
          %v4519 = vunpack.c.l.b16 %v602
          %v4520 = vunpack.c.l.b16 %v603
          %v4521 = vunpack.c.l.b16 %v604
          %v4522 = vunpack.c.l.b16 %v605
          %v4523 = vunpack.c.l.b16 %v606
          %v4524 = vunpack.c.l.b16 %v607
          %v4525 = vunpack.c.l.b16 %v608
          %v4526 = vunpack.c.l.b16 %v609
          %v4527 = vunpack.c.l.b16 %v610
          %v4528 = vunpack.c.l.b16 %v611
          %v4529 = vpack.c.b16 %v4274, %v4273
          %v4530 = vpack.c.b16 %v4276, %v4275
          %v4531 = vpack.c.b16 %v4278, %v4277
          %v4532 = vpack.c.b16 %v4280, %v4279
          %v4533 = vpack.c.b16 %v4282, %v4281
          %v4534 = vpack.c.b16 %v4284, %v4283
          %v4535 = vpack.c.b16 %v4286, %v4285
          %v4536 = vpack.c.b16 %v4288, %v4287
          %v4537 = vpack.c.b16 %v4290, %v4289
          %v4538 = vpack.c.b16 %v4292, %v4291
          %v4539 = vpack.c.b16 %v4294, %v4293
          %v4540 = vpack.c.b16 %v4296, %v4295
          %v4541 = vpack.c.b16 %v4298, %v4297
          %v4542 = vpack.c.b16 %v4300, %v4299
          %v4543 = vpack.c.b16 %v4302, %v4301
          %v4544 = vpack.c.b16 %v4304, %v4303
          %v4545 = vpack.c.b16 %v4306, %v4305
          %v4546 = vpack.c.b16 %v4308, %v4307
          %v4547 = vpack.c.b16 %v4310, %v4309
          %v4548 = vpack.c.b16 %v4312, %v4311
          %v4549 = vpack.c.b16 %v4314, %v4313
          %v4550 = vpack.c.b16 %v4316, %v4315
          %v4551 = vpack.c.b16 %v4318, %v4317
          %v4552 = vpack.c.b16 %v4320, %v4319
          %v4553 = vpack.c.b16 %v4322, %v4321
          %v4554 = vpack.c.b16 %v4324, %v4323
          %v4555 = vpack.c.b16 %v4326, %v4325
          %v4556 = vpack.c.b16 %v4328, %v4327
          %v4557 = vpack.c.b16 %v4330, %v4329
          %v4558 = vpack.c.b16 %v4332, %v4331
          %v4559 = vpack.c.b16 %v4334, %v4333
          %v4560 = vpack.c.b16 %v4336, %v4335
          %v4561 = vpack.c.b16 %v4338, %v4337
          %v4562 = vpack.c.b16 %v4340, %v4339
          %v4563 = vpack.c.b16 %v4342, %v4341
          %v4564 = vpack.c.b16 %v4344, %v4343
          %v4565 = vpack.c.b16 %v4346, %v4345
          %v4566 = vpack.c.b16 %v4348, %v4347
          %v4567 = vpack.c.b16 %v4350, %v4349
          %v4568 = vpack.c.b16 %v4352, %v4351
          %v4569 = vpack.c.b16 %v4354, %v4353
          %v4570 = vpack.c.b16 %v4356, %v4355
          %v4571 = vpack.c.b16 %v4358, %v4357
          %v4572 = vpack.c.b16 %v4360, %v4359
          %v4573 = vpack.c.b16 %v4362, %v4361
          %v4574 = vpack.c.b16 %v4364, %v4363
          %v4575 = vpack.c.b16 %v4366, %v4365
          %v4576 = vpack.c.b16 %v4368, %v4367
          %v4577 = vpack.c.b16 %v4370, %v4369
          %v4578 = vpack.c.b16 %v4372, %v4371
          %v4579 = vpack.c.b16 %v4374, %v4373
          %v4580 = vpack.c.b16 %v4376, %v4375
          %v4581 = vpack.c.b16 %v4378, %v4377
          %v4582 = vpack.c.b16 %v4380, %v4379
          %v4583 = vpack.c.b16 %v4382, %v4381
          %v4584 = vpack.c.b16 %v4384, %v4383
          %v4585 = vpack.c.b16 %v4386, %v4385
          %v4586 = vpack.c.b16 %v4388, %v4387
          %v4587 = vpack.c.b16 %v4390, %v4389
          %v4588 = vpack.c.b16 %v4392, %v4391
          %v4589 = vpack.c.b16 %v4394, %v4393
          %v4590 = vpack.c.b16 %v4396, %v4395
          %v4591 = vpack.c.b16 %v4398, %v4397
          %v4592 = vpack.c.b16 %v4400, %v4399
          %v4593 = vpack.c.b16 %v4402, %v4401
          %v4594 = vpack.c.b16 %v4404, %v4403
          %v4595 = vpack.c.b16 %v4406, %v4405
          %v4596 = vpack.c.b16 %v4408, %v4407
          %v4597 = vpack.c.b16 %v4410, %v4409
          %v4598 = vpack.c.b16 %v4412, %v4411
          %v4599 = vpack.c.b16 %v4414, %v4413
          %v4600 = vpack.c.b16 %v4416, %v4415
          %v4601 = vpack.c.b16 %v4418, %v4417
          %v4602 = vpack.c.b16 %v4420, %v4419
          %v4603 = vpack.c.b16 %v4422, %v4421
          %v4604 = vpack.c.b16 %v4424, %v4423
          %v4605 = vpack.c.b16 %v4426, %v4425
          %v4606 = vpack.c.b16 %v4428, %v4427
          %v4607 = vpack.c.b16 %v4430, %v4429
          %v4608 = vpack.c.b16 %v4432, %v4431
          %v4609 = vpack.c.b16 %v4434, %v4433
          %v4610 = vpack.c.b16 %v4436, %v4435
          %v4611 = vpack.c.b16 %v4438, %v4437
          %v4612 = vpack.c.b16 %v4440, %v4439
          %v4613 = vpack.c.b16 %v4442, %v4441
          %v4614 = vpack.c.b16 %v4444, %v4443
          %v4615 = vpack.c.b16 %v4446, %v4445
          %v4616 = vpack.c.b16 %v4448, %v4447
          %v4617 = vpack.c.b16 %v4450, %v4449
          %v4618 = vpack.c.b16 %v4452, %v4451
          %v4619 = vpack.c.b16 %v4454, %v4453
          %v4620 = vpack.c.b16 %v4456, %v4455
          %v4621 = vpack.c.b16 %v4458, %v4457
          %v4622 = vpack.c.b16 %v4460, %v4459
          %v4623 = vpack.c.b16 %v4462, %v4461
          %v4624 = vpack.c.b16 %v4464, %v4463
          %v4625 = vpack.c.b16 %v4466, %v4465
          %v4626 = vpack.c.b16 %v4468, %v4467
          %v4627 = vpack.c.b16 %v4470, %v4469
          %v4628 = vpack.c.b16 %v4472, %v4471
          %v4629 = vpack.c.b16 %v4474, %v4473
          %v4630 = vpack.c.b16 %v4476, %v4475
          %v4631 = vpack.c.b16 %v4478, %v4477
          %v4632 = vpack.c.b16 %v4480, %v4479
          %v4633 = vpack.c.b16 %v4482, %v4481
          %v4634 = vpack.c.b16 %v4484, %v4483
          %v4635 = vpack.c.b16 %v4486, %v4485
          %v4636 = vpack.c.b16 %v4488, %v4487
          %v4637 = vpack.c.b16 %v4490, %v4489
          %v4638 = vpack.c.b16 %v4492, %v4491
          %v4639 = vpack.c.b16 %v4494, %v4493
          %v4640 = vpack.c.b16 %v4496, %v4495
          %v4641 = vpack.c.b16 %v4498, %v4497
          %v4642 = vpack.c.b16 %v4500, %v4499
          %v4643 = vpack.c.b16 %v4502, %v4501
          %v4644 = vpack.c.b16 %v4504, %v4503
          %v4645 = vpack.c.b16 %v4506, %v4505
          %v4646 = vpack.c.b16 %v4508, %v4507
          %v4647 = vpack.c.b16 %v4510, %v4509
          %v4648 = vpack.c.b16 %v4512, %v4511
          %v4649 = vpack.c.b16 %v4514, %v4513
          %v4650 = vpack.c.b16 %v4516, %v4515
          %v4651 = vpack.c.b16 %v4518, %v4517
          %v4652 = vpack.c.b16 %v4520, %v4519
          %v4653 = vpack.c.b16 %v4522, %v4521
          %v4654 = vpack.c.b16 %v4524, %v4523
          %v4655 = vpack.c.b16 %v4526, %v4525
          %v4656 = vpack.c.b16 %v4528, %v4527
          %4785 = vmatprep.subr.bf16.mxu0 0
          %4786 = vmatpush1.bf16.msra.mxu0 %v4529
          %4787 = vmatprep.subr.bf16.mxu0 0
          %4788 = vmatpush1.bf16.msra.mxu0 %v4530
          %4789 = vmatprep.subr.bf16.mxu0 0
          %4790 = vmatpush1.bf16.msra.mxu0 %v4531
          %4791 = vmatprep.subr.bf16.mxu0 0
          %4792 = vmatpush1.bf16.msra.mxu0 %v4532
          %4793 = vmatprep.subr.bf16.mxu0 0
          %4794 = vmatpush1.bf16.msra.mxu0 %v4533
          %4795 = vmatprep.subr.bf16.mxu0 0
          %4796 = vmatpush1.bf16.msra.mxu0 %v4534
          %4797 = vmatprep.subr.bf16.mxu0 0
          %4798 = vmatpush1.bf16.msra.mxu0 %v4535
          %4799 = vmatprep.subr.bf16.mxu0 0
          %4800 = vmatpush1.bf16.msra.mxu0 %v4536
          %4801 = vmatprep.subr.bf16.mxu0 0
          %4802 = vmatpush1.bf16.msra.mxu0 %v4537
          %4803 = vmatprep.subr.bf16.mxu0 0
          %4804 = vmatpush1.bf16.msra.mxu0 %v4538
          %4805 = vmatprep.subr.bf16.mxu0 0
          %4806 = vmatpush1.bf16.msra.mxu0 %v4539
          %4807 = vmatprep.subr.bf16.mxu0 0
          %4808 = vmatpush1.bf16.msra.mxu0 %v4540
          %4809 = vmatprep.subr.bf16.mxu0 0
          %4810 = vmatpush1.bf16.msra.mxu0 %v4541
          %4811 = vmatprep.subr.bf16.mxu0 0
          %4812 = vmatpush1.bf16.msra.mxu0 %v4542
          %4813 = vmatprep.subr.bf16.mxu0 0
          %4814 = vmatpush1.bf16.msra.mxu0 %v4543
          %4815 = vmatprep.subr.bf16.mxu0 0
          %4816 = vmatpush1.bf16.msra.mxu0 %v4544
          %4817 = vmatprep.mubr.bf16.mxu0 %v3986
          %4818 = vmatmul.mubr.bf16.gmra.mrb[0].mxu0 %v3985
          %v4819 = vpop.f32.mrb[0].mxu0
          %v4820 = vadd.f32 0.0, %v4819
          %v4821 = vpop.f32.mrb[0].mxu0
          %v4822 = vpop.f32.mrb[0].mxu0
          %v4823 = vpop.f32.mrb[0].mxu0
          %4824 = vdwg.mxu0
          %4825 = vmatprep.subr.bf16.mxu0 0
          %4826 = vmatpush1.bf16.msra.mxu0 %v4545
          %4827 = vmatprep.subr.bf16.mxu0 0
          %4828 = vmatpush1.bf16.msra.mxu0 %v4546
          %4829 = vmatprep.subr.bf16.mxu0 0
          %4830 = vmatpush1.bf16.msra.mxu0 %v4547
          %4831 = vmatprep.subr.bf16.mxu0 0
          %4832 = vmatpush1.bf16.msra.mxu0 %v4548
          %4833 = vmatprep.subr.bf16.mxu0 0
          %4834 = vmatpush1.bf16.msra.mxu0 %v4549
          %4835 = vmatprep.subr.bf16.mxu0 0
          %4836 = vmatpush1.bf16.msra.mxu0 %v4550
          %4837 = vmatprep.subr.bf16.mxu0 0
          %4838 = vmatpush1.bf16.msra.mxu0 %v4551
          %4839 = vmatprep.subr.bf16.mxu0 0
          %4840 = vmatpush1.bf16.msra.mxu0 %v4552
          %4841 = vmatprep.subr.bf16.mxu0 0
          %4842 = vmatpush1.bf16.msra.mxu0 %v4553
          %4843 = vmatprep.subr.bf16.mxu0 0
          %4844 = vmatpush1.bf16.msra.mxu0 %v4554
          %4845 = vmatprep.subr.bf16.mxu0 0
          %4846 = vmatpush1.bf16.msra.mxu0 %v4555
          %4847 = vmatprep.subr.bf16.mxu0 0
          %4848 = vmatpush1.bf16.msra.mxu0 %v4556
          %4849 = vmatprep.subr.bf16.mxu0 0
          %4850 = vmatpush1.bf16.msra.mxu0 %v4557
          %4851 = vmatprep.subr.bf16.mxu0 0
          %4852 = vmatpush1.bf16.msra.mxu0 %v4558
          %4853 = vmatprep.subr.bf16.mxu0 0
          %4854 = vmatpush1.bf16.msra.mxu0 %v4559
          %4855 = vmatprep.subr.bf16.mxu0 0
          %4856 = vmatpush1.bf16.msra.mxu0 %v4560
          %4857 = vmatprep.mubr.bf16.mxu0 %v3988
          %4858 = vmatmul.mubr.bf16.gmra.mrb[0].mxu0 %v3987
          %v4859 = vpop.f32.mrb[0].mxu0
          %v4860 = vadd.f32 %v4820, %v4859
          %v4861 = vpop.f32.mrb[0].mxu0
          %v4862 = vpop.f32.mrb[0].mxu0
          %v4863 = vpop.f32.mrb[0].mxu0
          %4864 = vdwg.mxu0
          %4865 = vmatprep.subr.bf16.mxu0 0
          %4866 = vmatpush1.bf16.msra.mxu0 %v4561
          %4867 = vmatprep.subr.bf16.mxu0 0
          %4868 = vmatpush1.bf16.msra.mxu0 %v4562
          %4869 = vmatprep.subr.bf16.mxu0 0
          %4870 = vmatpush1.bf16.msra.mxu0 %v4563
          %4871 = vmatprep.subr.bf16.mxu0 0
          %4872 = vmatpush1.bf16.msra.mxu0 %v4564
          %4873 = vmatprep.subr.bf16.mxu0 0
          %4874 = vmatpush1.bf16.msra.mxu0 %v4565
          %4875 = vmatprep.subr.bf16.mxu0 0
          %4876 = vmatpush1.bf16.msra.mxu0 %v4566
          %4877 = vmatprep.subr.bf16.mxu0 0
          %4878 = vmatpush1.bf16.msra.mxu0 %v4567
          %4879 = vmatprep.subr.bf16.mxu0 0
          %4880 = vmatpush1.bf16.msra.mxu0 %v4568
          %4881 = vmatprep.subr.bf16.mxu0 0
          %4882 = vmatpush1.bf16.msra.mxu0 %v4569
          %4883 = vmatprep.subr.bf16.mxu0 0
          %4884 = vmatpush1.bf16.msra.mxu0 %v4570
          %4885 = vmatprep.subr.bf16.mxu0 0
          %4886 = vmatpush1.bf16.msra.mxu0 %v4571
          %4887 = vmatprep.subr.bf16.mxu0 0
          %4888 = vmatpush1.bf16.msra.mxu0 %v4572
          %4889 = vmatprep.subr.bf16.mxu0 0
          %4890 = vmatpush1.bf16.msra.mxu0 %v4573
          %4891 = vmatprep.subr.bf16.mxu0 0
          %4892 = vmatpush1.bf16.msra.mxu0 %v4574
          %4893 = vmatprep.subr.bf16.mxu0 0
          %4894 = vmatpush1.bf16.msra.mxu0 %v4575
          %4895 = vmatprep.subr.bf16.mxu0 0
          %4896 = vmatpush1.bf16.msra.mxu0 %v4576
          %4897 = vmatprep.mubr.bf16.mxu0 %v3990
          %4898 = vmatmul.mubr.bf16.gmra.mrb[0].mxu0 %v3989
          %v4899 = vpop.f32.mrb[0].mxu0
          %v4900 = vadd.f32 %v4860, %v4899
          %v4901 = vpop.f32.mrb[0].mxu0
          %v4902 = vpop.f32.mrb[0].mxu0
          %v4903 = vpop.f32.mrb[0].mxu0
          %4904 = vdwg.mxu0
          %4905 = vmatprep.subr.bf16.mxu0 0
          %4906 = vmatpush1.bf16.msra.mxu0 %v4577
          %4907 = vmatprep.subr.bf16.mxu0 0
          %4908 = vmatpush1.bf16.msra.mxu0 %v4578
          %4909 = vmatprep.subr.bf16.mxu0 0
          %4910 = vmatpush1.bf16.msra.mxu0 %v4579
          %4911 = vmatprep.subr.bf16.mxu0 0
          %4912 = vmatpush1.bf16.msra.mxu0 %v4580
          %4913 = vmatprep.subr.bf16.mxu0 0
          %4914 = vmatpush1.bf16.msra.mxu0 %v4581
          %4915 = vmatprep.subr.bf16.mxu0 0
          %4916 = vmatpush1.bf16.msra.mxu0 %v4582
          %4917 = vmatprep.subr.bf16.mxu0 0
          %4918 = vmatpush1.bf16.msra.mxu0 %v4583
          %4919 = vmatprep.subr.bf16.mxu0 0
          %4920 = vmatpush1.bf16.msra.mxu0 %v4584
          %4921 = vmatprep.subr.bf16.mxu0 0
          %4922 = vmatpush1.bf16.msra.mxu0 %v4585
          %4923 = vmatprep.subr.bf16.mxu0 0
          %4924 = vmatpush1.bf16.msra.mxu0 %v4586
          %4925 = vmatprep.subr.bf16.mxu0 0
          %4926 = vmatpush1.bf16.msra.mxu0 %v4587
          %4927 = vmatprep.subr.bf16.mxu0 0
          %4928 = vmatpush1.bf16.msra.mxu0 %v4588
          %4929 = vmatprep.subr.bf16.mxu0 0
          %4930 = vmatpush1.bf16.msra.mxu0 %v4589
          %4931 = vmatprep.subr.bf16.mxu0 0
          %4932 = vmatpush1.bf16.msra.mxu0 %v4590
          %4933 = vmatprep.subr.bf16.mxu0 0
          %4934 = vmatpush1.bf16.msra.mxu0 %v4591
          %4935 = vmatprep.subr.bf16.mxu0 0
          %4936 = vmatpush1.bf16.msra.mxu0 %v4592
          %4937 = vmatprep.mubr.bf16.mxu0 %v3992
          %4938 = vmatmul.mubr.bf16.gmra.mrb[0].mxu0 %v3991
          %v4939 = vpop.f32.mrb[0].mxu0
          %v4940 = vadd.f32 %v4900, %v4939
          %v4941 = vpop.f32.mrb[0].mxu0
          %v4942 = vpop.f32.mrb[0].mxu0
          %v4943 = vpop.f32.mrb[0].mxu0
          %4944 = vdwg.mxu0
          %4945 = vmatprep.subr.bf16.mxu0 0
          %4946 = vmatpush1.bf16.msra.mxu0 %v4593
          %4947 = vmatprep.subr.bf16.mxu0 0
          %4948 = vmatpush1.bf16.msra.mxu0 %v4594
          %4949 = vmatprep.subr.bf16.mxu0 0
          %4950 = vmatpush1.bf16.msra.mxu0 %v4595
          %4951 = vmatprep.subr.bf16.mxu0 0
          %4952 = vmatpush1.bf16.msra.mxu0 %v4596
          %4953 = vmatprep.subr.bf16.mxu0 0
          %4954 = vmatpush1.bf16.msra.mxu0 %v4597
          %4955 = vmatprep.subr.bf16.mxu0 0
          %4956 = vmatpush1.bf16.msra.mxu0 %v4598
          %4957 = vmatprep.subr.bf16.mxu0 0
          %4958 = vmatpush1.bf16.msra.mxu0 %v4599
          %4959 = vmatprep.subr.bf16.mxu0 0
          %4960 = vmatpush1.bf16.msra.mxu0 %v4600
          %4961 = vmatprep.subr.bf16.mxu0 0
          %4962 = vmatpush1.bf16.msra.mxu0 %v4601
          %4963 = vmatprep.subr.bf16.mxu0 0
          %4964 = vmatpush1.bf16.msra.mxu0 %v4602
          %4965 = vmatprep.subr.bf16.mxu0 0
          %4966 = vmatpush1.bf16.msra.mxu0 %v4603
          %4967 = vmatprep.subr.bf16.mxu0 0
          %4968 = vmatpush1.bf16.msra.mxu0 %v4604
          %4969 = vmatprep.subr.bf16.mxu0 0
          %4970 = vmatpush1.bf16.msra.mxu0 %v4605
          %4971 = vmatprep.subr.bf16.mxu0 0
          %4972 = vmatpush1.bf16.msra.mxu0 %v4606
          %4973 = vmatprep.subr.bf16.mxu0 0
          %4974 = vmatpush1.bf16.msra.mxu0 %v4607
          %4975 = vmatprep.subr.bf16.mxu0 0
          %4976 = vmatpush1.bf16.msra.mxu0 %v4608
          %4977 = vmatprep.mubr.bf16.mxu0 %v3994
          %4978 = vmatmul.mubr.bf16.gmra.mrb[0].mxu0 %v3993
          %v4979 = vpop.f32.mrb[0].mxu0
          %v4980 = vadd.f32 %v4940, %v4979
          %v4981 = vpop.f32.mrb[0].mxu0
          %v4982 = vpop.f32.mrb[0].mxu0
          %v4983 = vpop.f32.mrb[0].mxu0
          %4984 = vdwg.mxu0
          %4985 = vmatprep.subr.bf16.mxu0 0
          %4986 = vmatpush1.bf16.msra.mxu0 %v4609
          %4987 = vmatprep.subr.bf16.mxu0 0
          %4988 = vmatpush1.bf16.msra.mxu0 %v4610
          %4989 = vmatprep.subr.bf16.mxu0 0
          %4990 = vmatpush1.bf16.msra.mxu0 %v4611
          %4991 = vmatprep.subr.bf16.mxu0 0
          %4992 = vmatpush1.bf16.msra.mxu0 %v4612
          %4993 = vmatprep.subr.bf16.mxu0 0
          %4994 = vmatpush1.bf16.msra.mxu0 %v4613
          %4995 = vmatprep.subr.bf16.mxu0 0
          %4996 = vmatpush1.bf16.msra.mxu0 %v4614
          %4997 = vmatprep.subr.bf16.mxu0 0
          %4998 = vmatpush1.bf16.msra.mxu0 %v4615
          %4999 = vmatprep.subr.bf16.mxu0 0
          %5000 = vmatpush1.bf16.msra.mxu0 %v4616
          %5001 = vmatprep.subr.bf16.mxu0 0
          %5002 = vmatpush1.bf16.msra.mxu0 %v4617
          %5003 = vmatprep.subr.bf16.mxu0 0
          %5004 = vmatpush1.bf16.msra.mxu0 %v4618
          %5005 = vmatprep.subr.bf16.mxu0 0
          %5006 = vmatpush1.bf16.msra.mxu0 %v4619
          %5007 = vmatprep.subr.bf16.mxu0 0
          %5008 = vmatpush1.bf16.msra.mxu0 %v4620
          %5009 = vmatprep.subr.bf16.mxu0 0
          %5010 = vmatpush1.bf16.msra.mxu0 %v4621
          %5011 = vmatprep.subr.bf16.mxu0 0
          %5012 = vmatpush1.bf16.msra.mxu0 %v4622
          %5013 = vmatprep.subr.bf16.mxu0 0
          %5014 = vmatpush1.bf16.msra.mxu0 %v4623
          %5015 = vmatprep.subr.bf16.mxu0 0
          %5016 = vmatpush1.bf16.msra.mxu0 %v4624
          %5017 = vmatprep.mubr.bf16.mxu0 %v3996
          %5018 = vmatmul.mubr.bf16.gmra.mrb[0].mxu0 %v3995
          %v5019 = vpop.f32.mrb[0].mxu0
          %v5020 = vadd.f32 %v4980, %v5019
          %v5021 = vpop.f32.mrb[0].mxu0
          %v5022 = vpop.f32.mrb[0].mxu0
          %v5023 = vpop.f32.mrb[0].mxu0
          %5024 = vdwg.mxu0
          %5025 = vmatprep.subr.bf16.mxu0 0
          %5026 = vmatpush1.bf16.msra.mxu0 %v4625
          %5027 = vmatprep.subr.bf16.mxu0 0
          %5028 = vmatpush1.bf16.msra.mxu0 %v4626
          %5029 = vmatprep.subr.bf16.mxu0 0
          %5030 = vmatpush1.bf16.msra.mxu0 %v4627
          %5031 = vmatprep.subr.bf16.mxu0 0
          %5032 = vmatpush1.bf16.msra.mxu0 %v4628
          %5033 = vmatprep.subr.bf16.mxu0 0
          %5034 = vmatpush1.bf16.msra.mxu0 %v4629
          %5035 = vmatprep.subr.bf16.mxu0 0
          %5036 = vmatpush1.bf16.msra.mxu0 %v4630
          %5037 = vmatprep.subr.bf16.mxu0 0
          %5038 = vmatpush1.bf16.msra.mxu0 %v4631
          %5039 = vmatprep.subr.bf16.mxu0 0
          %5040 = vmatpush1.bf16.msra.mxu0 %v4632
          %5041 = vmatprep.subr.bf16.mxu0 0
          %5042 = vmatpush1.bf16.msra.mxu0 %v4633
          %5043 = vmatprep.subr.bf16.mxu0 0
          %5044 = vmatpush1.bf16.msra.mxu0 %v4634
          %5045 = vmatprep.subr.bf16.mxu0 0
          %5046 = vmatpush1.bf16.msra.mxu0 %v4635
          %5047 = vmatprep.subr.bf16.mxu0 0
          %5048 = vmatpush1.bf16.msra.mxu0 %v4636
          %5049 = vmatprep.subr.bf16.mxu0 0
          %5050 = vmatpush1.bf16.msra.mxu0 %v4637
          %5051 = vmatprep.subr.bf16.mxu0 0
          %5052 = vmatpush1.bf16.msra.mxu0 %v4638
          %5053 = vmatprep.subr.bf16.mxu0 0
          %5054 = vmatpush1.bf16.msra.mxu0 %v4639
          %5055 = vmatprep.subr.bf16.mxu0 0
          %5056 = vmatpush1.bf16.msra.mxu0 %v4640
          %5057 = vmatprep.mubr.bf16.mxu0 %v3998
          %5058 = vmatmul.mubr.bf16.gmra.mrb[0].mxu0 %v3997
          %v5059 = vpop.f32.mrb[0].mxu0
          %v5060 = vadd.f32 %v5020, %v5059
          %v5061 = vpop.f32.mrb[0].mxu0
          %v5062 = vpop.f32.mrb[0].mxu0
          %v5063 = vpop.f32.mrb[0].mxu0
          %5064 = vdwg.mxu0
          %5065 = vmatprep.subr.bf16.mxu0 0
          %5066 = vmatpush1.bf16.msra.mxu0 %v4641
          %5067 = vmatprep.subr.bf16.mxu0 0
          %5068 = vmatpush1.bf16.msra.mxu0 %v4642
          %5069 = vmatprep.subr.bf16.mxu0 0
          %5070 = vmatpush1.bf16.msra.mxu0 %v4643
          %5071 = vmatprep.subr.bf16.mxu0 0
          %5072 = vmatpush1.bf16.msra.mxu0 %v4644
          %5073 = vmatprep.subr.bf16.mxu0 0
          %5074 = vmatpush1.bf16.msra.mxu0 %v4645
          %5075 = vmatprep.subr.bf16.mxu0 0
          %5076 = vmatpush1.bf16.msra.mxu0 %v4646
          %5077 = vmatprep.subr.bf16.mxu0 0
          %5078 = vmatpush1.bf16.msra.mxu0 %v4647
          %5079 = vmatprep.subr.bf16.mxu0 0
          %5080 = vmatpush1.bf16.msra.mxu0 %v4648
          %5081 = vmatprep.subr.bf16.mxu0 0
          %5082 = vmatpush1.bf16.msra.mxu0 %v4649
          %5083 = vmatprep.subr.bf16.mxu0 0
          %5084 = vmatpush1.bf16.msra.mxu0 %v4650
          %5085 = vmatprep.subr.bf16.mxu0 0
          %5086 = vmatpush1.bf16.msra.mxu0 %v4651
          %5087 = vmatprep.subr.bf16.mxu0 0
          %5088 = vmatpush1.bf16.msra.mxu0 %v4652
          %5089 = vmatprep.subr.bf16.mxu0 0
          %5090 = vmatpush1.bf16.msra.mxu0 %v4653
          %5091 = vmatprep.subr.bf16.mxu0 0
          %5092 = vmatpush1.bf16.msra.mxu0 %v4654
          %5093 = vmatprep.subr.bf16.mxu0 0
          %5094 = vmatpush1.bf16.msra.mxu0 %v4655
          %5095 = vmatprep.subr.bf16.mxu0 0
          %5096 = vmatpush1.bf16.msra.mxu0 %v4656
          %5097 = vmatprep.mubr.bf16.mxu0 %v4000
          %5098 = vmatmul.mubr.bf16.gmra.mrb[0].mxu0 %v3999
          %v5099 = vpop.f32.mrb[0].mxu0
          %v5100 = vadd.f32 %v5060, %v5099
          %v5101 = vpop.f32.mrb[0].mxu0
          %v5102 = vpop.f32.mrb[0].mxu0
          %v5103 = vpop.f32.mrb[0].mxu0
          %5104 = vdwg.mxu0
          %v5105 = vadd.f32 %v619, %v5100
          %5106 = vmatprep.subr.bf16.mxu0 0
          %5107 = vmatpush1.bf16.xpose.msra.mxu0 %v1961
          %5108 = vmatprep.subr.bf16.mxu0 0
          %5109 = vmatpush1.bf16.xpose.msra.mxu0 %v1964
          %5110 = vmatprep.subr.bf16.mxu0 0
          %5111 = vmatpush1.bf16.xpose.msra.mxu0 %v1967
          %5112 = vmatprep.subr.bf16.mxu0 0
          %5113 = vmatpush1.bf16.xpose.msra.mxu0 %v1970
          %5114 = vmatprep.subr.bf16.mxu0 0
          %5115 = vmatpush1.bf16.xpose.msra.mxu0 0
          %5116 = vmatprep.subr.bf16.mxu0 0
          %5117 = vmatpush1.bf16.xpose.msra.mxu0 0
          %5118 = vmatprep.subr.bf16.mxu0 0
          %5119 = vmatpush1.bf16.xpose.msra.mxu0 0
          %5120 = vmatprep.subr.bf16.mxu0 0
          %5121 = vmatpush1.bf16.xpose.msra.mxu0 0
          %5122 = vmatprep.subr.bf16.mxu0 0
          %5123 = vmatpush1.bf16.xpose.msra.mxu0 0
          %5124 = vmatprep.subr.bf16.mxu0 0
          %5125 = vmatpush1.bf16.xpose.msra.mxu0 0
          %5126 = vmatprep.subr.bf16.mxu0 0
          %5127 = vmatpush1.bf16.xpose.msra.mxu0 0
          %5128 = vmatprep.subr.bf16.mxu0 0
          %5129 = vmatpush1.bf16.xpose.msra.mxu0 0
          %5130 = vmatprep.subr.bf16.mxu0 0
          %5131 = vmatpush1.bf16.xpose.msra.mxu0 0
          %5132 = vmatprep.subr.bf16.mxu0 0
          %5133 = vmatpush1.bf16.xpose.msra.mxu0 0
          %5134 = vmatprep.subr.bf16.mxu0 0
          %5135 = vmatpush1.bf16.xpose.msra.mxu0 0
          %5136 = vmatprep.subr.bf16.mxu0 0
          %5137 = vmatpush1.bf16.xpose.msra.mxu0 0
          %5138 = vmatprep.mubr.bf16.mxu0 0
          %5139 = vmatmul.mubr.bf16.gmra.mrb[0].mxu0 %v1973
          %v5140 = vpop.f32.mrb[0].mxu0
          %v5141 = vadd.f32 0.0, %v5140
          %v5142 = vpop.f32.mrb[0].mxu0
          %v5143 = vpop.f32.mrb[0].mxu0
          %v5144 = vadd.f32 0.0, %v5143
          %v5145 = vpop.f32.mrb[0].mxu0
          %5146 = vmatprep.mubr.bf16.mxu0 0
          %5147 = vmatmul.mubr.bf16.gmra.mrb[0].mxu0 %v1976
          %v5148 = vpop.f32.mrb[0].mxu0
          %v5149 = vadd.f32 0.0, %v5148
          %v5150 = vpop.f32.mrb[0].mxu0
          %v5151 = vpop.f32.mrb[0].mxu0
          %v5152 = vadd.f32 0.0, %v5151
          %v5153 = vpop.f32.mrb[0].mxu0
          %5154 = vmatprep.mubr.bf16.mxu0 0
          %5155 = vmatmul.mubr.bf16.gmra.mrb[0].mxu0 %v1979
          %v5156 = vpop.f32.mrb[0].mxu0
          %v5157 = vadd.f32 0.0, %v5156
          %v5158 = vpop.f32.mrb[0].mxu0
          %v5159 = vpop.f32.mrb[0].mxu0
          %v5160 = vadd.f32 0.0, %v5159
          %v5161 = vpop.f32.mrb[0].mxu0
          %5162 = vmatprep.mubr.bf16.mxu0 0
          %5163 = vmatmul.mubr.bf16.gmra.mrb[0].mxu0 %v1982
          %v5164 = vpop.f32.mrb[0].mxu0
          %v5165 = vadd.f32 0.0, %v5164
          %v5166 = vpop.f32.mrb[0].mxu0
          %v5167 = vpop.f32.mrb[0].mxu0
          %v5168 = vadd.f32 0.0, %v5167
          %v5169 = vpop.f32.mrb[0].mxu0
          %5170 = vmatprep.mubr.bf16.mxu0 0
          %5171 = vmatmul.mubr.bf16.gmra.mrb[0].mxu0 %v1985
          %v5172 = vpop.f32.mrb[0].mxu0
          %v5173 = vadd.f32 0.0, %v5172
          %v5174 = vpop.f32.mrb[0].mxu0
          %v5175 = vpop.f32.mrb[0].mxu0
          %v5176 = vadd.f32 0.0, %v5175
          %v5177 = vpop.f32.mrb[0].mxu0
          %5178 = vmatprep.mubr.bf16.mxu0 0
          %5179 = vmatmul.mubr.bf16.gmra.mrb[0].mxu0 %v1988
          %v5180 = vpop.f32.mrb[0].mxu0
          %v5181 = vadd.f32 0.0, %v5180
          %v5182 = vpop.f32.mrb[0].mxu0
          %v5183 = vpop.f32.mrb[0].mxu0
          %v5184 = vadd.f32 0.0, %v5183
          %v5185 = vpop.f32.mrb[0].mxu0
          %5186 = vmatprep.mubr.bf16.mxu0 0
          %5187 = vmatmul.mubr.bf16.gmra.mrb[0].mxu0 %v1991
          %v5188 = vpop.f32.mrb[0].mxu0
          %v5189 = vadd.f32 0.0, %v5188
          %v5190 = vpop.f32.mrb[0].mxu0
          %v5191 = vpop.f32.mrb[0].mxu0
          %v5192 = vadd.f32 0.0, %v5191
          %v5193 = vpop.f32.mrb[0].mxu0
          %5194 = vmatprep.mubr.bf16.mxu0 0
          %5195 = vmatmul.mubr.bf16.gmra.mrb[0].mxu0 %v1994
          %v5196 = vpop.f32.mrb[0].mxu0
          %v5197 = vadd.f32 0.0, %v5196
          %v5198 = vpop.f32.mrb[0].mxu0
          %v5199 = vpop.f32.mrb[0].mxu0
          %v5200 = vadd.f32 0.0, %v5199
          %v5201 = vpop.f32.mrb[0].mxu0
          %5202 = vmatprep.mubr.bf16.mxu0 0
          %5203 = vmatmul.mubr.bf16.gmra.mrb[0].mxu0 %v1997
          %v5204 = vpop.f32.mrb[0].mxu0
          %v5205 = vadd.f32 0.0, %v5204
          %v5206 = vpop.f32.mrb[0].mxu0
          %v5207 = vpop.f32.mrb[0].mxu0
          %v5208 = vadd.f32 0.0, %v5207
          %v5209 = vpop.f32.mrb[0].mxu0
          %5210 = vmatprep.mubr.bf16.mxu0 0
          %5211 = vmatmul.mubr.bf16.gmra.mrb[0].mxu0 %v2000
          %v5212 = vpop.f32.mrb[0].mxu0
          %v5213 = vadd.f32 0.0, %v5212
          %v5214 = vpop.f32.mrb[0].mxu0
          %v5215 = vpop.f32.mrb[0].mxu0
          %v5216 = vadd.f32 0.0, %v5215
          %v5217 = vpop.f32.mrb[0].mxu0
          %5218 = vmatprep.mubr.bf16.mxu0 0
          %5219 = vmatmul.mubr.bf16.gmra.mrb[0].mxu0 %v2003
          %v5220 = vpop.f32.mrb[0].mxu0
          %v5221 = vadd.f32 0.0, %v5220
          %v5222 = vpop.f32.mrb[0].mxu0
          %v5223 = vpop.f32.mrb[0].mxu0
          %v5224 = vadd.f32 0.0, %v5223
          %v5225 = vpop.f32.mrb[0].mxu0
          %5226 = vmatprep.mubr.bf16.mxu0 0
          %5227 = vmatmul.mubr.bf16.gmra.mrb[0].mxu0 %v2006
          %v5228 = vpop.f32.mrb[0].mxu0
          %v5229 = vadd.f32 0.0, %v5228
          %v5230 = vpop.f32.mrb[0].mxu0
          %v5231 = vpop.f32.mrb[0].mxu0
          %v5232 = vadd.f32 0.0, %v5231
          %v5233 = vpop.f32.mrb[0].mxu0
          %5234 = vmatprep.mubr.bf16.mxu0 0
          %5235 = vmatmul.mubr.bf16.gmra.mrb[0].mxu0 %v2009
          %v5236 = vpop.f32.mrb[0].mxu0
          %v5237 = vadd.f32 0.0, %v5236
          %v5238 = vpop.f32.mrb[0].mxu0
          %v5239 = vpop.f32.mrb[0].mxu0
          %v5240 = vadd.f32 0.0, %v5239
          %v5241 = vpop.f32.mrb[0].mxu0
          %5242 = vmatprep.mubr.bf16.mxu0 0
          %5243 = vmatmul.mubr.bf16.gmra.mrb[0].mxu0 %v2012
          %v5244 = vpop.f32.mrb[0].mxu0
          %v5245 = vadd.f32 0.0, %v5244
          %v5246 = vpop.f32.mrb[0].mxu0
          %v5247 = vpop.f32.mrb[0].mxu0
          %v5248 = vadd.f32 0.0, %v5247
          %v5249 = vpop.f32.mrb[0].mxu0
          %5250 = vmatprep.mubr.bf16.mxu0 0
          %5251 = vmatmul.mubr.bf16.gmra.mrb[0].mxu0 %v2015
          %v5252 = vpop.f32.mrb[0].mxu0
          %v5253 = vadd.f32 0.0, %v5252
          %v5254 = vpop.f32.mrb[0].mxu0
          %v5255 = vpop.f32.mrb[0].mxu0
          %v5256 = vadd.f32 0.0, %v5255
          %v5257 = vpop.f32.mrb[0].mxu0
          %5258 = vmatprep.mubr.bf16.mxu0 0
          %5259 = vmatmul.mubr.bf16.gmra.mrb[0].mxu0 %v2018
          %v5260 = vpop.f32.mrb[0].mxu0
          %v5261 = vadd.f32 0.0, %v5260
          %v5262 = vpop.f32.mrb[0].mxu0
          %v5263 = vpop.f32.mrb[0].mxu0
          %v5264 = vadd.f32 0.0, %v5263
          %v5265 = vpop.f32.mrb[0].mxu0
          %5266 = vmatprep.mubr.bf16.mxu0 0
          %5267 = vmatmul.mubr.bf16.gmra.mrb[0].mxu0 %v2021
          %v5268 = vpop.f32.mrb[0].mxu0
          %v5269 = vadd.f32 0.0, %v5268
          %v5270 = vpop.f32.mrb[0].mxu0
          %v5271 = vpop.f32.mrb[0].mxu0
          %v5272 = vadd.f32 0.0, %v5271
          %v5273 = vpop.f32.mrb[0].mxu0
          %5274 = vmatprep.mubr.bf16.mxu0 0
          %5275 = vmatmul.mubr.bf16.gmra.mrb[0].mxu0 %v2024
          %v5276 = vpop.f32.mrb[0].mxu0
          %v5277 = vadd.f32 0.0, %v5276
          %v5278 = vpop.f32.mrb[0].mxu0
          %v5279 = vpop.f32.mrb[0].mxu0
          %v5280 = vadd.f32 0.0, %v5279
          %v5281 = vpop.f32.mrb[0].mxu0
          %5282 = vmatprep.mubr.bf16.mxu0 0
          %5283 = vmatmul.mubr.bf16.gmra.mrb[0].mxu0 %v2027
          %v5284 = vpop.f32.mrb[0].mxu0
          %v5285 = vadd.f32 0.0, %v5284
          %v5286 = vpop.f32.mrb[0].mxu0
          %v5287 = vpop.f32.mrb[0].mxu0
          %v5288 = vadd.f32 0.0, %v5287
          %v5289 = vpop.f32.mrb[0].mxu0
          %5290 = vmatprep.mubr.bf16.mxu0 0
          %5291 = vmatmul.mubr.bf16.gmra.mrb[0].mxu0 %v2030
          %v5292 = vpop.f32.mrb[0].mxu0
          %v5293 = vadd.f32 0.0, %v5292
          %v5294 = vpop.f32.mrb[0].mxu0
          %v5295 = vpop.f32.mrb[0].mxu0
          %v5296 = vadd.f32 0.0, %v5295
          %v5297 = vpop.f32.mrb[0].mxu0
          %5298 = vmatprep.mubr.bf16.mxu0 0
          %5299 = vmatmul.mubr.bf16.gmra.mrb[0].mxu0 %v2033
          %v5300 = vpop.f32.mrb[0].mxu0
          %v5301 = vadd.f32 0.0, %v5300
          %v5302 = vpop.f32.mrb[0].mxu0
          %v5303 = vpop.f32.mrb[0].mxu0
          %v5304 = vadd.f32 0.0, %v5303
          %v5305 = vpop.f32.mrb[0].mxu0
          %5306 = vmatprep.mubr.bf16.mxu0 0
          %5307 = vmatmul.mubr.bf16.gmra.mrb[0].mxu0 %v2036
          %v5308 = vpop.f32.mrb[0].mxu0
          %v5309 = vadd.f32 0.0, %v5308
          %v5310 = vpop.f32.mrb[0].mxu0
          %v5311 = vpop.f32.mrb[0].mxu0
          %v5312 = vadd.f32 0.0, %v5311
          %v5313 = vpop.f32.mrb[0].mxu0
          %5314 = vmatprep.mubr.bf16.mxu0 0
          %5315 = vmatmul.mubr.bf16.gmra.mrb[0].mxu0 %v2039
          %v5316 = vpop.f32.mrb[0].mxu0
          %v5317 = vadd.f32 0.0, %v5316
          %v5318 = vpop.f32.mrb[0].mxu0
          %v5319 = vpop.f32.mrb[0].mxu0
          %v5320 = vadd.f32 0.0, %v5319
          %v5321 = vpop.f32.mrb[0].mxu0
          %5322 = vmatprep.mubr.bf16.mxu0 0
          %5323 = vmatmul.mubr.bf16.gmra.mrb[0].mxu0 %v2042
          %v5324 = vpop.f32.mrb[0].mxu0
          %v5325 = vadd.f32 0.0, %v5324
          %v5326 = vpop.f32.mrb[0].mxu0
          %v5327 = vpop.f32.mrb[0].mxu0
          %v5328 = vadd.f32 0.0, %v5327
          %v5329 = vpop.f32.mrb[0].mxu0
          %5330 = vmatprep.mubr.bf16.mxu0 0
          %5331 = vmatmul.mubr.bf16.gmra.mrb[0].mxu0 %v2045
          %v5332 = vpop.f32.mrb[0].mxu0
          %v5333 = vadd.f32 0.0, %v5332
          %v5334 = vpop.f32.mrb[0].mxu0
          %v5335 = vpop.f32.mrb[0].mxu0
          %v5336 = vadd.f32 0.0, %v5335
          %v5337 = vpop.f32.mrb[0].mxu0
          %5338 = vmatprep.mubr.bf16.mxu0 0
          %5339 = vmatmul.mubr.bf16.gmra.mrb[0].mxu0 %v2048
          %v5340 = vpop.f32.mrb[0].mxu0
          %v5341 = vadd.f32 0.0, %v5340
          %v5342 = vpop.f32.mrb[0].mxu0
          %v5343 = vpop.f32.mrb[0].mxu0
          %v5344 = vadd.f32 0.0, %v5343
          %v5345 = vpop.f32.mrb[0].mxu0
          %5346 = vmatprep.mubr.bf16.mxu0 0
          %5347 = vmatmul.mubr.bf16.gmra.mrb[0].mxu0 %v2051
          %v5348 = vpop.f32.mrb[0].mxu0
          %v5349 = vadd.f32 0.0, %v5348
          %v5350 = vpop.f32.mrb[0].mxu0
          %v5351 = vpop.f32.mrb[0].mxu0
          %v5352 = vadd.f32 0.0, %v5351
          %v5353 = vpop.f32.mrb[0].mxu0
          %5354 = vmatprep.mubr.bf16.mxu0 0
          %5355 = vmatmul.mubr.bf16.gmra.mrb[0].mxu0 %v2054
          %v5356 = vpop.f32.mrb[0].mxu0
          %v5357 = vadd.f32 0.0, %v5356
          %v5358 = vpop.f32.mrb[0].mxu0
          %v5359 = vpop.f32.mrb[0].mxu0
          %v5360 = vadd.f32 0.0, %v5359
          %v5361 = vpop.f32.mrb[0].mxu0
          %5362 = vmatprep.mubr.bf16.mxu0 0
          %5363 = vmatmul.mubr.bf16.gmra.mrb[0].mxu0 %v2057
          %v5364 = vpop.f32.mrb[0].mxu0
          %v5365 = vadd.f32 0.0, %v5364
          %v5366 = vpop.f32.mrb[0].mxu0
          %v5367 = vpop.f32.mrb[0].mxu0
          %v5368 = vadd.f32 0.0, %v5367
          %v5369 = vpop.f32.mrb[0].mxu0
          %5370 = vmatprep.mubr.bf16.mxu0 0
          %5371 = vmatmul.mubr.bf16.gmra.mrb[0].mxu0 %v2060
          %v5372 = vpop.f32.mrb[0].mxu0
          %v5373 = vadd.f32 0.0, %v5372
          %v5374 = vpop.f32.mrb[0].mxu0
          %v5375 = vpop.f32.mrb[0].mxu0
          %v5376 = vadd.f32 0.0, %v5375
          %v5377 = vpop.f32.mrb[0].mxu0
          %5378 = vmatprep.mubr.bf16.mxu0 0
          %5379 = vmatmul.mubr.bf16.gmra.mrb[0].mxu0 %v2063
          %v5380 = vpop.f32.mrb[0].mxu0
          %v5381 = vadd.f32 0.0, %v5380
          %v5382 = vpop.f32.mrb[0].mxu0
          %v5383 = vpop.f32.mrb[0].mxu0
          %v5384 = vadd.f32 0.0, %v5383
          %v5385 = vpop.f32.mrb[0].mxu0
          %5386 = vmatprep.mubr.bf16.mxu0 0
          %5387 = vmatmul.mubr.bf16.gmra.mrb[0].mxu0 %v2066
          %v5388 = vpop.f32.mrb[0].mxu0
          %v5389 = vadd.f32 0.0, %v5388
          %v5390 = vpop.f32.mrb[0].mxu0
          %v5391 = vpop.f32.mrb[0].mxu0
          %v5392 = vadd.f32 0.0, %v5391
          %v5393 = vpop.f32.mrb[0].mxu0
          %5394 = vmatprep.mubr.bf16.mxu0 0
          %5395 = vmatmul.mubr.bf16.gmra.mrb[0].mxu0 %v2069
          %v5396 = vpop.f32.mrb[0].mxu0
          %v5397 = vadd.f32 0.0, %v5396
          %v5398 = vpop.f32.mrb[0].mxu0
          %v5399 = vpop.f32.mrb[0].mxu0
          %v5400 = vadd.f32 0.0, %v5399
          %v5401 = vpop.f32.mrb[0].mxu0
          %5402 = vmatprep.mubr.bf16.mxu0 0
          %5403 = vmatmul.mubr.bf16.gmra.mrb[0].mxu0 %v2072
          %v5404 = vpop.f32.mrb[0].mxu0
          %v5405 = vadd.f32 0.0, %v5404
          %v5406 = vpop.f32.mrb[0].mxu0
          %v5407 = vpop.f32.mrb[0].mxu0
          %v5408 = vadd.f32 0.0, %v5407
          %v5409 = vpop.f32.mrb[0].mxu0
          %5410 = vmatprep.mubr.bf16.mxu0 0
          %5411 = vmatmul.mubr.bf16.gmra.mrb[0].mxu0 %v2075
          %v5412 = vpop.f32.mrb[0].mxu0
          %v5413 = vadd.f32 0.0, %v5412
          %v5414 = vpop.f32.mrb[0].mxu0
          %v5415 = vpop.f32.mrb[0].mxu0
          %v5416 = vadd.f32 0.0, %v5415
          %v5417 = vpop.f32.mrb[0].mxu0
          %5418 = vmatprep.mubr.bf16.mxu0 0
          %5419 = vmatmul.mubr.bf16.gmra.mrb[0].mxu0 %v2078
          %v5420 = vpop.f32.mrb[0].mxu0
          %v5421 = vadd.f32 0.0, %v5420
          %v5422 = vpop.f32.mrb[0].mxu0
          %v5423 = vpop.f32.mrb[0].mxu0
          %v5424 = vadd.f32 0.0, %v5423
          %v5425 = vpop.f32.mrb[0].mxu0
          %5426 = vmatprep.mubr.bf16.mxu0 0
          %5427 = vmatmul.mubr.bf16.gmra.mrb[0].mxu0 %v2081
          %v5428 = vpop.f32.mrb[0].mxu0
          %v5429 = vadd.f32 0.0, %v5428
          %v5430 = vpop.f32.mrb[0].mxu0
          %v5431 = vpop.f32.mrb[0].mxu0
          %v5432 = vadd.f32 0.0, %v5431
          %v5433 = vpop.f32.mrb[0].mxu0
          %5434 = vmatprep.mubr.bf16.mxu0 0
          %5435 = vmatmul.mubr.bf16.gmra.mrb[0].mxu0 %v2084
          %v5436 = vpop.f32.mrb[0].mxu0
          %v5437 = vadd.f32 0.0, %v5436
          %v5438 = vpop.f32.mrb[0].mxu0
          %v5439 = vpop.f32.mrb[0].mxu0
          %v5440 = vadd.f32 0.0, %v5439
          %v5441 = vpop.f32.mrb[0].mxu0
          %5442 = vmatprep.mubr.bf16.mxu0 0
          %5443 = vmatmul.mubr.bf16.gmra.mrb[0].mxu0 %v2087
          %v5444 = vpop.f32.mrb[0].mxu0
          %v5445 = vadd.f32 0.0, %v5444
          %v5446 = vpop.f32.mrb[0].mxu0
          %v5447 = vpop.f32.mrb[0].mxu0
          %v5448 = vadd.f32 0.0, %v5447
          %v5449 = vpop.f32.mrb[0].mxu0
          %5450 = vmatprep.mubr.bf16.mxu0 0
          %5451 = vmatmul.mubr.bf16.gmra.mrb[0].mxu0 %v2090
          %v5452 = vpop.f32.mrb[0].mxu0
          %v5453 = vadd.f32 0.0, %v5452
          %v5454 = vpop.f32.mrb[0].mxu0
          %v5455 = vpop.f32.mrb[0].mxu0
          %v5456 = vadd.f32 0.0, %v5455
          %v5457 = vpop.f32.mrb[0].mxu0
          %5458 = vmatprep.mubr.bf16.mxu0 0
          %5459 = vmatmul.mubr.bf16.gmra.mrb[0].mxu0 %v2093
          %v5460 = vpop.f32.mrb[0].mxu0
          %v5461 = vadd.f32 0.0, %v5460
          %v5462 = vpop.f32.mrb[0].mxu0
          %v5463 = vpop.f32.mrb[0].mxu0
          %v5464 = vadd.f32 0.0, %v5463
          %v5465 = vpop.f32.mrb[0].mxu0
          %5466 = vmatprep.mubr.bf16.mxu0 0
          %5467 = vmatmul.mubr.bf16.gmra.mrb[0].mxu0 %v2096
          %v5468 = vpop.f32.mrb[0].mxu0
          %v5469 = vadd.f32 0.0, %v5468
          %v5470 = vpop.f32.mrb[0].mxu0
          %v5471 = vpop.f32.mrb[0].mxu0
          %v5472 = vadd.f32 0.0, %v5471
          %v5473 = vpop.f32.mrb[0].mxu0
          %5474 = vmatprep.mubr.bf16.mxu0 0
          %5475 = vmatmul.mubr.bf16.gmra.mrb[0].mxu0 %v2099
          %v5476 = vpop.f32.mrb[0].mxu0
          %v5477 = vadd.f32 0.0, %v5476
          %v5478 = vpop.f32.mrb[0].mxu0
          %v5479 = vpop.f32.mrb[0].mxu0
          %v5480 = vadd.f32 0.0, %v5479
          %v5481 = vpop.f32.mrb[0].mxu0
          %5482 = vmatprep.mubr.bf16.mxu0 0
          %5483 = vmatmul.mubr.bf16.gmra.mrb[0].mxu0 %v2102
          %v5484 = vpop.f32.mrb[0].mxu0
          %v5485 = vadd.f32 0.0, %v5484
          %v5486 = vpop.f32.mrb[0].mxu0
          %v5487 = vpop.f32.mrb[0].mxu0
          %v5488 = vadd.f32 0.0, %v5487
          %v5489 = vpop.f32.mrb[0].mxu0
          %5490 = vmatprep.mubr.bf16.mxu0 0
          %5491 = vmatmul.mubr.bf16.gmra.mrb[0].mxu0 %v2105
          %v5492 = vpop.f32.mrb[0].mxu0
          %v5493 = vadd.f32 0.0, %v5492
          %v5494 = vpop.f32.mrb[0].mxu0
          %v5495 = vpop.f32.mrb[0].mxu0
          %v5496 = vadd.f32 0.0, %v5495
          %v5497 = vpop.f32.mrb[0].mxu0
          %5498 = vmatprep.mubr.bf16.mxu0 0
          %5499 = vmatmul.mubr.bf16.gmra.mrb[0].mxu0 %v2108
          %v5500 = vpop.f32.mrb[0].mxu0
          %v5501 = vadd.f32 0.0, %v5500
          %v5502 = vpop.f32.mrb[0].mxu0
          %v5503 = vpop.f32.mrb[0].mxu0
          %v5504 = vadd.f32 0.0, %v5503
          %v5505 = vpop.f32.mrb[0].mxu0
          %5506 = vmatprep.mubr.bf16.mxu0 0
          %5507 = vmatmul.mubr.bf16.gmra.mrb[0].mxu0 %v2111
          %v5508 = vpop.f32.mrb[0].mxu0
          %v5509 = vadd.f32 0.0, %v5508
          %v5510 = vpop.f32.mrb[0].mxu0
          %v5511 = vpop.f32.mrb[0].mxu0
          %v5512 = vadd.f32 0.0, %v5511
          %v5513 = vpop.f32.mrb[0].mxu0
          %5514 = vmatprep.mubr.bf16.mxu0 0
          %5515 = vmatmul.mubr.bf16.gmra.mrb[0].mxu0 %v2114
          %v5516 = vpop.f32.mrb[0].mxu0
          %v5517 = vadd.f32 0.0, %v5516
          %v5518 = vpop.f32.mrb[0].mxu0
          %v5519 = vpop.f32.mrb[0].mxu0
          %v5520 = vadd.f32 0.0, %v5519
          %v5521 = vpop.f32.mrb[0].mxu0
          %5522 = vmatprep.mubr.bf16.mxu0 0
          %5523 = vmatmul.mubr.bf16.gmra.mrb[0].mxu0 %v2117
          %v5524 = vpop.f32.mrb[0].mxu0
          %v5525 = vadd.f32 0.0, %v5524
          %v5526 = vpop.f32.mrb[0].mxu0
          %v5527 = vpop.f32.mrb[0].mxu0
          %v5528 = vadd.f32 0.0, %v5527
          %v5529 = vpop.f32.mrb[0].mxu0
          %5530 = vmatprep.mubr.bf16.mxu0 0
          %5531 = vmatmul.mubr.bf16.gmra.mrb[0].mxu0 %v2120
          %v5532 = vpop.f32.mrb[0].mxu0
          %v5533 = vadd.f32 0.0, %v5532
          %v5534 = vpop.f32.mrb[0].mxu0
          %v5535 = vpop.f32.mrb[0].mxu0
          %v5536 = vadd.f32 0.0, %v5535
          %v5537 = vpop.f32.mrb[0].mxu0
          %5538 = vmatprep.mubr.bf16.mxu0 0
          %5539 = vmatmul.mubr.bf16.gmra.mrb[0].mxu0 %v2123
          %v5540 = vpop.f32.mrb[0].mxu0
          %v5541 = vadd.f32 0.0, %v5540
          %v5542 = vpop.f32.mrb[0].mxu0
          %v5543 = vpop.f32.mrb[0].mxu0
          %v5544 = vadd.f32 0.0, %v5543
          %v5545 = vpop.f32.mrb[0].mxu0
          %5546 = vmatprep.mubr.bf16.mxu0 0
          %5547 = vmatmul.mubr.bf16.gmra.mrb[0].mxu0 %v2126
          %v5548 = vpop.f32.mrb[0].mxu0
          %v5549 = vadd.f32 0.0, %v5548
          %v5550 = vpop.f32.mrb[0].mxu0
          %v5551 = vpop.f32.mrb[0].mxu0
          %v5552 = vadd.f32 0.0, %v5551
          %v5553 = vpop.f32.mrb[0].mxu0
          %5554 = vmatprep.mubr.bf16.mxu0 0
          %5555 = vmatmul.mubr.bf16.gmra.mrb[0].mxu0 %v2129
          %v5556 = vpop.f32.mrb[0].mxu0
          %v5557 = vadd.f32 0.0, %v5556
          %v5558 = vpop.f32.mrb[0].mxu0
          %v5559 = vpop.f32.mrb[0].mxu0
          %v5560 = vadd.f32 0.0, %v5559
          %v5561 = vpop.f32.mrb[0].mxu0
          %5562 = vmatprep.mubr.bf16.mxu0 0
          %5563 = vmatmul.mubr.bf16.gmra.mrb[0].mxu0 %v2132
          %v5564 = vpop.f32.mrb[0].mxu0
          %v5565 = vadd.f32 0.0, %v5564
          %v5566 = vpop.f32.mrb[0].mxu0
          %v5567 = vpop.f32.mrb[0].mxu0
          %v5568 = vadd.f32 0.0, %v5567
          %v5569 = vpop.f32.mrb[0].mxu0
          %5570 = vmatprep.mubr.bf16.mxu0 0
          %5571 = vmatmul.mubr.bf16.gmra.mrb[0].mxu0 %v2135
          %v5572 = vpop.f32.mrb[0].mxu0
          %v5573 = vadd.f32 0.0, %v5572
          %v5574 = vpop.f32.mrb[0].mxu0
          %v5575 = vpop.f32.mrb[0].mxu0
          %v5576 = vadd.f32 0.0, %v5575
          %v5577 = vpop.f32.mrb[0].mxu0
          %5578 = vmatprep.mubr.bf16.mxu0 0
          %5579 = vmatmul.mubr.bf16.gmra.mrb[0].mxu0 %v2138
          %v5580 = vpop.f32.mrb[0].mxu0
          %v5581 = vadd.f32 0.0, %v5580
          %v5582 = vpop.f32.mrb[0].mxu0
          %v5583 = vpop.f32.mrb[0].mxu0
          %v5584 = vadd.f32 0.0, %v5583
          %v5585 = vpop.f32.mrb[0].mxu0
          %5586 = vmatprep.mubr.bf16.mxu0 0
          %5587 = vmatmul.mubr.bf16.gmra.mrb[0].mxu0 %v2141
          %v5588 = vpop.f32.mrb[0].mxu0
          %v5589 = vadd.f32 0.0, %v5588
          %v5590 = vpop.f32.mrb[0].mxu0
          %v5591 = vpop.f32.mrb[0].mxu0
          %v5592 = vadd.f32 0.0, %v5591
          %v5593 = vpop.f32.mrb[0].mxu0
          %5594 = vmatprep.mubr.bf16.mxu0 0
          %5595 = vmatmul.mubr.bf16.gmra.mrb[0].mxu0 %v2144
          %v5596 = vpop.f32.mrb[0].mxu0
          %v5597 = vadd.f32 0.0, %v5596
          %v5598 = vpop.f32.mrb[0].mxu0
          %v5599 = vpop.f32.mrb[0].mxu0
          %v5600 = vadd.f32 0.0, %v5599
          %v5601 = vpop.f32.mrb[0].mxu0
          %5602 = vmatprep.mubr.bf16.mxu0 0
          %5603 = vmatmul.mubr.bf16.gmra.mrb[0].mxu0 %v2147
          %v5604 = vpop.f32.mrb[0].mxu0
          %v5605 = vadd.f32 0.0, %v5604
          %v5606 = vpop.f32.mrb[0].mxu0
          %v5607 = vpop.f32.mrb[0].mxu0
          %v5608 = vadd.f32 0.0, %v5607
          %v5609 = vpop.f32.mrb[0].mxu0
          %5610 = vmatprep.mubr.bf16.mxu0 0
          %5611 = vmatmul.mubr.bf16.gmra.mrb[0].mxu0 %v2150
          %v5612 = vpop.f32.mrb[0].mxu0
          %v5613 = vadd.f32 0.0, %v5612
          %v5614 = vpop.f32.mrb[0].mxu0
          %v5615 = vpop.f32.mrb[0].mxu0
          %v5616 = vadd.f32 0.0, %v5615
          %v5617 = vpop.f32.mrb[0].mxu0
          %5618 = vmatprep.mubr.bf16.mxu0 0
          %5619 = vmatmul.mubr.bf16.gmra.mrb[0].mxu0 %v2153
          %v5620 = vpop.f32.mrb[0].mxu0
          %v5621 = vadd.f32 0.0, %v5620
          %v5622 = vpop.f32.mrb[0].mxu0
          %v5623 = vpop.f32.mrb[0].mxu0
          %v5624 = vadd.f32 0.0, %v5623
          %v5625 = vpop.f32.mrb[0].mxu0
          %5626 = vmatprep.mubr.bf16.mxu0 0
          %5627 = vmatmul.mubr.bf16.gmra.mrb[0].mxu0 %v2156
          %v5628 = vpop.f32.mrb[0].mxu0
          %v5629 = vadd.f32 0.0, %v5628
          %v5630 = vpop.f32.mrb[0].mxu0
          %v5631 = vpop.f32.mrb[0].mxu0
          %v5632 = vadd.f32 0.0, %v5631
          %v5633 = vpop.f32.mrb[0].mxu0
          %5634 = vmatprep.mubr.bf16.mxu0 0
          %5635 = vmatmul.mubr.bf16.gmra.mrb[0].mxu0 %v2159
          %v5636 = vpop.f32.mrb[0].mxu0
          %v5637 = vadd.f32 0.0, %v5636
          %v5638 = vpop.f32.mrb[0].mxu0
          %v5639 = vpop.f32.mrb[0].mxu0
          %v5640 = vadd.f32 0.0, %v5639
          %v5641 = vpop.f32.mrb[0].mxu0
          %5642 = vmatprep.mubr.bf16.mxu0 0
          %5643 = vmatmul.mubr.bf16.gmra.mrb[0].mxu0 %v2162
          %v5644 = vpop.f32.mrb[0].mxu0
          %v5645 = vadd.f32 0.0, %v5644
          %v5646 = vpop.f32.mrb[0].mxu0
          %v5647 = vpop.f32.mrb[0].mxu0
          %v5648 = vadd.f32 0.0, %v5647
          %v5649 = vpop.f32.mrb[0].mxu0
          %5650 = vmatprep.mubr.bf16.mxu0 0
          %5651 = vmatmul.mubr.bf16.gmra.mrb[0].mxu0 %v2165
          %v5652 = vpop.f32.mrb[0].mxu0
          %v5653 = vadd.f32 0.0, %v5652
          %v5654 = vpop.f32.mrb[0].mxu0
          %v5655 = vpop.f32.mrb[0].mxu0
          %v5656 = vadd.f32 0.0, %v5655
          %v5657 = vpop.f32.mrb[0].mxu0
          %5658 = vmatprep.mubr.bf16.mxu0 0
          %5659 = vmatmul.mubr.bf16.gmra.mrb[0].mxu0 %v2168
          %v5660 = vpop.f32.mrb[0].mxu0
          %v5661 = vadd.f32 0.0, %v5660
          %v5662 = vpop.f32.mrb[0].mxu0
          %v5663 = vpop.f32.mrb[0].mxu0
          %v5664 = vadd.f32 0.0, %v5663
          %v5665 = vpop.f32.mrb[0].mxu0
          %5666 = vmatprep.mubr.bf16.mxu0 0
          %5667 = vmatmul.mubr.bf16.gmra.mrb[0].mxu0 %v2171
          %v5668 = vpop.f32.mrb[0].mxu0
          %v5669 = vadd.f32 0.0, %v5668
          %v5670 = vpop.f32.mrb[0].mxu0
          %v5671 = vpop.f32.mrb[0].mxu0
          %v5672 = vadd.f32 0.0, %v5671
          %v5673 = vpop.f32.mrb[0].mxu0
          %5674 = vmatprep.mubr.bf16.mxu0 0
          %5675 = vmatmul.mubr.bf16.gmra.mrb[0].mxu0 %v2174
          %v5676 = vpop.f32.mrb[0].mxu0
          %v5677 = vadd.f32 0.0, %v5676
          %v5678 = vpop.f32.mrb[0].mxu0
          %v5679 = vpop.f32.mrb[0].mxu0
          %v5680 = vadd.f32 0.0, %v5679
          %v5681 = vpop.f32.mrb[0].mxu0
          %5682 = vmatprep.mubr.bf16.mxu0 0
          %5683 = vmatmul.mubr.bf16.gmra.mrb[0].mxu0 %v2177
          %v5684 = vpop.f32.mrb[0].mxu0
          %v5685 = vadd.f32 0.0, %v5684
          %v5686 = vpop.f32.mrb[0].mxu0
          %v5687 = vpop.f32.mrb[0].mxu0
          %v5688 = vadd.f32 0.0, %v5687
          %v5689 = vpop.f32.mrb[0].mxu0
          %5690 = vmatprep.mubr.bf16.mxu0 0
          %5691 = vmatmul.mubr.bf16.gmra.mrb[0].mxu0 %v2180
          %v5692 = vpop.f32.mrb[0].mxu0
          %v5693 = vadd.f32 0.0, %v5692
          %v5694 = vpop.f32.mrb[0].mxu0
          %v5695 = vpop.f32.mrb[0].mxu0
          %v5696 = vadd.f32 0.0, %v5695
          %v5697 = vpop.f32.mrb[0].mxu0
          %5698 = vmatprep.mubr.bf16.mxu0 0
          %5699 = vmatmul.mubr.bf16.gmra.mrb[0].mxu0 %v2183
          %v5700 = vpop.f32.mrb[0].mxu0
          %v5701 = vadd.f32 0.0, %v5700
          %v5702 = vpop.f32.mrb[0].mxu0
          %v5703 = vpop.f32.mrb[0].mxu0
          %v5704 = vadd.f32 0.0, %v5703
          %v5705 = vpop.f32.mrb[0].mxu0
          %5706 = vmatprep.mubr.bf16.mxu0 0
          %5707 = vmatmul.mubr.bf16.gmra.mrb[0].mxu0 %v2186
          %v5708 = vpop.f32.mrb[0].mxu0
          %v5709 = vadd.f32 0.0, %v5708
          %v5710 = vpop.f32.mrb[0].mxu0
          %v5711 = vpop.f32.mrb[0].mxu0
          %v5712 = vadd.f32 0.0, %v5711
          %v5713 = vpop.f32.mrb[0].mxu0
          %5714 = vmatprep.mubr.bf16.mxu0 0
          %5715 = vmatmul.mubr.bf16.gmra.mrb[0].mxu0 %v2189
          %v5716 = vpop.f32.mrb[0].mxu0
          %v5717 = vadd.f32 0.0, %v5716
          %v5718 = vpop.f32.mrb[0].mxu0
          %v5719 = vpop.f32.mrb[0].mxu0
          %v5720 = vadd.f32 0.0, %v5719
          %v5721 = vpop.f32.mrb[0].mxu0
          %5722 = vmatprep.mubr.bf16.mxu0 0
          %5723 = vmatmul.mubr.bf16.gmra.mrb[0].mxu0 %v2192
          %v5724 = vpop.f32.mrb[0].mxu0
          %v5725 = vadd.f32 0.0, %v5724
          %v5726 = vpop.f32.mrb[0].mxu0
          %v5727 = vpop.f32.mrb[0].mxu0
          %v5728 = vadd.f32 0.0, %v5727
          %v5729 = vpop.f32.mrb[0].mxu0
          %5730 = vmatprep.mubr.bf16.mxu0 0
          %5731 = vmatmul.mubr.bf16.gmra.mrb[0].mxu0 %v2195
          %v5732 = vpop.f32.mrb[0].mxu0
          %v5733 = vadd.f32 0.0, %v5732
          %v5734 = vpop.f32.mrb[0].mxu0
          %v5735 = vpop.f32.mrb[0].mxu0
          %v5736 = vadd.f32 0.0, %v5735
          %v5737 = vpop.f32.mrb[0].mxu0
          %5738 = vmatprep.mubr.bf16.mxu0 0
          %5739 = vmatmul.mubr.bf16.gmra.mrb[0].mxu0 %v2198
          %v5740 = vpop.f32.mrb[0].mxu0
          %v5741 = vadd.f32 0.0, %v5740
          %v5742 = vpop.f32.mrb[0].mxu0
          %v5743 = vpop.f32.mrb[0].mxu0
          %v5744 = vadd.f32 0.0, %v5743
          %v5745 = vpop.f32.mrb[0].mxu0
          %5746 = vmatprep.mubr.bf16.mxu0 0
          %5747 = vmatmul.mubr.bf16.gmra.mrb[0].mxu0 %v2201
          %v5748 = vpop.f32.mrb[0].mxu0
          %v5749 = vadd.f32 0.0, %v5748
          %v5750 = vpop.f32.mrb[0].mxu0
          %v5751 = vpop.f32.mrb[0].mxu0
          %v5752 = vadd.f32 0.0, %v5751
          %v5753 = vpop.f32.mrb[0].mxu0
          %5754 = vmatprep.mubr.bf16.mxu0 0
          %5755 = vmatmul.mubr.bf16.gmra.mrb[0].mxu0 %v2204
          %v5756 = vpop.f32.mrb[0].mxu0
          %v5757 = vadd.f32 0.0, %v5756
          %v5758 = vpop.f32.mrb[0].mxu0
          %v5759 = vpop.f32.mrb[0].mxu0
          %v5760 = vadd.f32 0.0, %v5759
          %v5761 = vpop.f32.mrb[0].mxu0
          %5762 = vmatprep.mubr.bf16.mxu0 0
          %5763 = vmatmul.mubr.bf16.gmra.mrb[0].mxu0 %v2207
          %v5764 = vpop.f32.mrb[0].mxu0
          %v5765 = vadd.f32 0.0, %v5764
          %v5766 = vpop.f32.mrb[0].mxu0
          %v5767 = vpop.f32.mrb[0].mxu0
          %v5768 = vadd.f32 0.0, %v5767
          %v5769 = vpop.f32.mrb[0].mxu0
          %5770 = vmatprep.mubr.bf16.mxu0 0
          %5771 = vmatmul.mubr.bf16.gmra.mrb[0].mxu0 %v2210
          %v5772 = vpop.f32.mrb[0].mxu0
          %v5773 = vadd.f32 0.0, %v5772
          %v5774 = vpop.f32.mrb[0].mxu0
          %v5775 = vpop.f32.mrb[0].mxu0
          %v5776 = vadd.f32 0.0, %v5775
          %v5777 = vpop.f32.mrb[0].mxu0
          %5778 = vmatprep.mubr.bf16.mxu0 0
          %5779 = vmatmul.mubr.bf16.gmra.mrb[0].mxu0 %v2213
          %v5780 = vpop.f32.mrb[0].mxu0
          %v5781 = vadd.f32 0.0, %v5780
          %v5782 = vpop.f32.mrb[0].mxu0
          %v5783 = vpop.f32.mrb[0].mxu0
          %v5784 = vadd.f32 0.0, %v5783
          %v5785 = vpop.f32.mrb[0].mxu0
          %5786 = vmatprep.mubr.bf16.mxu0 0
          %5787 = vmatmul.mubr.bf16.gmra.mrb[0].mxu0 %v2216
          %v5788 = vpop.f32.mrb[0].mxu0
          %v5789 = vadd.f32 0.0, %v5788
          %v5790 = vpop.f32.mrb[0].mxu0
          %v5791 = vpop.f32.mrb[0].mxu0
          %v5792 = vadd.f32 0.0, %v5791
          %v5793 = vpop.f32.mrb[0].mxu0
          %5794 = vmatprep.mubr.bf16.mxu0 0
          %5795 = vmatmul.mubr.bf16.gmra.mrb[0].mxu0 %v2219
          %v5796 = vpop.f32.mrb[0].mxu0
          %v5797 = vadd.f32 0.0, %v5796
          %v5798 = vpop.f32.mrb[0].mxu0
          %v5799 = vpop.f32.mrb[0].mxu0
          %v5800 = vadd.f32 0.0, %v5799
          %v5801 = vpop.f32.mrb[0].mxu0
          %5802 = vmatprep.mubr.bf16.mxu0 0
          %5803 = vmatmul.mubr.bf16.gmra.mrb[0].mxu0 %v2222
          %v5804 = vpop.f32.mrb[0].mxu0
          %v5805 = vadd.f32 0.0, %v5804
          %v5806 = vpop.f32.mrb[0].mxu0
          %v5807 = vpop.f32.mrb[0].mxu0
          %v5808 = vadd.f32 0.0, %v5807
          %v5809 = vpop.f32.mrb[0].mxu0
          %5810 = vmatprep.mubr.bf16.mxu0 0
          %5811 = vmatmul.mubr.bf16.gmra.mrb[0].mxu0 %v2225
          %v5812 = vpop.f32.mrb[0].mxu0
          %v5813 = vadd.f32 0.0, %v5812
          %v5814 = vpop.f32.mrb[0].mxu0
          %v5815 = vpop.f32.mrb[0].mxu0
          %v5816 = vadd.f32 0.0, %v5815
          %v5817 = vpop.f32.mrb[0].mxu0
          %5818 = vmatprep.mubr.bf16.mxu0 0
          %5819 = vmatmul.mubr.bf16.gmra.mrb[0].mxu0 %v2228
          %v5820 = vpop.f32.mrb[0].mxu0
          %v5821 = vadd.f32 0.0, %v5820
          %v5822 = vpop.f32.mrb[0].mxu0
          %v5823 = vpop.f32.mrb[0].mxu0
          %v5824 = vadd.f32 0.0, %v5823
          %v5825 = vpop.f32.mrb[0].mxu0
          %5826 = vmatprep.mubr.bf16.mxu0 0
          %5827 = vmatmul.mubr.bf16.gmra.mrb[0].mxu0 %v2231
          %v5828 = vpop.f32.mrb[0].mxu0
          %v5829 = vadd.f32 0.0, %v5828
          %v5830 = vpop.f32.mrb[0].mxu0
          %v5831 = vpop.f32.mrb[0].mxu0
          %v5832 = vadd.f32 0.0, %v5831
          %v5833 = vpop.f32.mrb[0].mxu0
          %5834 = vmatprep.mubr.bf16.mxu0 0
          %5835 = vmatmul.mubr.bf16.gmra.mrb[0].mxu0 %v2234
          %v5836 = vpop.f32.mrb[0].mxu0
          %v5837 = vadd.f32 0.0, %v5836
          %v5838 = vpop.f32.mrb[0].mxu0
          %v5839 = vpop.f32.mrb[0].mxu0
          %v5840 = vadd.f32 0.0, %v5839
          %v5841 = vpop.f32.mrb[0].mxu0
          %5842 = vmatprep.mubr.bf16.mxu0 0
          %5843 = vmatmul.mubr.bf16.gmra.mrb[0].mxu0 %v2237
          %v5844 = vpop.f32.mrb[0].mxu0
          %v5845 = vadd.f32 0.0, %v5844
          %v5846 = vpop.f32.mrb[0].mxu0
          %v5847 = vpop.f32.mrb[0].mxu0
          %v5848 = vadd.f32 0.0, %v5847
          %v5849 = vpop.f32.mrb[0].mxu0
          %5850 = vmatprep.mubr.bf16.mxu0 0
          %5851 = vmatmul.mubr.bf16.gmra.mrb[0].mxu0 %v2240
          %v5852 = vpop.f32.mrb[0].mxu0
          %v5853 = vadd.f32 0.0, %v5852
          %v5854 = vpop.f32.mrb[0].mxu0
          %v5855 = vpop.f32.mrb[0].mxu0
          %v5856 = vadd.f32 0.0, %v5855
          %v5857 = vpop.f32.mrb[0].mxu0
          %5858 = vmatprep.mubr.bf16.mxu0 0
          %5859 = vmatmul.mubr.bf16.gmra.mrb[0].mxu0 %v2243
          %v5860 = vpop.f32.mrb[0].mxu0
          %v5861 = vadd.f32 0.0, %v5860
          %v5862 = vpop.f32.mrb[0].mxu0
          %v5863 = vpop.f32.mrb[0].mxu0
          %v5864 = vadd.f32 0.0, %v5863
          %v5865 = vpop.f32.mrb[0].mxu0
          %5866 = vmatprep.mubr.bf16.mxu0 0
          %5867 = vmatmul.mubr.bf16.gmra.mrb[0].mxu0 %v2246
          %v5868 = vpop.f32.mrb[0].mxu0
          %v5869 = vadd.f32 0.0, %v5868
          %v5870 = vpop.f32.mrb[0].mxu0
          %v5871 = vpop.f32.mrb[0].mxu0
          %v5872 = vadd.f32 0.0, %v5871
          %v5873 = vpop.f32.mrb[0].mxu0
          %5874 = vmatprep.mubr.bf16.mxu0 0
          %5875 = vmatmul.mubr.bf16.gmra.mrb[0].mxu0 %v2249
          %v5876 = vpop.f32.mrb[0].mxu0
          %v5877 = vadd.f32 0.0, %v5876
          %v5878 = vpop.f32.mrb[0].mxu0
          %v5879 = vpop.f32.mrb[0].mxu0
          %v5880 = vadd.f32 0.0, %v5879
          %v5881 = vpop.f32.mrb[0].mxu0
          %5882 = vmatprep.mubr.bf16.mxu0 0
          %5883 = vmatmul.mubr.bf16.gmra.mrb[0].mxu0 %v2252
          %v5884 = vpop.f32.mrb[0].mxu0
          %v5885 = vadd.f32 0.0, %v5884
          %v5886 = vpop.f32.mrb[0].mxu0
          %v5887 = vpop.f32.mrb[0].mxu0
          %v5888 = vadd.f32 0.0, %v5887
          %v5889 = vpop.f32.mrb[0].mxu0
          %5890 = vmatprep.mubr.bf16.mxu0 0
          %5891 = vmatmul.mubr.bf16.gmra.mrb[0].mxu0 %v2255
          %v5892 = vpop.f32.mrb[0].mxu0
          %v5893 = vadd.f32 0.0, %v5892
          %v5894 = vpop.f32.mrb[0].mxu0
          %v5895 = vpop.f32.mrb[0].mxu0
          %v5896 = vadd.f32 0.0, %v5895
          %v5897 = vpop.f32.mrb[0].mxu0
          %5898 = vmatprep.mubr.bf16.mxu0 0
          %5899 = vmatmul.mubr.bf16.gmra.mrb[0].mxu0 %v2258
          %v5900 = vpop.f32.mrb[0].mxu0
          %v5901 = vadd.f32 0.0, %v5900
          %v5902 = vpop.f32.mrb[0].mxu0
          %v5903 = vpop.f32.mrb[0].mxu0
          %v5904 = vadd.f32 0.0, %v5903
          %v5905 = vpop.f32.mrb[0].mxu0
          %5906 = vmatprep.mubr.bf16.mxu0 0
          %5907 = vmatmul.mubr.bf16.gmra.mrb[0].mxu0 %v2261
          %v5908 = vpop.f32.mrb[0].mxu0
          %v5909 = vadd.f32 0.0, %v5908
          %v5910 = vpop.f32.mrb[0].mxu0
          %v5911 = vpop.f32.mrb[0].mxu0
          %v5912 = vadd.f32 0.0, %v5911
          %v5913 = vpop.f32.mrb[0].mxu0
          %5914 = vmatprep.mubr.bf16.mxu0 0
          %5915 = vmatmul.mubr.bf16.gmra.mrb[0].mxu0 %v2264
          %v5916 = vpop.f32.mrb[0].mxu0
          %v5917 = vadd.f32 0.0, %v5916
          %v5918 = vpop.f32.mrb[0].mxu0
          %v5919 = vpop.f32.mrb[0].mxu0
          %v5920 = vadd.f32 0.0, %v5919
          %v5921 = vpop.f32.mrb[0].mxu0
          %5922 = vmatprep.mubr.bf16.mxu0 0
          %5923 = vmatmul.mubr.bf16.gmra.mrb[0].mxu0 %v2267
          %v5924 = vpop.f32.mrb[0].mxu0
          %v5925 = vadd.f32 0.0, %v5924
          %v5926 = vpop.f32.mrb[0].mxu0
          %v5927 = vpop.f32.mrb[0].mxu0
          %v5928 = vadd.f32 0.0, %v5927
          %v5929 = vpop.f32.mrb[0].mxu0
          %5930 = vmatprep.mubr.bf16.mxu0 0
          %5931 = vmatmul.mubr.bf16.gmra.mrb[0].mxu0 %v2270
          %v5932 = vpop.f32.mrb[0].mxu0
          %v5933 = vadd.f32 0.0, %v5932
          %v5934 = vpop.f32.mrb[0].mxu0
          %v5935 = vpop.f32.mrb[0].mxu0
          %v5936 = vadd.f32 0.0, %v5935
          %v5937 = vpop.f32.mrb[0].mxu0
          %5938 = vmatprep.mubr.bf16.mxu0 0
          %5939 = vmatmul.mubr.bf16.gmra.mrb[0].mxu0 %v2273
          %v5940 = vpop.f32.mrb[0].mxu0
          %v5941 = vadd.f32 0.0, %v5940
          %v5942 = vpop.f32.mrb[0].mxu0
          %v5943 = vpop.f32.mrb[0].mxu0
          %v5944 = vadd.f32 0.0, %v5943
          %v5945 = vpop.f32.mrb[0].mxu0
          %5946 = vmatprep.mubr.bf16.mxu0 0
          %5947 = vmatmul.mubr.bf16.gmra.mrb[0].mxu0 %v2276
          %v5948 = vpop.f32.mrb[0].mxu0
          %v5949 = vadd.f32 0.0, %v5948
          %v5950 = vpop.f32.mrb[0].mxu0
          %v5951 = vpop.f32.mrb[0].mxu0
          %v5952 = vadd.f32 0.0, %v5951
          %v5953 = vpop.f32.mrb[0].mxu0
          %5954 = vmatprep.mubr.bf16.mxu0 0
          %5955 = vmatmul.mubr.bf16.gmra.mrb[0].mxu0 %v2279
          %v5956 = vpop.f32.mrb[0].mxu0
          %v5957 = vadd.f32 0.0, %v5956
          %v5958 = vpop.f32.mrb[0].mxu0
          %v5959 = vpop.f32.mrb[0].mxu0
          %v5960 = vadd.f32 0.0, %v5959
          %v5961 = vpop.f32.mrb[0].mxu0
          %5962 = vmatprep.mubr.bf16.mxu0 0
          %5963 = vmatmul.mubr.bf16.gmra.mrb[0].mxu0 %v2282
          %v5964 = vpop.f32.mrb[0].mxu0
          %v5965 = vadd.f32 0.0, %v5964
          %v5966 = vpop.f32.mrb[0].mxu0
          %v5967 = vpop.f32.mrb[0].mxu0
          %v5968 = vadd.f32 0.0, %v5967
          %v5969 = vpop.f32.mrb[0].mxu0
          %5970 = vmatprep.mubr.bf16.mxu0 0
          %5971 = vmatmul.mubr.bf16.gmra.mrb[0].mxu0 %v2285
          %v5972 = vpop.f32.mrb[0].mxu0
          %v5973 = vadd.f32 0.0, %v5972
          %v5974 = vpop.f32.mrb[0].mxu0
          %v5975 = vpop.f32.mrb[0].mxu0
          %v5976 = vadd.f32 0.0, %v5975
          %v5977 = vpop.f32.mrb[0].mxu0
          %5978 = vmatprep.mubr.bf16.mxu0 0
          %5979 = vmatmul.mubr.bf16.gmra.mrb[0].mxu0 %v2288
          %v5980 = vpop.f32.mrb[0].mxu0
          %v5981 = vadd.f32 0.0, %v5980
          %v5982 = vpop.f32.mrb[0].mxu0
          %v5983 = vpop.f32.mrb[0].mxu0
          %v5984 = vadd.f32 0.0, %v5983
          %v5985 = vpop.f32.mrb[0].mxu0
          %5986 = vmatprep.mubr.bf16.mxu0 0
          %5987 = vmatmul.mubr.bf16.gmra.mrb[0].mxu0 %v2291
          %v5988 = vpop.f32.mrb[0].mxu0
          %v5989 = vadd.f32 0.0, %v5988
          %v5990 = vpop.f32.mrb[0].mxu0
          %v5991 = vpop.f32.mrb[0].mxu0
          %v5992 = vadd.f32 0.0, %v5991
          %v5993 = vpop.f32.mrb[0].mxu0
          %5994 = vmatprep.mubr.bf16.mxu0 0
          %5995 = vmatmul.mubr.bf16.gmra.mrb[0].mxu0 %v2294
          %v5996 = vpop.f32.mrb[0].mxu0
          %v5997 = vadd.f32 0.0, %v5996
          %v5998 = vpop.f32.mrb[0].mxu0
          %v5999 = vpop.f32.mrb[0].mxu0
          %v6000 = vadd.f32 0.0, %v5999
          %v6001 = vpop.f32.mrb[0].mxu0
          %6002 = vmatprep.mubr.bf16.mxu0 0
          %6003 = vmatmul.mubr.bf16.gmra.mrb[0].mxu0 %v2297
          %v6004 = vpop.f32.mrb[0].mxu0
          %v6005 = vadd.f32 0.0, %v6004
          %v6006 = vpop.f32.mrb[0].mxu0
          %v6007 = vpop.f32.mrb[0].mxu0
          %v6008 = vadd.f32 0.0, %v6007
          %v6009 = vpop.f32.mrb[0].mxu0
          %6010 = vmatprep.mubr.bf16.mxu0 0
          %6011 = vmatmul.mubr.bf16.gmra.mrb[0].mxu0 %v2300
          %v6012 = vpop.f32.mrb[0].mxu0
          %v6013 = vadd.f32 0.0, %v6012
          %v6014 = vpop.f32.mrb[0].mxu0
          %v6015 = vpop.f32.mrb[0].mxu0
          %v6016 = vadd.f32 0.0, %v6015
          %v6017 = vpop.f32.mrb[0].mxu0
          %6018 = vmatprep.mubr.bf16.mxu0 0
          %6019 = vmatmul.mubr.bf16.gmra.mrb[0].mxu0 %v2303
          %v6020 = vpop.f32.mrb[0].mxu0
          %v6021 = vadd.f32 0.0, %v6020
          %v6022 = vpop.f32.mrb[0].mxu0
          %v6023 = vpop.f32.mrb[0].mxu0
          %v6024 = vadd.f32 0.0, %v6023
          %v6025 = vpop.f32.mrb[0].mxu0
          %6026 = vmatprep.mubr.bf16.mxu0 0
          %6027 = vmatmul.mubr.bf16.gmra.mrb[0].mxu0 %v2306
          %v6028 = vpop.f32.mrb[0].mxu0
          %v6029 = vadd.f32 0.0, %v6028
          %v6030 = vpop.f32.mrb[0].mxu0
          %v6031 = vpop.f32.mrb[0].mxu0
          %v6032 = vadd.f32 0.0, %v6031
          %v6033 = vpop.f32.mrb[0].mxu0
          %6034 = vmatprep.mubr.bf16.mxu0 0
          %6035 = vmatmul.mubr.bf16.gmra.mrb[0].mxu0 %v2309
          %v6036 = vpop.f32.mrb[0].mxu0
          %v6037 = vadd.f32 0.0, %v6036
          %v6038 = vpop.f32.mrb[0].mxu0
          %v6039 = vpop.f32.mrb[0].mxu0
          %v6040 = vadd.f32 0.0, %v6039
          %v6041 = vpop.f32.mrb[0].mxu0
          %6042 = vmatprep.mubr.bf16.mxu0 0
          %6043 = vmatmul.mubr.bf16.gmra.mrb[0].mxu0 %v2312
          %v6044 = vpop.f32.mrb[0].mxu0
          %v6045 = vadd.f32 0.0, %v6044
          %v6046 = vpop.f32.mrb[0].mxu0
          %v6047 = vpop.f32.mrb[0].mxu0
          %v6048 = vadd.f32 0.0, %v6047
          %v6049 = vpop.f32.mrb[0].mxu0
          %6050 = vmatprep.mubr.bf16.mxu0 0
          %6051 = vmatmul.mubr.bf16.gmra.mrb[0].mxu0 %v2315
          %v6052 = vpop.f32.mrb[0].mxu0
          %v6053 = vadd.f32 0.0, %v6052
          %v6054 = vpop.f32.mrb[0].mxu0
          %v6055 = vpop.f32.mrb[0].mxu0
          %v6056 = vadd.f32 0.0, %v6055
          %v6057 = vpop.f32.mrb[0].mxu0
          %6058 = vmatprep.mubr.bf16.mxu0 0
          %6059 = vmatmul.mubr.bf16.gmra.mrb[0].mxu0 %v2318
          %v6060 = vpop.f32.mrb[0].mxu0
          %v6061 = vadd.f32 0.0, %v6060
          %v6062 = vpop.f32.mrb[0].mxu0
          %v6063 = vpop.f32.mrb[0].mxu0
          %v6064 = vadd.f32 0.0, %v6063
          %v6065 = vpop.f32.mrb[0].mxu0
          %6066 = vmatprep.mubr.bf16.mxu0 0
          %6067 = vmatmul.mubr.bf16.gmra.mrb[0].mxu0 %v2321
          %v6068 = vpop.f32.mrb[0].mxu0
          %v6069 = vadd.f32 0.0, %v6068
          %v6070 = vpop.f32.mrb[0].mxu0
          %v6071 = vpop.f32.mrb[0].mxu0
          %v6072 = vadd.f32 0.0, %v6071
          %v6073 = vpop.f32.mrb[0].mxu0
          %6074 = vmatprep.mubr.bf16.mxu0 0
          %6075 = vmatmul.mubr.bf16.gmra.mrb[0].mxu0 %v2324
          %v6076 = vpop.f32.mrb[0].mxu0
          %v6077 = vadd.f32 0.0, %v6076
          %v6078 = vpop.f32.mrb[0].mxu0
          %v6079 = vpop.f32.mrb[0].mxu0
          %v6080 = vadd.f32 0.0, %v6079
          %v6081 = vpop.f32.mrb[0].mxu0
          %6082 = vmatprep.mubr.bf16.mxu0 0
          %6083 = vmatmul.mubr.bf16.gmra.mrb[0].mxu0 %v2327
          %v6084 = vpop.f32.mrb[0].mxu0
          %v6085 = vadd.f32 0.0, %v6084
          %v6086 = vpop.f32.mrb[0].mxu0
          %v6087 = vpop.f32.mrb[0].mxu0
          %v6088 = vadd.f32 0.0, %v6087
          %v6089 = vpop.f32.mrb[0].mxu0
          %6090 = vmatprep.mubr.bf16.mxu0 0
          %6091 = vmatmul.mubr.bf16.gmra.mrb[0].mxu0 %v2330
          %v6092 = vpop.f32.mrb[0].mxu0
          %v6093 = vadd.f32 0.0, %v6092
          %v6094 = vpop.f32.mrb[0].mxu0
          %v6095 = vpop.f32.mrb[0].mxu0
          %v6096 = vadd.f32 0.0, %v6095
          %v6097 = vpop.f32.mrb[0].mxu0
          %6098 = vmatprep.mubr.bf16.mxu0 0
          %6099 = vmatmul.mubr.bf16.gmra.mrb[0].mxu0 %v2333
          %v6100 = vpop.f32.mrb[0].mxu0
          %v6101 = vadd.f32 0.0, %v6100
          %v6102 = vpop.f32.mrb[0].mxu0
          %v6103 = vpop.f32.mrb[0].mxu0
          %v6104 = vadd.f32 0.0, %v6103
          %v6105 = vpop.f32.mrb[0].mxu0
          %6106 = vmatprep.mubr.bf16.mxu0 0
          %6107 = vmatmul.mubr.bf16.gmra.mrb[0].mxu0 %v2336
          %v6108 = vpop.f32.mrb[0].mxu0
          %v6109 = vadd.f32 0.0, %v6108
          %v6110 = vpop.f32.mrb[0].mxu0
          %v6111 = vpop.f32.mrb[0].mxu0
          %v6112 = vadd.f32 0.0, %v6111
          %v6113 = vpop.f32.mrb[0].mxu0
          %6114 = vmatprep.mubr.bf16.mxu0 0
          %6115 = vmatmul.mubr.bf16.gmra.mrb[0].mxu0 %v2339
          %v6116 = vpop.f32.mrb[0].mxu0
          %v6117 = vadd.f32 0.0, %v6116
          %v6118 = vpop.f32.mrb[0].mxu0
          %v6119 = vpop.f32.mrb[0].mxu0
          %v6120 = vadd.f32 0.0, %v6119
          %v6121 = vpop.f32.mrb[0].mxu0
          %6122 = vmatprep.mubr.bf16.mxu0 0
          %6123 = vmatmul.mubr.bf16.gmra.mrb[0].mxu0 %v2342
          %v6124 = vpop.f32.mrb[0].mxu0
          %v6125 = vadd.f32 0.0, %v6124
          %v6126 = vpop.f32.mrb[0].mxu0
          %v6127 = vpop.f32.mrb[0].mxu0
          %v6128 = vadd.f32 0.0, %v6127
          %v6129 = vpop.f32.mrb[0].mxu0
          %6130 = vmatprep.mubr.bf16.mxu0 0
          %6131 = vmatmul.mubr.bf16.gmra.mrb[0].mxu0 %v2345
          %v6132 = vpop.f32.mrb[0].mxu0
          %v6133 = vadd.f32 0.0, %v6132
          %v6134 = vpop.f32.mrb[0].mxu0
          %v6135 = vpop.f32.mrb[0].mxu0
          %v6136 = vadd.f32 0.0, %v6135
          %v6137 = vpop.f32.mrb[0].mxu0
          %6138 = vmatprep.mubr.bf16.mxu0 0
          %6139 = vmatmul.mubr.bf16.gmra.mrb[0].mxu0 %v2348
          %v6140 = vpop.f32.mrb[0].mxu0
          %v6141 = vadd.f32 0.0, %v6140
          %v6142 = vpop.f32.mrb[0].mxu0
          %v6143 = vpop.f32.mrb[0].mxu0
          %v6144 = vadd.f32 0.0, %v6143
          %v6145 = vpop.f32.mrb[0].mxu0
          %6146 = vmatprep.mubr.bf16.mxu0 0
          %6147 = vmatmul.mubr.bf16.gmra.mrb[0].mxu0 %v2351
          %v6148 = vpop.f32.mrb[0].mxu0
          %v6149 = vadd.f32 0.0, %v6148
          %v6150 = vpop.f32.mrb[0].mxu0
          %v6151 = vpop.f32.mrb[0].mxu0
          %v6152 = vadd.f32 0.0, %v6151
          %v6153 = vpop.f32.mrb[0].mxu0
          %6154 = vmatprep.mubr.bf16.mxu0 0
          %6155 = vmatmul.mubr.bf16.gmra.mrb[0].mxu0 %v2354
          %v6156 = vpop.f32.mrb[0].mxu0
          %v6157 = vadd.f32 0.0, %v6156
          %v6158 = vpop.f32.mrb[0].mxu0
          %v6159 = vpop.f32.mrb[0].mxu0
          %v6160 = vadd.f32 0.0, %v6159
          %v6161 = vpop.f32.mrb[0].mxu0
          %6162 = vdwg.mxu0
          %v6163 = vpack.c.bf16 %v5144, %v5141
          %v6164 = vpack.c.bf16 %v5152, %v5149
          %v6165 = vpack.c.bf16 %v5160, %v5157
          %v6166 = vpack.c.bf16 %v5168, %v5165
          %v6167 = vpack.c.bf16 %v5176, %v5173
          %v6168 = vpack.c.bf16 %v5184, %v5181
          %v6169 = vpack.c.bf16 %v5192, %v5189
          %v6170 = vpack.c.bf16 %v5200, %v5197
          %v6171 = vpack.c.bf16 %v5208, %v5205
          %v6172 = vpack.c.bf16 %v5216, %v5213
          %v6173 = vpack.c.bf16 %v5224, %v5221
          %v6174 = vpack.c.bf16 %v5232, %v5229
          %v6175 = vpack.c.bf16 %v5240, %v5237
          %v6176 = vpack.c.bf16 %v5248, %v5245
          %v6177 = vpack.c.bf16 %v5256, %v5253
          %v6178 = vpack.c.bf16 %v5264, %v5261
          %v6179 = vpack.c.bf16 %v5272, %v5269
          %v6180 = vpack.c.bf16 %v5280, %v5277
          %v6181 = vpack.c.bf16 %v5288, %v5285
          %v6182 = vpack.c.bf16 %v5296, %v5293
          %v6183 = vpack.c.bf16 %v5304, %v5301
          %v6184 = vpack.c.bf16 %v5312, %v5309
          %v6185 = vpack.c.bf16 %v5320, %v5317
          %v6186 = vpack.c.bf16 %v5328, %v5325
          %v6187 = vpack.c.bf16 %v5336, %v5333
          %v6188 = vpack.c.bf16 %v5344, %v5341
          %v6189 = vpack.c.bf16 %v5352, %v5349
          %v6190 = vpack.c.bf16 %v5360, %v5357
          %v6191 = vpack.c.bf16 %v5368, %v5365
          %v6192 = vpack.c.bf16 %v5376, %v5373
          %v6193 = vpack.c.bf16 %v5384, %v5381
          %v6194 = vpack.c.bf16 %v5392, %v5389
          %v6195 = vpack.c.bf16 %v5400, %v5397
          %v6196 = vpack.c.bf16 %v5408, %v5405
          %v6197 = vpack.c.bf16 %v5416, %v5413
          %v6198 = vpack.c.bf16 %v5424, %v5421
          %v6199 = vpack.c.bf16 %v5432, %v5429
          %v6200 = vpack.c.bf16 %v5440, %v5437
          %v6201 = vpack.c.bf16 %v5448, %v5445
          %v6202 = vpack.c.bf16 %v5456, %v5453
          %v6203 = vpack.c.bf16 %v5464, %v5461
          %v6204 = vpack.c.bf16 %v5472, %v5469
          %v6205 = vpack.c.bf16 %v5480, %v5477
          %v6206 = vpack.c.bf16 %v5488, %v5485
          %v6207 = vpack.c.bf16 %v5496, %v5493
          %v6208 = vpack.c.bf16 %v5504, %v5501
          %v6209 = vpack.c.bf16 %v5512, %v5509
          %v6210 = vpack.c.bf16 %v5520, %v5517
          %v6211 = vpack.c.bf16 %v5528, %v5525
          %v6212 = vpack.c.bf16 %v5536, %v5533
          %v6213 = vpack.c.bf16 %v5544, %v5541
          %v6214 = vpack.c.bf16 %v5552, %v5549
          %v6215 = vpack.c.bf16 %v5560, %v5557
          %v6216 = vpack.c.bf16 %v5568, %v5565
          %v6217 = vpack.c.bf16 %v5576, %v5573
          %v6218 = vpack.c.bf16 %v5584, %v5581
          %v6219 = vpack.c.bf16 %v5592, %v5589
          %v6220 = vpack.c.bf16 %v5600, %v5597
          %v6221 = vpack.c.bf16 %v5608, %v5605
          %v6222 = vpack.c.bf16 %v5616, %v5613
          %v6223 = vpack.c.bf16 %v5624, %v5621
          %v6224 = vpack.c.bf16 %v5632, %v5629
          %v6225 = vpack.c.bf16 %v5640, %v5637
          %v6226 = vpack.c.bf16 %v5648, %v5645
          %v6227 = vpack.c.bf16 %v5656, %v5653
          %v6228 = vpack.c.bf16 %v5664, %v5661
          %v6229 = vpack.c.bf16 %v5672, %v5669
          %v6230 = vpack.c.bf16 %v5680, %v5677
          %v6231 = vpack.c.bf16 %v5688, %v5685
          %v6232 = vpack.c.bf16 %v5696, %v5693
          %v6233 = vpack.c.bf16 %v5704, %v5701
          %v6234 = vpack.c.bf16 %v5712, %v5709
          %v6235 = vpack.c.bf16 %v5720, %v5717
          %v6236 = vpack.c.bf16 %v5728, %v5725
          %v6237 = vpack.c.bf16 %v5736, %v5733
          %v6238 = vpack.c.bf16 %v5744, %v5741
          %v6239 = vpack.c.bf16 %v5752, %v5749
          %v6240 = vpack.c.bf16 %v5760, %v5757
          %v6241 = vpack.c.bf16 %v5768, %v5765
          %v6242 = vpack.c.bf16 %v5776, %v5773
          %v6243 = vpack.c.bf16 %v5784, %v5781
          %v6244 = vpack.c.bf16 %v5792, %v5789
          %v6245 = vpack.c.bf16 %v5800, %v5797
          %v6246 = vpack.c.bf16 %v5808, %v5805
          %v6247 = vpack.c.bf16 %v5816, %v5813
          %v6248 = vpack.c.bf16 %v5824, %v5821
          %v6249 = vpack.c.bf16 %v5832, %v5829
          %v6250 = vpack.c.bf16 %v5840, %v5837
          %v6251 = vpack.c.bf16 %v5848, %v5845
          %v6252 = vpack.c.bf16 %v5856, %v5853
          %v6253 = vpack.c.bf16 %v5864, %v5861
          %v6254 = vpack.c.bf16 %v5872, %v5869
          %v6255 = vpack.c.bf16 %v5880, %v5877
          %v6256 = vpack.c.bf16 %v5888, %v5885
          %v6257 = vpack.c.bf16 %v5896, %v5893
          %v6258 = vpack.c.bf16 %v5904, %v5901
          %v6259 = vpack.c.bf16 %v5912, %v5909
          %v6260 = vpack.c.bf16 %v5920, %v5917
          %v6261 = vpack.c.bf16 %v5928, %v5925
          %v6262 = vpack.c.bf16 %v5936, %v5933
          %v6263 = vpack.c.bf16 %v5944, %v5941
          %v6264 = vpack.c.bf16 %v5952, %v5949
          %v6265 = vpack.c.bf16 %v5960, %v5957
          %v6266 = vpack.c.bf16 %v5968, %v5965
          %v6267 = vpack.c.bf16 %v5976, %v5973
          %v6268 = vpack.c.bf16 %v5984, %v5981
          %v6269 = vpack.c.bf16 %v5992, %v5989
          %v6270 = vpack.c.bf16 %v6000, %v5997
          %v6271 = vpack.c.bf16 %v6008, %v6005
          %v6272 = vpack.c.bf16 %v6016, %v6013
          %v6273 = vpack.c.bf16 %v6024, %v6021
          %v6274 = vpack.c.bf16 %v6032, %v6029
          %v6275 = vpack.c.bf16 %v6040, %v6037
          %v6276 = vpack.c.bf16 %v6048, %v6045
          %v6277 = vpack.c.bf16 %v6056, %v6053
          %v6278 = vpack.c.bf16 %v6064, %v6061
          %v6279 = vpack.c.bf16 %v6072, %v6069
          %v6280 = vpack.c.bf16 %v6080, %v6077
          %v6281 = vpack.c.bf16 %v6088, %v6085
          %v6282 = vpack.c.bf16 %v6096, %v6093
          %v6283 = vpack.c.bf16 %v6104, %v6101
          %v6284 = vpack.c.bf16 %v6112, %v6109
          %v6285 = vpack.c.bf16 %v6120, %v6117
          %v6286 = vpack.c.bf16 %v6128, %v6125
          %v6287 = vpack.c.bf16 %v6136, %v6133
          %v6288 = vpack.c.bf16 %v6144, %v6141
          %v6289 = vpack.c.bf16 %v6152, %v6149
          %v6290 = vpack.c.bf16 %v6160, %v6157
          %s6291 = smul.u32 %s614, 2
          %s6292 = smul.addr %s6291, 4
          %s6293 = scalar_lea.vmem %s5, %s6292
          %v6294 = vld [vmem:[%s6293] sm:$0xf]
          %v6295 = vld [vmem:[%s6293 + $0x4] sm:$0xf]
          %v6298 = vunpack.c.l.b16 %v6294
          %v6299 = vunpack.c.l.b16 %v6295
          %v6300 = vpack.c.b16 %v6299, %v6298
          %v6302 = vmul.bf16 %v6163, %v6300
          %v6303 = vmul.bf16 %v6164, %v6300
          %v6304 = vmul.bf16 %v6165, %v6300
          %v6305 = vmul.bf16 %v6166, %v6300
          %v6306 = vmul.bf16 %v6167, %v6300
          %v6307 = vmul.bf16 %v6168, %v6300
          %v6308 = vmul.bf16 %v6169, %v6300
          %v6309 = vmul.bf16 %v6170, %v6300
          %v6310 = vmul.bf16 %v6171, %v6300
          %v6311 = vmul.bf16 %v6172, %v6300
          %v6312 = vmul.bf16 %v6173, %v6300
          %v6313 = vmul.bf16 %v6174, %v6300
          %v6314 = vmul.bf16 %v6175, %v6300
          %v6315 = vmul.bf16 %v6176, %v6300
          %v6316 = vmul.bf16 %v6177, %v6300
          %v6317 = vmul.bf16 %v6178, %v6300
          %v6318 = vmul.bf16 %v6179, %v6300
          %v6319 = vmul.bf16 %v6180, %v6300
          %v6320 = vmul.bf16 %v6181, %v6300
          %v6321 = vmul.bf16 %v6182, %v6300
          %v6322 = vmul.bf16 %v6183, %v6300
          %v6323 = vmul.bf16 %v6184, %v6300
          %v6324 = vmul.bf16 %v6185, %v6300
          %v6325 = vmul.bf16 %v6186, %v6300
          %v6326 = vmul.bf16 %v6187, %v6300
          %v6327 = vmul.bf16 %v6188, %v6300
          %v6328 = vmul.bf16 %v6189, %v6300
          %v6329 = vmul.bf16 %v6190, %v6300
          %v6330 = vmul.bf16 %v6191, %v6300
          %v6331 = vmul.bf16 %v6192, %v6300
          %v6332 = vmul.bf16 %v6193, %v6300
          %v6333 = vmul.bf16 %v6194, %v6300
          %v6334 = vmul.bf16 %v6195, %v6300
          %v6335 = vmul.bf16 %v6196, %v6300
          %v6336 = vmul.bf16 %v6197, %v6300
          %v6337 = vmul.bf16 %v6198, %v6300
          %v6338 = vmul.bf16 %v6199, %v6300
          %v6339 = vmul.bf16 %v6200, %v6300
          %v6340 = vmul.bf16 %v6201, %v6300
          %v6341 = vmul.bf16 %v6202, %v6300
          %v6342 = vmul.bf16 %v6203, %v6300
          %v6343 = vmul.bf16 %v6204, %v6300
          %v6344 = vmul.bf16 %v6205, %v6300
          %v6345 = vmul.bf16 %v6206, %v6300
          %v6346 = vmul.bf16 %v6207, %v6300
          %v6347 = vmul.bf16 %v6208, %v6300
          %v6348 = vmul.bf16 %v6209, %v6300
          %v6349 = vmul.bf16 %v6210, %v6300
          %v6350 = vmul.bf16 %v6211, %v6300
          %v6351 = vmul.bf16 %v6212, %v6300
          %v6352 = vmul.bf16 %v6213, %v6300
          %v6353 = vmul.bf16 %v6214, %v6300
          %v6354 = vmul.bf16 %v6215, %v6300
          %v6355 = vmul.bf16 %v6216, %v6300
          %v6356 = vmul.bf16 %v6217, %v6300
          %v6357 = vmul.bf16 %v6218, %v6300
          %v6358 = vmul.bf16 %v6219, %v6300
          %v6359 = vmul.bf16 %v6220, %v6300
          %v6360 = vmul.bf16 %v6221, %v6300
          %v6361 = vmul.bf16 %v6222, %v6300
          %v6362 = vmul.bf16 %v6223, %v6300
          %v6363 = vmul.bf16 %v6224, %v6300
          %v6364 = vmul.bf16 %v6225, %v6300
          %v6365 = vmul.bf16 %v6226, %v6300
          %v6366 = vmul.bf16 %v6227, %v6300
          %v6367 = vmul.bf16 %v6228, %v6300
          %v6368 = vmul.bf16 %v6229, %v6300
          %v6369 = vmul.bf16 %v6230, %v6300
          %v6370 = vmul.bf16 %v6231, %v6300
          %v6371 = vmul.bf16 %v6232, %v6300
          %v6372 = vmul.bf16 %v6233, %v6300
          %v6373 = vmul.bf16 %v6234, %v6300
          %v6374 = vmul.bf16 %v6235, %v6300
          %v6375 = vmul.bf16 %v6236, %v6300
          %v6376 = vmul.bf16 %v6237, %v6300
          %v6377 = vmul.bf16 %v6238, %v6300
          %v6378 = vmul.bf16 %v6239, %v6300
          %v6379 = vmul.bf16 %v6240, %v6300
          %v6380 = vmul.bf16 %v6241, %v6300
          %v6381 = vmul.bf16 %v6242, %v6300
          %v6382 = vmul.bf16 %v6243, %v6300
          %v6383 = vmul.bf16 %v6244, %v6300
          %v6384 = vmul.bf16 %v6245, %v6300
          %v6385 = vmul.bf16 %v6246, %v6300
          %v6386 = vmul.bf16 %v6247, %v6300
          %v6387 = vmul.bf16 %v6248, %v6300
          %v6388 = vmul.bf16 %v6249, %v6300
          %v6389 = vmul.bf16 %v6250, %v6300
          %v6390 = vmul.bf16 %v6251, %v6300
          %v6391 = vmul.bf16 %v6252, %v6300
          %v6392 = vmul.bf16 %v6253, %v6300
          %v6393 = vmul.bf16 %v6254, %v6300
          %v6394 = vmul.bf16 %v6255, %v6300
          %v6395 = vmul.bf16 %v6256, %v6300
          %v6396 = vmul.bf16 %v6257, %v6300
          %v6397 = vmul.bf16 %v6258, %v6300
          %v6398 = vmul.bf16 %v6259, %v6300
          %v6399 = vmul.bf16 %v6260, %v6300
          %v6400 = vmul.bf16 %v6261, %v6300
          %v6401 = vmul.bf16 %v6262, %v6300
          %v6402 = vmul.bf16 %v6263, %v6300
          %v6403 = vmul.bf16 %v6264, %v6300
          %v6404 = vmul.bf16 %v6265, %v6300
          %v6405 = vmul.bf16 %v6266, %v6300
          %v6406 = vmul.bf16 %v6267, %v6300
          %v6407 = vmul.bf16 %v6268, %v6300
          %v6408 = vmul.bf16 %v6269, %v6300
          %v6409 = vmul.bf16 %v6270, %v6300
          %v6410 = vmul.bf16 %v6271, %v6300
          %v6411 = vmul.bf16 %v6272, %v6300
          %v6412 = vmul.bf16 %v6273, %v6300
          %v6413 = vmul.bf16 %v6274, %v6300
          %v6414 = vmul.bf16 %v6275, %v6300
          %v6415 = vmul.bf16 %v6276, %v6300
          %v6416 = vmul.bf16 %v6277, %v6300
          %v6417 = vmul.bf16 %v6278, %v6300
          %v6418 = vmul.bf16 %v6279, %v6300
          %v6419 = vmul.bf16 %v6280, %v6300
          %v6420 = vmul.bf16 %v6281, %v6300
          %v6421 = vmul.bf16 %v6282, %v6300
          %v6422 = vmul.bf16 %v6283, %v6300
          %v6423 = vmul.bf16 %v6284, %v6300
          %v6424 = vmul.bf16 %v6285, %v6300
          %v6425 = vmul.bf16 %v6286, %v6300
          %v6426 = vmul.bf16 %v6287, %v6300
          %v6427 = vmul.bf16 %v6288, %v6300
          %v6428 = vmul.bf16 %v6289, %v6300
          %v6429 = vmul.bf16 %v6290, %v6300
          %vm6430 = vcmask 523264
          %v6433 = vsel %vm6430, %v6302, 4286644096
          %v6435 = vunpack.i.l.bf16 %v6433
          %v6436 = vunpack.i.h.bf16 %v6433
          %v6437 = vmax.f32 %v6435, %v6436
          %v6438 = vrot.slane %v6437, 4
          %v6439 = vmax.f32 %v6437, %v6438
          %v6440 = vrot.slane %v6439, 2
          %v6441 = vmax.f32 %v6439, %v6440
          %v6442 = vrot.slane %v6441, 1
          %v6443 = vmax.f32 %v6441, %v6442
          %v6444 = vpack.i.bf16 %v6443, %v6443
          %v6446 = vsel %vm6430, %v6303, 4286644096
          %v6448 = vunpack.i.l.bf16 %v6446
          %v6449 = vunpack.i.h.bf16 %v6446
          %v6450 = vmax.f32 %v6448, %v6449
          %v6451 = vrot.slane %v6450, 4
          %v6452 = vmax.f32 %v6450, %v6451
          %v6453 = vrot.slane %v6452, 2
          %v6454 = vmax.f32 %v6452, %v6453
          %v6455 = vrot.slane %v6454, 1
          %v6456 = vmax.f32 %v6454, %v6455
          %v6457 = vpack.i.bf16 %v6456, %v6456
          %v6459 = vsel %vm6430, %v6304, 4286644096
          %v6461 = vunpack.i.l.bf16 %v6459
          %v6462 = vunpack.i.h.bf16 %v6459
          %v6463 = vmax.f32 %v6461, %v6462
          %v6464 = vrot.slane %v6463, 4
          %v6465 = vmax.f32 %v6463, %v6464
          %v6466 = vrot.slane %v6465, 2
          %v6467 = vmax.f32 %v6465, %v6466
          %v6468 = vrot.slane %v6467, 1
          %v6469 = vmax.f32 %v6467, %v6468
          %v6470 = vpack.i.bf16 %v6469, %v6469
          %v6472 = vsel %vm6430, %v6305, 4286644096
          %v6474 = vunpack.i.l.bf16 %v6472
          %v6475 = vunpack.i.h.bf16 %v6472
          %v6476 = vmax.f32 %v6474, %v6475
          %v6477 = vrot.slane %v6476, 4
          %v6478 = vmax.f32 %v6476, %v6477
          %v6479 = vrot.slane %v6478, 2
          %v6480 = vmax.f32 %v6478, %v6479
          %v6481 = vrot.slane %v6480, 1
          %v6482 = vmax.f32 %v6480, %v6481
          %v6483 = vpack.i.bf16 %v6482, %v6482
          %v6485 = vsel %vm6430, %v6306, 4286644096
          %v6487 = vunpack.i.l.bf16 %v6485
          %v6488 = vunpack.i.h.bf16 %v6485
          %v6489 = vmax.f32 %v6487, %v6488
          %v6490 = vrot.slane %v6489, 4
          %v6491 = vmax.f32 %v6489, %v6490
          %v6492 = vrot.slane %v6491, 2
          %v6493 = vmax.f32 %v6491, %v6492
          %v6494 = vrot.slane %v6493, 1
          %v6495 = vmax.f32 %v6493, %v6494
          %v6496 = vpack.i.bf16 %v6495, %v6495
          %v6498 = vsel %vm6430, %v6307, 4286644096
          %v6500 = vunpack.i.l.bf16 %v6498
          %v6501 = vunpack.i.h.bf16 %v6498
          %v6502 = vmax.f32 %v6500, %v6501
          %v6503 = vrot.slane %v6502, 4
          %v6504 = vmax.f32 %v6502, %v6503
          %v6505 = vrot.slane %v6504, 2
          %v6506 = vmax.f32 %v6504, %v6505
          %v6507 = vrot.slane %v6506, 1
          %v6508 = vmax.f32 %v6506, %v6507
          %v6509 = vpack.i.bf16 %v6508, %v6508
          %v6511 = vsel %vm6430, %v6308, 4286644096
          %v6513 = vunpack.i.l.bf16 %v6511
          %v6514 = vunpack.i.h.bf16 %v6511
          %v6515 = vmax.f32 %v6513, %v6514
          %v6516 = vrot.slane %v6515, 4
          %v6517 = vmax.f32 %v6515, %v6516
          %v6518 = vrot.slane %v6517, 2
          %v6519 = vmax.f32 %v6517, %v6518
          %v6520 = vrot.slane %v6519, 1
          %v6521 = vmax.f32 %v6519, %v6520
          %v6522 = vpack.i.bf16 %v6521, %v6521
          %v6524 = vsel %vm6430, %v6309, 4286644096
          %v6526 = vunpack.i.l.bf16 %v6524
          %v6527 = vunpack.i.h.bf16 %v6524
          %v6528 = vmax.f32 %v6526, %v6527
          %v6529 = vrot.slane %v6528, 4
          %v6530 = vmax.f32 %v6528, %v6529
          %v6531 = vrot.slane %v6530, 2
          %v6532 = vmax.f32 %v6530, %v6531
          %v6533 = vrot.slane %v6532, 1
          %v6534 = vmax.f32 %v6532, %v6533
          %v6535 = vpack.i.bf16 %v6534, %v6534
          %v6537 = vsel %vm6430, %v6310, 4286644096
          %v6539 = vunpack.i.l.bf16 %v6537
          %v6540 = vunpack.i.h.bf16 %v6537
          %v6541 = vmax.f32 %v6539, %v6540
          %v6542 = vrot.slane %v6541, 4
          %v6543 = vmax.f32 %v6541, %v6542
          %v6544 = vrot.slane %v6543, 2
          %v6545 = vmax.f32 %v6543, %v6544
          %v6546 = vrot.slane %v6545, 1
          %v6547 = vmax.f32 %v6545, %v6546
          %v6548 = vpack.i.bf16 %v6547, %v6547
          %v6550 = vsel %vm6430, %v6311, 4286644096
          %v6552 = vunpack.i.l.bf16 %v6550
          %v6553 = vunpack.i.h.bf16 %v6550
          %v6554 = vmax.f32 %v6552, %v6553
          %v6555 = vrot.slane %v6554, 4
          %v6556 = vmax.f32 %v6554, %v6555
          %v6557 = vrot.slane %v6556, 2
          %v6558 = vmax.f32 %v6556, %v6557
          %v6559 = vrot.slane %v6558, 1
          %v6560 = vmax.f32 %v6558, %v6559
          %v6561 = vpack.i.bf16 %v6560, %v6560
          %v6563 = vsel %vm6430, %v6312, 4286644096
          %v6565 = vunpack.i.l.bf16 %v6563
          %v6566 = vunpack.i.h.bf16 %v6563
          %v6567 = vmax.f32 %v6565, %v6566
          %v6568 = vrot.slane %v6567, 4
          %v6569 = vmax.f32 %v6567, %v6568
          %v6570 = vrot.slane %v6569, 2
          %v6571 = vmax.f32 %v6569, %v6570
          %v6572 = vrot.slane %v6571, 1
          %v6573 = vmax.f32 %v6571, %v6572
          %v6574 = vpack.i.bf16 %v6573, %v6573
          %v6576 = vsel %vm6430, %v6313, 4286644096
          %v6578 = vunpack.i.l.bf16 %v6576
          %v6579 = vunpack.i.h.bf16 %v6576
          %v6580 = vmax.f32 %v6578, %v6579
          %v6581 = vrot.slane %v6580, 4
          %v6582 = vmax.f32 %v6580, %v6581
          %v6583 = vrot.slane %v6582, 2
          %v6584 = vmax.f32 %v6582, %v6583
          %v6585 = vrot.slane %v6584, 1
          %v6586 = vmax.f32 %v6584, %v6585
          %v6587 = vpack.i.bf16 %v6586, %v6586
          %v6589 = vsel %vm6430, %v6314, 4286644096
          %v6591 = vunpack.i.l.bf16 %v6589
          %v6592 = vunpack.i.h.bf16 %v6589
          %v6593 = vmax.f32 %v6591, %v6592
          %v6594 = vrot.slane %v6593, 4
          %v6595 = vmax.f32 %v6593, %v6594
          %v6596 = vrot.slane %v6595, 2
          %v6597 = vmax.f32 %v6595, %v6596
          %v6598 = vrot.slane %v6597, 1
          %v6599 = vmax.f32 %v6597, %v6598
          %v6600 = vpack.i.bf16 %v6599, %v6599
          %v6602 = vsel %vm6430, %v6315, 4286644096
          %v6604 = vunpack.i.l.bf16 %v6602
          %v6605 = vunpack.i.h.bf16 %v6602
          %v6606 = vmax.f32 %v6604, %v6605
          %v6607 = vrot.slane %v6606, 4
          %v6608 = vmax.f32 %v6606, %v6607
          %v6609 = vrot.slane %v6608, 2
          %v6610 = vmax.f32 %v6608, %v6609
          %v6611 = vrot.slane %v6610, 1
          %v6612 = vmax.f32 %v6610, %v6611
          %v6613 = vpack.i.bf16 %v6612, %v6612
          %v6615 = vsel %vm6430, %v6316, 4286644096
          %v6617 = vunpack.i.l.bf16 %v6615
          %v6618 = vunpack.i.h.bf16 %v6615
          %v6619 = vmax.f32 %v6617, %v6618
          %v6620 = vrot.slane %v6619, 4
          %v6621 = vmax.f32 %v6619, %v6620
          %v6622 = vrot.slane %v6621, 2
          %v6623 = vmax.f32 %v6621, %v6622
          %v6624 = vrot.slane %v6623, 1
          %v6625 = vmax.f32 %v6623, %v6624
          %v6626 = vpack.i.bf16 %v6625, %v6625
          %v6628 = vsel %vm6430, %v6317, 4286644096
          %v6630 = vunpack.i.l.bf16 %v6628
          %v6631 = vunpack.i.h.bf16 %v6628
          %v6632 = vmax.f32 %v6630, %v6631
          %v6633 = vrot.slane %v6632, 4
          %v6634 = vmax.f32 %v6632, %v6633
          %v6635 = vrot.slane %v6634, 2
          %v6636 = vmax.f32 %v6634, %v6635
          %v6637 = vrot.slane %v6636, 1
          %v6638 = vmax.f32 %v6636, %v6637
          %v6639 = vpack.i.bf16 %v6638, %v6638
          %v6641 = vsel %vm6430, %v6318, 4286644096
          %v6643 = vunpack.i.l.bf16 %v6641
          %v6644 = vunpack.i.h.bf16 %v6641
          %v6645 = vmax.f32 %v6643, %v6644
          %v6646 = vrot.slane %v6645, 4
          %v6647 = vmax.f32 %v6645, %v6646
          %v6648 = vrot.slane %v6647, 2
          %v6649 = vmax.f32 %v6647, %v6648
          %v6650 = vrot.slane %v6649, 1
          %v6651 = vmax.f32 %v6649, %v6650
          %v6652 = vpack.i.bf16 %v6651, %v6651
          %v6654 = vsel %vm6430, %v6319, 4286644096
          %v6656 = vunpack.i.l.bf16 %v6654
          %v6657 = vunpack.i.h.bf16 %v6654
          %v6658 = vmax.f32 %v6656, %v6657
          %v6659 = vrot.slane %v6658, 4
          %v6660 = vmax.f32 %v6658, %v6659
          %v6661 = vrot.slane %v6660, 2
          %v6662 = vmax.f32 %v6660, %v6661
          %v6663 = vrot.slane %v6662, 1
          %v6664 = vmax.f32 %v6662, %v6663
          %v6665 = vpack.i.bf16 %v6664, %v6664
          %v6667 = vsel %vm6430, %v6320, 4286644096
          %v6669 = vunpack.i.l.bf16 %v6667
          %v6670 = vunpack.i.h.bf16 %v6667
          %v6671 = vmax.f32 %v6669, %v6670
          %v6672 = vrot.slane %v6671, 4
          %v6673 = vmax.f32 %v6671, %v6672
          %v6674 = vrot.slane %v6673, 2
          %v6675 = vmax.f32 %v6673, %v6674
          %v6676 = vrot.slane %v6675, 1
          %v6677 = vmax.f32 %v6675, %v6676
          %v6678 = vpack.i.bf16 %v6677, %v6677
          %v6680 = vsel %vm6430, %v6321, 4286644096
          %v6682 = vunpack.i.l.bf16 %v6680
          %v6683 = vunpack.i.h.bf16 %v6680
          %v6684 = vmax.f32 %v6682, %v6683
          %v6685 = vrot.slane %v6684, 4
          %v6686 = vmax.f32 %v6684, %v6685
          %v6687 = vrot.slane %v6686, 2
          %v6688 = vmax.f32 %v6686, %v6687
          %v6689 = vrot.slane %v6688, 1
          %v6690 = vmax.f32 %v6688, %v6689
          %v6691 = vpack.i.bf16 %v6690, %v6690
          %v6693 = vsel %vm6430, %v6322, 4286644096
          %v6695 = vunpack.i.l.bf16 %v6693
          %v6696 = vunpack.i.h.bf16 %v6693
          %v6697 = vmax.f32 %v6695, %v6696
          %v6698 = vrot.slane %v6697, 4
          %v6699 = vmax.f32 %v6697, %v6698
          %v6700 = vrot.slane %v6699, 2
          %v6701 = vmax.f32 %v6699, %v6700
          %v6702 = vrot.slane %v6701, 1
          %v6703 = vmax.f32 %v6701, %v6702
          %v6704 = vpack.i.bf16 %v6703, %v6703
          %v6706 = vsel %vm6430, %v6323, 4286644096
          %v6708 = vunpack.i.l.bf16 %v6706
          %v6709 = vunpack.i.h.bf16 %v6706
          %v6710 = vmax.f32 %v6708, %v6709
          %v6711 = vrot.slane %v6710, 4
          %v6712 = vmax.f32 %v6710, %v6711
          %v6713 = vrot.slane %v6712, 2
          %v6714 = vmax.f32 %v6712, %v6713
          %v6715 = vrot.slane %v6714, 1
          %v6716 = vmax.f32 %v6714, %v6715
          %v6717 = vpack.i.bf16 %v6716, %v6716
          %v6719 = vsel %vm6430, %v6324, 4286644096
          %v6721 = vunpack.i.l.bf16 %v6719
          %v6722 = vunpack.i.h.bf16 %v6719
          %v6723 = vmax.f32 %v6721, %v6722
          %v6724 = vrot.slane %v6723, 4
          %v6725 = vmax.f32 %v6723, %v6724
          %v6726 = vrot.slane %v6725, 2
          %v6727 = vmax.f32 %v6725, %v6726
          %v6728 = vrot.slane %v6727, 1
          %v6729 = vmax.f32 %v6727, %v6728
          %v6730 = vpack.i.bf16 %v6729, %v6729
          %v6732 = vsel %vm6430, %v6325, 4286644096
          %v6734 = vunpack.i.l.bf16 %v6732
          %v6735 = vunpack.i.h.bf16 %v6732
          %v6736 = vmax.f32 %v6734, %v6735
          %v6737 = vrot.slane %v6736, 4
          %v6738 = vmax.f32 %v6736, %v6737
          %v6739 = vrot.slane %v6738, 2
          %v6740 = vmax.f32 %v6738, %v6739
          %v6741 = vrot.slane %v6740, 1
          %v6742 = vmax.f32 %v6740, %v6741
          %v6743 = vpack.i.bf16 %v6742, %v6742
          %v6745 = vsel %vm6430, %v6326, 4286644096
          %v6747 = vunpack.i.l.bf16 %v6745
          %v6748 = vunpack.i.h.bf16 %v6745
          %v6749 = vmax.f32 %v6747, %v6748
          %v6750 = vrot.slane %v6749, 4
          %v6751 = vmax.f32 %v6749, %v6750
          %v6752 = vrot.slane %v6751, 2
          %v6753 = vmax.f32 %v6751, %v6752
          %v6754 = vrot.slane %v6753, 1
          %v6755 = vmax.f32 %v6753, %v6754
          %v6756 = vpack.i.bf16 %v6755, %v6755
          %v6758 = vsel %vm6430, %v6327, 4286644096
          %v6760 = vunpack.i.l.bf16 %v6758
          %v6761 = vunpack.i.h.bf16 %v6758
          %v6762 = vmax.f32 %v6760, %v6761
          %v6763 = vrot.slane %v6762, 4
          %v6764 = vmax.f32 %v6762, %v6763
          %v6765 = vrot.slane %v6764, 2
          %v6766 = vmax.f32 %v6764, %v6765
          %v6767 = vrot.slane %v6766, 1
          %v6768 = vmax.f32 %v6766, %v6767
          %v6769 = vpack.i.bf16 %v6768, %v6768
          %v6771 = vsel %vm6430, %v6328, 4286644096
          %v6773 = vunpack.i.l.bf16 %v6771
          %v6774 = vunpack.i.h.bf16 %v6771
          %v6775 = vmax.f32 %v6773, %v6774
          %v6776 = vrot.slane %v6775, 4
          %v6777 = vmax.f32 %v6775, %v6776
          %v6778 = vrot.slane %v6777, 2
          %v6779 = vmax.f32 %v6777, %v6778
          %v6780 = vrot.slane %v6779, 1
          %v6781 = vmax.f32 %v6779, %v6780
          %v6782 = vpack.i.bf16 %v6781, %v6781
          %v6784 = vsel %vm6430, %v6329, 4286644096
          %v6786 = vunpack.i.l.bf16 %v6784
          %v6787 = vunpack.i.h.bf16 %v6784
          %v6788 = vmax.f32 %v6786, %v6787
          %v6789 = vrot.slane %v6788, 4
          %v6790 = vmax.f32 %v6788, %v6789
          %v6791 = vrot.slane %v6790, 2
          %v6792 = vmax.f32 %v6790, %v6791
          %v6793 = vrot.slane %v6792, 1
          %v6794 = vmax.f32 %v6792, %v6793
          %v6795 = vpack.i.bf16 %v6794, %v6794
          %v6797 = vsel %vm6430, %v6330, 4286644096
          %v6799 = vunpack.i.l.bf16 %v6797
          %v6800 = vunpack.i.h.bf16 %v6797
          %v6801 = vmax.f32 %v6799, %v6800
          %v6802 = vrot.slane %v6801, 4
          %v6803 = vmax.f32 %v6801, %v6802
          %v6804 = vrot.slane %v6803, 2
          %v6805 = vmax.f32 %v6803, %v6804
          %v6806 = vrot.slane %v6805, 1
          %v6807 = vmax.f32 %v6805, %v6806
          %v6808 = vpack.i.bf16 %v6807, %v6807
          %v6810 = vsel %vm6430, %v6331, 4286644096
          %v6812 = vunpack.i.l.bf16 %v6810
          %v6813 = vunpack.i.h.bf16 %v6810
          %v6814 = vmax.f32 %v6812, %v6813
          %v6815 = vrot.slane %v6814, 4
          %v6816 = vmax.f32 %v6814, %v6815
          %v6817 = vrot.slane %v6816, 2
          %v6818 = vmax.f32 %v6816, %v6817
          %v6819 = vrot.slane %v6818, 1
          %v6820 = vmax.f32 %v6818, %v6819
          %v6821 = vpack.i.bf16 %v6820, %v6820
          %v6823 = vsel %vm6430, %v6332, 4286644096
          %v6825 = vunpack.i.l.bf16 %v6823
          %v6826 = vunpack.i.h.bf16 %v6823
          %v6827 = vmax.f32 %v6825, %v6826
          %v6828 = vrot.slane %v6827, 4
          %v6829 = vmax.f32 %v6827, %v6828
          %v6830 = vrot.slane %v6829, 2
          %v6831 = vmax.f32 %v6829, %v6830
          %v6832 = vrot.slane %v6831, 1
          %v6833 = vmax.f32 %v6831, %v6832
          %v6834 = vpack.i.bf16 %v6833, %v6833
          %v6836 = vsel %vm6430, %v6333, 4286644096
          %v6838 = vunpack.i.l.bf16 %v6836
          %v6839 = vunpack.i.h.bf16 %v6836
          %v6840 = vmax.f32 %v6838, %v6839
          %v6841 = vrot.slane %v6840, 4
          %v6842 = vmax.f32 %v6840, %v6841
          %v6843 = vrot.slane %v6842, 2
          %v6844 = vmax.f32 %v6842, %v6843
          %v6845 = vrot.slane %v6844, 1
          %v6846 = vmax.f32 %v6844, %v6845
          %v6847 = vpack.i.bf16 %v6846, %v6846
          %v6849 = vsel %vm6430, %v6334, 4286644096
          %v6851 = vunpack.i.l.bf16 %v6849
          %v6852 = vunpack.i.h.bf16 %v6849
          %v6853 = vmax.f32 %v6851, %v6852
          %v6854 = vrot.slane %v6853, 4
          %v6855 = vmax.f32 %v6853, %v6854
          %v6856 = vrot.slane %v6855, 2
          %v6857 = vmax.f32 %v6855, %v6856
          %v6858 = vrot.slane %v6857, 1
          %v6859 = vmax.f32 %v6857, %v6858
          %v6860 = vpack.i.bf16 %v6859, %v6859
          %v6862 = vsel %vm6430, %v6335, 4286644096
          %v6864 = vunpack.i.l.bf16 %v6862
          %v6865 = vunpack.i.h.bf16 %v6862
          %v6866 = vmax.f32 %v6864, %v6865
          %v6867 = vrot.slane %v6866, 4
          %v6868 = vmax.f32 %v6866, %v6867
          %v6869 = vrot.slane %v6868, 2
          %v6870 = vmax.f32 %v6868, %v6869
          %v6871 = vrot.slane %v6870, 1
          %v6872 = vmax.f32 %v6870, %v6871
          %v6873 = vpack.i.bf16 %v6872, %v6872
          %v6875 = vsel %vm6430, %v6336, 4286644096
          %v6877 = vunpack.i.l.bf16 %v6875
          %v6878 = vunpack.i.h.bf16 %v6875
          %v6879 = vmax.f32 %v6877, %v6878
          %v6880 = vrot.slane %v6879, 4
          %v6881 = vmax.f32 %v6879, %v6880
          %v6882 = vrot.slane %v6881, 2
          %v6883 = vmax.f32 %v6881, %v6882
          %v6884 = vrot.slane %v6883, 1
          %v6885 = vmax.f32 %v6883, %v6884
          %v6886 = vpack.i.bf16 %v6885, %v6885
          %v6888 = vsel %vm6430, %v6337, 4286644096
          %v6890 = vunpack.i.l.bf16 %v6888
          %v6891 = vunpack.i.h.bf16 %v6888
          %v6892 = vmax.f32 %v6890, %v6891
          %v6893 = vrot.slane %v6892, 4
          %v6894 = vmax.f32 %v6892, %v6893
          %v6895 = vrot.slane %v6894, 2
          %v6896 = vmax.f32 %v6894, %v6895
          %v6897 = vrot.slane %v6896, 1
          %v6898 = vmax.f32 %v6896, %v6897
          %v6899 = vpack.i.bf16 %v6898, %v6898
          %v6901 = vsel %vm6430, %v6338, 4286644096
          %v6903 = vunpack.i.l.bf16 %v6901
          %v6904 = vunpack.i.h.bf16 %v6901
          %v6905 = vmax.f32 %v6903, %v6904
          %v6906 = vrot.slane %v6905, 4
          %v6907 = vmax.f32 %v6905, %v6906
          %v6908 = vrot.slane %v6907, 2
          %v6909 = vmax.f32 %v6907, %v6908
          %v6910 = vrot.slane %v6909, 1
          %v6911 = vmax.f32 %v6909, %v6910
          %v6912 = vpack.i.bf16 %v6911, %v6911
          %v6914 = vsel %vm6430, %v6339, 4286644096
          %v6916 = vunpack.i.l.bf16 %v6914
          %v6917 = vunpack.i.h.bf16 %v6914
          %v6918 = vmax.f32 %v6916, %v6917
          %v6919 = vrot.slane %v6918, 4
          %v6920 = vmax.f32 %v6918, %v6919
          %v6921 = vrot.slane %v6920, 2
          %v6922 = vmax.f32 %v6920, %v6921
          %v6923 = vrot.slane %v6922, 1
          %v6924 = vmax.f32 %v6922, %v6923
          %v6925 = vpack.i.bf16 %v6924, %v6924
          %v6927 = vsel %vm6430, %v6340, 4286644096
          %v6929 = vunpack.i.l.bf16 %v6927
          %v6930 = vunpack.i.h.bf16 %v6927
          %v6931 = vmax.f32 %v6929, %v6930
          %v6932 = vrot.slane %v6931, 4
          %v6933 = vmax.f32 %v6931, %v6932
          %v6934 = vrot.slane %v6933, 2
          %v6935 = vmax.f32 %v6933, %v6934
          %v6936 = vrot.slane %v6935, 1
          %v6937 = vmax.f32 %v6935, %v6936
          %v6938 = vpack.i.bf16 %v6937, %v6937
          %v6940 = vsel %vm6430, %v6341, 4286644096
          %v6942 = vunpack.i.l.bf16 %v6940
          %v6943 = vunpack.i.h.bf16 %v6940
          %v6944 = vmax.f32 %v6942, %v6943
          %v6945 = vrot.slane %v6944, 4
          %v6946 = vmax.f32 %v6944, %v6945
          %v6947 = vrot.slane %v6946, 2
          %v6948 = vmax.f32 %v6946, %v6947
          %v6949 = vrot.slane %v6948, 1
          %v6950 = vmax.f32 %v6948, %v6949
          %v6951 = vpack.i.bf16 %v6950, %v6950
          %v6953 = vsel %vm6430, %v6342, 4286644096
          %v6955 = vunpack.i.l.bf16 %v6953
          %v6956 = vunpack.i.h.bf16 %v6953
          %v6957 = vmax.f32 %v6955, %v6956
          %v6958 = vrot.slane %v6957, 4
          %v6959 = vmax.f32 %v6957, %v6958
          %v6960 = vrot.slane %v6959, 2
          %v6961 = vmax.f32 %v6959, %v6960
          %v6962 = vrot.slane %v6961, 1
          %v6963 = vmax.f32 %v6961, %v6962
          %v6964 = vpack.i.bf16 %v6963, %v6963
          %v6966 = vsel %vm6430, %v6343, 4286644096
          %v6968 = vunpack.i.l.bf16 %v6966
          %v6969 = vunpack.i.h.bf16 %v6966
          %v6970 = vmax.f32 %v6968, %v6969
          %v6971 = vrot.slane %v6970, 4
          %v6972 = vmax.f32 %v6970, %v6971
          %v6973 = vrot.slane %v6972, 2
          %v6974 = vmax.f32 %v6972, %v6973
          %v6975 = vrot.slane %v6974, 1
          %v6976 = vmax.f32 %v6974, %v6975
          %v6977 = vpack.i.bf16 %v6976, %v6976
          %v6979 = vsel %vm6430, %v6344, 4286644096
          %v6981 = vunpack.i.l.bf16 %v6979
          %v6982 = vunpack.i.h.bf16 %v6979
          %v6983 = vmax.f32 %v6981, %v6982
          %v6984 = vrot.slane %v6983, 4
          %v6985 = vmax.f32 %v6983, %v6984
          %v6986 = vrot.slane %v6985, 2
          %v6987 = vmax.f32 %v6985, %v6986
          %v6988 = vrot.slane %v6987, 1
          %v6989 = vmax.f32 %v6987, %v6988
          %v6990 = vpack.i.bf16 %v6989, %v6989
          %v6992 = vsel %vm6430, %v6345, 4286644096
          %v6994 = vunpack.i.l.bf16 %v6992
          %v6995 = vunpack.i.h.bf16 %v6992
          %v6996 = vmax.f32 %v6994, %v6995
          %v6997 = vrot.slane %v6996, 4
          %v6998 = vmax.f32 %v6996, %v6997
          %v6999 = vrot.slane %v6998, 2
          %v7000 = vmax.f32 %v6998, %v6999
          %v7001 = vrot.slane %v7000, 1
          %v7002 = vmax.f32 %v7000, %v7001
          %v7003 = vpack.i.bf16 %v7002, %v7002
          %v7005 = vsel %vm6430, %v6346, 4286644096
          %v7007 = vunpack.i.l.bf16 %v7005
          %v7008 = vunpack.i.h.bf16 %v7005
          %v7009 = vmax.f32 %v7007, %v7008
          %v7010 = vrot.slane %v7009, 4
          %v7011 = vmax.f32 %v7009, %v7010
          %v7012 = vrot.slane %v7011, 2
          %v7013 = vmax.f32 %v7011, %v7012
          %v7014 = vrot.slane %v7013, 1
          %v7015 = vmax.f32 %v7013, %v7014
          %v7016 = vpack.i.bf16 %v7015, %v7015
          %v7018 = vsel %vm6430, %v6347, 4286644096
          %v7020 = vunpack.i.l.bf16 %v7018
          %v7021 = vunpack.i.h.bf16 %v7018
          %v7022 = vmax.f32 %v7020, %v7021
          %v7023 = vrot.slane %v7022, 4
          %v7024 = vmax.f32 %v7022, %v7023
          %v7025 = vrot.slane %v7024, 2
          %v7026 = vmax.f32 %v7024, %v7025
          %v7027 = vrot.slane %v7026, 1
          %v7028 = vmax.f32 %v7026, %v7027
          %v7029 = vpack.i.bf16 %v7028, %v7028
          %v7031 = vsel %vm6430, %v6348, 4286644096
          %v7033 = vunpack.i.l.bf16 %v7031
          %v7034 = vunpack.i.h.bf16 %v7031
          %v7035 = vmax.f32 %v7033, %v7034
          %v7036 = vrot.slane %v7035, 4
          %v7037 = vmax.f32 %v7035, %v7036
          %v7038 = vrot.slane %v7037, 2
          %v7039 = vmax.f32 %v7037, %v7038
          %v7040 = vrot.slane %v7039, 1
          %v7041 = vmax.f32 %v7039, %v7040
          %v7042 = vpack.i.bf16 %v7041, %v7041
          %v7044 = vsel %vm6430, %v6349, 4286644096
          %v7046 = vunpack.i.l.bf16 %v7044
          %v7047 = vunpack.i.h.bf16 %v7044
          %v7048 = vmax.f32 %v7046, %v7047
          %v7049 = vrot.slane %v7048, 4
          %v7050 = vmax.f32 %v7048, %v7049
          %v7051 = vrot.slane %v7050, 2
          %v7052 = vmax.f32 %v7050, %v7051
          %v7053 = vrot.slane %v7052, 1
          %v7054 = vmax.f32 %v7052, %v7053
          %v7055 = vpack.i.bf16 %v7054, %v7054
          %v7057 = vsel %vm6430, %v6350, 4286644096
          %v7059 = vunpack.i.l.bf16 %v7057
          %v7060 = vunpack.i.h.bf16 %v7057
          %v7061 = vmax.f32 %v7059, %v7060
          %v7062 = vrot.slane %v7061, 4
          %v7063 = vmax.f32 %v7061, %v7062
          %v7064 = vrot.slane %v7063, 2
          %v7065 = vmax.f32 %v7063, %v7064
          %v7066 = vrot.slane %v7065, 1
          %v7067 = vmax.f32 %v7065, %v7066
          %v7068 = vpack.i.bf16 %v7067, %v7067
          %v7070 = vsel %vm6430, %v6351, 4286644096
          %v7072 = vunpack.i.l.bf16 %v7070
          %v7073 = vunpack.i.h.bf16 %v7070
          %v7074 = vmax.f32 %v7072, %v7073
          %v7075 = vrot.slane %v7074, 4
          %v7076 = vmax.f32 %v7074, %v7075
          %v7077 = vrot.slane %v7076, 2
          %v7078 = vmax.f32 %v7076, %v7077
          %v7079 = vrot.slane %v7078, 1
          %v7080 = vmax.f32 %v7078, %v7079
          %v7081 = vpack.i.bf16 %v7080, %v7080
          %v7083 = vsel %vm6430, %v6352, 4286644096
          %v7085 = vunpack.i.l.bf16 %v7083
          %v7086 = vunpack.i.h.bf16 %v7083
          %v7087 = vmax.f32 %v7085, %v7086
          %v7088 = vrot.slane %v7087, 4
          %v7089 = vmax.f32 %v7087, %v7088
          %v7090 = vrot.slane %v7089, 2
          %v7091 = vmax.f32 %v7089, %v7090
          %v7092 = vrot.slane %v7091, 1
          %v7093 = vmax.f32 %v7091, %v7092
          %v7094 = vpack.i.bf16 %v7093, %v7093
          %v7096 = vsel %vm6430, %v6353, 4286644096
          %v7098 = vunpack.i.l.bf16 %v7096
          %v7099 = vunpack.i.h.bf16 %v7096
          %v7100 = vmax.f32 %v7098, %v7099
          %v7101 = vrot.slane %v7100, 4
          %v7102 = vmax.f32 %v7100, %v7101
          %v7103 = vrot.slane %v7102, 2
          %v7104 = vmax.f32 %v7102, %v7103
          %v7105 = vrot.slane %v7104, 1
          %v7106 = vmax.f32 %v7104, %v7105
          %v7107 = vpack.i.bf16 %v7106, %v7106
          %v7109 = vsel %vm6430, %v6354, 4286644096
          %v7111 = vunpack.i.l.bf16 %v7109
          %v7112 = vunpack.i.h.bf16 %v7109
          %v7113 = vmax.f32 %v7111, %v7112
          %v7114 = vrot.slane %v7113, 4
          %v7115 = vmax.f32 %v7113, %v7114
          %v7116 = vrot.slane %v7115, 2
          %v7117 = vmax.f32 %v7115, %v7116
          %v7118 = vrot.slane %v7117, 1
          %v7119 = vmax.f32 %v7117, %v7118
          %v7120 = vpack.i.bf16 %v7119, %v7119
          %v7122 = vsel %vm6430, %v6355, 4286644096
          %v7124 = vunpack.i.l.bf16 %v7122
          %v7125 = vunpack.i.h.bf16 %v7122
          %v7126 = vmax.f32 %v7124, %v7125
          %v7127 = vrot.slane %v7126, 4
          %v7128 = vmax.f32 %v7126, %v7127
          %v7129 = vrot.slane %v7128, 2
          %v7130 = vmax.f32 %v7128, %v7129
          %v7131 = vrot.slane %v7130, 1
          %v7132 = vmax.f32 %v7130, %v7131
          %v7133 = vpack.i.bf16 %v7132, %v7132
          %v7135 = vsel %vm6430, %v6356, 4286644096
          %v7137 = vunpack.i.l.bf16 %v7135
          %v7138 = vunpack.i.h.bf16 %v7135
          %v7139 = vmax.f32 %v7137, %v7138
          %v7140 = vrot.slane %v7139, 4
          %v7141 = vmax.f32 %v7139, %v7140
          %v7142 = vrot.slane %v7141, 2
          %v7143 = vmax.f32 %v7141, %v7142
          %v7144 = vrot.slane %v7143, 1
          %v7145 = vmax.f32 %v7143, %v7144
          %v7146 = vpack.i.bf16 %v7145, %v7145
          %v7148 = vsel %vm6430, %v6357, 4286644096
          %v7150 = vunpack.i.l.bf16 %v7148
          %v7151 = vunpack.i.h.bf16 %v7148
          %v7152 = vmax.f32 %v7150, %v7151
          %v7153 = vrot.slane %v7152, 4
          %v7154 = vmax.f32 %v7152, %v7153
          %v7155 = vrot.slane %v7154, 2
          %v7156 = vmax.f32 %v7154, %v7155
          %v7157 = vrot.slane %v7156, 1
          %v7158 = vmax.f32 %v7156, %v7157
          %v7159 = vpack.i.bf16 %v7158, %v7158
          %v7161 = vsel %vm6430, %v6358, 4286644096
          %v7163 = vunpack.i.l.bf16 %v7161
          %v7164 = vunpack.i.h.bf16 %v7161
          %v7165 = vmax.f32 %v7163, %v7164
          %v7166 = vrot.slane %v7165, 4
          %v7167 = vmax.f32 %v7165, %v7166
          %v7168 = vrot.slane %v7167, 2
          %v7169 = vmax.f32 %v7167, %v7168
          %v7170 = vrot.slane %v7169, 1
          %v7171 = vmax.f32 %v7169, %v7170
          %v7172 = vpack.i.bf16 %v7171, %v7171
          %v7174 = vsel %vm6430, %v6359, 4286644096
          %v7176 = vunpack.i.l.bf16 %v7174
          %v7177 = vunpack.i.h.bf16 %v7174
          %v7178 = vmax.f32 %v7176, %v7177
          %v7179 = vrot.slane %v7178, 4
          %v7180 = vmax.f32 %v7178, %v7179
          %v7181 = vrot.slane %v7180, 2
          %v7182 = vmax.f32 %v7180, %v7181
          %v7183 = vrot.slane %v7182, 1
          %v7184 = vmax.f32 %v7182, %v7183
          %v7185 = vpack.i.bf16 %v7184, %v7184
          %v7187 = vsel %vm6430, %v6360, 4286644096
          %v7189 = vunpack.i.l.bf16 %v7187
          %v7190 = vunpack.i.h.bf16 %v7187
          %v7191 = vmax.f32 %v7189, %v7190
          %v7192 = vrot.slane %v7191, 4
          %v7193 = vmax.f32 %v7191, %v7192
          %v7194 = vrot.slane %v7193, 2
          %v7195 = vmax.f32 %v7193, %v7194
          %v7196 = vrot.slane %v7195, 1
          %v7197 = vmax.f32 %v7195, %v7196
          %v7198 = vpack.i.bf16 %v7197, %v7197
          %v7200 = vsel %vm6430, %v6361, 4286644096
          %v7202 = vunpack.i.l.bf16 %v7200
          %v7203 = vunpack.i.h.bf16 %v7200
          %v7204 = vmax.f32 %v7202, %v7203
          %v7205 = vrot.slane %v7204, 4
          %v7206 = vmax.f32 %v7204, %v7205
          %v7207 = vrot.slane %v7206, 2
          %v7208 = vmax.f32 %v7206, %v7207
          %v7209 = vrot.slane %v7208, 1
          %v7210 = vmax.f32 %v7208, %v7209
          %v7211 = vpack.i.bf16 %v7210, %v7210
          %v7213 = vsel %vm6430, %v6362, 4286644096
          %v7215 = vunpack.i.l.bf16 %v7213
          %v7216 = vunpack.i.h.bf16 %v7213
          %v7217 = vmax.f32 %v7215, %v7216
          %v7218 = vrot.slane %v7217, 4
          %v7219 = vmax.f32 %v7217, %v7218
          %v7220 = vrot.slane %v7219, 2
          %v7221 = vmax.f32 %v7219, %v7220
          %v7222 = vrot.slane %v7221, 1
          %v7223 = vmax.f32 %v7221, %v7222
          %v7224 = vpack.i.bf16 %v7223, %v7223
          %v7226 = vsel %vm6430, %v6363, 4286644096
          %v7228 = vunpack.i.l.bf16 %v7226
          %v7229 = vunpack.i.h.bf16 %v7226
          %v7230 = vmax.f32 %v7228, %v7229
          %v7231 = vrot.slane %v7230, 4
          %v7232 = vmax.f32 %v7230, %v7231
          %v7233 = vrot.slane %v7232, 2
          %v7234 = vmax.f32 %v7232, %v7233
          %v7235 = vrot.slane %v7234, 1
          %v7236 = vmax.f32 %v7234, %v7235
          %v7237 = vpack.i.bf16 %v7236, %v7236
          %v7239 = vsel %vm6430, %v6364, 4286644096
          %v7241 = vunpack.i.l.bf16 %v7239
          %v7242 = vunpack.i.h.bf16 %v7239
          %v7243 = vmax.f32 %v7241, %v7242
          %v7244 = vrot.slane %v7243, 4
          %v7245 = vmax.f32 %v7243, %v7244
          %v7246 = vrot.slane %v7245, 2
          %v7247 = vmax.f32 %v7245, %v7246
          %v7248 = vrot.slane %v7247, 1
          %v7249 = vmax.f32 %v7247, %v7248
          %v7250 = vpack.i.bf16 %v7249, %v7249
          %v7252 = vsel %vm6430, %v6365, 4286644096
          %v7254 = vunpack.i.l.bf16 %v7252
          %v7255 = vunpack.i.h.bf16 %v7252
          %v7256 = vmax.f32 %v7254, %v7255
          %v7257 = vrot.slane %v7256, 4
          %v7258 = vmax.f32 %v7256, %v7257
          %v7259 = vrot.slane %v7258, 2
          %v7260 = vmax.f32 %v7258, %v7259
          %v7261 = vrot.slane %v7260, 1
          %v7262 = vmax.f32 %v7260, %v7261
          %v7263 = vpack.i.bf16 %v7262, %v7262
          %v7265 = vsel %vm6430, %v6366, 4286644096
          %v7267 = vunpack.i.l.bf16 %v7265
          %v7268 = vunpack.i.h.bf16 %v7265
          %v7269 = vmax.f32 %v7267, %v7268
          %v7270 = vrot.slane %v7269, 4
          %v7271 = vmax.f32 %v7269, %v7270
          %v7272 = vrot.slane %v7271, 2
          %v7273 = vmax.f32 %v7271, %v7272
          %v7274 = vrot.slane %v7273, 1
          %v7275 = vmax.f32 %v7273, %v7274
          %v7276 = vpack.i.bf16 %v7275, %v7275
          %v7278 = vsel %vm6430, %v6367, 4286644096
          %v7280 = vunpack.i.l.bf16 %v7278
          %v7281 = vunpack.i.h.bf16 %v7278
          %v7282 = vmax.f32 %v7280, %v7281
          %v7283 = vrot.slane %v7282, 4
          %v7284 = vmax.f32 %v7282, %v7283
          %v7285 = vrot.slane %v7284, 2
          %v7286 = vmax.f32 %v7284, %v7285
          %v7287 = vrot.slane %v7286, 1
          %v7288 = vmax.f32 %v7286, %v7287
          %v7289 = vpack.i.bf16 %v7288, %v7288
          %v7291 = vsel %vm6430, %v6368, 4286644096
          %v7293 = vunpack.i.l.bf16 %v7291
          %v7294 = vunpack.i.h.bf16 %v7291
          %v7295 = vmax.f32 %v7293, %v7294
          %v7296 = vrot.slane %v7295, 4
          %v7297 = vmax.f32 %v7295, %v7296
          %v7298 = vrot.slane %v7297, 2
          %v7299 = vmax.f32 %v7297, %v7298
          %v7300 = vrot.slane %v7299, 1
          %v7301 = vmax.f32 %v7299, %v7300
          %v7302 = vpack.i.bf16 %v7301, %v7301
          %v7304 = vsel %vm6430, %v6369, 4286644096
          %v7306 = vunpack.i.l.bf16 %v7304
          %v7307 = vunpack.i.h.bf16 %v7304
          %v7308 = vmax.f32 %v7306, %v7307
          %v7309 = vrot.slane %v7308, 4
          %v7310 = vmax.f32 %v7308, %v7309
          %v7311 = vrot.slane %v7310, 2
          %v7312 = vmax.f32 %v7310, %v7311
          %v7313 = vrot.slane %v7312, 1
          %v7314 = vmax.f32 %v7312, %v7313
          %v7315 = vpack.i.bf16 %v7314, %v7314
          %v7317 = vsel %vm6430, %v6370, 4286644096
          %v7319 = vunpack.i.l.bf16 %v7317
          %v7320 = vunpack.i.h.bf16 %v7317
          %v7321 = vmax.f32 %v7319, %v7320
          %v7322 = vrot.slane %v7321, 4
          %v7323 = vmax.f32 %v7321, %v7322
          %v7324 = vrot.slane %v7323, 2
          %v7325 = vmax.f32 %v7323, %v7324
          %v7326 = vrot.slane %v7325, 1
          %v7327 = vmax.f32 %v7325, %v7326
          %v7328 = vpack.i.bf16 %v7327, %v7327
          %v7330 = vsel %vm6430, %v6371, 4286644096
          %v7332 = vunpack.i.l.bf16 %v7330
          %v7333 = vunpack.i.h.bf16 %v7330
          %v7334 = vmax.f32 %v7332, %v7333
          %v7335 = vrot.slane %v7334, 4
          %v7336 = vmax.f32 %v7334, %v7335
          %v7337 = vrot.slane %v7336, 2
          %v7338 = vmax.f32 %v7336, %v7337
          %v7339 = vrot.slane %v7338, 1
          %v7340 = vmax.f32 %v7338, %v7339
          %v7341 = vpack.i.bf16 %v7340, %v7340
          %v7343 = vsel %vm6430, %v6372, 4286644096
          %v7345 = vunpack.i.l.bf16 %v7343
          %v7346 = vunpack.i.h.bf16 %v7343
          %v7347 = vmax.f32 %v7345, %v7346
          %v7348 = vrot.slane %v7347, 4
          %v7349 = vmax.f32 %v7347, %v7348
          %v7350 = vrot.slane %v7349, 2
          %v7351 = vmax.f32 %v7349, %v7350
          %v7352 = vrot.slane %v7351, 1
          %v7353 = vmax.f32 %v7351, %v7352
          %v7354 = vpack.i.bf16 %v7353, %v7353
          %v7356 = vsel %vm6430, %v6373, 4286644096
          %v7358 = vunpack.i.l.bf16 %v7356
          %v7359 = vunpack.i.h.bf16 %v7356
          %v7360 = vmax.f32 %v7358, %v7359
          %v7361 = vrot.slane %v7360, 4
          %v7362 = vmax.f32 %v7360, %v7361
          %v7363 = vrot.slane %v7362, 2
          %v7364 = vmax.f32 %v7362, %v7363
          %v7365 = vrot.slane %v7364, 1
          %v7366 = vmax.f32 %v7364, %v7365
          %v7367 = vpack.i.bf16 %v7366, %v7366
          %v7369 = vsel %vm6430, %v6374, 4286644096
          %v7371 = vunpack.i.l.bf16 %v7369
          %v7372 = vunpack.i.h.bf16 %v7369
          %v7373 = vmax.f32 %v7371, %v7372
          %v7374 = vrot.slane %v7373, 4
          %v7375 = vmax.f32 %v7373, %v7374
          %v7376 = vrot.slane %v7375, 2
          %v7377 = vmax.f32 %v7375, %v7376
          %v7378 = vrot.slane %v7377, 1
          %v7379 = vmax.f32 %v7377, %v7378
          %v7380 = vpack.i.bf16 %v7379, %v7379
          %v7382 = vsel %vm6430, %v6375, 4286644096
          %v7384 = vunpack.i.l.bf16 %v7382
          %v7385 = vunpack.i.h.bf16 %v7382
          %v7386 = vmax.f32 %v7384, %v7385
          %v7387 = vrot.slane %v7386, 4
          %v7388 = vmax.f32 %v7386, %v7387
          %v7389 = vrot.slane %v7388, 2
          %v7390 = vmax.f32 %v7388, %v7389
          %v7391 = vrot.slane %v7390, 1
          %v7392 = vmax.f32 %v7390, %v7391
          %v7393 = vpack.i.bf16 %v7392, %v7392
          %v7395 = vsel %vm6430, %v6376, 4286644096
          %v7397 = vunpack.i.l.bf16 %v7395
          %v7398 = vunpack.i.h.bf16 %v7395
          %v7399 = vmax.f32 %v7397, %v7398
          %v7400 = vrot.slane %v7399, 4
          %v7401 = vmax.f32 %v7399, %v7400
          %v7402 = vrot.slane %v7401, 2
          %v7403 = vmax.f32 %v7401, %v7402
          %v7404 = vrot.slane %v7403, 1
          %v7405 = vmax.f32 %v7403, %v7404
          %v7406 = vpack.i.bf16 %v7405, %v7405
          %v7408 = vsel %vm6430, %v6377, 4286644096
          %v7410 = vunpack.i.l.bf16 %v7408
          %v7411 = vunpack.i.h.bf16 %v7408
          %v7412 = vmax.f32 %v7410, %v7411
          %v7413 = vrot.slane %v7412, 4
          %v7414 = vmax.f32 %v7412, %v7413
          %v7415 = vrot.slane %v7414, 2
          %v7416 = vmax.f32 %v7414, %v7415
          %v7417 = vrot.slane %v7416, 1
          %v7418 = vmax.f32 %v7416, %v7417
          %v7419 = vpack.i.bf16 %v7418, %v7418
          %v7421 = vsel %vm6430, %v6378, 4286644096
          %v7423 = vunpack.i.l.bf16 %v7421
          %v7424 = vunpack.i.h.bf16 %v7421
          %v7425 = vmax.f32 %v7423, %v7424
          %v7426 = vrot.slane %v7425, 4
          %v7427 = vmax.f32 %v7425, %v7426
          %v7428 = vrot.slane %v7427, 2
          %v7429 = vmax.f32 %v7427, %v7428
          %v7430 = vrot.slane %v7429, 1
          %v7431 = vmax.f32 %v7429, %v7430
          %v7432 = vpack.i.bf16 %v7431, %v7431
          %v7434 = vsel %vm6430, %v6379, 4286644096
          %v7436 = vunpack.i.l.bf16 %v7434
          %v7437 = vunpack.i.h.bf16 %v7434
          %v7438 = vmax.f32 %v7436, %v7437
          %v7439 = vrot.slane %v7438, 4
          %v7440 = vmax.f32 %v7438, %v7439
          %v7441 = vrot.slane %v7440, 2
          %v7442 = vmax.f32 %v7440, %v7441
          %v7443 = vrot.slane %v7442, 1
          %v7444 = vmax.f32 %v7442, %v7443
          %v7445 = vpack.i.bf16 %v7444, %v7444
          %v7447 = vsel %vm6430, %v6380, 4286644096
          %v7449 = vunpack.i.l.bf16 %v7447
          %v7450 = vunpack.i.h.bf16 %v7447
          %v7451 = vmax.f32 %v7449, %v7450
          %v7452 = vrot.slane %v7451, 4
          %v7453 = vmax.f32 %v7451, %v7452
          %v7454 = vrot.slane %v7453, 2
          %v7455 = vmax.f32 %v7453, %v7454
          %v7456 = vrot.slane %v7455, 1
          %v7457 = vmax.f32 %v7455, %v7456
          %v7458 = vpack.i.bf16 %v7457, %v7457
          %v7460 = vsel %vm6430, %v6381, 4286644096
          %v7462 = vunpack.i.l.bf16 %v7460
          %v7463 = vunpack.i.h.bf16 %v7460
          %v7464 = vmax.f32 %v7462, %v7463
          %v7465 = vrot.slane %v7464, 4
          %v7466 = vmax.f32 %v7464, %v7465
          %v7467 = vrot.slane %v7466, 2
          %v7468 = vmax.f32 %v7466, %v7467
          %v7469 = vrot.slane %v7468, 1
          %v7470 = vmax.f32 %v7468, %v7469
          %v7471 = vpack.i.bf16 %v7470, %v7470
          %v7473 = vsel %vm6430, %v6382, 4286644096
          %v7475 = vunpack.i.l.bf16 %v7473
          %v7476 = vunpack.i.h.bf16 %v7473
          %v7477 = vmax.f32 %v7475, %v7476
          %v7478 = vrot.slane %v7477, 4
          %v7479 = vmax.f32 %v7477, %v7478
          %v7480 = vrot.slane %v7479, 2
          %v7481 = vmax.f32 %v7479, %v7480
          %v7482 = vrot.slane %v7481, 1
          %v7483 = vmax.f32 %v7481, %v7482
          %v7484 = vpack.i.bf16 %v7483, %v7483
          %v7486 = vsel %vm6430, %v6383, 4286644096
          %v7488 = vunpack.i.l.bf16 %v7486
          %v7489 = vunpack.i.h.bf16 %v7486
          %v7490 = vmax.f32 %v7488, %v7489
          %v7491 = vrot.slane %v7490, 4
          %v7492 = vmax.f32 %v7490, %v7491
          %v7493 = vrot.slane %v7492, 2
          %v7494 = vmax.f32 %v7492, %v7493
          %v7495 = vrot.slane %v7494, 1
          %v7496 = vmax.f32 %v7494, %v7495
          %v7497 = vpack.i.bf16 %v7496, %v7496
          %v7499 = vsel %vm6430, %v6384, 4286644096
          %v7501 = vunpack.i.l.bf16 %v7499
          %v7502 = vunpack.i.h.bf16 %v7499
          %v7503 = vmax.f32 %v7501, %v7502
          %v7504 = vrot.slane %v7503, 4
          %v7505 = vmax.f32 %v7503, %v7504
          %v7506 = vrot.slane %v7505, 2
          %v7507 = vmax.f32 %v7505, %v7506
          %v7508 = vrot.slane %v7507, 1
          %v7509 = vmax.f32 %v7507, %v7508
          %v7510 = vpack.i.bf16 %v7509, %v7509
          %v7512 = vsel %vm6430, %v6385, 4286644096
          %v7514 = vunpack.i.l.bf16 %v7512
          %v7515 = vunpack.i.h.bf16 %v7512
          %v7516 = vmax.f32 %v7514, %v7515
          %v7517 = vrot.slane %v7516, 4
          %v7518 = vmax.f32 %v7516, %v7517
          %v7519 = vrot.slane %v7518, 2
          %v7520 = vmax.f32 %v7518, %v7519
          %v7521 = vrot.slane %v7520, 1
          %v7522 = vmax.f32 %v7520, %v7521
          %v7523 = vpack.i.bf16 %v7522, %v7522
          %v7525 = vsel %vm6430, %v6386, 4286644096
          %v7527 = vunpack.i.l.bf16 %v7525
          %v7528 = vunpack.i.h.bf16 %v7525
          %v7529 = vmax.f32 %v7527, %v7528
          %v7530 = vrot.slane %v7529, 4
          %v7531 = vmax.f32 %v7529, %v7530
          %v7532 = vrot.slane %v7531, 2
          %v7533 = vmax.f32 %v7531, %v7532
          %v7534 = vrot.slane %v7533, 1
          %v7535 = vmax.f32 %v7533, %v7534
          %v7536 = vpack.i.bf16 %v7535, %v7535
          %v7538 = vsel %vm6430, %v6387, 4286644096
          %v7540 = vunpack.i.l.bf16 %v7538
          %v7541 = vunpack.i.h.bf16 %v7538
          %v7542 = vmax.f32 %v7540, %v7541
          %v7543 = vrot.slane %v7542, 4
          %v7544 = vmax.f32 %v7542, %v7543
          %v7545 = vrot.slane %v7544, 2
          %v7546 = vmax.f32 %v7544, %v7545
          %v7547 = vrot.slane %v7546, 1
          %v7548 = vmax.f32 %v7546, %v7547
          %v7549 = vpack.i.bf16 %v7548, %v7548
          %v7551 = vsel %vm6430, %v6388, 4286644096
          %v7553 = vunpack.i.l.bf16 %v7551
          %v7554 = vunpack.i.h.bf16 %v7551
          %v7555 = vmax.f32 %v7553, %v7554
          %v7556 = vrot.slane %v7555, 4
          %v7557 = vmax.f32 %v7555, %v7556
          %v7558 = vrot.slane %v7557, 2
          %v7559 = vmax.f32 %v7557, %v7558
          %v7560 = vrot.slane %v7559, 1
          %v7561 = vmax.f32 %v7559, %v7560
          %v7562 = vpack.i.bf16 %v7561, %v7561
          %v7564 = vsel %vm6430, %v6389, 4286644096
          %v7566 = vunpack.i.l.bf16 %v7564
          %v7567 = vunpack.i.h.bf16 %v7564
          %v7568 = vmax.f32 %v7566, %v7567
          %v7569 = vrot.slane %v7568, 4
          %v7570 = vmax.f32 %v7568, %v7569
          %v7571 = vrot.slane %v7570, 2
          %v7572 = vmax.f32 %v7570, %v7571
          %v7573 = vrot.slane %v7572, 1
          %v7574 = vmax.f32 %v7572, %v7573
          %v7575 = vpack.i.bf16 %v7574, %v7574
          %v7577 = vsel %vm6430, %v6390, 4286644096
          %v7579 = vunpack.i.l.bf16 %v7577
          %v7580 = vunpack.i.h.bf16 %v7577
          %v7581 = vmax.f32 %v7579, %v7580
          %v7582 = vrot.slane %v7581, 4
          %v7583 = vmax.f32 %v7581, %v7582
          %v7584 = vrot.slane %v7583, 2
          %v7585 = vmax.f32 %v7583, %v7584
          %v7586 = vrot.slane %v7585, 1
          %v7587 = vmax.f32 %v7585, %v7586
          %v7588 = vpack.i.bf16 %v7587, %v7587
          %v7590 = vsel %vm6430, %v6391, 4286644096
          %v7592 = vunpack.i.l.bf16 %v7590
          %v7593 = vunpack.i.h.bf16 %v7590
          %v7594 = vmax.f32 %v7592, %v7593
          %v7595 = vrot.slane %v7594, 4
          %v7596 = vmax.f32 %v7594, %v7595
          %v7597 = vrot.slane %v7596, 2
          %v7598 = vmax.f32 %v7596, %v7597
          %v7599 = vrot.slane %v7598, 1
          %v7600 = vmax.f32 %v7598, %v7599
          %v7601 = vpack.i.bf16 %v7600, %v7600
          %v7603 = vsel %vm6430, %v6392, 4286644096
          %v7605 = vunpack.i.l.bf16 %v7603
          %v7606 = vunpack.i.h.bf16 %v7603
          %v7607 = vmax.f32 %v7605, %v7606
          %v7608 = vrot.slane %v7607, 4
          %v7609 = vmax.f32 %v7607, %v7608
          %v7610 = vrot.slane %v7609, 2
          %v7611 = vmax.f32 %v7609, %v7610
          %v7612 = vrot.slane %v7611, 1
          %v7613 = vmax.f32 %v7611, %v7612
          %v7614 = vpack.i.bf16 %v7613, %v7613
          %v7616 = vsel %vm6430, %v6393, 4286644096
          %v7618 = vunpack.i.l.bf16 %v7616
          %v7619 = vunpack.i.h.bf16 %v7616
          %v7620 = vmax.f32 %v7618, %v7619
          %v7621 = vrot.slane %v7620, 4
          %v7622 = vmax.f32 %v7620, %v7621
          %v7623 = vrot.slane %v7622, 2
          %v7624 = vmax.f32 %v7622, %v7623
          %v7625 = vrot.slane %v7624, 1
          %v7626 = vmax.f32 %v7624, %v7625
          %v7627 = vpack.i.bf16 %v7626, %v7626
          %v7629 = vsel %vm6430, %v6394, 4286644096
          %v7631 = vunpack.i.l.bf16 %v7629
          %v7632 = vunpack.i.h.bf16 %v7629
          %v7633 = vmax.f32 %v7631, %v7632
          %v7634 = vrot.slane %v7633, 4
          %v7635 = vmax.f32 %v7633, %v7634
          %v7636 = vrot.slane %v7635, 2
          %v7637 = vmax.f32 %v7635, %v7636
          %v7638 = vrot.slane %v7637, 1
          %v7639 = vmax.f32 %v7637, %v7638
          %v7640 = vpack.i.bf16 %v7639, %v7639
          %v7642 = vsel %vm6430, %v6395, 4286644096
          %v7644 = vunpack.i.l.bf16 %v7642
          %v7645 = vunpack.i.h.bf16 %v7642
          %v7646 = vmax.f32 %v7644, %v7645
          %v7647 = vrot.slane %v7646, 4
          %v7648 = vmax.f32 %v7646, %v7647
          %v7649 = vrot.slane %v7648, 2
          %v7650 = vmax.f32 %v7648, %v7649
          %v7651 = vrot.slane %v7650, 1
          %v7652 = vmax.f32 %v7650, %v7651
          %v7653 = vpack.i.bf16 %v7652, %v7652
          %v7655 = vsel %vm6430, %v6396, 4286644096
          %v7657 = vunpack.i.l.bf16 %v7655
          %v7658 = vunpack.i.h.bf16 %v7655
          %v7659 = vmax.f32 %v7657, %v7658
          %v7660 = vrot.slane %v7659, 4
          %v7661 = vmax.f32 %v7659, %v7660
          %v7662 = vrot.slane %v7661, 2
          %v7663 = vmax.f32 %v7661, %v7662
          %v7664 = vrot.slane %v7663, 1
          %v7665 = vmax.f32 %v7663, %v7664
          %v7666 = vpack.i.bf16 %v7665, %v7665
          %v7668 = vsel %vm6430, %v6397, 4286644096
          %v7670 = vunpack.i.l.bf16 %v7668
          %v7671 = vunpack.i.h.bf16 %v7668
          %v7672 = vmax.f32 %v7670, %v7671
          %v7673 = vrot.slane %v7672, 4
          %v7674 = vmax.f32 %v7672, %v7673
          %v7675 = vrot.slane %v7674, 2
          %v7676 = vmax.f32 %v7674, %v7675
          %v7677 = vrot.slane %v7676, 1
          %v7678 = vmax.f32 %v7676, %v7677
          %v7679 = vpack.i.bf16 %v7678, %v7678
          %v7681 = vsel %vm6430, %v6398, 4286644096
          %v7683 = vunpack.i.l.bf16 %v7681
          %v7684 = vunpack.i.h.bf16 %v7681
          %v7685 = vmax.f32 %v7683, %v7684
          %v7686 = vrot.slane %v7685, 4
          %v7687 = vmax.f32 %v7685, %v7686
          %v7688 = vrot.slane %v7687, 2
          %v7689 = vmax.f32 %v7687, %v7688
          %v7690 = vrot.slane %v7689, 1
          %v7691 = vmax.f32 %v7689, %v7690
          %v7692 = vpack.i.bf16 %v7691, %v7691
          %v7694 = vsel %vm6430, %v6399, 4286644096
          %v7696 = vunpack.i.l.bf16 %v7694
          %v7697 = vunpack.i.h.bf16 %v7694
          %v7698 = vmax.f32 %v7696, %v7697
          %v7699 = vrot.slane %v7698, 4
          %v7700 = vmax.f32 %v7698, %v7699
          %v7701 = vrot.slane %v7700, 2
          %v7702 = vmax.f32 %v7700, %v7701
          %v7703 = vrot.slane %v7702, 1
          %v7704 = vmax.f32 %v7702, %v7703
          %v7705 = vpack.i.bf16 %v7704, %v7704
          %v7707 = vsel %vm6430, %v6400, 4286644096
          %v7709 = vunpack.i.l.bf16 %v7707
          %v7710 = vunpack.i.h.bf16 %v7707
          %v7711 = vmax.f32 %v7709, %v7710
          %v7712 = vrot.slane %v7711, 4
          %v7713 = vmax.f32 %v7711, %v7712
          %v7714 = vrot.slane %v7713, 2
          %v7715 = vmax.f32 %v7713, %v7714
          %v7716 = vrot.slane %v7715, 1
          %v7717 = vmax.f32 %v7715, %v7716
          %v7718 = vpack.i.bf16 %v7717, %v7717
          %v7720 = vsel %vm6430, %v6401, 4286644096
          %v7722 = vunpack.i.l.bf16 %v7720
          %v7723 = vunpack.i.h.bf16 %v7720
          %v7724 = vmax.f32 %v7722, %v7723
          %v7725 = vrot.slane %v7724, 4
          %v7726 = vmax.f32 %v7724, %v7725
          %v7727 = vrot.slane %v7726, 2
          %v7728 = vmax.f32 %v7726, %v7727
          %v7729 = vrot.slane %v7728, 1
          %v7730 = vmax.f32 %v7728, %v7729
          %v7731 = vpack.i.bf16 %v7730, %v7730
          %v7733 = vsel %vm6430, %v6402, 4286644096
          %v7735 = vunpack.i.l.bf16 %v7733
          %v7736 = vunpack.i.h.bf16 %v7733
          %v7737 = vmax.f32 %v7735, %v7736
          %v7738 = vrot.slane %v7737, 4
          %v7739 = vmax.f32 %v7737, %v7738
          %v7740 = vrot.slane %v7739, 2
          %v7741 = vmax.f32 %v7739, %v7740
          %v7742 = vrot.slane %v7741, 1
          %v7743 = vmax.f32 %v7741, %v7742
          %v7744 = vpack.i.bf16 %v7743, %v7743
          %v7746 = vsel %vm6430, %v6403, 4286644096
          %v7748 = vunpack.i.l.bf16 %v7746
          %v7749 = vunpack.i.h.bf16 %v7746
          %v7750 = vmax.f32 %v7748, %v7749
          %v7751 = vrot.slane %v7750, 4
          %v7752 = vmax.f32 %v7750, %v7751
          %v7753 = vrot.slane %v7752, 2
          %v7754 = vmax.f32 %v7752, %v7753
          %v7755 = vrot.slane %v7754, 1
          %v7756 = vmax.f32 %v7754, %v7755
          %v7757 = vpack.i.bf16 %v7756, %v7756
          %v7759 = vsel %vm6430, %v6404, 4286644096
          %v7761 = vunpack.i.l.bf16 %v7759
          %v7762 = vunpack.i.h.bf16 %v7759
          %v7763 = vmax.f32 %v7761, %v7762
          %v7764 = vrot.slane %v7763, 4
          %v7765 = vmax.f32 %v7763, %v7764
          %v7766 = vrot.slane %v7765, 2
          %v7767 = vmax.f32 %v7765, %v7766
          %v7768 = vrot.slane %v7767, 1
          %v7769 = vmax.f32 %v7767, %v7768
          %v7770 = vpack.i.bf16 %v7769, %v7769
          %v7772 = vsel %vm6430, %v6405, 4286644096
          %v7774 = vunpack.i.l.bf16 %v7772
          %v7775 = vunpack.i.h.bf16 %v7772
          %v7776 = vmax.f32 %v7774, %v7775
          %v7777 = vrot.slane %v7776, 4
          %v7778 = vmax.f32 %v7776, %v7777
          %v7779 = vrot.slane %v7778, 2
          %v7780 = vmax.f32 %v7778, %v7779
          %v7781 = vrot.slane %v7780, 1
          %v7782 = vmax.f32 %v7780, %v7781
          %v7783 = vpack.i.bf16 %v7782, %v7782
          %v7785 = vsel %vm6430, %v6406, 4286644096
          %v7787 = vunpack.i.l.bf16 %v7785
          %v7788 = vunpack.i.h.bf16 %v7785
          %v7789 = vmax.f32 %v7787, %v7788
          %v7790 = vrot.slane %v7789, 4
          %v7791 = vmax.f32 %v7789, %v7790
          %v7792 = vrot.slane %v7791, 2
          %v7793 = vmax.f32 %v7791, %v7792
          %v7794 = vrot.slane %v7793, 1
          %v7795 = vmax.f32 %v7793, %v7794
          %v7796 = vpack.i.bf16 %v7795, %v7795
          %v7798 = vsel %vm6430, %v6407, 4286644096
          %v7800 = vunpack.i.l.bf16 %v7798
          %v7801 = vunpack.i.h.bf16 %v7798
          %v7802 = vmax.f32 %v7800, %v7801
          %v7803 = vrot.slane %v7802, 4
          %v7804 = vmax.f32 %v7802, %v7803
          %v7805 = vrot.slane %v7804, 2
          %v7806 = vmax.f32 %v7804, %v7805
          %v7807 = vrot.slane %v7806, 1
          %v7808 = vmax.f32 %v7806, %v7807
          %v7809 = vpack.i.bf16 %v7808, %v7808
          %v7811 = vsel %vm6430, %v6408, 4286644096
          %v7813 = vunpack.i.l.bf16 %v7811
          %v7814 = vunpack.i.h.bf16 %v7811
          %v7815 = vmax.f32 %v7813, %v7814
          %v7816 = vrot.slane %v7815, 4
          %v7817 = vmax.f32 %v7815, %v7816
          %v7818 = vrot.slane %v7817, 2
          %v7819 = vmax.f32 %v7817, %v7818
          %v7820 = vrot.slane %v7819, 1
          %v7821 = vmax.f32 %v7819, %v7820
          %v7822 = vpack.i.bf16 %v7821, %v7821
          %v7824 = vsel %vm6430, %v6409, 4286644096
          %v7826 = vunpack.i.l.bf16 %v7824
          %v7827 = vunpack.i.h.bf16 %v7824
          %v7828 = vmax.f32 %v7826, %v7827
          %v7829 = vrot.slane %v7828, 4
          %v7830 = vmax.f32 %v7828, %v7829
          %v7831 = vrot.slane %v7830, 2
          %v7832 = vmax.f32 %v7830, %v7831
          %v7833 = vrot.slane %v7832, 1
          %v7834 = vmax.f32 %v7832, %v7833
          %v7835 = vpack.i.bf16 %v7834, %v7834
          %v7837 = vsel %vm6430, %v6410, 4286644096
          %v7839 = vunpack.i.l.bf16 %v7837
          %v7840 = vunpack.i.h.bf16 %v7837
          %v7841 = vmax.f32 %v7839, %v7840
          %v7842 = vrot.slane %v7841, 4
          %v7843 = vmax.f32 %v7841, %v7842
          %v7844 = vrot.slane %v7843, 2
          %v7845 = vmax.f32 %v7843, %v7844
          %v7846 = vrot.slane %v7845, 1
          %v7847 = vmax.f32 %v7845, %v7846
          %v7848 = vpack.i.bf16 %v7847, %v7847
          %v7850 = vsel %vm6430, %v6411, 4286644096
          %v7852 = vunpack.i.l.bf16 %v7850
          %v7853 = vunpack.i.h.bf16 %v7850
          %v7854 = vmax.f32 %v7852, %v7853
          %v7855 = vrot.slane %v7854, 4
          %v7856 = vmax.f32 %v7854, %v7855
          %v7857 = vrot.slane %v7856, 2
          %v7858 = vmax.f32 %v7856, %v7857
          %v7859 = vrot.slane %v7858, 1
          %v7860 = vmax.f32 %v7858, %v7859
          %v7861 = vpack.i.bf16 %v7860, %v7860
          %v7863 = vsel %vm6430, %v6412, 4286644096
          %v7865 = vunpack.i.l.bf16 %v7863
          %v7866 = vunpack.i.h.bf16 %v7863
          %v7867 = vmax.f32 %v7865, %v7866
          %v7868 = vrot.slane %v7867, 4
          %v7869 = vmax.f32 %v7867, %v7868
          %v7870 = vrot.slane %v7869, 2
          %v7871 = vmax.f32 %v7869, %v7870
          %v7872 = vrot.slane %v7871, 1
          %v7873 = vmax.f32 %v7871, %v7872
          %v7874 = vpack.i.bf16 %v7873, %v7873
          %v7876 = vsel %vm6430, %v6413, 4286644096
          %v7878 = vunpack.i.l.bf16 %v7876
          %v7879 = vunpack.i.h.bf16 %v7876
          %v7880 = vmax.f32 %v7878, %v7879
          %v7881 = vrot.slane %v7880, 4
          %v7882 = vmax.f32 %v7880, %v7881
          %v7883 = vrot.slane %v7882, 2
          %v7884 = vmax.f32 %v7882, %v7883
          %v7885 = vrot.slane %v7884, 1
          %v7886 = vmax.f32 %v7884, %v7885
          %v7887 = vpack.i.bf16 %v7886, %v7886
          %v7889 = vsel %vm6430, %v6414, 4286644096
          %v7891 = vunpack.i.l.bf16 %v7889
          %v7892 = vunpack.i.h.bf16 %v7889
          %v7893 = vmax.f32 %v7891, %v7892
          %v7894 = vrot.slane %v7893, 4
          %v7895 = vmax.f32 %v7893, %v7894
          %v7896 = vrot.slane %v7895, 2
          %v7897 = vmax.f32 %v7895, %v7896
          %v7898 = vrot.slane %v7897, 1
          %v7899 = vmax.f32 %v7897, %v7898
          %v7900 = vpack.i.bf16 %v7899, %v7899
          %v7902 = vsel %vm6430, %v6415, 4286644096
          %v7904 = vunpack.i.l.bf16 %v7902
          %v7905 = vunpack.i.h.bf16 %v7902
          %v7906 = vmax.f32 %v7904, %v7905
          %v7907 = vrot.slane %v7906, 4
          %v7908 = vmax.f32 %v7906, %v7907
          %v7909 = vrot.slane %v7908, 2
          %v7910 = vmax.f32 %v7908, %v7909
          %v7911 = vrot.slane %v7910, 1
          %v7912 = vmax.f32 %v7910, %v7911
          %v7913 = vpack.i.bf16 %v7912, %v7912
          %v7915 = vsel %vm6430, %v6416, 4286644096
          %v7917 = vunpack.i.l.bf16 %v7915
          %v7918 = vunpack.i.h.bf16 %v7915
          %v7919 = vmax.f32 %v7917, %v7918
          %v7920 = vrot.slane %v7919, 4
          %v7921 = vmax.f32 %v7919, %v7920
          %v7922 = vrot.slane %v7921, 2
          %v7923 = vmax.f32 %v7921, %v7922
          %v7924 = vrot.slane %v7923, 1
          %v7925 = vmax.f32 %v7923, %v7924
          %v7926 = vpack.i.bf16 %v7925, %v7925
          %v7928 = vsel %vm6430, %v6417, 4286644096
          %v7930 = vunpack.i.l.bf16 %v7928
          %v7931 = vunpack.i.h.bf16 %v7928
          %v7932 = vmax.f32 %v7930, %v7931
          %v7933 = vrot.slane %v7932, 4
          %v7934 = vmax.f32 %v7932, %v7933
          %v7935 = vrot.slane %v7934, 2
          %v7936 = vmax.f32 %v7934, %v7935
          %v7937 = vrot.slane %v7936, 1
          %v7938 = vmax.f32 %v7936, %v7937
          %v7939 = vpack.i.bf16 %v7938, %v7938
          %v7941 = vsel %vm6430, %v6418, 4286644096
          %v7943 = vunpack.i.l.bf16 %v7941
          %v7944 = vunpack.i.h.bf16 %v7941
          %v7945 = vmax.f32 %v7943, %v7944
          %v7946 = vrot.slane %v7945, 4
          %v7947 = vmax.f32 %v7945, %v7946
          %v7948 = vrot.slane %v7947, 2
          %v7949 = vmax.f32 %v7947, %v7948
          %v7950 = vrot.slane %v7949, 1
          %v7951 = vmax.f32 %v7949, %v7950
          %v7952 = vpack.i.bf16 %v7951, %v7951
          %v7954 = vsel %vm6430, %v6419, 4286644096
          %v7956 = vunpack.i.l.bf16 %v7954
          %v7957 = vunpack.i.h.bf16 %v7954
          %v7958 = vmax.f32 %v7956, %v7957
          %v7959 = vrot.slane %v7958, 4
          %v7960 = vmax.f32 %v7958, %v7959
          %v7961 = vrot.slane %v7960, 2
          %v7962 = vmax.f32 %v7960, %v7961
          %v7963 = vrot.slane %v7962, 1
          %v7964 = vmax.f32 %v7962, %v7963
          %v7965 = vpack.i.bf16 %v7964, %v7964
          %v7967 = vsel %vm6430, %v6420, 4286644096
          %v7969 = vunpack.i.l.bf16 %v7967
          %v7970 = vunpack.i.h.bf16 %v7967
          %v7971 = vmax.f32 %v7969, %v7970
          %v7972 = vrot.slane %v7971, 4
          %v7973 = vmax.f32 %v7971, %v7972
          %v7974 = vrot.slane %v7973, 2
          %v7975 = vmax.f32 %v7973, %v7974
          %v7976 = vrot.slane %v7975, 1
          %v7977 = vmax.f32 %v7975, %v7976
          %v7978 = vpack.i.bf16 %v7977, %v7977
          %v7980 = vsel %vm6430, %v6421, 4286644096
          %v7982 = vunpack.i.l.bf16 %v7980
          %v7983 = vunpack.i.h.bf16 %v7980
          %v7984 = vmax.f32 %v7982, %v7983
          %v7985 = vrot.slane %v7984, 4
          %v7986 = vmax.f32 %v7984, %v7985
          %v7987 = vrot.slane %v7986, 2
          %v7988 = vmax.f32 %v7986, %v7987
          %v7989 = vrot.slane %v7988, 1
          %v7990 = vmax.f32 %v7988, %v7989
          %v7991 = vpack.i.bf16 %v7990, %v7990
          %v7993 = vsel %vm6430, %v6422, 4286644096
          %v7995 = vunpack.i.l.bf16 %v7993
          %v7996 = vunpack.i.h.bf16 %v7993
          %v7997 = vmax.f32 %v7995, %v7996
          %v7998 = vrot.slane %v7997, 4
          %v7999 = vmax.f32 %v7997, %v7998
          %v8000 = vrot.slane %v7999, 2
          %v8001 = vmax.f32 %v7999, %v8000
          %v8002 = vrot.slane %v8001, 1
          %v8003 = vmax.f32 %v8001, %v8002
          %v8004 = vpack.i.bf16 %v8003, %v8003
          %v8006 = vsel %vm6430, %v6423, 4286644096
          %v8008 = vunpack.i.l.bf16 %v8006
          %v8009 = vunpack.i.h.bf16 %v8006
          %v8010 = vmax.f32 %v8008, %v8009
          %v8011 = vrot.slane %v8010, 4
          %v8012 = vmax.f32 %v8010, %v8011
          %v8013 = vrot.slane %v8012, 2
          %v8014 = vmax.f32 %v8012, %v8013
          %v8015 = vrot.slane %v8014, 1
          %v8016 = vmax.f32 %v8014, %v8015
          %v8017 = vpack.i.bf16 %v8016, %v8016
          %v8019 = vsel %vm6430, %v6424, 4286644096
          %v8021 = vunpack.i.l.bf16 %v8019
          %v8022 = vunpack.i.h.bf16 %v8019
          %v8023 = vmax.f32 %v8021, %v8022
          %v8024 = vrot.slane %v8023, 4
          %v8025 = vmax.f32 %v8023, %v8024
          %v8026 = vrot.slane %v8025, 2
          %v8027 = vmax.f32 %v8025, %v8026
          %v8028 = vrot.slane %v8027, 1
          %v8029 = vmax.f32 %v8027, %v8028
          %v8030 = vpack.i.bf16 %v8029, %v8029
          %v8032 = vsel %vm6430, %v6425, 4286644096
          %v8034 = vunpack.i.l.bf16 %v8032
          %v8035 = vunpack.i.h.bf16 %v8032
          %v8036 = vmax.f32 %v8034, %v8035
          %v8037 = vrot.slane %v8036, 4
          %v8038 = vmax.f32 %v8036, %v8037
          %v8039 = vrot.slane %v8038, 2
          %v8040 = vmax.f32 %v8038, %v8039
          %v8041 = vrot.slane %v8040, 1
          %v8042 = vmax.f32 %v8040, %v8041
          %v8043 = vpack.i.bf16 %v8042, %v8042
          %v8045 = vsel %vm6430, %v6426, 4286644096
          %v8047 = vunpack.i.l.bf16 %v8045
          %v8048 = vunpack.i.h.bf16 %v8045
          %v8049 = vmax.f32 %v8047, %v8048
          %v8050 = vrot.slane %v8049, 4
          %v8051 = vmax.f32 %v8049, %v8050
          %v8052 = vrot.slane %v8051, 2
          %v8053 = vmax.f32 %v8051, %v8052
          %v8054 = vrot.slane %v8053, 1
          %v8055 = vmax.f32 %v8053, %v8054
          %v8056 = vpack.i.bf16 %v8055, %v8055
          %v8058 = vsel %vm6430, %v6427, 4286644096
          %v8060 = vunpack.i.l.bf16 %v8058
          %v8061 = vunpack.i.h.bf16 %v8058
          %v8062 = vmax.f32 %v8060, %v8061
          %v8063 = vrot.slane %v8062, 4
          %v8064 = vmax.f32 %v8062, %v8063
          %v8065 = vrot.slane %v8064, 2
          %v8066 = vmax.f32 %v8064, %v8065
          %v8067 = vrot.slane %v8066, 1
          %v8068 = vmax.f32 %v8066, %v8067
          %v8069 = vpack.i.bf16 %v8068, %v8068
          %v8071 = vsel %vm6430, %v6428, 4286644096
          %v8073 = vunpack.i.l.bf16 %v8071
          %v8074 = vunpack.i.h.bf16 %v8071
          %v8075 = vmax.f32 %v8073, %v8074
          %v8076 = vrot.slane %v8075, 4
          %v8077 = vmax.f32 %v8075, %v8076
          %v8078 = vrot.slane %v8077, 2
          %v8079 = vmax.f32 %v8077, %v8078
          %v8080 = vrot.slane %v8079, 1
          %v8081 = vmax.f32 %v8079, %v8080
          %v8082 = vpack.i.bf16 %v8081, %v8081
          %v8084 = vsel %vm6430, %v6429, 4286644096
          %v8086 = vunpack.i.l.bf16 %v8084
          %v8087 = vunpack.i.h.bf16 %v8084
          %v8088 = vmax.f32 %v8086, %v8087
          %v8089 = vrot.slane %v8088, 4
          %v8090 = vmax.f32 %v8088, %v8089
          %v8091 = vrot.slane %v8090, 2
          %v8092 = vmax.f32 %v8090, %v8091
          %v8093 = vrot.slane %v8092, 1
          %v8094 = vmax.f32 %v8092, %v8093
          %v8095 = vpack.i.bf16 %v8094, %v8094
          %v8224 = vunpack.c.l.b16 %v6444
          %v8225 = vunpack.c.l.b16 %v6457
          %v8226 = vunpack.c.l.b16 %v6470
          %v8227 = vunpack.c.l.b16 %v6483
          %v8228 = vunpack.c.l.b16 %v6496
          %v8229 = vunpack.c.l.b16 %v6509
          %v8230 = vunpack.c.l.b16 %v6522
          %v8231 = vunpack.c.l.b16 %v6535
          %v8232 = vunpack.c.l.b16 %v6548
          %v8233 = vunpack.c.l.b16 %v6561
          %v8234 = vunpack.c.l.b16 %v6574
          %v8235 = vunpack.c.l.b16 %v6587
          %v8236 = vunpack.c.l.b16 %v6600
          %v8237 = vunpack.c.l.b16 %v6613
          %v8238 = vunpack.c.l.b16 %v6626
          %v8239 = vunpack.c.l.b16 %v6639
          %v8240 = vunpack.c.l.b16 %v6652
          %v8241 = vunpack.c.l.b16 %v6665
          %v8242 = vunpack.c.l.b16 %v6678
          %v8243 = vunpack.c.l.b16 %v6691
          %v8244 = vunpack.c.l.b16 %v6704
          %v8245 = vunpack.c.l.b16 %v6717
          %v8246 = vunpack.c.l.b16 %v6730
          %v8247 = vunpack.c.l.b16 %v6743
          %v8248 = vunpack.c.l.b16 %v6756
          %v8249 = vunpack.c.l.b16 %v6769
          %v8250 = vunpack.c.l.b16 %v6782
          %v8251 = vunpack.c.l.b16 %v6795
          %v8252 = vunpack.c.l.b16 %v6808
          %v8253 = vunpack.c.l.b16 %v6821
          %v8254 = vunpack.c.l.b16 %v6834
          %v8255 = vunpack.c.l.b16 %v6847
          %v8256 = vunpack.c.l.b16 %v6860
          %v8257 = vunpack.c.l.b16 %v6873
          %v8258 = vunpack.c.l.b16 %v6886
          %v8259 = vunpack.c.l.b16 %v6899
          %v8260 = vunpack.c.l.b16 %v6912
          %v8261 = vunpack.c.l.b16 %v6925
          %v8262 = vunpack.c.l.b16 %v6938
          %v8263 = vunpack.c.l.b16 %v6951
          %v8264 = vunpack.c.l.b16 %v6964
          %v8265 = vunpack.c.l.b16 %v6977
          %v8266 = vunpack.c.l.b16 %v6990
          %v8267 = vunpack.c.l.b16 %v7003
          %v8268 = vunpack.c.l.b16 %v7016
          %v8269 = vunpack.c.l.b16 %v7029
          %v8270 = vunpack.c.l.b16 %v7042
          %v8271 = vunpack.c.l.b16 %v7055
          %v8272 = vunpack.c.l.b16 %v7068
          %v8273 = vunpack.c.l.b16 %v7081
          %v8274 = vunpack.c.l.b16 %v7094
          %v8275 = vunpack.c.l.b16 %v7107
          %v8276 = vunpack.c.l.b16 %v7120
          %v8277 = vunpack.c.l.b16 %v7133
          %v8278 = vunpack.c.l.b16 %v7146
          %v8279 = vunpack.c.l.b16 %v7159
          %v8280 = vunpack.c.l.b16 %v7172
          %v8281 = vunpack.c.l.b16 %v7185
          %v8282 = vunpack.c.l.b16 %v7198
          %v8283 = vunpack.c.l.b16 %v7211
          %v8284 = vunpack.c.l.b16 %v7224
          %v8285 = vunpack.c.l.b16 %v7237
          %v8286 = vunpack.c.l.b16 %v7250
          %v8287 = vunpack.c.l.b16 %v7263
          %v8288 = vunpack.c.l.b16 %v7276
          %v8289 = vunpack.c.l.b16 %v7289
          %v8290 = vunpack.c.l.b16 %v7302
          %v8291 = vunpack.c.l.b16 %v7315
          %v8292 = vunpack.c.l.b16 %v7328
          %v8293 = vunpack.c.l.b16 %v7341
          %v8294 = vunpack.c.l.b16 %v7354
          %v8295 = vunpack.c.l.b16 %v7367
          %v8296 = vunpack.c.l.b16 %v7380
          %v8297 = vunpack.c.l.b16 %v7393
          %v8298 = vunpack.c.l.b16 %v7406
          %v8299 = vunpack.c.l.b16 %v7419
          %v8300 = vunpack.c.l.b16 %v7432
          %v8301 = vunpack.c.l.b16 %v7445
          %v8302 = vunpack.c.l.b16 %v7458
          %v8303 = vunpack.c.l.b16 %v7471
          %v8304 = vunpack.c.l.b16 %v7484
          %v8305 = vunpack.c.l.b16 %v7497
          %v8306 = vunpack.c.l.b16 %v7510
          %v8307 = vunpack.c.l.b16 %v7523
          %v8308 = vunpack.c.l.b16 %v7536
          %v8309 = vunpack.c.l.b16 %v7549
          %v8310 = vunpack.c.l.b16 %v7562
          %v8311 = vunpack.c.l.b16 %v7575
          %v8312 = vunpack.c.l.b16 %v7588
          %v8313 = vunpack.c.l.b16 %v7601
          %v8314 = vunpack.c.l.b16 %v7614
          %v8315 = vunpack.c.l.b16 %v7627
          %v8316 = vunpack.c.l.b16 %v7640
          %v8317 = vunpack.c.l.b16 %v7653
          %v8318 = vunpack.c.l.b16 %v7666
          %v8319 = vunpack.c.l.b16 %v7679
          %v8320 = vunpack.c.l.b16 %v7692
          %v8321 = vunpack.c.l.b16 %v7705
          %v8322 = vunpack.c.l.b16 %v7718
          %v8323 = vunpack.c.l.b16 %v7731
          %v8324 = vunpack.c.l.b16 %v7744
          %v8325 = vunpack.c.l.b16 %v7757
          %v8326 = vunpack.c.l.b16 %v7770
          %v8327 = vunpack.c.l.b16 %v7783
          %v8328 = vunpack.c.l.b16 %v7796
          %v8329 = vunpack.c.l.b16 %v7809
          %v8330 = vunpack.c.l.b16 %v7822
          %v8331 = vunpack.c.l.b16 %v7835
          %v8332 = vunpack.c.l.b16 %v7848
          %v8333 = vunpack.c.l.b16 %v7861
          %v8334 = vunpack.c.l.b16 %v7874
          %v8335 = vunpack.c.l.b16 %v7887
          %v8336 = vunpack.c.l.b16 %v7900
          %v8337 = vunpack.c.l.b16 %v7913
          %v8338 = vunpack.c.l.b16 %v7926
          %v8339 = vunpack.c.l.b16 %v7939
          %v8340 = vunpack.c.l.b16 %v7952
          %v8341 = vunpack.c.l.b16 %v7965
          %v8342 = vunpack.c.l.b16 %v7978
          %v8343 = vunpack.c.l.b16 %v7991
          %v8344 = vunpack.c.l.b16 %v8004
          %v8345 = vunpack.c.l.b16 %v8017
          %v8346 = vunpack.c.l.b16 %v8030
          %v8347 = vunpack.c.l.b16 %v8043
          %v8348 = vunpack.c.l.b16 %v8056
          %v8349 = vunpack.c.l.b16 %v8069
          %v8350 = vunpack.c.l.b16 %v8082
          %v8351 = vunpack.c.l.b16 %v8095
          %v8352 = vsel %vm3934, %v8225, %v8224
          %v8353 = vsel %vm3936, %v8226, %v8352
          %v8354 = vsel %vm3938, %v8227, %v8353
          %vm8355 = vcmask 1044484
          %v8356 = vsel %vm8355, %v8228, %v8354
          %vm8357 = vcmask 1045509
          %v8358 = vsel %vm8357, %v8229, %v8356
          %vm8359 = vcmask 1046534
          %v8360 = vsel %vm8359, %v8230, %v8358
          %vm8361 = vcmask 1047559
          %v8362 = vsel %vm8361, %v8231, %v8360
          %v8363 = vsel %vm3934, %v8233, %v8232
          %v8364 = vsel %vm3936, %v8234, %v8363
          %v8365 = vsel %vm3938, %v8235, %v8364
          %v8366 = vsel %vm8355, %v8236, %v8365
          %v8367 = vsel %vm8357, %v8237, %v8366
          %v8368 = vsel %vm8359, %v8238, %v8367
          %v8369 = vsel %vm8361, %v8239, %v8368
          %v8370 = vsel %vm3934, %v8241, %v8240
          %v8371 = vsel %vm3936, %v8242, %v8370
          %v8372 = vsel %vm3938, %v8243, %v8371
          %v8373 = vsel %vm8355, %v8244, %v8372
          %v8374 = vsel %vm8357, %v8245, %v8373
          %v8375 = vsel %vm8359, %v8246, %v8374
          %v8376 = vsel %vm8361, %v8247, %v8375
          %v8377 = vsel %vm3934, %v8249, %v8248
          %v8378 = vsel %vm3936, %v8250, %v8377
          %v8379 = vsel %vm3938, %v8251, %v8378
          %v8380 = vsel %vm8355, %v8252, %v8379
          %v8381 = vsel %vm8357, %v8253, %v8380
          %v8382 = vsel %vm8359, %v8254, %v8381
          %v8383 = vsel %vm8361, %v8255, %v8382
          %v8384 = vsel %vm3934, %v8257, %v8256
          %v8385 = vsel %vm3936, %v8258, %v8384
          %v8386 = vsel %vm3938, %v8259, %v8385
          %v8387 = vsel %vm8355, %v8260, %v8386
          %v8388 = vsel %vm8357, %v8261, %v8387
          %v8389 = vsel %vm8359, %v8262, %v8388
          %v8390 = vsel %vm8361, %v8263, %v8389
          %v8391 = vsel %vm3934, %v8265, %v8264
          %v8392 = vsel %vm3936, %v8266, %v8391
          %v8393 = vsel %vm3938, %v8267, %v8392
          %v8394 = vsel %vm8355, %v8268, %v8393
          %v8395 = vsel %vm8357, %v8269, %v8394
          %v8396 = vsel %vm8359, %v8270, %v8395
          %v8397 = vsel %vm8361, %v8271, %v8396
          %v8398 = vsel %vm3934, %v8273, %v8272
          %v8399 = vsel %vm3936, %v8274, %v8398
          %v8400 = vsel %vm3938, %v8275, %v8399
          %v8401 = vsel %vm8355, %v8276, %v8400
          %v8402 = vsel %vm8357, %v8277, %v8401
          %v8403 = vsel %vm8359, %v8278, %v8402
          %v8404 = vsel %vm8361, %v8279, %v8403
          %v8405 = vsel %vm3934, %v8281, %v8280
          %v8406 = vsel %vm3936, %v8282, %v8405
          %v8407 = vsel %vm3938, %v8283, %v8406
          %v8408 = vsel %vm8355, %v8284, %v8407
          %v8409 = vsel %vm8357, %v8285, %v8408
          %v8410 = vsel %vm8359, %v8286, %v8409
          %v8411 = vsel %vm8361, %v8287, %v8410
          %v8412 = vsel %vm3934, %v8289, %v8288
          %v8413 = vsel %vm3936, %v8290, %v8412
          %v8414 = vsel %vm3938, %v8291, %v8413
          %v8415 = vsel %vm8355, %v8292, %v8414
          %v8416 = vsel %vm8357, %v8293, %v8415
          %v8417 = vsel %vm8359, %v8294, %v8416
          %v8418 = vsel %vm8361, %v8295, %v8417
          %v8419 = vsel %vm3934, %v8297, %v8296
          %v8420 = vsel %vm3936, %v8298, %v8419
          %v8421 = vsel %vm3938, %v8299, %v8420
          %v8422 = vsel %vm8355, %v8300, %v8421
          %v8423 = vsel %vm8357, %v8301, %v8422
          %v8424 = vsel %vm8359, %v8302, %v8423
          %v8425 = vsel %vm8361, %v8303, %v8424
          %v8426 = vsel %vm3934, %v8305, %v8304
          %v8427 = vsel %vm3936, %v8306, %v8426
          %v8428 = vsel %vm3938, %v8307, %v8427
          %v8429 = vsel %vm8355, %v8308, %v8428
          %v8430 = vsel %vm8357, %v8309, %v8429
          %v8431 = vsel %vm8359, %v8310, %v8430
          %v8432 = vsel %vm8361, %v8311, %v8431
          %v8433 = vsel %vm3934, %v8313, %v8312
          %v8434 = vsel %vm3936, %v8314, %v8433
          %v8435 = vsel %vm3938, %v8315, %v8434
          %v8436 = vsel %vm8355, %v8316, %v8435
          %v8437 = vsel %vm8357, %v8317, %v8436
          %v8438 = vsel %vm8359, %v8318, %v8437
          %v8439 = vsel %vm8361, %v8319, %v8438
          %v8440 = vsel %vm3934, %v8321, %v8320
          %v8441 = vsel %vm3936, %v8322, %v8440
          %v8442 = vsel %vm3938, %v8323, %v8441
          %v8443 = vsel %vm8355, %v8324, %v8442
          %v8444 = vsel %vm8357, %v8325, %v8443
          %v8445 = vsel %vm8359, %v8326, %v8444
          %v8446 = vsel %vm8361, %v8327, %v8445
          %v8447 = vsel %vm3934, %v8329, %v8328
          %v8448 = vsel %vm3936, %v8330, %v8447
          %v8449 = vsel %vm3938, %v8331, %v8448
          %v8450 = vsel %vm8355, %v8332, %v8449
          %v8451 = vsel %vm8357, %v8333, %v8450
          %v8452 = vsel %vm8359, %v8334, %v8451
          %v8453 = vsel %vm8361, %v8335, %v8452
          %v8454 = vsel %vm3934, %v8337, %v8336
          %v8455 = vsel %vm3936, %v8338, %v8454
          %v8456 = vsel %vm3938, %v8339, %v8455
          %v8457 = vsel %vm8355, %v8340, %v8456
          %v8458 = vsel %vm8357, %v8341, %v8457
          %v8459 = vsel %vm8359, %v8342, %v8458
          %v8460 = vsel %vm8361, %v8343, %v8459
          %v8461 = vsel %vm3934, %v8345, %v8344
          %v8462 = vsel %vm3936, %v8346, %v8461
          %v8463 = vsel %vm3938, %v8347, %v8462
          %v8464 = vsel %vm8355, %v8348, %v8463
          %v8465 = vsel %vm8357, %v8349, %v8464
          %v8466 = vsel %vm8359, %v8350, %v8465
          %v8467 = vsel %vm8361, %v8351, %v8466
          %v8468 = vpack.c.b16 %v8369, %v8362
          %v8469 = vpack.c.b16 %v8383, %v8376
          %v8470 = vpack.c.b16 %v8397, %v8390
          %v8471 = vpack.c.b16 %v8411, %v8404
          %v8472 = vpack.c.b16 %v8425, %v8418
          %v8473 = vpack.c.b16 %v8439, %v8432
          %v8474 = vpack.c.b16 %v8453, %v8446
          %v8475 = vpack.c.b16 %v8467, %v8460
          %v8477 = vsel %vm6430, %v612, 0
          %v8480 = vsel %vm6430, %v8468, 0
          %v8483 = vsel %vm6430, %v8469, 0
          %v8486 = vsel %vm6430, %v8470, 0
          %v8489 = vsel %vm6430, %v8471, 0
          %v8492 = vsel %vm6430, %v8472, 0
          %v8495 = vsel %vm6430, %v8473, 0
          %v8498 = vsel %vm6430, %v8474, 0
          %v8501 = vsel %vm6430, %v8475, 0
          %8503 = vmatprep.subr.bf16.mxu0 0
          %8504 = vmatpush1.bf16.xpose.msra.mxu0 %v8480
          %8505 = vmatprep.subr.bf16.mxu0 0
          %8506 = vmatpush1.bf16.xpose.msra.mxu0 %v8483
          %8507 = vmatprep.subr.bf16.mxu0 0
          %8508 = vmatpush1.bf16.xpose.msra.mxu0 %v8486
          %8509 = vmatprep.subr.bf16.mxu0 0
          %8510 = vmatpush1.bf16.xpose.msra.mxu0 %v8489
          %8511 = vmatprep.subr.bf16.mxu0 0
          %8512 = vmatpush1.bf16.xpose.msra.mxu0 %v8492
          %8513 = vmatprep.subr.bf16.mxu0 0
          %8514 = vmatpush1.bf16.xpose.msra.mxu0 %v8495
          %8515 = vmatprep.subr.bf16.mxu0 0
          %8516 = vmatpush1.bf16.xpose.msra.mxu0 %v8498
          %8517 = vmatprep.subr.bf16.mxu0 0
          %8518 = vmatpush1.bf16.xpose.msra.mxu0 %v8501
          %8519 = vmatprep.subr.bf16.mxu0 0
          %8520 = vmatpush1.bf16.xpose.msra.mxu0 0
          %8521 = vmatprep.subr.bf16.mxu0 0
          %8522 = vmatpush1.bf16.xpose.msra.mxu0 0
          %8523 = vmatprep.subr.bf16.mxu0 0
          %8524 = vmatpush1.bf16.xpose.msra.mxu0 0
          %8525 = vmatprep.subr.bf16.mxu0 0
          %8526 = vmatpush1.bf16.xpose.msra.mxu0 0
          %8527 = vmatprep.subr.bf16.mxu0 0
          %8528 = vmatpush1.bf16.xpose.msra.mxu0 0
          %8529 = vmatprep.subr.bf16.mxu0 0
          %8530 = vmatpush1.bf16.xpose.msra.mxu0 0
          %8531 = vmatprep.subr.bf16.mxu0 0
          %8532 = vmatpush1.bf16.xpose.msra.mxu0 0
          %8533 = vmatprep.subr.bf16.mxu0 0
          %8534 = vmatpush1.bf16.xpose.msra.mxu0 0
          %8535 = vmatprep.mubr.bf16.mxu0 0
          %8536 = vmatmul.mubr.bf16.gmra.mrb[0].mxu0 %v8477
          %v8537 = vpop.f32.mrb[0].mxu0
          %v8538 = vadd.f32 0.0, %v8537
          %v8539 = vpop.f32.mrb[0].mxu0
          %v8540 = vpop.f32.mrb[0].mxu0
          %v8541 = vpop.f32.mrb[0].mxu0
          %8542 = vdwg.mxu0
          %v8543 = vadd.f32 %v5105, %v8538
        $region69: #{tpu_custom_call.1} parent=51 // loop_footer
          %s618 = sadd.s32 1, %s614
        $region70: #{tpu_custom_call.1} parent=51 // loop_footer_branch
          %613 = sbr.rel target = $region66
        $region71: #{tpu_custom_call.1} parent=51 // loop_exit
          _
        %8544 = vst [vmem:[%s352] sm:$0xf] %v619
        %s8545 = sand.u32 %s207, 1
        %s8546 = scalar_lea.sflag [#allocation4], %s8545
        %s8547 = sand.u32 %s207, 1
        %s8548 = smul.addr %s8547, 4
        %s8549 = scalar_lea.vmem [#allocation8], %s8548
        // Predicated region
        $region72: #{tpu_custom_call.1} parent=51 // pred_check
          %p8550 = pneg %p217
        $region73: #{tpu_custom_call.1} parent=51 // pred_check_branch
          %8552 = sbr.rel (%p8550) target = $region75
        $region74: #{tpu_custom_call.1} parent=51 // pred_region
          %s8554 = ssub.s32 64, 64
          %8555 = vsyncadd %s8546, %s8554
          %s8556 = smul.addr %s26, 64
          %s8557 = scalar_lea.hbm %s8, %s8556
          %s8559 = sshll.u32 %s8549, 4
          %s8560 = int_to_ptr.vmem [resolvable:$true] %s8559
          %8562 = dma.vmem_to_hbm [thread:$0]  %s8560, 64, %s8557, %s8546
        $region75: #{tpu_custom_call.1} parent=51 // pred_fallthru
          _
      $region52: #{tpu_custom_call.1} parent=5 // pred_fallthru
        _
      %p8563 = scmp.le.s32.totalorder 2, %s21
      // Predicated region
      $region76: #{tpu_custom_call.1} parent=5 // pred_check
        %p8564 = pneg %p8563
      $region77: #{tpu_custom_call.1} parent=5 // pred_check_branch
        %8566 = sbr.rel (%p8564) target = $region79
      $region78: #{tpu_custom_call.1} parent=5 // pred_region
        %s8567 = ssub.s32 %s21, 2
        // Predicated region
        $region80: #{tpu_custom_call.1} parent=78 // pred_check
          %p8568 = pneg %p223
        $region81: #{tpu_custom_call.1} parent=78 // pred_check_branch
          %8570 = sbr.rel (%p8568) target = $region83
        $region82: #{tpu_custom_call.1} parent=78 // pred_region
          %s8571 = sand.u32 %s208, 1
          %s8572 = scalar_lea.sflag [#allocation4], %s8571
          %s8573 = sand.u32 %s208, 1
          %s8574 = smul.addr %s8573, 4
          %s8575 = scalar_lea.vmem [#allocation8], %s8574
          %8576 = dma.done %s8572, 64
        $region83: #{tpu_custom_call.1} parent=78 // pred_fallthru
          _
      $region79: #{tpu_custom_call.1} parent=5 // pred_fallthru
        _
    $region6: #{tpu_custom_call.1} parent=1 // loop_footer
      %s25 = sadd.s32 1, %s21
    $region7: #{tpu_custom_call.1} parent=1 // loop_footer_branch
      %20 = sbr.rel target = $region3
    $region8: #{tpu_custom_call.1} parent=1 // loop_exit
      _
    %8577 = vsyncpa [#allocation3], 1
    %s8578 = scalar_lea.sflag [#allocation3], 1
    %8579 = vsyncpa %s8578, 1
    %8580 = vsyncpa [#allocation6], 1
    %8581 = vsyncpa [#allocation4], 1
    %s8582 = scalar_lea.sflag [#allocation4], 1
    %8583 = vsyncpa %s8582, 1

</llo_original>
